<compile_context>
chip_gen: v7x
topology: tpu7x:2x2x1
jax: 0.10.0
libtpu: 0.0.40
codegen_flags: <defaults>
</compile_context>

<pallas_src>
import math

import jax
import jax.numpy as jnp
from jax.experimental import pallas as pl
from jax.experimental.pallas import tpu as pltpu


# ---------------------------------------------------------------------------
# Kernel
# ---------------------------------------------------------------------------

def _make_mha_kernel(num_heads, head_dim, batch_tile, sq, sk, attn_dtype):
    dout = num_heads * head_dim
    hb = num_heads * batch_tile            # fused (head, batch-element) batch dim

    def to_heads(x2d, s):
        # (TB*s, H*hd) -> (H*TB, s, hd); fused batch index = h*TB + b.
        # One 3-D major<->sublane swap + leading-dim reshapes only (lane dim untouched).
        x = jnp.swapaxes(x2d.reshape(batch_tile * s, num_heads, head_dim), 0, 1)  # (H, TB*s, hd)
        return x.reshape(hb, s, head_dim)

    def from_heads(x3d):
        # (H*TB, Sq, hd) -> (TB*Sq, H*hd) -- matches torch transpose(1,2).contiguous().view(...).
        x = x3d.reshape(num_heads, batch_tile * sq, head_dim)       # (H, TB*Sq, hd)
        x = jnp.swapaxes(x, 0, 1)                                   # (TB*Sq, H, hd)
        return x.reshape(batch_tile * sq, dout)

    def mha_kernel(x1_ref, x2_ref,
                   wq_ref, bq_ref,
                   wkv_ref, bkv_ref,
                   wo_ref, bo_ref,
                   o_ref):
        # ---- fused projections over the whole batch tile (big-M MXU matmuls, f32 acc) ----
        # 1/sqrt(head_dim) is pre-folded into wq/bq at parameter-prep time.
        x1 = x1_ref[...]                                             # (TB*Sq, Din)
        x2 = x2_ref[...]                                             # (TB*Sk, Din)
        q = jnp.dot(x1, wq_ref[...], preferred_element_type=jnp.float32) + bq_ref[...]
        kv = jnp.dot(x2, wkv_ref[...], preferred_element_type=jnp.float32) + bkv_ref[...]

        # bf16 operands for every post-projection MXU matmul; softmax math stays f32
        # (v5e has no bf16 VPU/EUP, so elementwise math is kept f32 on all generations).
        # NOTE: kv[:, :dout] is only a free lane slice when dout % 128 == 0 (relayout otherwise).
        q = q.astype(attn_dtype)
        k = kv[:, :dout].astype(attn_dtype)
        v = kv[:, dout:].astype(attn_dtype)

        qh = to_heads(q, sq)                                         # (H*TB, Sq, hd)
        kh = to_heads(k, sk)                                         # (H*TB, Sk, hd)
        vh = to_heads(v, sk)                                         # (H*TB, Sk, hd)

        # ---- attention: one batched contraction over all (head, batch-element) pairs ----
        # TODO(synk): when head_dim < 32, pack heads into a >=128-deep contraction (or do the
        # score product on the VPU) instead of feeding a tiny contraction depth to the MXU.
        s = jnp.einsum('bqd,bkd->bqk', qh, kh,
                       preferred_element_type=jnp.float32)           # (H*TB, Sq, Sk) f32
        s = s - jnp.max(s, axis=-1, keepdims=True)
        p = jnp.exp(s)
        denom = jnp.sum(p, axis=-1, keepdims=True)
        p = p * pl.reciprocal(denom, approx=True)                    # EUP reciprocal, no VPU divide

        ctx = jnp.einsum('bqk,bkd->bqd', p.astype(attn_dtype), vh,
                         preferred_element_type=jnp.float32)         # (H*TB, Sq, hd)
        ctx2d = from_heads(ctx).astype(attn_dtype)                   # (TB*Sq, Dout) bf16

        out = jnp.dot(ctx2d, wo_ref[...], preferred_element_type=jnp.float32) + bo_ref[...]
        o_ref[...] = out.astype(o_ref.dtype)

    return mha_kernel


# ---------------------------------------------------------------------------
# Tiling / budget helpers
# ---------------------------------------------------------------------------

def _tpu_vmem_and_cores():
    """(physical VMEM bytes per core, TensorCores per chip), with safe fallbacks."""
    vmem = 128 * 1024 * 1024
    cores = 1
    try:
        info = pltpu.get_tpu_info()
        vmem = int(getattr(info, "vmem_capacity_bytes", vmem))
    except Exception:
        pass
    try:
        kind = jax.devices()[0].device_kind.lower()
        if "v7" in kind:                     # 2 TensorCores per chip on v7x
            cores = 2
    except Exception:
        pass
    return vmem, cores


def _vmem_bytes_estimate(tb, sq, sk, din, dout, num_heads,
                         in_itemsize, attn_itemsize, weight_bufs):
    """Rough per-grid-step VMEM footprint for a batch tile of `tb` elements."""
    f32 = 4
    rq, rk = tb * sq, tb * sk
    io = 2 * (rq * din + rk * din + rq * dout) * in_itemsize          # dbl-buffered x1/x2/out
    weights = weight_bufs * ((din * dout + din * 2 * dout) * in_itemsize
                             + dout * dout * attn_itemsize
                             + (dout + 2 * dout) * in_itemsize + dout * f32)
    inter = (rq * dout + rk * 2 * dout) * f32                         # q, kv (f32)
    inter += (rq * dout + 2 * rk * dout) * attn_itemsize              # bf16 q/k/v
    inter += tb * num_heads * sq * sk * (f32 + attn_itemsize)         # scores f32 + probs bf16
    inter += rq * dout * (f32 + attn_itemsize)                        # ctx
    return int(1.4 * (io + weights + inter))                          # slack for relayouts/padding


def _pick_batch_tile(B, sq, sk, din, dout, num_heads, in_itemsize, attn_itemsize,
                     vmem_limit, num_cores, weight_bufs):
    """Largest batch tile that (a) divides B, (b) keeps legal (8,128) block shapes,
    (c) fits the VMEM budget, and (d) leaves >= num_cores grid steps (v7x megacore)."""
    max_tb = B if num_cores <= 1 else max(1, B // num_cores)
    legal = [tb for tb in range(1, B + 1)
             if B % tb == 0 and (tb == B or ((tb * sq) % 8 == 0 and (tb * sk) % 8 == 0))]
    fitting = [tb for tb in legal
               if tb <= max_tb and _vmem_bytes_estimate(
                   tb, sq, sk, din, dout, num_heads,
                   in_itemsize, attn_itemsize, weight_bufs) <= vmem_limit]
    if fitting:
        return max(fitting)
    return min(legal)   # best effort: smallest legal block instead of blindly falling back to B


# ---------------------------------------------------------------------------
# Parameter prep (one-time) + wrapper
# ---------------------------------------------------------------------------

def prepare_mha_params(params, num_heads, attn_dtype=jnp.bfloat16):
    """One-time parameter prep, hoisted out of the per-call path:
    fuse K|V projections, fold 1/sqrt(head_dim) into wq/bq, bf16 output-projection weights."""
    dout = params["wq"].shape[1]
    scale = 1.0 / math.sqrt(dout // num_heads)
    return dict(
        wq=(params["wq"] * scale).astype(params["wq"].dtype),
        bq=(params["bq"] * scale).astype(params["bq"].dtype),
        wkv=jnp.concatenate([params["wk"], params["wv"]], axis=1),
        bkv=jnp.concatenate([params["bk"], params["bv"]], axis=1),
        wo=params["wo"].astype(attn_dtype),     # bf16 MXU operand for the output projection
        bo=params["bo"],                        # bias add stays f32
    )


def multi_head_attention(x1, x2, params, num_heads, attn_dtype=jnp.bfloat16):
    """x1: (B, Sq, Din), x2: (B, Sk, Din) -> (B, Sq, Dout)."""
    if "wkv" not in params:                     # accept raw torch-style params too
        params = prepare_mha_params(params, num_heads, attn_dtype)

    B, Sq, Din = x1.shape
    _, Sk, _ = x2.shape
    Dout = params["wq"].shape[1]
    head_dim = Dout // num_heads

    vmem_cap, num_cores = _tpu_vmem_and_cores()
    vmem_limit = (vmem_cap * 3) // 4            # ~96 MiB on v5e/v6e, ~48 MiB on v7x

    in_itemsize = jnp.dtype(x1.dtype).itemsize
    attn_itemsize = jnp.dtype(attn_dtype).itemsize

    x1_flat = x1.reshape(B * Sq, Din)           # batch*seq flattened into the matmul M dim
    x2_flat = x2.reshape(B * Sk, Din)
    args = (x1_flat, x2_flat,
            params["wq"], params["bq"],
            params["wkv"], params["bkv"],
            params["wo"], params["bo"])

    def build(weight_bufs):
        TB = _pick_batch_tile(B, Sq, Sk, Din, Dout, num_heads, in_itemsize, attn_itemsize,
                              vmem_limit, num_cores, weight_bufs)
        grid = (B // TB,)
        kernel = _make_mha_kernel(num_heads, head_dim, TB, Sq, Sk, attn_dtype)

        w_kwargs = {} if weight_bufs == 2 else dict(pipeline_mode=pl.Buffered(weight_bufs))

        def w_spec(shape):
            # Grid-invariant weights/biases; single-buffered when supported (saves VMEM).
            return pl.BlockSpec(shape, lambda g: (0,) * len(shape), **w_kwargs)

        grid_spec = pltpu.PrefetchScalarGridSpec(
            num_scalar_prefetch=0,
            grid=grid,
            in_specs=[
                pl.BlockSpec((TB * Sq, Din), lambda g: (g, 0)),
                pl.BlockSpec((TB * Sk, Din), lambda g: (g, 0)),
                w_spec((Din, Dout)), w_spec((1, Dout)),          # Q projection (scale folded in)
                w_spec((Din, 2 * Dout)), w_spec((1, 2 * Dout)),  # fused K|V projection
                w_spec((Dout, Dout)), w_spec((1, Dout)),         # output projection
            ],
            out_specs=pl.BlockSpec((TB * Sq, Dout), lambda g: (g, 0)),
        )
        return pl.pallas_call(
            kernel,
            out_shape=jax.ShapeDtypeStruct((B * Sq, Dout), x1.dtype),
            grid_spec=grid_spec,
            compiler_params=pltpu.CompilerParams(
                dimension_semantics=("parallel",),
                vmem_limit_bytes=int(vmem_limit),
            ),
        )

    # TODO(synk): for large Sq/Sk split into a projection kernel + flash-style kernel
    # (Sq "parallel", Sk "arbitrary", m/l/acc scratch with pl.when init/finalize) so the
    # (H, Sq, Sk) f32 score block is never materialized -- required on v7x's 64 MiB VMEM.
    if hasattr(pl, "Buffered"):
        try:
            return build(1)(*args).reshape(B, Sq, Dout)
        except Exception:
            pass  # pipeline_mode single-buffering unsupported here -> default double buffering
    return build(2)(*args).reshape(B, Sq, Dout)


# ---------------------------------------------------------------------------
# Pure-JAX reference (mirrors the PyTorch forward, f32 throughout)
# ---------------------------------------------------------------------------

def _reference_mha(x1, x2, params, num_heads):
    B, Sq, _ = x1.shape
    Dout = params["wq"].shape[1]
    hd = Dout // num_heads

    def proj(x, w, b):
        return jnp.einsum("bsd,de->bse", x, w) + b[0]

    q = proj(x1, params["wq"], params["bq"]).reshape(B, Sq, num_heads, hd).transpose(0, 2, 1, 3)
    k = proj(x2, params["wk"], params["bk"]).reshape(B, -1, num_heads, hd).transpose(0, 2, 1, 3)
    v = proj(x2, params["wv"], params["bv"]).reshape(B, -1, num_heads, hd).transpose(0, 2, 1, 3)
    s = jnp.einsum("bhqd,bhkd->bhqk", q, k) / math.sqrt(hd)
    p = jax.nn.softmax(s, axis=-1)
    ctx = jnp.einsum("bhqk,bhkd->bhqd", p, v).transpose(0, 2, 1, 3).reshape(B, Sq, Dout)
    return jnp.einsum("bsd,de->bse", ctx, params["wo"]) + params["bo"][0]


if __name__ == "__main__":
    B, Sq, Sk = 2, 8, 8
    input_dim, output_dim, num_heads = 32, 32, 8

    key = jax.random.PRNGKey(0)
    ks = jax.random.split(key, 10)

    def linear_init(kw, kb, fan_in, fan_out):
        bound = 1.0 / math.sqrt(fan_in)
        w = jax.random.uniform(kw, (fan_in, fan_out), jnp.float32, -bound, bound)
        b = jax.random.uniform(kb, (1, fan_out), jnp.float32, -bound, bound)
        return w, b

    wq, bq = linear_init(ks[0], ks[1], input_dim, output_dim)
    wk, bk = linear_init(ks[2], ks[3], input_dim, output_dim)
    wv, bv = linear_init(ks[4], ks[5], input_dim, output_dim)
    wo, bo = linear_init(ks[6], ks[7], output_dim, output_dim)
    raw_params = dict(wq=wq, bq=bq, wk=wk, bk=bk, wv=wv, bv=bv, wo=wo, bo=bo)

    x1 = jax.random.normal(ks[8], (B, Sq, input_dim), jnp.float32)
    x2 = jax.random.normal(ks[9], (B, Sk, input_dim), jnp.float32)

    prepared = prepare_mha_params(raw_params, num_heads)   # one-time parameter prep
    out = multi_head_attention(x1, x2, prepared, num_heads)
    out = jax.block_until_ready(out)

    ref = _reference_mha(x1, x2, raw_params, num_heads)
    assert out.shape == (B, Sq, output_dim)
    # bf16 matmul operands (f32 accumulation) + approx EUP reciprocal in the softmax:
    # compare against the pure-f32 reference with a correspondingly loosened tolerance.
    max_err = float(jnp.max(jnp.abs(out - ref)))
    assert jnp.allclose(out, ref, atol=2e-2, rtol=2e-2), (
        f"Pallas output mismatch vs reference (max abs err {max_err})")

    print("KERNEL_OK")
</pallas_src>

<mosaic_0001>
module attributes {stable_mosaic.version = 11 : i64} {
  func.func @mha_kernel(%arg0: i32, %arg1: memref<16x32xf32, #tpu.memory_space<vmem>>, %arg2: memref<16x32xf32, #tpu.memory_space<vmem>>, %arg3: memref<32x32xf32, #tpu.memory_space<vmem>>, %arg4: memref<1x32xf32, #tpu.memory_space<vmem>>, %arg5: memref<32x64xf32, #tpu.memory_space<vmem>>, %arg6: memref<1x64xf32, #tpu.memory_space<vmem>>, %arg7: memref<32x32xbf16, #tpu.memory_space<vmem>>, %arg8: memref<1x32xf32, #tpu.memory_space<vmem>>, %arg9: memref<16x32xf32, #tpu.memory_space<vmem>>) attributes {dimension_semantics = [#tpu.dimension_semantics<parallel>], iteration_bounds = array<i64: 1>, scalar_prefetch = 0 : i64, scratch_operands = 0 : i64, tpu.core_type = #tpu.core_type<tc>, window_params = [{transform_indices = @transform_0, window_bounds = array<i64: 16, 32>}, {transform_indices = @transform_1, window_bounds = array<i64: 16, 32>}, {pipeline_mode = #tpu.pipeline_mode<synchronous>, transform_indices = @transform_2, window_bounds = array<i64: 32, 32>}, {pipeline_mode = #tpu.pipeline_mode<synchronous>, transform_indices = @transform_3, window_bounds = array<i64: 1, 32>}, {pipeline_mode = #tpu.pipeline_mode<synchronous>, transform_indices = @transform_4, window_bounds = array<i64: 32, 64>}, {pipeline_mode = #tpu.pipeline_mode<synchronous>, transform_indices = @transform_5, window_bounds = array<i64: 1, 64>}, {pipeline_mode = #tpu.pipeline_mode<synchronous>, transform_indices = @transform_6, window_bounds = array<i64: 32, 32>}, {pipeline_mode = #tpu.pipeline_mode<synchronous>, transform_indices = @transform_7, window_bounds = array<i64: 1, 32>}, {transform_indices = @transform_8, window_bounds = array<i64: 16, 32>}]} {
    %c0 = arith.constant 0 : index
    %c0_0 = arith.constant 0 : index
    %0 = vector.load %arg1[%c0, %c0_0] : memref<16x32xf32, #tpu.memory_space<vmem>>, vector<16x32xf32>
    %c0_1 = arith.constant 0 : index
    %c0_2 = arith.constant 0 : index
    %1 = vector.load %arg2[%c0_1, %c0_2] : memref<16x32xf32, #tpu.memory_space<vmem>>, vector<16x32xf32>
    %c0_3 = arith.constant 0 : index
    %c0_4 = arith.constant 0 : index
    %2 = vector.load %arg3[%c0_3, %c0_4] : memref<32x32xf32, #tpu.memory_space<vmem>>, vector<32x32xf32>
    %cst = arith.constant dense<0.000000e+00> : vector<16x32xf32>
    %3 = tpu.matmul %0, %2, %cst {dimension_numbers = #tpu.dot_dimension_numbers<[1], [0], [0], [1], [0, 0, 1, 1], [], []>} : vector<16x32xf32>, vector<32x32xf32>, vector<16x32xf32> -> vector<16x32xf32>
    %c0_5 = arith.constant 0 : index
    %c0_6 = arith.constant 0 : index
    %4 = vector.load %arg4[%c0_5, %c0_6] : memref<1x32xf32, #tpu.memory_space<vmem>>, vector<1x32xf32>
    %5 = vector.broadcast %4 : vector<1x32xf32> to vector<16x32xf32>
    %6 = arith.addf %3, %5 : vector<16x32xf32>
    %c0_7 = arith.constant 0 : index
    %c0_8 = arith.constant 0 : index
    %7 = vector.load %arg5[%c0_7, %c0_8] : memref<32x64xf32, #tpu.memory_space<vmem>>, vector<32x64xf32>
    %cst_9 = arith.constant dense<0.000000e+00> : vector<16x64xf32>
    %8 = tpu.matmul %1, %7, %cst_9 {dimension_numbers = #tpu.dot_dimension_numbers<[1], [0], [0], [1], [0, 0, 1, 1], [], []>} : vector<16x32xf32>, vector<32x64xf32>, vector<16x64xf32> -> vector<16x64xf32>
    %c0_10 = arith.constant 0 : index
    %c0_11 = arith.constant 0 : index
    %9 = vector.load %arg6[%c0_10, %c0_11] : memref<1x64xf32, #tpu.memory_space<vmem>>, vector<1x64xf32>
    %10 = vector.broadcast %9 : vector<1x64xf32> to vector<16x64xf32>
    %11 = arith.addf %8, %10 : vector<16x64xf32>
    %12 = arith.truncf %6 : vector<16x32xf32> to vector<16x32xbf16>
    %13 = vector.extract_strided_slice %11 {offsets = [0, 0], sizes = [16, 32], strides = [1, 1]} : vector<16x64xf32> to vector<16x32xf32>
    %14 = arith.truncf %13 : vector<16x32xf32> to vector<16x32xbf16>
    %15 = vector.extract_strided_slice %11 {offsets = [0, 32], sizes = [16, 32], strides = [1, 1]} : vector<16x64xf32> to vector<16x32xf32>
    %16 = arith.truncf %15 : vector<16x32xf32> to vector<16x32xbf16>
    %17 = vector.shape_cast %12 : vector<16x32xbf16> to vector<16x8x4xbf16>
    %18 = tpu.transpose %17, [1, 0, 2] : vector<16x8x4xbf16> -> vector<8x16x4xbf16>
    %19 = vector.shape_cast %18 : vector<8x16x4xbf16> to vector<16x8x4xbf16>
    %20 = vector.shape_cast %14 : vector<16x32xbf16> to vector<16x8x4xbf16>
    %21 = tpu.transpose %20, [1, 0, 2] : vector<16x8x4xbf16> -> vector<8x16x4xbf16>
    %22 = vector.shape_cast %21 : vector<8x16x4xbf16> to vector<16x8x4xbf16>
    %23 = vector.shape_cast %16 : vector<16x32xbf16> to vector<16x8x4xbf16>
    %24 = tpu.transpose %23, [1, 0, 2] : vector<16x8x4xbf16> -> vector<8x16x4xbf16>
    %25 = vector.shape_cast %24 : vector<8x16x4xbf16> to vector<16x8x4xbf16>
    "tpu.trace_start"() <{level = 10 : i32, message = "bqd,bkd->bqk"}> : () -> ()
    %cst_12 = arith.constant dense<0.000000e+00> : vector<16x8x8xf32>
    %26 = tpu.matmul %19, %22, %cst_12 {dimension_numbers = #tpu.dot_dimension_numbers<[2], [2], [1], [1], [0, 0, 0, 1, 1, 1], [0], [0]>} : vector<16x8x4xbf16>, vector<16x8x4xbf16>, vector<16x8x8xf32> -> vector<16x8x8xf32>
    "tpu.trace_stop"() : () -> ()
    %cst_13 = arith.constant dense<0xFF800000> : vector<16x8xf32>
    %27 = vector.multi_reduction <maximumf>, %26, %cst_13 [2] : vector<16x8x8xf32> to vector<16x8xf32>
    %28 = vector.shape_cast %27 : vector<16x8xf32> to vector<16x8x1xf32>
    %29 = vector.broadcast %28 : vector<16x8x1xf32> to vector<16x8x8xf32>
    %30 = arith.subf %26, %29 : vector<16x8x8xf32>
    %31 = math.exp %30 : vector<16x8x8xf32>
    %cst_14 = arith.constant dense<0.000000e+00> : vector<16x8xf32>
    %32 = vector.multi_reduction <add>, %31, %cst_14 [2] : vector<16x8x8xf32> to vector<16x8xf32>
    %33 = vector.shape_cast %32 : vector<16x8xf32> to vector<16x8x1xf32>
    %34 = tpu.reciprocal %33 {approx = true} : vector<16x8x1xf32> -> vector<16x8x1xf32>
    %35 = vector.broadcast %34 : vector<16x8x1xf32> to vector<16x8x8xf32>
    %36 = arith.mulf %31, %35 : vector<16x8x8xf32>
    %37 = arith.truncf %36 : vector<16x8x8xf32> to vector<16x8x8xbf16>
    "tpu.trace_start"() <{level = 10 : i32, message = "bqk,bkd->bqd"}> : () -> ()
    %cst_15 = arith.constant dense<0.000000e+00> : vector<16x8x4xf32>
    %38 = tpu.matmul %37, %25, %cst_15 {dimension_numbers = #tpu.dot_dimension_numbers<[2], [1], [1], [2], [0, 0, 0, 1, 1, 2], [0], [0]>} : vector<16x8x8xbf16>, vector<16x8x4xbf16>, vector<16x8x4xf32> -> vector<16x8x4xf32>
    "tpu.trace_stop"() : () -> ()
    %39 = vector.shape_cast %38 : vector<16x8x4xf32> to vector<8x16x4xf32>
    %40 = tpu.transpose %39, [1, 0, 2] : vector<8x16x4xf32> -> vector<16x8x4xf32>
    %41 = vector.shape_cast %40 : vector<16x8x4xf32> to vector<16x32xf32>
    %42 = arith.truncf %41 : vector<16x32xf32> to vector<16x32xbf16>
    %c0_16 = arith.constant 0 : index
    %c0_17 = arith.constant 0 : index
    %43 = vector.load %arg7[%c0_16, %c0_17] : memref<32x32xbf16, #tpu.memory_space<vmem>>, vector<32x32xbf16>
    %cst_18 = arith.constant dense<0.000000e+00> : vector<16x32xf32>
    %44 = tpu.matmul %42, %43, %cst_18 {dimension_numbers = #tpu.dot_dimension_numbers<[1], [0], [0], [1], [0, 0, 1, 1], [], []>} : vector<16x32xbf16>, vector<32x32xbf16>, vector<16x32xf32> -> vector<16x32xf32>
    %c0_19 = arith.constant 0 : index
    %c0_20 = arith.constant 0 : index
    %45 = vector.load %arg8[%c0_19, %c0_20] : memref<1x32xf32, #tpu.memory_space<vmem>>, vector<1x32xf32>
    %46 = vector.broadcast %45 : vector<1x32xf32> to vector<16x32xf32>
    %47 = arith.addf %44, %46 : vector<16x32xf32>
    %c0_21 = arith.constant 0 : index
    %c0_22 = arith.constant 0 : index
    %48 = vector.load %arg9[%c0_21, %c0_22] : memref<16x32xf32, #tpu.memory_space<vmem>>, vector<16x32xf32>
    tpu.vector_store %arg9[%c0_21, %c0_22], %47 {strides = array<i32>} : memref<16x32xf32, #tpu.memory_space<vmem>>, vector<16x32xf32>,
    return
  }
  func.func @transform_0(%arg0: i32) -> (i32, i32) {
    %c0_i32 = arith.constant 0 : i32
    %c0_i32_0 = arith.constant 0 : i32
    return %arg0, %c0_i32 : i32, i32
  }
  func.func @transform_1(%arg0: i32) -> (i32, i32) {
    %c0_i32 = arith.constant 0 : i32
    %c0_i32_0 = arith.constant 0 : i32
    return %arg0, %c0_i32 : i32, i32
  }
  func.func @transform_2(%arg0: i32) -> (i32, i32) {
    %c0_i32 = arith.constant 0 : i32
    %c0_i32_0 = arith.constant 0 : i32
    %c0_i32_1 = arith.constant 0 : i32
    return %c0_i32, %c0_i32_0 : i32, i32
  }
  func.func @transform_3(%arg0: i32) -> (i32, i32) {
    %c0_i32 = arith.constant 0 : i32
    %c0_i32_0 = arith.constant 0 : i32
    %c0_i32_1 = arith.constant 0 : i32
    return %c0_i32, %c0_i32_0 : i32, i32
  }
  func.func @transform_4(%arg0: i32) -> (i32, i32) {
    %c0_i32 = arith.constant 0 : i32
    %c0_i32_0 = arith.constant 0 : i32
    %c0_i32_1 = arith.constant 0 : i32
    return %c0_i32, %c0_i32_0 : i32, i32
  }
  func.func @transform_5(%arg0: i32) -> (i32, i32) {
    %c0_i32 = arith.constant 0 : i32
    %c0_i32_0 = arith.constant 0 : i32
    %c0_i32_1 = arith.constant 0 : i32
    return %c0_i32, %c0_i32_0 : i32, i32
  }
  func.func @transform_6(%arg0: i32) -> (i32, i32) {
    %c0_i32 = arith.constant 0 : i32
    %c0_i32_0 = arith.constant 0 : i32
    %c0_i32_1 = arith.constant 0 : i32
    return %c0_i32, %c0_i32_0 : i32, i32
  }
  func.func @transform_7(%arg0: i32) -> (i32, i32) {
    %c0_i32 = arith.constant 0 : i32
    %c0_i32_0 = arith.constant 0 : i32
    %c0_i32_1 = arith.constant 0 : i32
    return %c0_i32, %c0_i32_0 : i32, i32
  }
  func.func @transform_8(%arg0: i32) -> (i32, i32) {
    %c0_i32 = arith.constant 0 : i32
    %c0_i32_0 = arith.constant 0 : i32
    return %arg0, %c0_i32 : i32, i32
  }
}

module attributes {stable_mosaic.version = 11 : i64} {
  func.func @mha_kernel(%arg0: i32, %arg1: memref<16x32xf32, #tpu.memory_space<vmem>>, %arg2: memref<16x32xf32, #tpu.memory_space<vmem>>, %arg3: memref<32x32xf32, #tpu.memory_space<vmem>>, %arg4: memref<1x32xf32, #tpu.memory_space<vmem>>, %arg5: memref<32x64xf32, #tpu.memory_space<vmem>>, %arg6: memref<1x64xf32, #tpu.memory_space<vmem>>, %arg7: memref<32x32xbf16, #tpu.memory_space<vmem>>, %arg8: memref<1x32xf32, #tpu.memory_space<vmem>>, %arg9: memref<16x32xf32, #tpu.memory_space<vmem>>) attributes {dimension_semantics = [#tpu.dimension_semantics<parallel>], iteration_bounds = array<i64: 1>, scalar_prefetch = 0 : i64, scratch_operands = 0 : i64, tpu.core_type = #tpu.core_type<tc>, window_params = [{transform_indices = @transform_0, window_bounds = array<i64: 16, 32>}, {transform_indices = @transform_1, window_bounds = array<i64: 16, 32>}, {pipeline_mode = #tpu.pipeline_mode<synchronous>, transform_indices = @transform_2, window_bounds = array<i64: 32, 32>}, {pipeline_mode = #tpu.pipeline_mode<synchronous>, transform_indices = @transform_3, window_bounds = array<i64: 1, 32>}, {pipeline_mode = #tpu.pipeline_mode<synchronous>, transform_indices = @transform_4, window_bounds = array<i64: 32, 64>}, {pipeline_mode = #tpu.pipeline_mode<synchronous>, transform_indices = @transform_5, window_bounds = array<i64: 1, 64>}, {pipeline_mode = #tpu.pipeline_mode<synchronous>, transform_indices = @transform_6, window_bounds = array<i64: 32, 32>}, {pipeline_mode = #tpu.pipeline_mode<synchronous>, transform_indices = @transform_7, window_bounds = array<i64: 1, 32>}, {transform_indices = @transform_8, window_bounds = array<i64: 16, 32>}]} {
    %c0 = arith.constant 0 : index
    %c0_0 = arith.constant 0 : index
    %0 = vector.load %arg1[%c0, %c0_0] : memref<16x32xf32, #tpu.memory_space<vmem>>, vector<16x32xf32>
    %c0_1 = arith.constant 0 : index
    %c0_2 = arith.constant 0 : index
    %1 = vector.load %arg2[%c0_1, %c0_2] : memref<16x32xf32, #tpu.memory_space<vmem>>, vector<16x32xf32>
    %c0_3 = arith.constant 0 : index
    %c0_4 = arith.constant 0 : index
    %2 = vector.load %arg3[%c0_3, %c0_4] : memref<32x32xf32, #tpu.memory_space<vmem>>, vector<32x32xf32>
    %cst = arith.constant dense<0.000000e+00> : vector<16x32xf32>
    %3 = tpu.matmul %0, %2, %cst {dimension_numbers = #tpu.dot_dimension_numbers<[1], [0], [0], [1], [0, 0, 1, 1], [], []>} : vector<16x32xf32>, vector<32x32xf32>, vector<16x32xf32> -> vector<16x32xf32>
    %c0_5 = arith.constant 0 : index
    %c0_6 = arith.constant 0 : index
    %4 = vector.load %arg4[%c0_5, %c0_6] : memref<1x32xf32, #tpu.memory_space<vmem>>, vector<1x32xf32>
    %5 = vector.broadcast %4 : vector<1x32xf32> to vector<16x32xf32>
    %6 = arith.addf %3, %5 : vector<16x32xf32>
    %c0_7 = arith.constant 0 : index
    %c0_8 = arith.constant 0 : index
    %7 = vector.load %arg5[%c0_7, %c0_8] : memref<32x64xf32, #tpu.memory_space<vmem>>, vector<32x64xf32>
    %cst_9 = arith.constant dense<0.000000e+00> : vector<16x64xf32>
    %8 = tpu.matmul %1, %7, %cst_9 {dimension_numbers = #tpu.dot_dimension_numbers<[1], [0], [0], [1], [0, 0, 1, 1], [], []>} : vector<16x32xf32>, vector<32x64xf32>, vector<16x64xf32> -> vector<16x64xf32>
    %c0_10 = arith.constant 0 : index
    %c0_11 = arith.constant 0 : index
    %9 = vector.load %arg6[%c0_10, %c0_11] : memref<1x64xf32, #tpu.memory_space<vmem>>, vector<1x64xf32>
    %10 = vector.broadcast %9 : vector<1x64xf32> to vector<16x64xf32>
    %11 = arith.addf %8, %10 : vector<16x64xf32>
    %12 = arith.truncf %6 : vector<16x32xf32> to vector<16x32xbf16>
    %13 = vector.extract_strided_slice %11 {offsets = [0, 0], sizes = [16, 32], strides = [1, 1]} : vector<16x64xf32> to vector<16x32xf32>
    %14 = arith.truncf %13 : vector<16x32xf32> to vector<16x32xbf16>
    %15 = vector.extract_strided_slice %11 {offsets = [0, 32], sizes = [16, 32], strides = [1, 1]} : vector<16x64xf32> to vector<16x32xf32>
    %16 = arith.truncf %15 : vector<16x32xf32> to vector<16x32xbf16>
    %17 = vector.shape_cast %12 : vector<16x32xbf16> to vector<16x8x4xbf16>
    %18 = tpu.transpose %17, [1, 0, 2] : vector<16x8x4xbf16> -> vector<8x16x4xbf16>
    %19 = vector.shape_cast %18 : vector<8x16x4xbf16> to vector<16x8x4xbf16>
    %20 = vector.shape_cast %14 : vector<16x32xbf16> to vector<16x8x4xbf16>
    %21 = tpu.transpose %20, [1, 0, 2] : vector<16x8x4xbf16> -> vector<8x16x4xbf16>
    %22 = vector.shape_cast %21 : vector<8x16x4xbf16> to vector<16x8x4xbf16>
    %23 = vector.shape_cast %16 : vector<16x32xbf16> to vector<16x8x4xbf16>
    %24 = tpu.transpose %23, [1, 0, 2] : vector<16x8x4xbf16> -> vector<8x16x4xbf16>
    %25 = vector.shape_cast %24 : vector<8x16x4xbf16> to vector<16x8x4xbf16>
    "tpu.trace_start"() <{level = 10 : i32, message = "bqd,bkd->bqk"}> : () -> ()
    %cst_12 = arith.constant dense<0.000000e+00> : vector<16x8x8xf32>
    %26 = tpu.matmul %19, %22, %cst_12 {dimension_numbers = #tpu.dot_dimension_numbers<[2], [2], [1], [1], [0, 0, 0, 1, 1, 1], [0], [0]>} : vector<16x8x4xbf16>, vector<16x8x4xbf16>, vector<16x8x8xf32> -> vector<16x8x8xf32>
    "tpu.trace_stop"() : () -> ()
    %cst_13 = arith.constant dense<0xFF800000> : vector<16x8xf32>
    %27 = vector.multi_reduction <maximumf>, %26, %cst_13 [2] : vector<16x8x8xf32> to vector<16x8xf32>
    %28 = vector.shape_cast %27 : vector<16x8xf32> to vector<16x8x1xf32>
    %29 = vector.broadcast %28 : vector<16x8x1xf32> to vector<16x8x8xf32>
    %30 = arith.subf %26, %29 : vector<16x8x8xf32>
    %31 = math.exp %30 : vector<16x8x8xf32>
    %cst_14 = arith.constant dense<0.000000e+00> : vector<16x8xf32>
    %32 = vector.multi_reduction <add>, %31, %cst_14 [2] : vector<16x8x8xf32> to vector<16x8xf32>
    %33 = vector.shape_cast %32 : vector<16x8xf32> to vector<16x8x1xf32>
    %34 = tpu.reciprocal %33 {approx = true} : vector<16x8x1xf32> -> vector<16x8x1xf32>
    %35 = vector.broadcast %34 : vector<16x8x1xf32> to vector<16x8x8xf32>
    %36 = arith.mulf %31, %35 : vector<16x8x8xf32>
    %37 = arith.truncf %36 : vector<16x8x8xf32> to vector<16x8x8xbf16>
    "tpu.trace_start"() <{level = 10 : i32, message = "bqk,bkd->bqd"}> : () -> ()
    %cst_15 = arith.constant dense<0.000000e+00> : vector<16x8x4xf32>
    %38 = tpu.matmul %37, %25, %cst_15 {dimension_numbers = #tpu.dot_dimension_numbers<[2], [1], [1], [2], [0, 0, 0, 1, 1, 2], [0], [0]>} : vector<16x8x8xbf16>, vector<16x8x4xbf16>, vector<16x8x4xf32> -> vector<16x8x4xf32>
    "tpu.trace_stop"() : () -> ()
    %39 = vector.shape_cast %38 : vector<16x8x4xf32> to vector<8x16x4xf32>
    %40 = tpu.transpose %39, [1, 0, 2] : vector<8x16x4xf32> -> vector<16x8x4xf32>
    %41 = vector.shape_cast %40 : vector<16x8x4xf32> to vector<16x32xf32>
    %42 = arith.truncf %41 : vector<16x32xf32> to vector<16x32xbf16>
    %c0_16 = arith.constant 0 : index
    %c0_17 = arith.constant 0 : index
    %43 = vector.load %arg7[%c0_16, %c0_17] : memref<32x32xbf16, #tpu.memory_space<vmem>>, vector<32x32xbf16>
    %cst_18 = arith.constant dense<0.000000e+00> : vector<16x32xf32>
    %44 = tpu.matmul %42, %43, %cst_18 {dimension_numbers = #tpu.dot_dimension_numbers<[1], [0], [0], [1], [0, 0, 1, 1], [], []>} : vector<16x32xbf16>, vector<32x32xbf16>, vector<16x32xf32> -> vector<16x32xf32>
    %c0_19 = arith.constant 0 : index
    %c0_20 = arith.constant 0 : index
    %45 = vector.load %arg8[%c0_19, %c0_20] : memref<1x32xf32, #tpu.memory_space<vmem>>, vector<1x32xf32>
    %46 = vector.broadcast %45 : vector<1x32xf32> to vector<16x32xf32>
    %47 = arith.addf %44, %46 : vector<16x32xf32>
    %c0_21 = arith.constant 0 : index
    %c0_22 = arith.constant 0 : index
    %48 = vector.load %arg9[%c0_21, %c0_22] : memref<16x32xf32, #tpu.memory_space<vmem>>, vector<16x32xf32>
    tpu.vector_store %arg9[%c0_21, %c0_22], %47 {strides = array<i32>} : memref<16x32xf32, #tpu.memory_space<vmem>>, vector<16x32xf32>,
    return
  }
  func.func @transform_0(%arg0: i32) -> (i32, i32) {
    %c0_i32 = arith.constant 0 : i32
    %c0_i32_0 = arith.constant 0 : i32
    return %arg0, %c0_i32 : i32, i32
  }
  func.func @transform_1(%arg0: i32) -> (i32, i32) {
    %c0_i32 = arith.constant 0 : i32
    %c0_i32_0 = arith.constant 0 : i32
    return %arg0, %c0_i32 : i32, i32
  }
  func.func @transform_2(%arg0: i32) -> (i32, i32) {
    %c0_i32 = arith.constant 0 : i32
    %c0_i32_0 = arith.constant 0 : i32
    %c0_i32_1 = arith.constant 0 : i32
    return %c0_i32, %c0_i32_0 : i32, i32
  }
  func.func @transform_3(%arg0: i32) -> (i32, i32) {
    %c0_i32 = arith.constant 0 : i32
    %c0_i32_0 = arith.constant 0 : i32
    %c0_i32_1 = arith.constant 0 : i32
    return %c0_i32, %c0_i32_0 : i32, i32
  }
  func.func @transform_4(%arg0: i32) -> (i32, i32) {
    %c0_i32 = arith.constant 0 : i32
    %c0_i32_0 = arith.constant 0 : i32
    %c0_i32_1 = arith.constant 0 : i32
    return %c0_i32, %c0_i32_0 : i32, i32
  }
  func.func @transform_5(%arg0: i32) -> (i32, i32) {
    %c0_i32 = arith.constant 0 : i32
    %c0_i32_0 = arith.constant 0 : i32
    %c0_i32_1 = arith.constant 0 : i32
    return %c0_i32, %c0_i32_0 : i32, i32
  }
  func.func @transform_6(%arg0: i32) -> (i32, i32) {
    %c0_i32 = arith.constant 0 : i32
    %c0_i32_0 = arith.constant 0 : i32
    %c0_i32_1 = arith.constant 0 : i32
    return %c0_i32, %c0_i32_0 : i32, i32
  }
  func.func @transform_7(%arg0: i32) -> (i32, i32) {
    %c0_i32 = arith.constant 0 : i32
    %c0_i32_0 = arith.constant 0 : i32
    %c0_i32_1 = arith.constant 0 : i32
    return %c0_i32, %c0_i32_0 : i32, i32
  }
  func.func @transform_8(%arg0: i32) -> (i32, i32) {
    %c0_i32 = arith.constant 0 : i32
    %c0_i32_0 = arith.constant 0 : i32
    return %arg0, %c0_i32 : i32, i32
  }
}

</mosaic_0001>

<llo_original>
// kernel: tpu_custom_call.1
$region0: #{tpu_custom_call.1}
  #allocation0 [shape = 'u32[]', space=smem, size = 0x4, offset = 0x4, fixed_abs, tag = 'smem constant byte address 0x4 - core index']
  #allocation1 [shape = 'u32[144,128]{1,0:T(1,128)}', space=vmem, size = 0x12000, scoped, tag = 'internal scratch']
  %s0 = inlined_call_operand.hbm [shape: f32[16,32], index: 0, kind: input, shape index: {}]
  %s1 = inlined_call_operand.hbm [shape: f32[16,32], index: 1, kind: input, shape index: {}]
  %s2 = inlined_call_operand.hbm [shape: f32[32,32], index: 2, kind: input, shape index: {}]
  %s3 = inlined_call_operand.hbm [shape: f32[1,32], index: 3, kind: input, shape index: {}]
  %s4 = inlined_call_operand.hbm [shape: f32[32,64], index: 4, kind: input, shape index: {}]
  %s5 = inlined_call_operand.hbm [shape: f32[1,64], index: 5, kind: input, shape index: {}]
  %s6 = inlined_call_operand.hbm [shape: bf16[32,32], index: 6, kind: input, shape index: {}]
  %s7 = inlined_call_operand.hbm [shape: f32[1,32], index: 7, kind: input, shape index: {}]
  %s8 = inlined_call_operand.hbm [shape: f32[16,32], index: 8, kind: output, shape index: {}]
  %s9 = sld [smem:[#allocation0]]
  $region74: #{tpu_custom_call.1} parent=0
    _
  %s11 = ssub.s32 1, %s9
  %s12 = scalar_select 0, %s11, %s9
  $region1: #{tpu_custom_call.1} parent=0
    #allocation2 [shape = 'u8[8192]{0}', space=vmem, size = 0x2000, scoped, tag = 'input window, operand 0, single buffered']
    #allocation3 [shape = 's32[1]{0}', space=sflag, size = 0x4, scoped, tag = 'scoped memory for tpu_custom_call.1']
    #allocation4 [shape = 's32[1]{0}', space=sflag, size = 0x4, scoped, tag = 'scoped memory for tpu_custom_call.1']
    #allocation5 [shape = 'u8[8192]{0}', space=vmem, size = 0x2000, scoped, tag = 'input window, operand 1, single buffered']
    #allocation6 [shape = 's32[1]{0}', space=sflag, size = 0x4, scoped, tag = 'scoped memory for tpu_custom_call.1']
    #allocation7 [shape = 'u8[16384]{0}', space=vmem, size = 0x4000, scoped, tag = 'input window, operand 2, single buffered']
    #allocation8 [shape = 'u8[512]{0}', space=vmem, size = 0x400, scoped, tag = 'input window, operand 3, single buffered']
    #allocation9 [shape = 's32[1]{0}', space=sflag, size = 0x4, scoped, tag = 'scoped memory for tpu_custom_call.1']
    #allocation10 [shape = 'u8[16384]{0}', space=vmem, size = 0x4000, scoped, tag = 'input window, operand 4, single buffered']
    #allocation11 [shape = 'u8[512]{0}', space=vmem, size = 0x400, scoped, tag = 'input window, operand 5, single buffered']
    #allocation12 [shape = 's32[1]{0}', space=sflag, size = 0x4, scoped, tag = 'scoped memory for tpu_custom_call.1']
    #allocation13 [shape = 'u8[8192]{0}', space=vmem, size = 0x2000, scoped, tag = 'input window, operand 6, single buffered']
    #allocation14 [shape = 'u8[512]{0}', space=vmem, size = 0x400, scoped, tag = 'input window, operand 7, single buffered']
    #allocation15 [shape = 's32[1]{0}', space=sflag, size = 0x4, scoped, tag = 'scoped memory for tpu_custom_call.1']
    #allocation16 [shape = 'u8[8192]{0}', space=vmem, size = 0x2000, scoped, tag = 'output window, operand 0, single buffered']
    %13 = vsyncpa [#allocation3], 0
    %14 = vsyncpa [#allocation6], 0
    %15 = vsyncpa [#allocation9], 0
    %16 = vsyncpa [#allocation12], 0
    %17 = vsyncpa [#allocation15], 0
    %18 = vsyncpa [#allocation4], 0
    // Predicated region
    $region2: #{tpu_custom_call.1} parent=1 // pred_check
      _
    $region3: #{tpu_custom_call.1} parent=1 // pred_check_branch
      %20 = sbr.rel (0) target = $region5
    $region4: #{tpu_custom_call.1} parent=1 // pred_region
      %s22 = ssub.s32 256, 256
      %23 = vsyncadd [#allocation3], %s22
      %s24 = sshll.u32 [#allocation2], 4
      %s25 = int_to_ptr.vmem [resolvable:$true] %s24
      %30 = dma.hbm_to_vmem [thread:$0]  %s0, 256, %s25, [#allocation3], 128, 128, 8
    $region5: #{tpu_custom_call.1} parent=1 // pred_fallthru
      _
    // Predicated region
    $region6: #{tpu_custom_call.1} parent=1 // pred_check
      _
    $region7: #{tpu_custom_call.1} parent=1 // pred_check_branch
      %32 = sbr.rel (0) target = $region9
    $region8: #{tpu_custom_call.1} parent=1 // pred_region
      %s34 = ssub.s32 256, 256
      %35 = vsyncadd [#allocation6], %s34
      %s36 = sshll.u32 [#allocation5], 4
      %s37 = int_to_ptr.vmem [resolvable:$true] %s36
      %42 = dma.hbm_to_vmem [thread:$0]  %s1, 256, %s37, [#allocation6], 128, 128, 8
    $region9: #{tpu_custom_call.1} parent=1 // pred_fallthru
      _
    // Predicated region
    $region10: #{tpu_custom_call.1} parent=1 // pred_check
      _
    $region11: #{tpu_custom_call.1} parent=1 // pred_check_branch
      %44 = sbr.rel (0) target = $region13
    $region12: #{tpu_custom_call.1} parent=1 // pred_region
      %s46 = ssub.s32 512, 512
      %47 = vsyncadd [#allocation6], %s46
      %s48 = sshll.u32 [#allocation7], 4
      %s49 = int_to_ptr.vmem [resolvable:$true] %s48
      %54 = dma.hbm_to_vmem [thread:$0]  %s2, 512, %s49, [#allocation6], 128, 128, 8
    $region13: #{tpu_custom_call.1} parent=1 // pred_fallthru
      _
    // Predicated region
    $region14: #{tpu_custom_call.1} parent=1 // pred_check
      _
    $region15: #{tpu_custom_call.1} parent=1 // pred_check_branch
      %56 = sbr.rel (0) target = $region17
    $region16: #{tpu_custom_call.1} parent=1 // pred_region
      %s58 = ssub.s32 16, 16
      %59 = vsyncadd [#allocation9], %s58
      %s61 = sshll.u32 [#allocation8], 4
      %s62 = int_to_ptr.vmem [resolvable:$true] %s61
      %64 = dma.hbm_to_vmem [thread:$0]  %s3, 16, %s62, [#allocation9]
    $region17: #{tpu_custom_call.1} parent=1 // pred_fallthru
      _
    // Predicated region
    $region18: #{tpu_custom_call.1} parent=1 // pred_check
      _
    $region19: #{tpu_custom_call.1} parent=1 // pred_check_branch
      %66 = sbr.rel (0) target = $region21
    $region20: #{tpu_custom_call.1} parent=1 // pred_region
      %s68 = ssub.s32 512, 512
      %69 = vsyncadd [#allocation9], %s68
      %s70 = sshll.u32 [#allocation10], 4
      %s71 = int_to_ptr.vmem [resolvable:$true] %s70
      %76 = dma.hbm_to_vmem [thread:$0]  %s4, 512, %s71, [#allocation9], 128, 128, 8
    $region21: #{tpu_custom_call.1} parent=1 // pred_fallthru
      _
    // Predicated region
    $region22: #{tpu_custom_call.1} parent=1 // pred_check
      _
    $region23: #{tpu_custom_call.1} parent=1 // pred_check_branch
      %78 = sbr.rel (0) target = $region25
    $region24: #{tpu_custom_call.1} parent=1 // pred_region
      %s80 = ssub.s32 16, 16
      %81 = vsyncadd [#allocation12], %s80
      %s83 = sshll.u32 [#allocation11], 4
      %s84 = int_to_ptr.vmem [resolvable:$true] %s83
      %86 = dma.hbm_to_vmem [thread:$0]  %s5, 16, %s84, [#allocation12]
    $region25: #{tpu_custom_call.1} parent=1 // pred_fallthru
      _
    // Predicated region
    $region26: #{tpu_custom_call.1} parent=1 // pred_check
      _
    $region27: #{tpu_custom_call.1} parent=1 // pred_check_branch
      %88 = sbr.rel (0) target = $region29
    $region28: #{tpu_custom_call.1} parent=1 // pred_region
      %s90 = ssub.s32 256, 256
      %91 = vsyncadd [#allocation12], %s90
      %s92 = sshll.u32 [#allocation13], 4
      %s93 = int_to_ptr.vmem [resolvable:$true] %s92
      %98 = dma.hbm_to_vmem [thread:$0]  %s6, 256, %s93, [#allocation12], 64, 64, 4
    $region29: #{tpu_custom_call.1} parent=1 // pred_fallthru
      _
    // Predicated region
    $region30: #{tpu_custom_call.1} parent=1 // pred_check
      _
    $region31: #{tpu_custom_call.1} parent=1 // pred_check_branch
      %100 = sbr.rel (0) target = $region33
    $region32: #{tpu_custom_call.1} parent=1 // pred_region
      %s102 = ssub.s32 16, 16
      %103 = vsyncadd [#allocation15], %s102
      %s105 = sshll.u32 [#allocation14], 4
      %s106 = int_to_ptr.vmem [resolvable:$true] %s105
      %108 = dma.hbm_to_vmem [thread:$0]  %s7, 16, %s106, [#allocation15]
    $region33: #{tpu_custom_call.1} parent=1 // pred_fallthru
      _
    // Predicated region
    $region34: #{tpu_custom_call.1} parent=1 // pred_check
      _
    $region35: #{tpu_custom_call.1} parent=1 // pred_check_branch
      %110 = sbr.rel (0) target = $region37
    $region36: #{tpu_custom_call.1} parent=1 // pred_region
      %111 = dma.done [#allocation3], 256
    $region37: #{tpu_custom_call.1} parent=1 // pred_fallthru
      _
    // Predicated region
    $region38: #{tpu_custom_call.1} parent=1 // pred_check
      _
    $region39: #{tpu_custom_call.1} parent=1 // pred_check_branch
      %113 = sbr.rel (0) target = $region41
    $region40: #{tpu_custom_call.1} parent=1 // pred_region
      %114 = dma.done [#allocation6], 256
    $region41: #{tpu_custom_call.1} parent=1 // pred_fallthru
      _
    // Predicated region
    $region42: #{tpu_custom_call.1} parent=1 // pred_check
      _
    $region43: #{tpu_custom_call.1} parent=1 // pred_check_branch
      %116 = sbr.rel (0) target = $region45
    $region44: #{tpu_custom_call.1} parent=1 // pred_region
      %117 = dma.done [#allocation6], 512
    $region45: #{tpu_custom_call.1} parent=1 // pred_fallthru
      _
    // Predicated region
    $region46: #{tpu_custom_call.1} parent=1 // pred_check
      _
    $region47: #{tpu_custom_call.1} parent=1 // pred_check_branch
      %119 = sbr.rel (0) target = $region49
    $region48: #{tpu_custom_call.1} parent=1 // pred_region
      %120 = dma.done [#allocation9], 16
    $region49: #{tpu_custom_call.1} parent=1 // pred_fallthru
      _
    // Predicated region
    $region50: #{tpu_custom_call.1} parent=1 // pred_check
      _
    $region51: #{tpu_custom_call.1} parent=1 // pred_check_branch
      %122 = sbr.rel (0) target = $region53
    $region52: #{tpu_custom_call.1} parent=1 // pred_region
      %123 = dma.done [#allocation9], 512
    $region53: #{tpu_custom_call.1} parent=1 // pred_fallthru
      _
    // Predicated region
    $region54: #{tpu_custom_call.1} parent=1 // pred_check
      _
    $region55: #{tpu_custom_call.1} parent=1 // pred_check_branch
      %125 = sbr.rel (0) target = $region57
    $region56: #{tpu_custom_call.1} parent=1 // pred_region
      %126 = dma.done [#allocation12], 16
    $region57: #{tpu_custom_call.1} parent=1 // pred_fallthru
      _
    // Predicated region
    $region58: #{tpu_custom_call.1} parent=1 // pred_check
      _
    $region59: #{tpu_custom_call.1} parent=1 // pred_check_branch
      %128 = sbr.rel (0) target = $region61
    $region60: #{tpu_custom_call.1} parent=1 // pred_region
      %129 = dma.done [#allocation12], 256
    $region61: #{tpu_custom_call.1} parent=1 // pred_fallthru
      _
    // Predicated region
    $region62: #{tpu_custom_call.1} parent=1 // pred_check
      _
    $region63: #{tpu_custom_call.1} parent=1 // pred_check_branch
      %131 = sbr.rel (0) target = $region65
    $region64: #{tpu_custom_call.1} parent=1 // pred_region
      %132 = dma.done [#allocation15], 16
    $region65: #{tpu_custom_call.1} parent=1 // pred_fallthru
      _
    %v134 = vld [vmem:[#allocation2] sm:$0xff]
    %v135 = vld [vmem:[#allocation2 + $0x8] sm:$0xff]
    %v136 = vld [vmem:[#allocation5] sm:$0xff]
    %v137 = vld [vmem:[#allocation5 + $0x8] sm:$0xff]
    %v138 = vld [vmem:[#allocation7] sm:$0xff]
    %v139 = vld [vmem:[#allocation7 + $0x8] sm:$0xff]
    %v140 = vld [vmem:[#allocation7 + $0x10] sm:$0xff]
    %v141 = vld [vmem:[#allocation7 + $0x18] sm:$0xff]
    %v142 = vld [vmem:[#allocation8] sm:$0x1]
    %v144 = vlaneseq
    %v145 = vshrl.u32 %v144, 7
    %v146 = vsub.s32 0, %v145
    %v147 = vrot.slane %v142, %v146
    %vm149 = vcmask 261120
    %v151 = vsel %vm149, %v134, 0
    %v154 = vsel %vm149, %v135, 0
    %156 = vmatprep.subr.mxu0 0.0
    %157 = vmatpush1.msra.mxu0 %v138
    %158 = vmatprep.subr.mxu0 0.0
    %159 = vmatpush1.msra.mxu0 %v139
    %160 = vmatprep.subr.mxu0 0.0
    %161 = vmatpush1.msra.mxu0 %v140
    %162 = vmatprep.subr.mxu0 0.0
    %163 = vmatpush1.msra.mxu0 %v141
    %164 = vmatprep.subr.mxu0 0.0
    %165 = vmatpush1.msra.mxu0 0.0
    %166 = vmatprep.subr.mxu0 0.0
    %167 = vmatpush1.msra.mxu0 0.0
    %168 = vmatprep.subr.mxu0 0.0
    %169 = vmatpush1.msra.mxu0 0.0
    %170 = vmatprep.subr.mxu0 0.0
    %171 = vmatpush1.msra.mxu0 0.0
    %172 = vmatprep.subr.mxu0 0.0
    %173 = vmatpush1.msra.mxu0 0.0
    %174 = vmatprep.subr.mxu0 0.0
    %175 = vmatpush1.msra.mxu0 0.0
    %176 = vmatprep.subr.mxu0 0.0
    %177 = vmatpush1.msra.mxu0 0.0
    %178 = vmatprep.subr.mxu0 0.0
    %179 = vmatpush1.msra.mxu0 0.0
    %180 = vmatprep.subr.mxu0 0.0
    %181 = vmatpush1.msra.mxu0 0.0
    %182 = vmatprep.subr.mxu0 0.0
    %183 = vmatpush1.msra.mxu0 0.0
    %184 = vmatprep.subr.mxu0 0.0
    %185 = vmatpush1.msra.mxu0 0.0
    %186 = vmatprep.subr.mxu0 0.0
    %187 = vmatpush1.msra.mxu0 0.0
    %188 = vmatprep.subr.mxu0 0.0
    %189 = vmatpush1.msra.mxu0 0.0
    %190 = vmatprep.subr.mxu0 0.0
    %191 = vmatpush1.msra.mxu0 0.0
    %192 = vmatprep.subr.mxu0 0.0
    %193 = vmatpush1.msra.mxu0 0.0
    %194 = vmatprep.subr.mxu0 0.0
    %195 = vmatpush1.msra.mxu0 0.0
    %196 = vmatprep.subr.mxu0 0.0
    %197 = vmatpush1.msra.mxu0 0.0
    %198 = vmatprep.subr.mxu0 0.0
    %199 = vmatpush1.msra.mxu0 0.0
    %200 = vmatprep.subr.mxu0 0.0
    %201 = vmatpush1.msra.mxu0 0.0
    %202 = vmatprep.subr.mxu0 0.0
    %203 = vmatpush1.msra.mxu0 0.0
    %204 = vmatprep.subr.mxu0 0.0
    %205 = vmatpush1.msra.mxu0 0.0
    %206 = vmatprep.subr.mxu0 0.0
    %207 = vmatpush1.msra.mxu0 0.0
    %208 = vmatprep.subr.mxu0 0.0
    %209 = vmatpush1.msra.mxu0 0.0
    %210 = vmatprep.subr.mxu0 0.0
    %211 = vmatpush1.msra.mxu0 0.0
    %212 = vmatprep.subr.mxu0 0.0
    %213 = vmatpush1.msra.mxu0 0.0
    %214 = vmatprep.subr.mxu0 0.0
    %215 = vmatpush1.msra.mxu0 0.0
    %216 = vmatprep.subr.mxu0 0.0
    %217 = vmatpush1.msra.mxu0 0.0
    %218 = vmatprep.subr.mxu0 0.0
    %219 = vmatpush1.msra.mxu0 0.0
    %220 = vmatprep.mubr.f32.mxu0 0.0
    %221 = vmatmul.mubr.f32.gmra.mrb[0].mxu0 %v151
    %v222 = vpop.f32.mrb[0].mxu0
    %v223 = vadd.f32 %v147, %v222
    %v224 = vpop.f32.mrb[0].mxu0
    %225 = vmatprep.mubr.f32.mxu0 0.0
    %226 = vmatmul.mubr.f32.gmra.mrb[0].mxu0 %v154
    %v227 = vpop.f32.mrb[0].mxu0
    %v228 = vadd.f32 %v147, %v227
    %v229 = vpop.f32.mrb[0].mxu0
    %230 = vdwg.mxu0
    %v231 = vld [vmem:[#allocation10] sm:$0xff]
    %v232 = vld [vmem:[#allocation10 + $0x8] sm:$0xff]
    %v233 = vld [vmem:[#allocation10 + $0x10] sm:$0xff]
    %v234 = vld [vmem:[#allocation10 + $0x18] sm:$0xff]
    %v235 = vld [vmem:[#allocation11] sm:$0x1]
    %v237 = vlaneseq
    %v238 = vshrl.u32 %v237, 7
    %v239 = vsub.s32 0, %v238
    %v240 = vrot.slane %v235, %v239
    %v243 = vsel %vm149, %v136, 0
    %v246 = vsel %vm149, %v137, 0
    %248 = vmatprep.subr.mxu0 0.0
    %249 = vmatpush1.msra.mxu0 %v231
    %250 = vmatprep.subr.mxu0 0.0
    %251 = vmatpush1.msra.mxu0 %v232
    %252 = vmatprep.subr.mxu0 0.0
    %253 = vmatpush1.msra.mxu0 %v233
    %254 = vmatprep.subr.mxu0 0.0
    %255 = vmatpush1.msra.mxu0 %v234
    %256 = vmatprep.subr.mxu0 0.0
    %257 = vmatpush1.msra.mxu0 0.0
    %258 = vmatprep.subr.mxu0 0.0
    %259 = vmatpush1.msra.mxu0 0.0
    %260 = vmatprep.subr.mxu0 0.0
    %261 = vmatpush1.msra.mxu0 0.0
    %262 = vmatprep.subr.mxu0 0.0
    %263 = vmatpush1.msra.mxu0 0.0
    %264 = vmatprep.subr.mxu0 0.0
    %265 = vmatpush1.msra.mxu0 0.0
    %266 = vmatprep.subr.mxu0 0.0
    %267 = vmatpush1.msra.mxu0 0.0
    %268 = vmatprep.subr.mxu0 0.0
    %269 = vmatpush1.msra.mxu0 0.0
    %270 = vmatprep.subr.mxu0 0.0
    %271 = vmatpush1.msra.mxu0 0.0
    %272 = vmatprep.subr.mxu0 0.0
    %273 = vmatpush1.msra.mxu0 0.0
    %274 = vmatprep.subr.mxu0 0.0
    %275 = vmatpush1.msra.mxu0 0.0
    %276 = vmatprep.subr.mxu0 0.0
    %277 = vmatpush1.msra.mxu0 0.0
    %278 = vmatprep.subr.mxu0 0.0
    %279 = vmatpush1.msra.mxu0 0.0
    %280 = vmatprep.subr.mxu0 0.0
    %281 = vmatpush1.msra.mxu0 0.0
    %282 = vmatprep.subr.mxu0 0.0
    %283 = vmatpush1.msra.mxu0 0.0
    %284 = vmatprep.subr.mxu0 0.0
    %285 = vmatpush1.msra.mxu0 0.0
    %286 = vmatprep.subr.mxu0 0.0
    %287 = vmatpush1.msra.mxu0 0.0
    %288 = vmatprep.subr.mxu0 0.0
    %289 = vmatpush1.msra.mxu0 0.0
    %290 = vmatprep.subr.mxu0 0.0
    %291 = vmatpush1.msra.mxu0 0.0
    %292 = vmatprep.subr.mxu0 0.0
    %293 = vmatpush1.msra.mxu0 0.0
    %294 = vmatprep.subr.mxu0 0.0
    %295 = vmatpush1.msra.mxu0 0.0
    %296 = vmatprep.subr.mxu0 0.0
    %297 = vmatpush1.msra.mxu0 0.0
    %298 = vmatprep.subr.mxu0 0.0
    %299 = vmatpush1.msra.mxu0 0.0
    %300 = vmatprep.subr.mxu0 0.0
    %301 = vmatpush1.msra.mxu0 0.0
    %302 = vmatprep.subr.mxu0 0.0
    %303 = vmatpush1.msra.mxu0 0.0
    %304 = vmatprep.subr.mxu0 0.0
    %305 = vmatpush1.msra.mxu0 0.0
    %306 = vmatprep.subr.mxu0 0.0
    %307 = vmatpush1.msra.mxu0 0.0
    %308 = vmatprep.subr.mxu0 0.0
    %309 = vmatpush1.msra.mxu0 0.0
    %310 = vmatprep.subr.mxu0 0.0
    %311 = vmatpush1.msra.mxu0 0.0
    %312 = vmatprep.mubr.f32.mxu0 0.0
    %313 = vmatmul.mubr.f32.gmra.mrb[0].mxu0 %v243
    %v314 = vpop.f32.mrb[0].mxu0
    %v315 = vadd.f32 %v240, %v314
    %v316 = vpop.f32.mrb[0].mxu0
    %317 = vmatprep.mubr.f32.mxu0 0.0
    %318 = vmatmul.mubr.f32.gmra.mrb[0].mxu0 %v246
    %v319 = vpop.f32.mrb[0].mxu0
    %v320 = vadd.f32 %v240, %v319
    %v321 = vpop.f32.mrb[0].mxu0
    %322 = vdwg.mxu0
    %v323 = vpack.c.bf16 %v228, %v223
    %v324 = vpack.c.bf16 %v320, %v315
    %326 = vrot.lane.b32.xlu0 %v323, 124
    %v327 = vpop.permute.xlu0 %326
    %328 = vrot.lane.b32.xlu0 %v323, 120
    %v329 = vpop.permute.xlu0 %328
    %330 = vrot.lane.b32.xlu0 %v323, 116
    %v331 = vpop.permute.xlu0 %330
    %332 = vrot.lane.b32.xlu0 %v323, 112
    %v333 = vpop.permute.xlu0 %332
    %334 = vrot.lane.b32.xlu0 %v323, 108
    %v335 = vpop.permute.xlu0 %334
    %336 = vrot.lane.b32.xlu0 %v323, 104
    %v337 = vpop.permute.xlu0 %336
    %338 = vrot.lane.b32.xlu0 %v323, 100
    %v339 = vpop.permute.xlu0 %338
    %v342 = vpack.i.b16 %v327, %v323
    %v344 = vshrl.u32 %v323, 16
    %v345 = vshrl.u32 %v327, 16
    %v346 = vpack.i.b16 %v345, %v344
    %v350 = vpack.i.b16 %v331, %v329
    %v352 = vshrl.u32 %v329, 16
    %v353 = vshrl.u32 %v331, 16
    %v354 = vpack.i.b16 %v353, %v352
    %v358 = vpack.i.b16 %v335, %v333
    %v360 = vshrl.u32 %v333, 16
    %v361 = vshrl.u32 %v335, 16
    %v362 = vpack.i.b16 %v361, %v360
    %v366 = vpack.i.b16 %v339, %v337
    %v368 = vshrl.u32 %v337, 16
    %v369 = vshrl.u32 %v339, 16
    %v370 = vpack.i.b16 %v369, %v368
    %v372 = vcombine.low %v342, %v358
    %v373 = vcombine.high %v342, %v358
    %v375 = vunpack.c.l.s4 1983009808
    %v376 = vunpack.c.0.s8 %v375
    %v377 = vlaneseq
    %v378 = vshrl.u32 %v377, 7
    %v379 = vsub.s32 %v376, %v378
    %v380 = vrot.slane %v372, %v379
    %v382 = vunpack.c.l.s4 1983009808
    %v383 = vunpack.c.0.s8 %v382
    %v384 = vlaneseq
    %v385 = vshrl.u32 %v384, 7
    %v386 = vsub.s32 %v383, %v385
    %v387 = vrot.slane %v373, %v386
    %v388 = vcombine.low %v350, %v366
    %v389 = vcombine.high %v350, %v366
    %v391 = vunpack.c.l.s4 1983009808
    %v392 = vunpack.c.0.s8 %v391
    %v393 = vlaneseq
    %v394 = vshrl.u32 %v393, 7
    %v395 = vsub.s32 %v392, %v394
    %v396 = vrot.slane %v388, %v395
    %v398 = vunpack.c.l.s4 1983009808
    %v399 = vunpack.c.0.s8 %v398
    %v400 = vlaneseq
    %v401 = vshrl.u32 %v400, 7
    %v402 = vsub.s32 %v399, %v401
    %v403 = vrot.slane %v389, %v402
    %v404 = vcombine.low %v380, %v396
    %v405 = vcombine.high %v380, %v396
    %v407 = vunpack.c.l.s4 1934713408
    %v408 = vunpack.c.0.s8 %v407
    %v409 = vlaneseq
    %v410 = vshrl.u32 %v409, 7
    %v411 = vsub.s32 %v408, %v410
    %v412 = vrot.slane %v404, %v411
    %v414 = vunpack.c.l.s4 1934713408
    %v415 = vunpack.c.0.s8 %v414
    %v416 = vlaneseq
    %v417 = vshrl.u32 %v416, 7
    %v418 = vsub.s32 %v415, %v417
    %v419 = vrot.slane %v405, %v418
    %v420 = vcombine.low %v387, %v403
    %v421 = vcombine.high %v387, %v403
    %v423 = vunpack.c.l.s4 1934713408
    %v424 = vunpack.c.0.s8 %v423
    %v425 = vlaneseq
    %v426 = vshrl.u32 %v425, 7
    %v427 = vsub.s32 %v424, %v426
    %v428 = vrot.slane %v420, %v427
    %v430 = vunpack.c.l.s4 1934713408
    %v431 = vunpack.c.0.s8 %v430
    %v432 = vlaneseq
    %v433 = vshrl.u32 %v432, 7
    %v434 = vsub.s32 %v431, %v433
    %v435 = vrot.slane %v421, %v434
    %v436 = vcombine.high %v412, 0
    %v437 = vcombine.high %v419, 0
    %v438 = vcombine.high %v428, 0
    %v439 = vcombine.high %v435, 0
    %v440 = vcombine.low %v346, %v362
    %v441 = vcombine.high %v346, %v362
    %v443 = vunpack.c.l.s4 1983009808
    %v444 = vunpack.c.0.s8 %v443
    %v445 = vlaneseq
    %v446 = vshrl.u32 %v445, 7
    %v447 = vsub.s32 %v444, %v446
    %v448 = vrot.slane %v440, %v447
    %v450 = vunpack.c.l.s4 1983009808
    %v451 = vunpack.c.0.s8 %v450
    %v452 = vlaneseq
    %v453 = vshrl.u32 %v452, 7
    %v454 = vsub.s32 %v451, %v453
    %v455 = vrot.slane %v441, %v454
    %v456 = vcombine.low %v354, %v370
    %v457 = vcombine.high %v354, %v370
    %v459 = vunpack.c.l.s4 1983009808
    %v460 = vunpack.c.0.s8 %v459
    %v461 = vlaneseq
    %v462 = vshrl.u32 %v461, 7
    %v463 = vsub.s32 %v460, %v462
    %v464 = vrot.slane %v456, %v463
    %v466 = vunpack.c.l.s4 1983009808
    %v467 = vunpack.c.0.s8 %v466
    %v468 = vlaneseq
    %v469 = vshrl.u32 %v468, 7
    %v470 = vsub.s32 %v467, %v469
    %v471 = vrot.slane %v457, %v470
    %v472 = vcombine.low %v448, %v464
    %v473 = vcombine.high %v448, %v464
    %v475 = vunpack.c.l.s4 1934713408
    %v476 = vunpack.c.0.s8 %v475
    %v477 = vlaneseq
    %v478 = vshrl.u32 %v477, 7
    %v479 = vsub.s32 %v476, %v478
    %v480 = vrot.slane %v472, %v479
    %v482 = vunpack.c.l.s4 1934713408
    %v483 = vunpack.c.0.s8 %v482
    %v484 = vlaneseq
    %v485 = vshrl.u32 %v484, 7
    %v486 = vsub.s32 %v483, %v485
    %v487 = vrot.slane %v473, %v486
    %v488 = vcombine.low %v455, %v471
    %v489 = vcombine.high %v455, %v471
    %v491 = vunpack.c.l.s4 1934713408
    %v492 = vunpack.c.0.s8 %v491
    %v493 = vlaneseq
    %v494 = vshrl.u32 %v493, 7
    %v495 = vsub.s32 %v492, %v494
    %v496 = vrot.slane %v488, %v495
    %v498 = vunpack.c.l.s4 1934713408
    %v499 = vunpack.c.0.s8 %v498
    %v500 = vlaneseq
    %v501 = vshrl.u32 %v500, 7
    %v502 = vsub.s32 %v499, %v501
    %v503 = vrot.slane %v489, %v502
    %v504 = vcombine.high %v480, 0
    %v505 = vcombine.high %v487, 0
    %v506 = vcombine.high %v496, 0
    %v507 = vcombine.high %v503, 0
    %v508 = vcombine.low %v412, %v419
    %v510 = vunpack.c.l.s4 1983009808
    %v511 = vunpack.c.0.s8 %v510
    %v512 = vlaneseq
    %v513 = vshrl.u32 %v512, 7
    %v514 = vsub.s32 %v511, %v513
    %v515 = vrot.slane %v508, %v514
    %v516 = vcombine.low %v436, %v437
    %v518 = vunpack.c.l.s4 1983009808
    %v519 = vunpack.c.0.s8 %v518
    %v520 = vlaneseq
    %v521 = vshrl.u32 %v520, 7
    %v522 = vsub.s32 %v519, %v521
    %v523 = vrot.slane %v516, %v522
    %v524 = vcombine.low %v428, %v435
    %v526 = vunpack.c.l.s4 1983009808
    %v527 = vunpack.c.0.s8 %v526
    %v528 = vlaneseq
    %v529 = vshrl.u32 %v528, 7
    %v530 = vsub.s32 %v527, %v529
    %v531 = vrot.slane %v524, %v530
    %v532 = vcombine.low %v438, %v439
    %v534 = vunpack.c.l.s4 1983009808
    %v535 = vunpack.c.0.s8 %v534
    %v536 = vlaneseq
    %v537 = vshrl.u32 %v536, 7
    %v538 = vsub.s32 %v535, %v537
    %v539 = vrot.slane %v532, %v538
    %v540 = vcombine.low %v515, %v523
    %v541 = vcombine.high %v515, %v523
    %v543 = vunpack.c.l.s4 1934713408
    %v544 = vunpack.c.0.s8 %v543
    %v545 = vlaneseq
    %v546 = vshrl.u32 %v545, 7
    %v547 = vsub.s32 %v544, %v546
    %v548 = vrot.slane %v540, %v547
    %v550 = vunpack.c.l.s4 1934713408
    %v551 = vunpack.c.0.s8 %v550
    %v552 = vlaneseq
    %v553 = vshrl.u32 %v552, 7
    %v554 = vsub.s32 %v551, %v553
    %v555 = vrot.slane %v541, %v554
    %v556 = vcombine.low %v531, %v539
    %v557 = vcombine.high %v531, %v539
    %v559 = vunpack.c.l.s4 1934713408
    %v560 = vunpack.c.0.s8 %v559
    %v561 = vlaneseq
    %v562 = vshrl.u32 %v561, 7
    %v563 = vsub.s32 %v560, %v562
    %v564 = vrot.slane %v556, %v563
    %v566 = vunpack.c.l.s4 1934713408
    %v567 = vunpack.c.0.s8 %v566
    %v568 = vlaneseq
    %v569 = vshrl.u32 %v568, 7
    %v570 = vsub.s32 %v567, %v569
    %v571 = vrot.slane %v557, %v570
    %v572 = vcombine.low %v548, %v564
    %v573 = vcombine.high %v548, %v564
    %v574 = vcombine.low %v555, %v571
    %v575 = vcombine.high %v555, %v571
    %v576 = vcombine.low %v480, %v487
    %v578 = vunpack.c.l.s4 1983009808
    %v579 = vunpack.c.0.s8 %v578
    %v580 = vlaneseq
    %v581 = vshrl.u32 %v580, 7
    %v582 = vsub.s32 %v579, %v581
    %v583 = vrot.slane %v576, %v582
    %v584 = vcombine.low %v504, %v505
    %v586 = vunpack.c.l.s4 1983009808
    %v587 = vunpack.c.0.s8 %v586
    %v588 = vlaneseq
    %v589 = vshrl.u32 %v588, 7
    %v590 = vsub.s32 %v587, %v589
    %v591 = vrot.slane %v584, %v590
    %v592 = vcombine.low %v496, %v503
    %v594 = vunpack.c.l.s4 1983009808
    %v595 = vunpack.c.0.s8 %v594
    %v596 = vlaneseq
    %v597 = vshrl.u32 %v596, 7
    %v598 = vsub.s32 %v595, %v597
    %v599 = vrot.slane %v592, %v598
    %v600 = vcombine.low %v506, %v507
    %v602 = vunpack.c.l.s4 1983009808
    %v603 = vunpack.c.0.s8 %v602
    %v604 = vlaneseq
    %v605 = vshrl.u32 %v604, 7
    %v606 = vsub.s32 %v603, %v605
    %v607 = vrot.slane %v600, %v606
    %v608 = vcombine.low %v583, %v591
    %v609 = vcombine.high %v583, %v591
    %v611 = vunpack.c.l.s4 1934713408
    %v612 = vunpack.c.0.s8 %v611
    %v613 = vlaneseq
    %v614 = vshrl.u32 %v613, 7
    %v615 = vsub.s32 %v612, %v614
    %v616 = vrot.slane %v608, %v615
    %v618 = vunpack.c.l.s4 1934713408
    %v619 = vunpack.c.0.s8 %v618
    %v620 = vlaneseq
    %v621 = vshrl.u32 %v620, 7
    %v622 = vsub.s32 %v619, %v621
    %v623 = vrot.slane %v609, %v622
    %v624 = vcombine.low %v599, %v607
    %v625 = vcombine.high %v599, %v607
    %v627 = vunpack.c.l.s4 1934713408
    %v628 = vunpack.c.0.s8 %v627
    %v629 = vlaneseq
    %v630 = vshrl.u32 %v629, 7
    %v631 = vsub.s32 %v628, %v630
    %v632 = vrot.slane %v624, %v631
    %v634 = vunpack.c.l.s4 1934713408
    %v635 = vunpack.c.0.s8 %v634
    %v636 = vlaneseq
    %v637 = vshrl.u32 %v636, 7
    %v638 = vsub.s32 %v635, %v637
    %v639 = vrot.slane %v625, %v638
    %v640 = vcombine.low %v616, %v632
    %v641 = vcombine.high %v616, %v632
    %v642 = vcombine.low %v623, %v639
    %v643 = vcombine.high %v623, %v639
    %v646 = vpack.i.b16 %v640, %v572
    %v647 = vshrl.u32 %v572, 16
    %v648 = vshrl.u32 %v640, 16
    %v649 = vpack.i.b16 %v648, %v647
    %v652 = vpack.i.b16 %v641, %v573
    %v653 = vshrl.u32 %v573, 16
    %v654 = vshrl.u32 %v641, 16
    %v655 = vpack.i.b16 %v654, %v653
    %v658 = vpack.i.b16 %v642, %v574
    %v659 = vshrl.u32 %v574, 16
    %v660 = vshrl.u32 %v642, 16
    %v661 = vpack.i.b16 %v660, %v659
    %v664 = vpack.i.b16 %v643, %v575
    %v665 = vshrl.u32 %v575, 16
    %v666 = vshrl.u32 %v643, 16
    %v667 = vpack.i.b16 %v666, %v665
    %v668 = vunpack.c.l.b16 %v646
    %v669 = vunpack.c.h.b16 %v646
    %v670 = vunpack.c.l.b16 %v649
    %v671 = vunpack.c.h.b16 %v649
    %v672 = vunpack.c.l.b16 %v652
    %v673 = vunpack.c.h.b16 %v652
    %v674 = vunpack.c.l.b16 %v655
    %v675 = vunpack.c.h.b16 %v655
    %v676 = vunpack.c.l.b16 %v658
    %v677 = vunpack.c.h.b16 %v658
    %v678 = vunpack.c.l.b16 %v661
    %v679 = vunpack.c.h.b16 %v661
    %v680 = vunpack.c.l.b16 %v664
    %v681 = vunpack.c.h.b16 %v664
    %v682 = vunpack.c.l.b16 %v667
    %v683 = vunpack.c.h.b16 %v667
    %v684 = vpack.c.b16 %v668, %v668
    %v685 = vpack.c.b16 %v669, %v669
    %v686 = vpack.c.b16 %v670, %v670
    %v687 = vpack.c.b16 %v671, %v671
    %v688 = vpack.c.b16 %v672, %v672
    %v689 = vpack.c.b16 %v673, %v673
    %v690 = vpack.c.b16 %v674, %v674
    %v691 = vpack.c.b16 %v675, %v675
    %v692 = vpack.c.b16 %v676, %v676
    %v693 = vpack.c.b16 %v677, %v677
    %v694 = vpack.c.b16 %v678, %v678
    %v695 = vpack.c.b16 %v679, %v679
    %v696 = vpack.c.b16 %v680, %v680
    %v697 = vpack.c.b16 %v681, %v681
    %v698 = vpack.c.b16 %v682, %v682
    %v699 = vpack.c.b16 %v683, %v683
    %701 = vrot.lane.b32.xlu0 %v324, 124
    %v702 = vpop.permute.xlu0 %701
    %703 = vrot.lane.b32.xlu0 %v324, 120
    %v704 = vpop.permute.xlu0 %703
    %705 = vrot.lane.b32.xlu0 %v324, 116
    %v706 = vpop.permute.xlu0 %705
    %707 = vrot.lane.b32.xlu0 %v324, 112
    %v708 = vpop.permute.xlu0 %707
    %709 = vrot.lane.b32.xlu0 %v324, 108
    %v710 = vpop.permute.xlu0 %709
    %711 = vrot.lane.b32.xlu0 %v324, 104
    %v712 = vpop.permute.xlu0 %711
    %713 = vrot.lane.b32.xlu0 %v324, 100
    %v714 = vpop.permute.xlu0 %713
    %v717 = vpack.i.b16 %v702, %v324
    %v719 = vshrl.u32 %v324, 16
    %v720 = vshrl.u32 %v702, 16
    %v721 = vpack.i.b16 %v720, %v719
    %v725 = vpack.i.b16 %v706, %v704
    %v727 = vshrl.u32 %v704, 16
    %v728 = vshrl.u32 %v706, 16
    %v729 = vpack.i.b16 %v728, %v727
    %v733 = vpack.i.b16 %v710, %v708
    %v735 = vshrl.u32 %v708, 16
    %v736 = vshrl.u32 %v710, 16
    %v737 = vpack.i.b16 %v736, %v735
    %v741 = vpack.i.b16 %v714, %v712
    %v743 = vshrl.u32 %v712, 16
    %v744 = vshrl.u32 %v714, 16
    %v745 = vpack.i.b16 %v744, %v743
    %v747 = vcombine.low %v717, %v733
    %v748 = vcombine.high %v717, %v733
    %v750 = vunpack.c.l.s4 1983009808
    %v751 = vunpack.c.0.s8 %v750
    %v752 = vlaneseq
    %v753 = vshrl.u32 %v752, 7
    %v754 = vsub.s32 %v751, %v753
    %v755 = vrot.slane %v747, %v754
    %v757 = vunpack.c.l.s4 1983009808
    %v758 = vunpack.c.0.s8 %v757
    %v759 = vlaneseq
    %v760 = vshrl.u32 %v759, 7
    %v761 = vsub.s32 %v758, %v760
    %v762 = vrot.slane %v748, %v761
    %v763 = vcombine.low %v725, %v741
    %v764 = vcombine.high %v725, %v741
    %v766 = vunpack.c.l.s4 1983009808
    %v767 = vunpack.c.0.s8 %v766
    %v768 = vlaneseq
    %v769 = vshrl.u32 %v768, 7
    %v770 = vsub.s32 %v767, %v769
    %v771 = vrot.slane %v763, %v770
    %v773 = vunpack.c.l.s4 1983009808
    %v774 = vunpack.c.0.s8 %v773
    %v775 = vlaneseq
    %v776 = vshrl.u32 %v775, 7
    %v777 = vsub.s32 %v774, %v776
    %v778 = vrot.slane %v764, %v777
    %v779 = vcombine.low %v755, %v771
    %v780 = vcombine.high %v755, %v771
    %v782 = vunpack.c.l.s4 1934713408
    %v783 = vunpack.c.0.s8 %v782
    %v784 = vlaneseq
    %v785 = vshrl.u32 %v784, 7
    %v786 = vsub.s32 %v783, %v785
    %v787 = vrot.slane %v779, %v786
    %v789 = vunpack.c.l.s4 1934713408
    %v790 = vunpack.c.0.s8 %v789
    %v791 = vlaneseq
    %v792 = vshrl.u32 %v791, 7
    %v793 = vsub.s32 %v790, %v792
    %v794 = vrot.slane %v780, %v793
    %v795 = vcombine.low %v762, %v778
    %v796 = vcombine.high %v762, %v778
    %v798 = vunpack.c.l.s4 1934713408
    %v799 = vunpack.c.0.s8 %v798
    %v800 = vlaneseq
    %v801 = vshrl.u32 %v800, 7
    %v802 = vsub.s32 %v799, %v801
    %v803 = vrot.slane %v795, %v802
    %v805 = vunpack.c.l.s4 1934713408
    %v806 = vunpack.c.0.s8 %v805
    %v807 = vlaneseq
    %v808 = vshrl.u32 %v807, 7
    %v809 = vsub.s32 %v806, %v808
    %v810 = vrot.slane %v796, %v809
    %v811 = vcombine.high %v787, 0
    %v812 = vcombine.high %v794, 0
    %v813 = vcombine.high %v803, 0
    %v814 = vcombine.high %v810, 0
    %v815 = vcombine.low %v721, %v737
    %v816 = vcombine.high %v721, %v737
    %v818 = vunpack.c.l.s4 1983009808
    %v819 = vunpack.c.0.s8 %v818
    %v820 = vlaneseq
    %v821 = vshrl.u32 %v820, 7
    %v822 = vsub.s32 %v819, %v821
    %v823 = vrot.slane %v815, %v822
    %v825 = vunpack.c.l.s4 1983009808
    %v826 = vunpack.c.0.s8 %v825
    %v827 = vlaneseq
    %v828 = vshrl.u32 %v827, 7
    %v829 = vsub.s32 %v826, %v828
    %v830 = vrot.slane %v816, %v829
    %v831 = vcombine.low %v729, %v745
    %v832 = vcombine.high %v729, %v745
    %v834 = vunpack.c.l.s4 1983009808
    %v835 = vunpack.c.0.s8 %v834
    %v836 = vlaneseq
    %v837 = vshrl.u32 %v836, 7
    %v838 = vsub.s32 %v835, %v837
    %v839 = vrot.slane %v831, %v838
    %v841 = vunpack.c.l.s4 1983009808
    %v842 = vunpack.c.0.s8 %v841
    %v843 = vlaneseq
    %v844 = vshrl.u32 %v843, 7
    %v845 = vsub.s32 %v842, %v844
    %v846 = vrot.slane %v832, %v845
    %v847 = vcombine.low %v823, %v839
    %v848 = vcombine.high %v823, %v839
    %v850 = vunpack.c.l.s4 1934713408
    %v851 = vunpack.c.0.s8 %v850
    %v852 = vlaneseq
    %v853 = vshrl.u32 %v852, 7
    %v854 = vsub.s32 %v851, %v853
    %v855 = vrot.slane %v847, %v854
    %v857 = vunpack.c.l.s4 1934713408
    %v858 = vunpack.c.0.s8 %v857
    %v859 = vlaneseq
    %v860 = vshrl.u32 %v859, 7
    %v861 = vsub.s32 %v858, %v860
    %v862 = vrot.slane %v848, %v861
    %v863 = vcombine.low %v830, %v846
    %v864 = vcombine.high %v830, %v846
    %v866 = vunpack.c.l.s4 1934713408
    %v867 = vunpack.c.0.s8 %v866
    %v868 = vlaneseq
    %v869 = vshrl.u32 %v868, 7
    %v870 = vsub.s32 %v867, %v869
    %v871 = vrot.slane %v863, %v870
    %v873 = vunpack.c.l.s4 1934713408
    %v874 = vunpack.c.0.s8 %v873
    %v875 = vlaneseq
    %v876 = vshrl.u32 %v875, 7
    %v877 = vsub.s32 %v874, %v876
    %v878 = vrot.slane %v864, %v877
    %v879 = vcombine.high %v855, 0
    %v880 = vcombine.high %v862, 0
    %v881 = vcombine.high %v871, 0
    %v882 = vcombine.high %v878, 0
    %v883 = vcombine.low %v787, %v794
    %v885 = vunpack.c.l.s4 1983009808
    %v886 = vunpack.c.0.s8 %v885
    %v887 = vlaneseq
    %v888 = vshrl.u32 %v887, 7
    %v889 = vsub.s32 %v886, %v888
    %v890 = vrot.slane %v883, %v889
    %v891 = vcombine.low %v811, %v812
    %v893 = vunpack.c.l.s4 1983009808
    %v894 = vunpack.c.0.s8 %v893
    %v895 = vlaneseq
    %v896 = vshrl.u32 %v895, 7
    %v897 = vsub.s32 %v894, %v896
    %v898 = vrot.slane %v891, %v897
    %v899 = vcombine.low %v803, %v810
    %v901 = vunpack.c.l.s4 1983009808
    %v902 = vunpack.c.0.s8 %v901
    %v903 = vlaneseq
    %v904 = vshrl.u32 %v903, 7
    %v905 = vsub.s32 %v902, %v904
    %v906 = vrot.slane %v899, %v905
    %v907 = vcombine.low %v813, %v814
    %v909 = vunpack.c.l.s4 1983009808
    %v910 = vunpack.c.0.s8 %v909
    %v911 = vlaneseq
    %v912 = vshrl.u32 %v911, 7
    %v913 = vsub.s32 %v910, %v912
    %v914 = vrot.slane %v907, %v913
    %v915 = vcombine.low %v890, %v898
    %v916 = vcombine.high %v890, %v898
    %v918 = vunpack.c.l.s4 1934713408
    %v919 = vunpack.c.0.s8 %v918
    %v920 = vlaneseq
    %v921 = vshrl.u32 %v920, 7
    %v922 = vsub.s32 %v919, %v921
    %v923 = vrot.slane %v915, %v922
    %v925 = vunpack.c.l.s4 1934713408
    %v926 = vunpack.c.0.s8 %v925
    %v927 = vlaneseq
    %v928 = vshrl.u32 %v927, 7
    %v929 = vsub.s32 %v926, %v928
    %v930 = vrot.slane %v916, %v929
    %v931 = vcombine.low %v906, %v914
    %v932 = vcombine.high %v906, %v914
    %v934 = vunpack.c.l.s4 1934713408
    %v935 = vunpack.c.0.s8 %v934
    %v936 = vlaneseq
    %v937 = vshrl.u32 %v936, 7
    %v938 = vsub.s32 %v935, %v937
    %v939 = vrot.slane %v931, %v938
    %v941 = vunpack.c.l.s4 1934713408
    %v942 = vunpack.c.0.s8 %v941
    %v943 = vlaneseq
    %v944 = vshrl.u32 %v943, 7
    %v945 = vsub.s32 %v942, %v944
    %v946 = vrot.slane %v932, %v945
    %v947 = vcombine.low %v923, %v939
    %v948 = vcombine.high %v923, %v939
    %v949 = vcombine.low %v930, %v946
    %v950 = vcombine.high %v930, %v946
    %v951 = vcombine.low %v855, %v862
    %v953 = vunpack.c.l.s4 1983009808
    %v954 = vunpack.c.0.s8 %v953
    %v955 = vlaneseq
    %v956 = vshrl.u32 %v955, 7
    %v957 = vsub.s32 %v954, %v956
    %v958 = vrot.slane %v951, %v957
    %v959 = vcombine.low %v879, %v880
    %v961 = vunpack.c.l.s4 1983009808
    %v962 = vunpack.c.0.s8 %v961
    %v963 = vlaneseq
    %v964 = vshrl.u32 %v963, 7
    %v965 = vsub.s32 %v962, %v964
    %v966 = vrot.slane %v959, %v965
    %v967 = vcombine.low %v871, %v878
    %v969 = vunpack.c.l.s4 1983009808
    %v970 = vunpack.c.0.s8 %v969
    %v971 = vlaneseq
    %v972 = vshrl.u32 %v971, 7
    %v973 = vsub.s32 %v970, %v972
    %v974 = vrot.slane %v967, %v973
    %v975 = vcombine.low %v881, %v882
    %v977 = vunpack.c.l.s4 1983009808
    %v978 = vunpack.c.0.s8 %v977
    %v979 = vlaneseq
    %v980 = vshrl.u32 %v979, 7
    %v981 = vsub.s32 %v978, %v980
    %v982 = vrot.slane %v975, %v981
    %v983 = vcombine.low %v958, %v966
    %v984 = vcombine.high %v958, %v966
    %v986 = vunpack.c.l.s4 1934713408
    %v987 = vunpack.c.0.s8 %v986
    %v988 = vlaneseq
    %v989 = vshrl.u32 %v988, 7
    %v990 = vsub.s32 %v987, %v989
    %v991 = vrot.slane %v983, %v990
    %v993 = vunpack.c.l.s4 1934713408
    %v994 = vunpack.c.0.s8 %v993
    %v995 = vlaneseq
    %v996 = vshrl.u32 %v995, 7
    %v997 = vsub.s32 %v994, %v996
    %v998 = vrot.slane %v984, %v997
    %v999 = vcombine.low %v974, %v982
    %v1000 = vcombine.high %v974, %v982
    %v1002 = vunpack.c.l.s4 1934713408
    %v1003 = vunpack.c.0.s8 %v1002
    %v1004 = vlaneseq
    %v1005 = vshrl.u32 %v1004, 7
    %v1006 = vsub.s32 %v1003, %v1005
    %v1007 = vrot.slane %v999, %v1006
    %v1009 = vunpack.c.l.s4 1934713408
    %v1010 = vunpack.c.0.s8 %v1009
    %v1011 = vlaneseq
    %v1012 = vshrl.u32 %v1011, 7
    %v1013 = vsub.s32 %v1010, %v1012
    %v1014 = vrot.slane %v1000, %v1013
    %v1015 = vcombine.low %v991, %v1007
    %v1016 = vcombine.high %v991, %v1007
    %v1017 = vcombine.low %v998, %v1014
    %v1018 = vcombine.high %v998, %v1014
    %v1021 = vpack.i.b16 %v1015, %v947
    %v1022 = vshrl.u32 %v947, 16
    %v1023 = vshrl.u32 %v1015, 16
    %v1024 = vpack.i.b16 %v1023, %v1022
    %v1027 = vpack.i.b16 %v1016, %v948
    %v1028 = vshrl.u32 %v948, 16
    %v1029 = vshrl.u32 %v1016, 16
    %v1030 = vpack.i.b16 %v1029, %v1028
    %v1033 = vpack.i.b16 %v1017, %v949
    %v1034 = vshrl.u32 %v949, 16
    %v1035 = vshrl.u32 %v1017, 16
    %v1036 = vpack.i.b16 %v1035, %v1034
    %v1039 = vpack.i.b16 %v1018, %v950
    %v1040 = vshrl.u32 %v950, 16
    %v1041 = vshrl.u32 %v1018, 16
    %v1042 = vpack.i.b16 %v1041, %v1040
    %v1043 = vunpack.c.l.b16 %v1021
    %v1044 = vunpack.c.h.b16 %v1021
    %v1045 = vunpack.c.l.b16 %v1024
    %v1046 = vunpack.c.h.b16 %v1024
    %v1047 = vunpack.c.l.b16 %v1027
    %v1048 = vunpack.c.h.b16 %v1027
    %v1049 = vunpack.c.l.b16 %v1030
    %v1050 = vunpack.c.h.b16 %v1030
    %v1051 = vunpack.c.l.b16 %v1033
    %v1052 = vunpack.c.h.b16 %v1033
    %v1053 = vunpack.c.l.b16 %v1036
    %v1054 = vunpack.c.h.b16 %v1036
    %v1055 = vunpack.c.l.b16 %v1039
    %v1056 = vunpack.c.h.b16 %v1039
    %v1057 = vunpack.c.l.b16 %v1042
    %v1058 = vunpack.c.h.b16 %v1042
    %v1059 = vpack.c.b16 %v1043, %v1043
    %v1060 = vpack.c.b16 %v1044, %v1044
    %v1061 = vpack.c.b16 %v1045, %v1045
    %v1062 = vpack.c.b16 %v1046, %v1046
    %v1063 = vpack.c.b16 %v1047, %v1047
    %v1064 = vpack.c.b16 %v1048, %v1048
    %v1065 = vpack.c.b16 %v1049, %v1049
    %v1066 = vpack.c.b16 %v1050, %v1050
    %v1067 = vpack.c.b16 %v1051, %v1051
    %v1068 = vpack.c.b16 %v1052, %v1052
    %v1069 = vpack.c.b16 %v1053, %v1053
    %v1070 = vpack.c.b16 %v1054, %v1054
    %v1071 = vpack.c.b16 %v1055, %v1055
    %v1072 = vpack.c.b16 %v1056, %v1056
    %v1073 = vpack.c.b16 %v1057, %v1057
    %v1074 = vpack.c.b16 %v1058, %v1058
    %1075 = vrot.lane.b32.xlu0 %v324, 96
    %v1076 = vpop.permute.xlu0 %1075
    %1077 = vrot.lane.b32.xlu0 %v702, 96
    %v1078 = vpop.permute.xlu0 %1077
    %1079 = vrot.lane.b32.xlu0 %v704, 96
    %v1080 = vpop.permute.xlu0 %1079
    %1081 = vrot.lane.b32.xlu0 %v706, 96
    %v1082 = vpop.permute.xlu0 %1081
    %1083 = vrot.lane.b32.xlu0 %v708, 96
    %v1084 = vpop.permute.xlu0 %1083
    %1085 = vrot.lane.b32.xlu0 %v710, 96
    %v1086 = vpop.permute.xlu0 %1085
    %1087 = vrot.lane.b32.xlu0 %v712, 96
    %v1088 = vpop.permute.xlu0 %1087
    %1089 = vrot.lane.b32.xlu0 %v714, 96
    %v1090 = vpop.permute.xlu0 %1089
    %v1093 = vpack.i.b16 %v1078, %v1076
    %v1095 = vshrl.u32 %v1076, 16
    %v1096 = vshrl.u32 %v1078, 16
    %v1097 = vpack.i.b16 %v1096, %v1095
    %v1101 = vpack.i.b16 %v1082, %v1080
    %v1103 = vshrl.u32 %v1080, 16
    %v1104 = vshrl.u32 %v1082, 16
    %v1105 = vpack.i.b16 %v1104, %v1103
    %v1109 = vpack.i.b16 %v1086, %v1084
    %v1111 = vshrl.u32 %v1084, 16
    %v1112 = vshrl.u32 %v1086, 16
    %v1113 = vpack.i.b16 %v1112, %v1111
    %v1117 = vpack.i.b16 %v1090, %v1088
    %v1119 = vshrl.u32 %v1088, 16
    %v1120 = vshrl.u32 %v1090, 16
    %v1121 = vpack.i.b16 %v1120, %v1119
    %v1123 = vcombine.low %v1093, %v1109
    %v1124 = vcombine.high %v1093, %v1109
    %v1126 = vunpack.c.l.s4 1983009808
    %v1127 = vunpack.c.0.s8 %v1126
    %v1128 = vlaneseq
    %v1129 = vshrl.u32 %v1128, 7
    %v1130 = vsub.s32 %v1127, %v1129
    %v1131 = vrot.slane %v1123, %v1130
    %v1133 = vunpack.c.l.s4 1983009808
    %v1134 = vunpack.c.0.s8 %v1133
    %v1135 = vlaneseq
    %v1136 = vshrl.u32 %v1135, 7
    %v1137 = vsub.s32 %v1134, %v1136
    %v1138 = vrot.slane %v1124, %v1137
    %v1139 = vcombine.low %v1101, %v1117
    %v1140 = vcombine.high %v1101, %v1117
    %v1142 = vunpack.c.l.s4 1983009808
    %v1143 = vunpack.c.0.s8 %v1142
    %v1144 = vlaneseq
    %v1145 = vshrl.u32 %v1144, 7
    %v1146 = vsub.s32 %v1143, %v1145
    %v1147 = vrot.slane %v1139, %v1146
    %v1149 = vunpack.c.l.s4 1983009808
    %v1150 = vunpack.c.0.s8 %v1149
    %v1151 = vlaneseq
    %v1152 = vshrl.u32 %v1151, 7
    %v1153 = vsub.s32 %v1150, %v1152
    %v1154 = vrot.slane %v1140, %v1153
    %v1155 = vcombine.low %v1131, %v1147
    %v1156 = vcombine.high %v1131, %v1147
    %v1158 = vunpack.c.l.s4 1934713408
    %v1159 = vunpack.c.0.s8 %v1158
    %v1160 = vlaneseq
    %v1161 = vshrl.u32 %v1160, 7
    %v1162 = vsub.s32 %v1159, %v1161
    %v1163 = vrot.slane %v1155, %v1162
    %v1165 = vunpack.c.l.s4 1934713408
    %v1166 = vunpack.c.0.s8 %v1165
    %v1167 = vlaneseq
    %v1168 = vshrl.u32 %v1167, 7
    %v1169 = vsub.s32 %v1166, %v1168
    %v1170 = vrot.slane %v1156, %v1169
    %v1171 = vcombine.low %v1138, %v1154
    %v1172 = vcombine.high %v1138, %v1154
    %v1174 = vunpack.c.l.s4 1934713408
    %v1175 = vunpack.c.0.s8 %v1174
    %v1176 = vlaneseq
    %v1177 = vshrl.u32 %v1176, 7
    %v1178 = vsub.s32 %v1175, %v1177
    %v1179 = vrot.slane %v1171, %v1178
    %v1181 = vunpack.c.l.s4 1934713408
    %v1182 = vunpack.c.0.s8 %v1181
    %v1183 = vlaneseq
    %v1184 = vshrl.u32 %v1183, 7
    %v1185 = vsub.s32 %v1182, %v1184
    %v1186 = vrot.slane %v1172, %v1185
    %v1187 = vcombine.high %v1163, 0
    %v1188 = vcombine.high %v1170, 0
    %v1189 = vcombine.high %v1179, 0
    %v1190 = vcombine.high %v1186, 0
    %v1191 = vcombine.low %v1097, %v1113
    %v1192 = vcombine.high %v1097, %v1113
    %v1194 = vunpack.c.l.s4 1983009808
    %v1195 = vunpack.c.0.s8 %v1194
    %v1196 = vlaneseq
    %v1197 = vshrl.u32 %v1196, 7
    %v1198 = vsub.s32 %v1195, %v1197
    %v1199 = vrot.slane %v1191, %v1198
    %v1201 = vunpack.c.l.s4 1983009808
    %v1202 = vunpack.c.0.s8 %v1201
    %v1203 = vlaneseq
    %v1204 = vshrl.u32 %v1203, 7
    %v1205 = vsub.s32 %v1202, %v1204
    %v1206 = vrot.slane %v1192, %v1205
    %v1207 = vcombine.low %v1105, %v1121
    %v1208 = vcombine.high %v1105, %v1121
    %v1210 = vunpack.c.l.s4 1983009808
    %v1211 = vunpack.c.0.s8 %v1210
    %v1212 = vlaneseq
    %v1213 = vshrl.u32 %v1212, 7
    %v1214 = vsub.s32 %v1211, %v1213
    %v1215 = vrot.slane %v1207, %v1214
    %v1217 = vunpack.c.l.s4 1983009808
    %v1218 = vunpack.c.0.s8 %v1217
    %v1219 = vlaneseq
    %v1220 = vshrl.u32 %v1219, 7
    %v1221 = vsub.s32 %v1218, %v1220
    %v1222 = vrot.slane %v1208, %v1221
    %v1223 = vcombine.low %v1199, %v1215
    %v1224 = vcombine.high %v1199, %v1215
    %v1226 = vunpack.c.l.s4 1934713408
    %v1227 = vunpack.c.0.s8 %v1226
    %v1228 = vlaneseq
    %v1229 = vshrl.u32 %v1228, 7
    %v1230 = vsub.s32 %v1227, %v1229
    %v1231 = vrot.slane %v1223, %v1230
    %v1233 = vunpack.c.l.s4 1934713408
    %v1234 = vunpack.c.0.s8 %v1233
    %v1235 = vlaneseq
    %v1236 = vshrl.u32 %v1235, 7
    %v1237 = vsub.s32 %v1234, %v1236
    %v1238 = vrot.slane %v1224, %v1237
    %v1239 = vcombine.low %v1206, %v1222
    %v1240 = vcombine.high %v1206, %v1222
    %v1242 = vunpack.c.l.s4 1934713408
    %v1243 = vunpack.c.0.s8 %v1242
    %v1244 = vlaneseq
    %v1245 = vshrl.u32 %v1244, 7
    %v1246 = vsub.s32 %v1243, %v1245
    %v1247 = vrot.slane %v1239, %v1246
    %v1249 = vunpack.c.l.s4 1934713408
    %v1250 = vunpack.c.0.s8 %v1249
    %v1251 = vlaneseq
    %v1252 = vshrl.u32 %v1251, 7
    %v1253 = vsub.s32 %v1250, %v1252
    %v1254 = vrot.slane %v1240, %v1253
    %v1255 = vcombine.high %v1231, 0
    %v1256 = vcombine.high %v1238, 0
    %v1257 = vcombine.high %v1247, 0
    %v1258 = vcombine.high %v1254, 0
    %v1259 = vcombine.low %v1163, %v1170
    %v1261 = vunpack.c.l.s4 1983009808
    %v1262 = vunpack.c.0.s8 %v1261
    %v1263 = vlaneseq
    %v1264 = vshrl.u32 %v1263, 7
    %v1265 = vsub.s32 %v1262, %v1264
    %v1266 = vrot.slane %v1259, %v1265
    %v1267 = vcombine.low %v1187, %v1188
    %v1269 = vunpack.c.l.s4 1983009808
    %v1270 = vunpack.c.0.s8 %v1269
    %v1271 = vlaneseq
    %v1272 = vshrl.u32 %v1271, 7
    %v1273 = vsub.s32 %v1270, %v1272
    %v1274 = vrot.slane %v1267, %v1273
    %v1275 = vcombine.low %v1179, %v1186
    %v1277 = vunpack.c.l.s4 1983009808
    %v1278 = vunpack.c.0.s8 %v1277
    %v1279 = vlaneseq
    %v1280 = vshrl.u32 %v1279, 7
    %v1281 = vsub.s32 %v1278, %v1280
    %v1282 = vrot.slane %v1275, %v1281
    %v1283 = vcombine.low %v1189, %v1190
    %v1285 = vunpack.c.l.s4 1983009808
    %v1286 = vunpack.c.0.s8 %v1285
    %v1287 = vlaneseq
    %v1288 = vshrl.u32 %v1287, 7
    %v1289 = vsub.s32 %v1286, %v1288
    %v1290 = vrot.slane %v1283, %v1289
    %v1291 = vcombine.low %v1266, %v1274
    %v1292 = vcombine.high %v1266, %v1274
    %v1294 = vunpack.c.l.s4 1934713408
    %v1295 = vunpack.c.0.s8 %v1294
    %v1296 = vlaneseq
    %v1297 = vshrl.u32 %v1296, 7
    %v1298 = vsub.s32 %v1295, %v1297
    %v1299 = vrot.slane %v1291, %v1298
    %v1301 = vunpack.c.l.s4 1934713408
    %v1302 = vunpack.c.0.s8 %v1301
    %v1303 = vlaneseq
    %v1304 = vshrl.u32 %v1303, 7
    %v1305 = vsub.s32 %v1302, %v1304
    %v1306 = vrot.slane %v1292, %v1305
    %v1307 = vcombine.low %v1282, %v1290
    %v1308 = vcombine.high %v1282, %v1290
    %v1310 = vunpack.c.l.s4 1934713408
    %v1311 = vunpack.c.0.s8 %v1310
    %v1312 = vlaneseq
    %v1313 = vshrl.u32 %v1312, 7
    %v1314 = vsub.s32 %v1311, %v1313
    %v1315 = vrot.slane %v1307, %v1314
    %v1317 = vunpack.c.l.s4 1934713408
    %v1318 = vunpack.c.0.s8 %v1317
    %v1319 = vlaneseq
    %v1320 = vshrl.u32 %v1319, 7
    %v1321 = vsub.s32 %v1318, %v1320
    %v1322 = vrot.slane %v1308, %v1321
    %v1323 = vcombine.low %v1299, %v1315
    %v1324 = vcombine.high %v1299, %v1315
    %v1325 = vcombine.low %v1306, %v1322
    %v1326 = vcombine.high %v1306, %v1322
    %v1327 = vcombine.low %v1231, %v1238
    %v1329 = vunpack.c.l.s4 1983009808
    %v1330 = vunpack.c.0.s8 %v1329
    %v1331 = vlaneseq
    %v1332 = vshrl.u32 %v1331, 7
    %v1333 = vsub.s32 %v1330, %v1332
    %v1334 = vrot.slane %v1327, %v1333
    %v1335 = vcombine.low %v1255, %v1256
    %v1337 = vunpack.c.l.s4 1983009808
    %v1338 = vunpack.c.0.s8 %v1337
    %v1339 = vlaneseq
    %v1340 = vshrl.u32 %v1339, 7
    %v1341 = vsub.s32 %v1338, %v1340
    %v1342 = vrot.slane %v1335, %v1341
    %v1343 = vcombine.low %v1247, %v1254
    %v1345 = vunpack.c.l.s4 1983009808
    %v1346 = vunpack.c.0.s8 %v1345
    %v1347 = vlaneseq
    %v1348 = vshrl.u32 %v1347, 7
    %v1349 = vsub.s32 %v1346, %v1348
    %v1350 = vrot.slane %v1343, %v1349
    %v1351 = vcombine.low %v1257, %v1258
    %v1353 = vunpack.c.l.s4 1983009808
    %v1354 = vunpack.c.0.s8 %v1353
    %v1355 = vlaneseq
    %v1356 = vshrl.u32 %v1355, 7
    %v1357 = vsub.s32 %v1354, %v1356
    %v1358 = vrot.slane %v1351, %v1357
    %v1359 = vcombine.low %v1334, %v1342
    %v1360 = vcombine.high %v1334, %v1342
    %v1362 = vunpack.c.l.s4 1934713408
    %v1363 = vunpack.c.0.s8 %v1362
    %v1364 = vlaneseq
    %v1365 = vshrl.u32 %v1364, 7
    %v1366 = vsub.s32 %v1363, %v1365
    %v1367 = vrot.slane %v1359, %v1366
    %v1369 = vunpack.c.l.s4 1934713408
    %v1370 = vunpack.c.0.s8 %v1369
    %v1371 = vlaneseq
    %v1372 = vshrl.u32 %v1371, 7
    %v1373 = vsub.s32 %v1370, %v1372
    %v1374 = vrot.slane %v1360, %v1373
    %v1375 = vcombine.low %v1350, %v1358
    %v1376 = vcombine.high %v1350, %v1358
    %v1378 = vunpack.c.l.s4 1934713408
    %v1379 = vunpack.c.0.s8 %v1378
    %v1380 = vlaneseq
    %v1381 = vshrl.u32 %v1380, 7
    %v1382 = vsub.s32 %v1379, %v1381
    %v1383 = vrot.slane %v1375, %v1382
    %v1385 = vunpack.c.l.s4 1934713408
    %v1386 = vunpack.c.0.s8 %v1385
    %v1387 = vlaneseq
    %v1388 = vshrl.u32 %v1387, 7
    %v1389 = vsub.s32 %v1386, %v1388
    %v1390 = vrot.slane %v1376, %v1389
    %v1391 = vcombine.low %v1367, %v1383
    %v1392 = vcombine.high %v1367, %v1383
    %v1393 = vcombine.low %v1374, %v1390
    %v1394 = vcombine.high %v1374, %v1390
    %v1397 = vpack.i.b16 %v1391, %v1323
    %v1398 = vshrl.u32 %v1323, 16
    %v1399 = vshrl.u32 %v1391, 16
    %v1400 = vpack.i.b16 %v1399, %v1398
    %v1403 = vpack.i.b16 %v1392, %v1324
    %v1404 = vshrl.u32 %v1324, 16
    %v1405 = vshrl.u32 %v1392, 16
    %v1406 = vpack.i.b16 %v1405, %v1404
    %v1409 = vpack.i.b16 %v1393, %v1325
    %v1410 = vshrl.u32 %v1325, 16
    %v1411 = vshrl.u32 %v1393, 16
    %v1412 = vpack.i.b16 %v1411, %v1410
    %v1415 = vpack.i.b16 %v1394, %v1326
    %v1416 = vshrl.u32 %v1326, 16
    %v1417 = vshrl.u32 %v1394, 16
    %v1418 = vpack.i.b16 %v1417, %v1416
    %v1419 = vunpack.c.l.b16 %v1397
    %v1420 = vunpack.c.h.b16 %v1397
    %v1421 = vunpack.c.l.b16 %v1400
    %v1422 = vunpack.c.h.b16 %v1400
    %v1423 = vunpack.c.l.b16 %v1403
    %v1424 = vunpack.c.h.b16 %v1403
    %v1425 = vunpack.c.l.b16 %v1406
    %v1426 = vunpack.c.h.b16 %v1406
    %v1427 = vunpack.c.l.b16 %v1409
    %v1428 = vunpack.c.h.b16 %v1409
    %v1429 = vunpack.c.l.b16 %v1412
    %v1430 = vunpack.c.h.b16 %v1412
    %v1431 = vunpack.c.l.b16 %v1415
    %v1432 = vunpack.c.h.b16 %v1415
    %v1433 = vunpack.c.l.b16 %v1418
    %v1434 = vunpack.c.h.b16 %v1418
    %v1435 = vpack.c.b16 %v1419, %v1419
    %v1436 = vpack.c.b16 %v1420, %v1420
    %v1437 = vpack.c.b16 %v1421, %v1421
    %v1438 = vpack.c.b16 %v1422, %v1422
    %v1439 = vpack.c.b16 %v1423, %v1423
    %v1440 = vpack.c.b16 %v1424, %v1424
    %v1441 = vpack.c.b16 %v1425, %v1425
    %v1442 = vpack.c.b16 %v1426, %v1426
    %v1443 = vpack.c.b16 %v1427, %v1427
    %v1444 = vpack.c.b16 %v1428, %v1428
    %v1445 = vpack.c.b16 %v1429, %v1429
    %v1446 = vpack.c.b16 %v1430, %v1430
    %v1447 = vpack.c.b16 %v1431, %v1431
    %v1448 = vpack.c.b16 %v1432, %v1432
    %v1449 = vpack.c.b16 %v1433, %v1433
    %v1450 = vpack.c.b16 %v1434, %v1434
    %vm1451 = vcmask 31744
    %v1453 = vsel %vm1451, %v684, 0
    %v1456 = vsel %vm1451, %v1059, 0
    %1458 = vmatprep.subr.bf16.mxu0 0
    %1459 = vmatpush1.bf16.xpose.msra.mxu0 %v1456
    %1460 = vmatprep.subr.bf16.mxu0 0
    %1461 = vmatpush1.bf16.xpose.msra.mxu0 0
    %1462 = vmatprep.subr.bf16.mxu0 0
    %1463 = vmatpush1.bf16.xpose.msra.mxu0 0
    %1464 = vmatprep.subr.bf16.mxu0 0
    %1465 = vmatpush1.bf16.xpose.msra.mxu0 0
    %1466 = vmatprep.subr.bf16.mxu0 0
    %1467 = vmatpush1.bf16.xpose.msra.mxu0 0
    %1468 = vmatprep.subr.bf16.mxu0 0
    %1469 = vmatpush1.bf16.xpose.msra.mxu0 0
    %1470 = vmatprep.subr.bf16.mxu0 0
    %1471 = vmatpush1.bf16.xpose.msra.mxu0 0
    %1472 = vmatprep.subr.bf16.mxu0 0
    %1473 = vmatpush1.bf16.xpose.msra.mxu0 0
    %1474 = vmatprep.subr.bf16.mxu0 0
    %1475 = vmatpush1.bf16.xpose.msra.mxu0 0
    %1476 = vmatprep.subr.bf16.mxu0 0
    %1477 = vmatpush1.bf16.xpose.msra.mxu0 0
    %1478 = vmatprep.subr.bf16.mxu0 0
    %1479 = vmatpush1.bf16.xpose.msra.mxu0 0
    %1480 = vmatprep.subr.bf16.mxu0 0
    %1481 = vmatpush1.bf16.xpose.msra.mxu0 0
    %1482 = vmatprep.subr.bf16.mxu0 0
    %1483 = vmatpush1.bf16.xpose.msra.mxu0 0
    %1484 = vmatprep.subr.bf16.mxu0 0
    %1485 = vmatpush1.bf16.xpose.msra.mxu0 0
    %1486 = vmatprep.subr.bf16.mxu0 0
    %1487 = vmatpush1.bf16.xpose.msra.mxu0 0
    %1488 = vmatprep.subr.bf16.mxu0 0
    %1489 = vmatpush1.bf16.xpose.msra.mxu0 0
    %1490 = vmatprep.mubr.bf16.mxu0 0
    %1491 = vmatmul.mubr.bf16.gmra.mrb[0].mxu0 %v1453
    %v1492 = vpop.f32.mrb[0].mxu0
    %v1493 = vadd.f32 0.0, %v1492
    %v1494 = vpop.f32.mrb[0].mxu0
    %v1495 = vpop.f32.mrb[0].mxu0
    %v1496 = vpop.f32.mrb[0].mxu0
    %1497 = vdwg.mxu0
    %v1499 = vsel %vm1451, %v685, 0
    %v1502 = vsel %vm1451, %v1060, 0
    %1504 = vmatprep.subr.bf16.mxu0 0
    %1505 = vmatpush1.bf16.xpose.msra.mxu0 %v1502
    %1506 = vmatprep.subr.bf16.mxu0 0
    %1507 = vmatpush1.bf16.xpose.msra.mxu0 0
    %1508 = vmatprep.subr.bf16.mxu0 0
    %1509 = vmatpush1.bf16.xpose.msra.mxu0 0
    %1510 = vmatprep.subr.bf16.mxu0 0
    %1511 = vmatpush1.bf16.xpose.msra.mxu0 0
    %1512 = vmatprep.subr.bf16.mxu0 0
    %1513 = vmatpush1.bf16.xpose.msra.mxu0 0
    %1514 = vmatprep.subr.bf16.mxu0 0
    %1515 = vmatpush1.bf16.xpose.msra.mxu0 0
    %1516 = vmatprep.subr.bf16.mxu0 0
    %1517 = vmatpush1.bf16.xpose.msra.mxu0 0
    %1518 = vmatprep.subr.bf16.mxu0 0
    %1519 = vmatpush1.bf16.xpose.msra.mxu0 0
    %1520 = vmatprep.subr.bf16.mxu0 0
    %1521 = vmatpush1.bf16.xpose.msra.mxu0 0
    %1522 = vmatprep.subr.bf16.mxu0 0
    %1523 = vmatpush1.bf16.xpose.msra.mxu0 0
    %1524 = vmatprep.subr.bf16.mxu0 0
    %1525 = vmatpush1.bf16.xpose.msra.mxu0 0
    %1526 = vmatprep.subr.bf16.mxu0 0
    %1527 = vmatpush1.bf16.xpose.msra.mxu0 0
    %1528 = vmatprep.subr.bf16.mxu0 0
    %1529 = vmatpush1.bf16.xpose.msra.mxu0 0
    %1530 = vmatprep.subr.bf16.mxu0 0
    %1531 = vmatpush1.bf16.xpose.msra.mxu0 0
    %1532 = vmatprep.subr.bf16.mxu0 0
    %1533 = vmatpush1.bf16.xpose.msra.mxu0 0
    %1534 = vmatprep.subr.bf16.mxu0 0
    %1535 = vmatpush1.bf16.xpose.msra.mxu0 0
    %1536 = vmatprep.mubr.bf16.mxu0 0
    %1537 = vmatmul.mubr.bf16.gmra.mrb[0].mxu0 %v1499
    %v1538 = vpop.f32.mrb[0].mxu0
    %v1539 = vadd.f32 0.0, %v1538
    %v1540 = vpop.f32.mrb[0].mxu0
    %v1541 = vpop.f32.mrb[0].mxu0
    %v1542 = vpop.f32.mrb[0].mxu0
    %1543 = vdwg.mxu0
    %v1545 = vsel %vm1451, %v686, 0
    %v1548 = vsel %vm1451, %v1061, 0
    %1550 = vmatprep.subr.bf16.mxu0 0
    %1551 = vmatpush1.bf16.xpose.msra.mxu0 %v1548
    %1552 = vmatprep.subr.bf16.mxu0 0
    %1553 = vmatpush1.bf16.xpose.msra.mxu0 0
    %1554 = vmatprep.subr.bf16.mxu0 0
    %1555 = vmatpush1.bf16.xpose.msra.mxu0 0
    %1556 = vmatprep.subr.bf16.mxu0 0
    %1557 = vmatpush1.bf16.xpose.msra.mxu0 0
    %1558 = vmatprep.subr.bf16.mxu0 0
    %1559 = vmatpush1.bf16.xpose.msra.mxu0 0
    %1560 = vmatprep.subr.bf16.mxu0 0
    %1561 = vmatpush1.bf16.xpose.msra.mxu0 0
    %1562 = vmatprep.subr.bf16.mxu0 0
    %1563 = vmatpush1.bf16.xpose.msra.mxu0 0
    %1564 = vmatprep.subr.bf16.mxu0 0
    %1565 = vmatpush1.bf16.xpose.msra.mxu0 0
    %1566 = vmatprep.subr.bf16.mxu0 0
    %1567 = vmatpush1.bf16.xpose.msra.mxu0 0
    %1568 = vmatprep.subr.bf16.mxu0 0
    %1569 = vmatpush1.bf16.xpose.msra.mxu0 0
    %1570 = vmatprep.subr.bf16.mxu0 0
    %1571 = vmatpush1.bf16.xpose.msra.mxu0 0
    %1572 = vmatprep.subr.bf16.mxu0 0
    %1573 = vmatpush1.bf16.xpose.msra.mxu0 0
    %1574 = vmatprep.subr.bf16.mxu0 0
    %1575 = vmatpush1.bf16.xpose.msra.mxu0 0
    %1576 = vmatprep.subr.bf16.mxu0 0
    %1577 = vmatpush1.bf16.xpose.msra.mxu0 0
    %1578 = vmatprep.subr.bf16.mxu0 0
    %1579 = vmatpush1.bf16.xpose.msra.mxu0 0
    %1580 = vmatprep.subr.bf16.mxu0 0
    %1581 = vmatpush1.bf16.xpose.msra.mxu0 0
    %1582 = vmatprep.mubr.bf16.mxu0 0
    %1583 = vmatmul.mubr.bf16.gmra.mrb[0].mxu0 %v1545
    %v1584 = vpop.f32.mrb[0].mxu0
    %v1585 = vadd.f32 0.0, %v1584
    %v1586 = vpop.f32.mrb[0].mxu0
    %v1587 = vpop.f32.mrb[0].mxu0
    %v1588 = vpop.f32.mrb[0].mxu0
    %1589 = vdwg.mxu0
    %v1591 = vsel %vm1451, %v687, 0
    %v1594 = vsel %vm1451, %v1062, 0
    %1596 = vmatprep.subr.bf16.mxu0 0
    %1597 = vmatpush1.bf16.xpose.msra.mxu0 %v1594
    %1598 = vmatprep.subr.bf16.mxu0 0
    %1599 = vmatpush1.bf16.xpose.msra.mxu0 0
    %1600 = vmatprep.subr.bf16.mxu0 0
    %1601 = vmatpush1.bf16.xpose.msra.mxu0 0
    %1602 = vmatprep.subr.bf16.mxu0 0
    %1603 = vmatpush1.bf16.xpose.msra.mxu0 0
    %1604 = vmatprep.subr.bf16.mxu0 0
    %1605 = vmatpush1.bf16.xpose.msra.mxu0 0
    %1606 = vmatprep.subr.bf16.mxu0 0
    %1607 = vmatpush1.bf16.xpose.msra.mxu0 0
    %1608 = vmatprep.subr.bf16.mxu0 0
    %1609 = vmatpush1.bf16.xpose.msra.mxu0 0
    %1610 = vmatprep.subr.bf16.mxu0 0
    %1611 = vmatpush1.bf16.xpose.msra.mxu0 0
    %1612 = vmatprep.subr.bf16.mxu0 0
    %1613 = vmatpush1.bf16.xpose.msra.mxu0 0
    %1614 = vmatprep.subr.bf16.mxu0 0
    %1615 = vmatpush1.bf16.xpose.msra.mxu0 0
    %1616 = vmatprep.subr.bf16.mxu0 0
    %1617 = vmatpush1.bf16.xpose.msra.mxu0 0
    %1618 = vmatprep.subr.bf16.mxu0 0
    %1619 = vmatpush1.bf16.xpose.msra.mxu0 0
    %1620 = vmatprep.subr.bf16.mxu0 0
    %1621 = vmatpush1.bf16.xpose.msra.mxu0 0
    %1622 = vmatprep.subr.bf16.mxu0 0
    %1623 = vmatpush1.bf16.xpose.msra.mxu0 0
    %1624 = vmatprep.subr.bf16.mxu0 0
    %1625 = vmatpush1.bf16.xpose.msra.mxu0 0
    %1626 = vmatprep.subr.bf16.mxu0 0
    %1627 = vmatpush1.bf16.xpose.msra.mxu0 0
    %1628 = vmatprep.mubr.bf16.mxu0 0
    %1629 = vmatmul.mubr.bf16.gmra.mrb[0].mxu0 %v1591
    %v1630 = vpop.f32.mrb[0].mxu0
    %v1631 = vadd.f32 0.0, %v1630
    %v1632 = vpop.f32.mrb[0].mxu0
    %v1633 = vpop.f32.mrb[0].mxu0
    %v1634 = vpop.f32.mrb[0].mxu0
    %1635 = vdwg.mxu0
    %v1637 = vsel %vm1451, %v688, 0
    %v1640 = vsel %vm1451, %v1063, 0
    %1642 = vmatprep.subr.bf16.mxu0 0
    %1643 = vmatpush1.bf16.xpose.msra.mxu0 %v1640
    %1644 = vmatprep.subr.bf16.mxu0 0
    %1645 = vmatpush1.bf16.xpose.msra.mxu0 0
    %1646 = vmatprep.subr.bf16.mxu0 0
    %1647 = vmatpush1.bf16.xpose.msra.mxu0 0
    %1648 = vmatprep.subr.bf16.mxu0 0
    %1649 = vmatpush1.bf16.xpose.msra.mxu0 0
    %1650 = vmatprep.subr.bf16.mxu0 0
    %1651 = vmatpush1.bf16.xpose.msra.mxu0 0
    %1652 = vmatprep.subr.bf16.mxu0 0
    %1653 = vmatpush1.bf16.xpose.msra.mxu0 0
    %1654 = vmatprep.subr.bf16.mxu0 0
    %1655 = vmatpush1.bf16.xpose.msra.mxu0 0
    %1656 = vmatprep.subr.bf16.mxu0 0
    %1657 = vmatpush1.bf16.xpose.msra.mxu0 0
    %1658 = vmatprep.subr.bf16.mxu0 0
    %1659 = vmatpush1.bf16.xpose.msra.mxu0 0
    %1660 = vmatprep.subr.bf16.mxu0 0
    %1661 = vmatpush1.bf16.xpose.msra.mxu0 0
    %1662 = vmatprep.subr.bf16.mxu0 0
    %1663 = vmatpush1.bf16.xpose.msra.mxu0 0
    %1664 = vmatprep.subr.bf16.mxu0 0
    %1665 = vmatpush1.bf16.xpose.msra.mxu0 0
    %1666 = vmatprep.subr.bf16.mxu0 0
    %1667 = vmatpush1.bf16.xpose.msra.mxu0 0
    %1668 = vmatprep.subr.bf16.mxu0 0
    %1669 = vmatpush1.bf16.xpose.msra.mxu0 0
    %1670 = vmatprep.subr.bf16.mxu0 0
    %1671 = vmatpush1.bf16.xpose.msra.mxu0 0
    %1672 = vmatprep.subr.bf16.mxu0 0
    %1673 = vmatpush1.bf16.xpose.msra.mxu0 0
    %1674 = vmatprep.mubr.bf16.mxu0 0
    %1675 = vmatmul.mubr.bf16.gmra.mrb[0].mxu0 %v1637
    %v1676 = vpop.f32.mrb[0].mxu0
    %v1677 = vadd.f32 0.0, %v1676
    %v1678 = vpop.f32.mrb[0].mxu0
    %v1679 = vpop.f32.mrb[0].mxu0
    %v1680 = vpop.f32.mrb[0].mxu0
    %1681 = vdwg.mxu0
    %v1683 = vsel %vm1451, %v689, 0
    %v1686 = vsel %vm1451, %v1064, 0
    %1688 = vmatprep.subr.bf16.mxu0 0
    %1689 = vmatpush1.bf16.xpose.msra.mxu0 %v1686
    %1690 = vmatprep.subr.bf16.mxu0 0
    %1691 = vmatpush1.bf16.xpose.msra.mxu0 0
    %1692 = vmatprep.subr.bf16.mxu0 0
    %1693 = vmatpush1.bf16.xpose.msra.mxu0 0
    %1694 = vmatprep.subr.bf16.mxu0 0
    %1695 = vmatpush1.bf16.xpose.msra.mxu0 0
    %1696 = vmatprep.subr.bf16.mxu0 0
    %1697 = vmatpush1.bf16.xpose.msra.mxu0 0
    %1698 = vmatprep.subr.bf16.mxu0 0
    %1699 = vmatpush1.bf16.xpose.msra.mxu0 0
    %1700 = vmatprep.subr.bf16.mxu0 0
    %1701 = vmatpush1.bf16.xpose.msra.mxu0 0
    %1702 = vmatprep.subr.bf16.mxu0 0
    %1703 = vmatpush1.bf16.xpose.msra.mxu0 0
    %1704 = vmatprep.subr.bf16.mxu0 0
    %1705 = vmatpush1.bf16.xpose.msra.mxu0 0
    %1706 = vmatprep.subr.bf16.mxu0 0
    %1707 = vmatpush1.bf16.xpose.msra.mxu0 0
    %1708 = vmatprep.subr.bf16.mxu0 0
    %1709 = vmatpush1.bf16.xpose.msra.mxu0 0
    %1710 = vmatprep.subr.bf16.mxu0 0
    %1711 = vmatpush1.bf16.xpose.msra.mxu0 0
    %1712 = vmatprep.subr.bf16.mxu0 0
    %1713 = vmatpush1.bf16.xpose.msra.mxu0 0
    %1714 = vmatprep.subr.bf16.mxu0 0
    %1715 = vmatpush1.bf16.xpose.msra.mxu0 0
    %1716 = vmatprep.subr.bf16.mxu0 0
    %1717 = vmatpush1.bf16.xpose.msra.mxu0 0
    %1718 = vmatprep.subr.bf16.mxu0 0
    %1719 = vmatpush1.bf16.xpose.msra.mxu0 0
    %1720 = vmatprep.mubr.bf16.mxu0 0
    %1721 = vmatmul.mubr.bf16.gmra.mrb[0].mxu0 %v1683
    %v1722 = vpop.f32.mrb[0].mxu0
    %v1723 = vadd.f32 0.0, %v1722
    %v1724 = vpop.f32.mrb[0].mxu0
    %v1725 = vpop.f32.mrb[0].mxu0
    %v1726 = vpop.f32.mrb[0].mxu0
    %1727 = vdwg.mxu0
    %v1729 = vsel %vm1451, %v690, 0
    %v1732 = vsel %vm1451, %v1065, 0
    %1734 = vmatprep.subr.bf16.mxu0 0
    %1735 = vmatpush1.bf16.xpose.msra.mxu0 %v1732
    %1736 = vmatprep.subr.bf16.mxu0 0
    %1737 = vmatpush1.bf16.xpose.msra.mxu0 0
    %1738 = vmatprep.subr.bf16.mxu0 0
    %1739 = vmatpush1.bf16.xpose.msra.mxu0 0
    %1740 = vmatprep.subr.bf16.mxu0 0
    %1741 = vmatpush1.bf16.xpose.msra.mxu0 0
    %1742 = vmatprep.subr.bf16.mxu0 0
    %1743 = vmatpush1.bf16.xpose.msra.mxu0 0
    %1744 = vmatprep.subr.bf16.mxu0 0
    %1745 = vmatpush1.bf16.xpose.msra.mxu0 0
    %1746 = vmatprep.subr.bf16.mxu0 0
    %1747 = vmatpush1.bf16.xpose.msra.mxu0 0
    %1748 = vmatprep.subr.bf16.mxu0 0
    %1749 = vmatpush1.bf16.xpose.msra.mxu0 0
    %1750 = vmatprep.subr.bf16.mxu0 0
    %1751 = vmatpush1.bf16.xpose.msra.mxu0 0
    %1752 = vmatprep.subr.bf16.mxu0 0
    %1753 = vmatpush1.bf16.xpose.msra.mxu0 0
    %1754 = vmatprep.subr.bf16.mxu0 0
    %1755 = vmatpush1.bf16.xpose.msra.mxu0 0
    %1756 = vmatprep.subr.bf16.mxu0 0
    %1757 = vmatpush1.bf16.xpose.msra.mxu0 0
    %1758 = vmatprep.subr.bf16.mxu0 0
    %1759 = vmatpush1.bf16.xpose.msra.mxu0 0
    %1760 = vmatprep.subr.bf16.mxu0 0
    %1761 = vmatpush1.bf16.xpose.msra.mxu0 0
    %1762 = vmatprep.subr.bf16.mxu0 0
    %1763 = vmatpush1.bf16.xpose.msra.mxu0 0
    %1764 = vmatprep.subr.bf16.mxu0 0
    %1765 = vmatpush1.bf16.xpose.msra.mxu0 0
    %1766 = vmatprep.mubr.bf16.mxu0 0
    %1767 = vmatmul.mubr.bf16.gmra.mrb[0].mxu0 %v1729
    %v1768 = vpop.f32.mrb[0].mxu0
    %v1769 = vadd.f32 0.0, %v1768
    %v1770 = vpop.f32.mrb[0].mxu0
    %v1771 = vpop.f32.mrb[0].mxu0
    %v1772 = vpop.f32.mrb[0].mxu0
    %1773 = vdwg.mxu0
    %v1775 = vsel %vm1451, %v691, 0
    %v1778 = vsel %vm1451, %v1066, 0
    %1780 = vmatprep.subr.bf16.mxu0 0
    %1781 = vmatpush1.bf16.xpose.msra.mxu0 %v1778
    %1782 = vmatprep.subr.bf16.mxu0 0
    %1783 = vmatpush1.bf16.xpose.msra.mxu0 0
    %1784 = vmatprep.subr.bf16.mxu0 0
    %1785 = vmatpush1.bf16.xpose.msra.mxu0 0
    %1786 = vmatprep.subr.bf16.mxu0 0
    %1787 = vmatpush1.bf16.xpose.msra.mxu0 0
    %1788 = vmatprep.subr.bf16.mxu0 0
    %1789 = vmatpush1.bf16.xpose.msra.mxu0 0
    %1790 = vmatprep.subr.bf16.mxu0 0
    %1791 = vmatpush1.bf16.xpose.msra.mxu0 0
    %1792 = vmatprep.subr.bf16.mxu0 0
    %1793 = vmatpush1.bf16.xpose.msra.mxu0 0
    %1794 = vmatprep.subr.bf16.mxu0 0
    %1795 = vmatpush1.bf16.xpose.msra.mxu0 0
    %1796 = vmatprep.subr.bf16.mxu0 0
    %1797 = vmatpush1.bf16.xpose.msra.mxu0 0
    %1798 = vmatprep.subr.bf16.mxu0 0
    %1799 = vmatpush1.bf16.xpose.msra.mxu0 0
    %1800 = vmatprep.subr.bf16.mxu0 0
    %1801 = vmatpush1.bf16.xpose.msra.mxu0 0
    %1802 = vmatprep.subr.bf16.mxu0 0
    %1803 = vmatpush1.bf16.xpose.msra.mxu0 0
    %1804 = vmatprep.subr.bf16.mxu0 0
    %1805 = vmatpush1.bf16.xpose.msra.mxu0 0
    %1806 = vmatprep.subr.bf16.mxu0 0
    %1807 = vmatpush1.bf16.xpose.msra.mxu0 0
    %1808 = vmatprep.subr.bf16.mxu0 0
    %1809 = vmatpush1.bf16.xpose.msra.mxu0 0
    %1810 = vmatprep.subr.bf16.mxu0 0
    %1811 = vmatpush1.bf16.xpose.msra.mxu0 0
    %1812 = vmatprep.mubr.bf16.mxu0 0
    %1813 = vmatmul.mubr.bf16.gmra.mrb[0].mxu0 %v1775
    %v1814 = vpop.f32.mrb[0].mxu0
    %v1815 = vadd.f32 0.0, %v1814
    %v1816 = vpop.f32.mrb[0].mxu0
    %v1817 = vpop.f32.mrb[0].mxu0
    %v1818 = vpop.f32.mrb[0].mxu0
    %1819 = vdwg.mxu0
    %v1821 = vsel %vm1451, %v692, 0
    %v1824 = vsel %vm1451, %v1067, 0
    %1826 = vmatprep.subr.bf16.mxu0 0
    %1827 = vmatpush1.bf16.xpose.msra.mxu0 %v1824
    %1828 = vmatprep.subr.bf16.mxu0 0
    %1829 = vmatpush1.bf16.xpose.msra.mxu0 0
    %1830 = vmatprep.subr.bf16.mxu0 0
    %1831 = vmatpush1.bf16.xpose.msra.mxu0 0
    %1832 = vmatprep.subr.bf16.mxu0 0
    %1833 = vmatpush1.bf16.xpose.msra.mxu0 0
    %1834 = vmatprep.subr.bf16.mxu0 0
    %1835 = vmatpush1.bf16.xpose.msra.mxu0 0
    %1836 = vmatprep.subr.bf16.mxu0 0
    %1837 = vmatpush1.bf16.xpose.msra.mxu0 0
    %1838 = vmatprep.subr.bf16.mxu0 0
    %1839 = vmatpush1.bf16.xpose.msra.mxu0 0
    %1840 = vmatprep.subr.bf16.mxu0 0
    %1841 = vmatpush1.bf16.xpose.msra.mxu0 0
    %1842 = vmatprep.subr.bf16.mxu0 0
    %1843 = vmatpush1.bf16.xpose.msra.mxu0 0
    %1844 = vmatprep.subr.bf16.mxu0 0
    %1845 = vmatpush1.bf16.xpose.msra.mxu0 0
    %1846 = vmatprep.subr.bf16.mxu0 0
    %1847 = vmatpush1.bf16.xpose.msra.mxu0 0
    %1848 = vmatprep.subr.bf16.mxu0 0
    %1849 = vmatpush1.bf16.xpose.msra.mxu0 0
    %1850 = vmatprep.subr.bf16.mxu0 0
    %1851 = vmatpush1.bf16.xpose.msra.mxu0 0
    %1852 = vmatprep.subr.bf16.mxu0 0
    %1853 = vmatpush1.bf16.xpose.msra.mxu0 0
    %1854 = vmatprep.subr.bf16.mxu0 0
    %1855 = vmatpush1.bf16.xpose.msra.mxu0 0
    %1856 = vmatprep.subr.bf16.mxu0 0
    %1857 = vmatpush1.bf16.xpose.msra.mxu0 0
    %1858 = vmatprep.mubr.bf16.mxu0 0
    %1859 = vmatmul.mubr.bf16.gmra.mrb[0].mxu0 %v1821
    %v1860 = vpop.f32.mrb[0].mxu0
    %v1861 = vadd.f32 0.0, %v1860
    %v1862 = vpop.f32.mrb[0].mxu0
    %v1863 = vpop.f32.mrb[0].mxu0
    %v1864 = vpop.f32.mrb[0].mxu0
    %1865 = vdwg.mxu0
    %v1867 = vsel %vm1451, %v693, 0
    %v1870 = vsel %vm1451, %v1068, 0
    %1872 = vmatprep.subr.bf16.mxu0 0
    %1873 = vmatpush1.bf16.xpose.msra.mxu0 %v1870
    %1874 = vmatprep.subr.bf16.mxu0 0
    %1875 = vmatpush1.bf16.xpose.msra.mxu0 0
    %1876 = vmatprep.subr.bf16.mxu0 0
    %1877 = vmatpush1.bf16.xpose.msra.mxu0 0
    %1878 = vmatprep.subr.bf16.mxu0 0
    %1879 = vmatpush1.bf16.xpose.msra.mxu0 0
    %1880 = vmatprep.subr.bf16.mxu0 0
    %1881 = vmatpush1.bf16.xpose.msra.mxu0 0
    %1882 = vmatprep.subr.bf16.mxu0 0
    %1883 = vmatpush1.bf16.xpose.msra.mxu0 0
    %1884 = vmatprep.subr.bf16.mxu0 0
    %1885 = vmatpush1.bf16.xpose.msra.mxu0 0
    %1886 = vmatprep.subr.bf16.mxu0 0
    %1887 = vmatpush1.bf16.xpose.msra.mxu0 0
    %1888 = vmatprep.subr.bf16.mxu0 0
    %1889 = vmatpush1.bf16.xpose.msra.mxu0 0
    %1890 = vmatprep.subr.bf16.mxu0 0
    %1891 = vmatpush1.bf16.xpose.msra.mxu0 0
    %1892 = vmatprep.subr.bf16.mxu0 0
    %1893 = vmatpush1.bf16.xpose.msra.mxu0 0
    %1894 = vmatprep.subr.bf16.mxu0 0
    %1895 = vmatpush1.bf16.xpose.msra.mxu0 0
    %1896 = vmatprep.subr.bf16.mxu0 0
    %1897 = vmatpush1.bf16.xpose.msra.mxu0 0
    %1898 = vmatprep.subr.bf16.mxu0 0
    %1899 = vmatpush1.bf16.xpose.msra.mxu0 0
    %1900 = vmatprep.subr.bf16.mxu0 0
    %1901 = vmatpush1.bf16.xpose.msra.mxu0 0
    %1902 = vmatprep.subr.bf16.mxu0 0
    %1903 = vmatpush1.bf16.xpose.msra.mxu0 0
    %1904 = vmatprep.mubr.bf16.mxu0 0
    %1905 = vmatmul.mubr.bf16.gmra.mrb[0].mxu0 %v1867
    %v1906 = vpop.f32.mrb[0].mxu0
    %v1907 = vadd.f32 0.0, %v1906
    %v1908 = vpop.f32.mrb[0].mxu0
    %v1909 = vpop.f32.mrb[0].mxu0
    %v1910 = vpop.f32.mrb[0].mxu0
    %1911 = vdwg.mxu0
    %v1913 = vsel %vm1451, %v694, 0
    %v1916 = vsel %vm1451, %v1069, 0
    %1918 = vmatprep.subr.bf16.mxu0 0
    %1919 = vmatpush1.bf16.xpose.msra.mxu0 %v1916
    %1920 = vmatprep.subr.bf16.mxu0 0
    %1921 = vmatpush1.bf16.xpose.msra.mxu0 0
    %1922 = vmatprep.subr.bf16.mxu0 0
    %1923 = vmatpush1.bf16.xpose.msra.mxu0 0
    %1924 = vmatprep.subr.bf16.mxu0 0
    %1925 = vmatpush1.bf16.xpose.msra.mxu0 0
    %1926 = vmatprep.subr.bf16.mxu0 0
    %1927 = vmatpush1.bf16.xpose.msra.mxu0 0
    %1928 = vmatprep.subr.bf16.mxu0 0
    %1929 = vmatpush1.bf16.xpose.msra.mxu0 0
    %1930 = vmatprep.subr.bf16.mxu0 0
    %1931 = vmatpush1.bf16.xpose.msra.mxu0 0
    %1932 = vmatprep.subr.bf16.mxu0 0
    %1933 = vmatpush1.bf16.xpose.msra.mxu0 0
    %1934 = vmatprep.subr.bf16.mxu0 0
    %1935 = vmatpush1.bf16.xpose.msra.mxu0 0
    %1936 = vmatprep.subr.bf16.mxu0 0
    %1937 = vmatpush1.bf16.xpose.msra.mxu0 0
    %1938 = vmatprep.subr.bf16.mxu0 0
    %1939 = vmatpush1.bf16.xpose.msra.mxu0 0
    %1940 = vmatprep.subr.bf16.mxu0 0
    %1941 = vmatpush1.bf16.xpose.msra.mxu0 0
    %1942 = vmatprep.subr.bf16.mxu0 0
    %1943 = vmatpush1.bf16.xpose.msra.mxu0 0
    %1944 = vmatprep.subr.bf16.mxu0 0
    %1945 = vmatpush1.bf16.xpose.msra.mxu0 0
    %1946 = vmatprep.subr.bf16.mxu0 0
    %1947 = vmatpush1.bf16.xpose.msra.mxu0 0
    %1948 = vmatprep.subr.bf16.mxu0 0
    %1949 = vmatpush1.bf16.xpose.msra.mxu0 0
    %1950 = vmatprep.mubr.bf16.mxu0 0
    %1951 = vmatmul.mubr.bf16.gmra.mrb[0].mxu0 %v1913
    %v1952 = vpop.f32.mrb[0].mxu0
    %v1953 = vadd.f32 0.0, %v1952
    %v1954 = vpop.f32.mrb[0].mxu0
    %v1955 = vpop.f32.mrb[0].mxu0
    %v1956 = vpop.f32.mrb[0].mxu0
    %1957 = vdwg.mxu0
    %v1959 = vsel %vm1451, %v695, 0
    %v1962 = vsel %vm1451, %v1070, 0
    %1964 = vmatprep.subr.bf16.mxu0 0
    %1965 = vmatpush1.bf16.xpose.msra.mxu0 %v1962
    %1966 = vmatprep.subr.bf16.mxu0 0
    %1967 = vmatpush1.bf16.xpose.msra.mxu0 0
    %1968 = vmatprep.subr.bf16.mxu0 0
    %1969 = vmatpush1.bf16.xpose.msra.mxu0 0
    %1970 = vmatprep.subr.bf16.mxu0 0
    %1971 = vmatpush1.bf16.xpose.msra.mxu0 0
    %1972 = vmatprep.subr.bf16.mxu0 0
    %1973 = vmatpush1.bf16.xpose.msra.mxu0 0
    %1974 = vmatprep.subr.bf16.mxu0 0
    %1975 = vmatpush1.bf16.xpose.msra.mxu0 0
    %1976 = vmatprep.subr.bf16.mxu0 0
    %1977 = vmatpush1.bf16.xpose.msra.mxu0 0
    %1978 = vmatprep.subr.bf16.mxu0 0
    %1979 = vmatpush1.bf16.xpose.msra.mxu0 0
    %1980 = vmatprep.subr.bf16.mxu0 0
    %1981 = vmatpush1.bf16.xpose.msra.mxu0 0
    %1982 = vmatprep.subr.bf16.mxu0 0
    %1983 = vmatpush1.bf16.xpose.msra.mxu0 0
    %1984 = vmatprep.subr.bf16.mxu0 0
    %1985 = vmatpush1.bf16.xpose.msra.mxu0 0
    %1986 = vmatprep.subr.bf16.mxu0 0
    %1987 = vmatpush1.bf16.xpose.msra.mxu0 0
    %1988 = vmatprep.subr.bf16.mxu0 0
    %1989 = vmatpush1.bf16.xpose.msra.mxu0 0
    %1990 = vmatprep.subr.bf16.mxu0 0
    %1991 = vmatpush1.bf16.xpose.msra.mxu0 0
    %1992 = vmatprep.subr.bf16.mxu0 0
    %1993 = vmatpush1.bf16.xpose.msra.mxu0 0
    %1994 = vmatprep.subr.bf16.mxu0 0
    %1995 = vmatpush1.bf16.xpose.msra.mxu0 0
    %1996 = vmatprep.mubr.bf16.mxu0 0
    %1997 = vmatmul.mubr.bf16.gmra.mrb[0].mxu0 %v1959
    %v1998 = vpop.f32.mrb[0].mxu0
    %v1999 = vadd.f32 0.0, %v1998
    %v2000 = vpop.f32.mrb[0].mxu0
    %v2001 = vpop.f32.mrb[0].mxu0
    %v2002 = vpop.f32.mrb[0].mxu0
    %2003 = vdwg.mxu0
    %v2005 = vsel %vm1451, %v696, 0
    %v2008 = vsel %vm1451, %v1071, 0
    %2010 = vmatprep.subr.bf16.mxu0 0
    %2011 = vmatpush1.bf16.xpose.msra.mxu0 %v2008
    %2012 = vmatprep.subr.bf16.mxu0 0
    %2013 = vmatpush1.bf16.xpose.msra.mxu0 0
    %2014 = vmatprep.subr.bf16.mxu0 0
    %2015 = vmatpush1.bf16.xpose.msra.mxu0 0
    %2016 = vmatprep.subr.bf16.mxu0 0
    %2017 = vmatpush1.bf16.xpose.msra.mxu0 0
    %2018 = vmatprep.subr.bf16.mxu0 0
    %2019 = vmatpush1.bf16.xpose.msra.mxu0 0
    %2020 = vmatprep.subr.bf16.mxu0 0
    %2021 = vmatpush1.bf16.xpose.msra.mxu0 0
    %2022 = vmatprep.subr.bf16.mxu0 0
    %2023 = vmatpush1.bf16.xpose.msra.mxu0 0
    %2024 = vmatprep.subr.bf16.mxu0 0
    %2025 = vmatpush1.bf16.xpose.msra.mxu0 0
    %2026 = vmatprep.subr.bf16.mxu0 0
    %2027 = vmatpush1.bf16.xpose.msra.mxu0 0
    %2028 = vmatprep.subr.bf16.mxu0 0
    %2029 = vmatpush1.bf16.xpose.msra.mxu0 0
    %2030 = vmatprep.subr.bf16.mxu0 0
    %2031 = vmatpush1.bf16.xpose.msra.mxu0 0
    %2032 = vmatprep.subr.bf16.mxu0 0
    %2033 = vmatpush1.bf16.xpose.msra.mxu0 0
    %2034 = vmatprep.subr.bf16.mxu0 0
    %2035 = vmatpush1.bf16.xpose.msra.mxu0 0
    %2036 = vmatprep.subr.bf16.mxu0 0
    %2037 = vmatpush1.bf16.xpose.msra.mxu0 0
    %2038 = vmatprep.subr.bf16.mxu0 0
    %2039 = vmatpush1.bf16.xpose.msra.mxu0 0
    %2040 = vmatprep.subr.bf16.mxu0 0
    %2041 = vmatpush1.bf16.xpose.msra.mxu0 0
    %2042 = vmatprep.mubr.bf16.mxu0 0
    %2043 = vmatmul.mubr.bf16.gmra.mrb[0].mxu0 %v2005
    %v2044 = vpop.f32.mrb[0].mxu0
    %v2045 = vadd.f32 0.0, %v2044
    %v2046 = vpop.f32.mrb[0].mxu0
    %v2047 = vpop.f32.mrb[0].mxu0
    %v2048 = vpop.f32.mrb[0].mxu0
    %2049 = vdwg.mxu0
    %v2051 = vsel %vm1451, %v697, 0
    %v2054 = vsel %vm1451, %v1072, 0
    %2056 = vmatprep.subr.bf16.mxu0 0
    %2057 = vmatpush1.bf16.xpose.msra.mxu0 %v2054
    %2058 = vmatprep.subr.bf16.mxu0 0
    %2059 = vmatpush1.bf16.xpose.msra.mxu0 0
    %2060 = vmatprep.subr.bf16.mxu0 0
    %2061 = vmatpush1.bf16.xpose.msra.mxu0 0
    %2062 = vmatprep.subr.bf16.mxu0 0
    %2063 = vmatpush1.bf16.xpose.msra.mxu0 0
    %2064 = vmatprep.subr.bf16.mxu0 0
    %2065 = vmatpush1.bf16.xpose.msra.mxu0 0
    %2066 = vmatprep.subr.bf16.mxu0 0
    %2067 = vmatpush1.bf16.xpose.msra.mxu0 0
    %2068 = vmatprep.subr.bf16.mxu0 0
    %2069 = vmatpush1.bf16.xpose.msra.mxu0 0
    %2070 = vmatprep.subr.bf16.mxu0 0
    %2071 = vmatpush1.bf16.xpose.msra.mxu0 0
    %2072 = vmatprep.subr.bf16.mxu0 0
    %2073 = vmatpush1.bf16.xpose.msra.mxu0 0
    %2074 = vmatprep.subr.bf16.mxu0 0
    %2075 = vmatpush1.bf16.xpose.msra.mxu0 0
    %2076 = vmatprep.subr.bf16.mxu0 0
    %2077 = vmatpush1.bf16.xpose.msra.mxu0 0
    %2078 = vmatprep.subr.bf16.mxu0 0
    %2079 = vmatpush1.bf16.xpose.msra.mxu0 0
    %2080 = vmatprep.subr.bf16.mxu0 0
    %2081 = vmatpush1.bf16.xpose.msra.mxu0 0
    %2082 = vmatprep.subr.bf16.mxu0 0
    %2083 = vmatpush1.bf16.xpose.msra.mxu0 0
    %2084 = vmatprep.subr.bf16.mxu0 0
    %2085 = vmatpush1.bf16.xpose.msra.mxu0 0
    %2086 = vmatprep.subr.bf16.mxu0 0
    %2087 = vmatpush1.bf16.xpose.msra.mxu0 0
    %2088 = vmatprep.mubr.bf16.mxu0 0
    %2089 = vmatmul.mubr.bf16.gmra.mrb[0].mxu0 %v2051
    %v2090 = vpop.f32.mrb[0].mxu0
    %v2091 = vadd.f32 0.0, %v2090
    %v2092 = vpop.f32.mrb[0].mxu0
    %v2093 = vpop.f32.mrb[0].mxu0
    %v2094 = vpop.f32.mrb[0].mxu0
    %2095 = vdwg.mxu0
    %v2097 = vsel %vm1451, %v698, 0
    %v2100 = vsel %vm1451, %v1073, 0
    %2102 = vmatprep.subr.bf16.mxu0 0
    %2103 = vmatpush1.bf16.xpose.msra.mxu0 %v2100
    %2104 = vmatprep.subr.bf16.mxu0 0
    %2105 = vmatpush1.bf16.xpose.msra.mxu0 0
    %2106 = vmatprep.subr.bf16.mxu0 0
    %2107 = vmatpush1.bf16.xpose.msra.mxu0 0
    %2108 = vmatprep.subr.bf16.mxu0 0
    %2109 = vmatpush1.bf16.xpose.msra.mxu0 0
    %2110 = vmatprep.subr.bf16.mxu0 0
    %2111 = vmatpush1.bf16.xpose.msra.mxu0 0
    %2112 = vmatprep.subr.bf16.mxu0 0
    %2113 = vmatpush1.bf16.xpose.msra.mxu0 0
    %2114 = vmatprep.subr.bf16.mxu0 0
    %2115 = vmatpush1.bf16.xpose.msra.mxu0 0
    %2116 = vmatprep.subr.bf16.mxu0 0
    %2117 = vmatpush1.bf16.xpose.msra.mxu0 0
    %2118 = vmatprep.subr.bf16.mxu0 0
    %2119 = vmatpush1.bf16.xpose.msra.mxu0 0
    %2120 = vmatprep.subr.bf16.mxu0 0
    %2121 = vmatpush1.bf16.xpose.msra.mxu0 0
    %2122 = vmatprep.subr.bf16.mxu0 0
    %2123 = vmatpush1.bf16.xpose.msra.mxu0 0
    %2124 = vmatprep.subr.bf16.mxu0 0
    %2125 = vmatpush1.bf16.xpose.msra.mxu0 0
    %2126 = vmatprep.subr.bf16.mxu0 0
    %2127 = vmatpush1.bf16.xpose.msra.mxu0 0
    %2128 = vmatprep.subr.bf16.mxu0 0
    %2129 = vmatpush1.bf16.xpose.msra.mxu0 0
    %2130 = vmatprep.subr.bf16.mxu0 0
    %2131 = vmatpush1.bf16.xpose.msra.mxu0 0
    %2132 = vmatprep.subr.bf16.mxu0 0
    %2133 = vmatpush1.bf16.xpose.msra.mxu0 0
    %2134 = vmatprep.mubr.bf16.mxu0 0
    %2135 = vmatmul.mubr.bf16.gmra.mrb[0].mxu0 %v2097
    %v2136 = vpop.f32.mrb[0].mxu0
    %v2137 = vadd.f32 0.0, %v2136
    %v2138 = vpop.f32.mrb[0].mxu0
    %v2139 = vpop.f32.mrb[0].mxu0
    %v2140 = vpop.f32.mrb[0].mxu0
    %2141 = vdwg.mxu0
    %v2143 = vsel %vm1451, %v699, 0
    %v2146 = vsel %vm1451, %v1074, 0
    %2148 = vmatprep.subr.bf16.mxu0 0
    %2149 = vmatpush1.bf16.xpose.msra.mxu0 %v2146
    %2150 = vmatprep.subr.bf16.mxu0 0
    %2151 = vmatpush1.bf16.xpose.msra.mxu0 0
    %2152 = vmatprep.subr.bf16.mxu0 0
    %2153 = vmatpush1.bf16.xpose.msra.mxu0 0
    %2154 = vmatprep.subr.bf16.mxu0 0
    %2155 = vmatpush1.bf16.xpose.msra.mxu0 0
    %2156 = vmatprep.subr.bf16.mxu0 0
    %2157 = vmatpush1.bf16.xpose.msra.mxu0 0
    %2158 = vmatprep.subr.bf16.mxu0 0
    %2159 = vmatpush1.bf16.xpose.msra.mxu0 0
    %2160 = vmatprep.subr.bf16.mxu0 0
    %2161 = vmatpush1.bf16.xpose.msra.mxu0 0
    %2162 = vmatprep.subr.bf16.mxu0 0
    %2163 = vmatpush1.bf16.xpose.msra.mxu0 0
    %2164 = vmatprep.subr.bf16.mxu0 0
    %2165 = vmatpush1.bf16.xpose.msra.mxu0 0
    %2166 = vmatprep.subr.bf16.mxu0 0
    %2167 = vmatpush1.bf16.xpose.msra.mxu0 0
    %2168 = vmatprep.subr.bf16.mxu0 0
    %2169 = vmatpush1.bf16.xpose.msra.mxu0 0
    %2170 = vmatprep.subr.bf16.mxu0 0
    %2171 = vmatpush1.bf16.xpose.msra.mxu0 0
    %2172 = vmatprep.subr.bf16.mxu0 0
    %2173 = vmatpush1.bf16.xpose.msra.mxu0 0
    %2174 = vmatprep.subr.bf16.mxu0 0
    %2175 = vmatpush1.bf16.xpose.msra.mxu0 0
    %2176 = vmatprep.subr.bf16.mxu0 0
    %2177 = vmatpush1.bf16.xpose.msra.mxu0 0
    %2178 = vmatprep.subr.bf16.mxu0 0
    %2179 = vmatpush1.bf16.xpose.msra.mxu0 0
    %2180 = vmatprep.mubr.bf16.mxu0 0
    %2181 = vmatmul.mubr.bf16.gmra.mrb[0].mxu0 %v2143
    %v2182 = vpop.f32.mrb[0].mxu0
    %v2183 = vadd.f32 0.0, %v2182
    %v2184 = vpop.f32.mrb[0].mxu0
    %v2185 = vpop.f32.mrb[0].mxu0
    %v2186 = vpop.f32.mrb[0].mxu0
    %2187 = vdwg.mxu0
    %vm2188 = vcmask 64512
    %v2189 = vsel %vm2188, %v1493, -inf
    %2190 = vmax.xlane.f32.xlu0 %v2189
    %v2191 = vpop.xlane.xlu0 %2190
    %v2192 = vsel %vm2188, %v1539, -inf
    %2193 = vmax.xlane.f32.xlu0 %v2192
    %v2194 = vpop.xlane.xlu0 %2193
    %v2195 = vsel %vm2188, %v1585, -inf
    %2196 = vmax.xlane.f32.xlu0 %v2195
    %v2197 = vpop.xlane.xlu0 %2196
    %v2198 = vsel %vm2188, %v1631, -inf
    %2199 = vmax.xlane.f32.xlu0 %v2198
    %v2200 = vpop.xlane.xlu0 %2199
    %v2201 = vsel %vm2188, %v1677, -inf
    %2202 = vmax.xlane.f32.xlu0 %v2201
    %v2203 = vpop.xlane.xlu0 %2202
    %v2204 = vsel %vm2188, %v1723, -inf
    %2205 = vmax.xlane.f32.xlu0 %v2204
    %v2206 = vpop.xlane.xlu0 %2205
    %v2207 = vsel %vm2188, %v1769, -inf
    %2208 = vmax.xlane.f32.xlu0 %v2207
    %v2209 = vpop.xlane.xlu0 %2208
    %v2210 = vsel %vm2188, %v1815, -inf
    %2211 = vmax.xlane.f32.xlu0 %v2210
    %v2212 = vpop.xlane.xlu0 %2211
    %v2213 = vsel %vm2188, %v1861, -inf
    %2214 = vmax.xlane.f32.xlu0 %v2213
    %v2215 = vpop.xlane.xlu0 %2214
    %v2216 = vsel %vm2188, %v1907, -inf
    %2217 = vmax.xlane.f32.xlu0 %v2216
    %v2218 = vpop.xlane.xlu0 %2217
    %v2219 = vsel %vm2188, %v1953, -inf
    %2220 = vmax.xlane.f32.xlu0 %v2219
    %v2221 = vpop.xlane.xlu0 %2220
    %v2222 = vsel %vm2188, %v1999, -inf
    %2223 = vmax.xlane.f32.xlu0 %v2222
    %v2224 = vpop.xlane.xlu0 %2223
    %v2225 = vsel %vm2188, %v2045, -inf
    %2226 = vmax.xlane.f32.xlu0 %v2225
    %v2227 = vpop.xlane.xlu0 %2226
    %v2228 = vsel %vm2188, %v2091, -inf
    %2229 = vmax.xlane.f32.xlu0 %v2228
    %v2230 = vpop.xlane.xlu0 %2229
    %v2231 = vsel %vm2188, %v2137, -inf
    %2232 = vmax.xlane.f32.xlu0 %v2231
    %v2233 = vpop.xlane.xlu0 %2232
    %v2234 = vsel %vm2188, %v2183, -inf
    %2235 = vmax.xlane.f32.xlu0 %v2234
    %v2236 = vpop.xlane.xlu0 %2235
    %v2237 = vsub.f32 %v1493, %v2191
    %v2238 = vsub.f32 %v1539, %v2194
    %v2239 = vsub.f32 %v1585, %v2197
    %v2240 = vsub.f32 %v1631, %v2200
    %v2241 = vsub.f32 %v1677, %v2203
    %v2242 = vsub.f32 %v1723, %v2206
    %v2243 = vsub.f32 %v1769, %v2209
    %v2244 = vsub.f32 %v1815, %v2212
    %v2245 = vsub.f32 %v1861, %v2215
    %v2246 = vsub.f32 %v1907, %v2218
    %v2247 = vsub.f32 %v1953, %v2221
    %v2248 = vsub.f32 %v1999, %v2224
    %v2249 = vsub.f32 %v2045, %v2227
    %v2250 = vsub.f32 %v2091, %v2230
    %v2251 = vsub.f32 %v2137, %v2233
    %v2252 = vsub.f32 %v2183, %v2236
    %v2253 = vmul.f32 %v2237, 1.442695
    %v2254 = vpow.pop %v2253
    %v2255 = vmul.f32 %v2238, 1.442695
    %v2256 = vpow.pop %v2255
    %v2257 = vmul.f32 %v2239, 1.442695
    %v2258 = vpow.pop %v2257
    %v2259 = vmul.f32 %v2240, 1.442695
    %v2260 = vpow.pop %v2259
    %v2261 = vmul.f32 %v2241, 1.442695
    %v2262 = vpow.pop %v2261
    %v2263 = vmul.f32 %v2242, 1.442695
    %v2264 = vpow.pop %v2263
    %v2265 = vmul.f32 %v2243, 1.442695
    %v2266 = vpow.pop %v2265
    %v2267 = vmul.f32 %v2244, 1.442695
    %v2268 = vpow.pop %v2267
    %v2269 = vmul.f32 %v2245, 1.442695
    %v2270 = vpow.pop %v2269
    %v2271 = vmul.f32 %v2246, 1.442695
    %v2272 = vpow.pop %v2271
    %v2273 = vmul.f32 %v2247, 1.442695
    %v2274 = vpow.pop %v2273
    %v2275 = vmul.f32 %v2248, 1.442695
    %v2276 = vpow.pop %v2275
    %v2277 = vmul.f32 %v2249, 1.442695
    %v2278 = vpow.pop %v2277
    %v2279 = vmul.f32 %v2250, 1.442695
    %v2280 = vpow.pop %v2279
    %v2281 = vmul.f32 %v2251, 1.442695
    %v2282 = vpow.pop %v2281
    %v2283 = vmul.f32 %v2252, 1.442695
    %v2284 = vpow.pop %v2283
    %v2285 = vsel %vm2188, %v2254, 0.0
    %2286 = vadd.xlane.f32.xlu0 %v2285
    %v2287 = vpop.xlane.xlu0 %2286
    %v2288 = vsel %vm2188, %v2256, 0.0
    %2289 = vadd.xlane.f32.xlu0 %v2288
    %v2290 = vpop.xlane.xlu0 %2289
    %v2291 = vsel %vm2188, %v2258, 0.0
    %2292 = vadd.xlane.f32.xlu0 %v2291
    %v2293 = vpop.xlane.xlu0 %2292
    %v2294 = vsel %vm2188, %v2260, 0.0
    %2295 = vadd.xlane.f32.xlu0 %v2294
    %v2296 = vpop.xlane.xlu0 %2295
    %v2297 = vsel %vm2188, %v2262, 0.0
    %2298 = vadd.xlane.f32.xlu0 %v2297
    %v2299 = vpop.xlane.xlu0 %2298
    %v2300 = vsel %vm2188, %v2264, 0.0
    %2301 = vadd.xlane.f32.xlu0 %v2300
    %v2302 = vpop.xlane.xlu0 %2301
    %v2303 = vsel %vm2188, %v2266, 0.0
    %2304 = vadd.xlane.f32.xlu0 %v2303
    %v2305 = vpop.xlane.xlu0 %2304
    %v2306 = vsel %vm2188, %v2268, 0.0
    %2307 = vadd.xlane.f32.xlu0 %v2306
    %v2308 = vpop.xlane.xlu0 %2307
    %v2309 = vsel %vm2188, %v2270, 0.0
    %2310 = vadd.xlane.f32.xlu0 %v2309
    %v2311 = vpop.xlane.xlu0 %2310
    %v2312 = vsel %vm2188, %v2272, 0.0
    %2313 = vadd.xlane.f32.xlu0 %v2312
    %v2314 = vpop.xlane.xlu0 %2313
    %v2315 = vsel %vm2188, %v2274, 0.0
    %2316 = vadd.xlane.f32.xlu0 %v2315
    %v2317 = vpop.xlane.xlu0 %2316
    %v2318 = vsel %vm2188, %v2276, 0.0
    %2319 = vadd.xlane.f32.xlu0 %v2318
    %v2320 = vpop.xlane.xlu0 %2319
    %v2321 = vsel %vm2188, %v2278, 0.0
    %2322 = vadd.xlane.f32.xlu0 %v2321
    %v2323 = vpop.xlane.xlu0 %2322
    %v2324 = vsel %vm2188, %v2280, 0.0
    %2325 = vadd.xlane.f32.xlu0 %v2324
    %v2326 = vpop.xlane.xlu0 %2325
    %v2327 = vsel %vm2188, %v2282, 0.0
    %2328 = vadd.xlane.f32.xlu0 %v2327
    %v2329 = vpop.xlane.xlu0 %2328
    %v2330 = vsel %vm2188, %v2284, 0.0
    %2331 = vadd.xlane.f32.xlu0 %v2330
    %v2332 = vpop.xlane.xlu0 %2331
    %v2333 = vrcp.pop %v2287
    %v2334 = vrcp.pop %v2290
    %v2335 = vrcp.pop %v2293
    %v2336 = vrcp.pop %v2296
    %v2337 = vrcp.pop %v2299
    %v2338 = vrcp.pop %v2302
    %v2339 = vrcp.pop %v2305
    %v2340 = vrcp.pop %v2308
    %v2341 = vrcp.pop %v2311
    %v2342 = vrcp.pop %v2314
    %v2343 = vrcp.pop %v2317
    %v2344 = vrcp.pop %v2320
    %v2345 = vrcp.pop %v2323
    %v2346 = vrcp.pop %v2326
    %v2347 = vrcp.pop %v2329
    %v2348 = vrcp.pop %v2332
    %v2349 = vmul.f32 %v2254, %v2333
    %v2350 = vmul.f32 %v2256, %v2334
    %v2351 = vmul.f32 %v2258, %v2335
    %v2352 = vmul.f32 %v2260, %v2336
    %v2353 = vmul.f32 %v2262, %v2337
    %v2354 = vmul.f32 %v2264, %v2338
    %v2355 = vmul.f32 %v2266, %v2339
    %v2356 = vmul.f32 %v2268, %v2340
    %v2357 = vmul.f32 %v2270, %v2341
    %v2358 = vmul.f32 %v2272, %v2342
    %v2359 = vmul.f32 %v2274, %v2343
    %v2360 = vmul.f32 %v2276, %v2344
    %v2361 = vmul.f32 %v2278, %v2345
    %v2362 = vmul.f32 %v2280, %v2346
    %v2363 = vmul.f32 %v2282, %v2347
    %v2364 = vmul.f32 %v2284, %v2348
    %v2365 = vpack.c.bf16 %v2349, %v2349
    %v2366 = vpack.c.bf16 %v2350, %v2350
    %v2367 = vpack.c.bf16 %v2351, %v2351
    %v2368 = vpack.c.bf16 %v2352, %v2352
    %v2369 = vpack.c.bf16 %v2353, %v2353
    %v2370 = vpack.c.bf16 %v2354, %v2354
    %v2371 = vpack.c.bf16 %v2355, %v2355
    %v2372 = vpack.c.bf16 %v2356, %v2356
    %v2373 = vpack.c.bf16 %v2357, %v2357
    %v2374 = vpack.c.bf16 %v2358, %v2358
    %v2375 = vpack.c.bf16 %v2359, %v2359
    %v2376 = vpack.c.bf16 %v2360, %v2360
    %v2377 = vpack.c.bf16 %v2361, %v2361
    %v2378 = vpack.c.bf16 %v2362, %v2362
    %v2379 = vpack.c.bf16 %v2363, %v2363
    %v2380 = vpack.c.bf16 %v2364, %v2364
    %v2382 = vsel %vm2188, %v2365, 0
    %vm2384 = vcmask 1043456
    %v2386 = vsel %vm2384, %v1435, 0
    %2388 = vmatprep.subr.bf16.mxu0 0
    %2389 = vmatpush1.bf16.msra.mxu0 %v2386
    %2390 = vmatprep.subr.bf16.mxu0 0
    %2391 = vmatpush1.bf16.msra.mxu0 0
    %2392 = vmatprep.subr.bf16.mxu0 0
    %2393 = vmatpush1.bf16.msra.mxu0 0
    %2394 = vmatprep.subr.bf16.mxu0 0
    %2395 = vmatpush1.bf16.msra.mxu0 0
    %2396 = vmatprep.subr.bf16.mxu0 0
    %2397 = vmatpush1.bf16.msra.mxu0 0
    %2398 = vmatprep.subr.bf16.mxu0 0
    %2399 = vmatpush1.bf16.msra.mxu0 0
    %2400 = vmatprep.subr.bf16.mxu0 0
    %2401 = vmatpush1.bf16.msra.mxu0 0
    %2402 = vmatprep.subr.bf16.mxu0 0
    %2403 = vmatpush1.bf16.msra.mxu0 0
    %2404 = vmatprep.subr.bf16.mxu0 0
    %2405 = vmatpush1.bf16.msra.mxu0 0
    %2406 = vmatprep.subr.bf16.mxu0 0
    %2407 = vmatpush1.bf16.msra.mxu0 0
    %2408 = vmatprep.subr.bf16.mxu0 0
    %2409 = vmatpush1.bf16.msra.mxu0 0
    %2410 = vmatprep.subr.bf16.mxu0 0
    %2411 = vmatpush1.bf16.msra.mxu0 0
    %2412 = vmatprep.subr.bf16.mxu0 0
    %2413 = vmatpush1.bf16.msra.mxu0 0
    %2414 = vmatprep.subr.bf16.mxu0 0
    %2415 = vmatpush1.bf16.msra.mxu0 0
    %2416 = vmatprep.subr.bf16.mxu0 0
    %2417 = vmatpush1.bf16.msra.mxu0 0
    %2418 = vmatprep.subr.bf16.mxu0 0
    %2419 = vmatpush1.bf16.msra.mxu0 0
    %2420 = vmatprep.mubr.bf16.mxu0 0
    %2421 = vmatmul.mubr.bf16.gmra.mrb[0].mxu0 %v2382
    %v2422 = vpop.f32.mrb[0].mxu0
    %v2423 = vadd.f32 0.0, %v2422
    %v2424 = vpop.f32.mrb[0].mxu0
    %v2425 = vpop.f32.mrb[0].mxu0
    %v2426 = vpop.f32.mrb[0].mxu0
    %2427 = vdwg.mxu0
    %v2429 = vsel %vm2188, %v2366, 0
    %v2432 = vsel %vm2384, %v1436, 0
    %2434 = vmatprep.subr.bf16.mxu0 0
    %2435 = vmatpush1.bf16.msra.mxu0 %v2432
    %2436 = vmatprep.subr.bf16.mxu0 0
    %2437 = vmatpush1.bf16.msra.mxu0 0
    %2438 = vmatprep.subr.bf16.mxu0 0
    %2439 = vmatpush1.bf16.msra.mxu0 0
    %2440 = vmatprep.subr.bf16.mxu0 0
    %2441 = vmatpush1.bf16.msra.mxu0 0
    %2442 = vmatprep.subr.bf16.mxu0 0
    %2443 = vmatpush1.bf16.msra.mxu0 0
    %2444 = vmatprep.subr.bf16.mxu0 0
    %2445 = vmatpush1.bf16.msra.mxu0 0
    %2446 = vmatprep.subr.bf16.mxu0 0
    %2447 = vmatpush1.bf16.msra.mxu0 0
    %2448 = vmatprep.subr.bf16.mxu0 0
    %2449 = vmatpush1.bf16.msra.mxu0 0
    %2450 = vmatprep.subr.bf16.mxu0 0
    %2451 = vmatpush1.bf16.msra.mxu0 0
    %2452 = vmatprep.subr.bf16.mxu0 0
    %2453 = vmatpush1.bf16.msra.mxu0 0
    %2454 = vmatprep.subr.bf16.mxu0 0
    %2455 = vmatpush1.bf16.msra.mxu0 0
    %2456 = vmatprep.subr.bf16.mxu0 0
    %2457 = vmatpush1.bf16.msra.mxu0 0
    %2458 = vmatprep.subr.bf16.mxu0 0
    %2459 = vmatpush1.bf16.msra.mxu0 0
    %2460 = vmatprep.subr.bf16.mxu0 0
    %2461 = vmatpush1.bf16.msra.mxu0 0
    %2462 = vmatprep.subr.bf16.mxu0 0
    %2463 = vmatpush1.bf16.msra.mxu0 0
    %2464 = vmatprep.subr.bf16.mxu0 0
    %2465 = vmatpush1.bf16.msra.mxu0 0
    %2466 = vmatprep.mubr.bf16.mxu0 0
    %2467 = vmatmul.mubr.bf16.gmra.mrb[0].mxu0 %v2429
    %v2468 = vpop.f32.mrb[0].mxu0
    %v2469 = vadd.f32 0.0, %v2468
    %v2470 = vpop.f32.mrb[0].mxu0
    %v2471 = vpop.f32.mrb[0].mxu0
    %v2472 = vpop.f32.mrb[0].mxu0
    %2473 = vdwg.mxu0
    %v2475 = vsel %vm2188, %v2367, 0
    %v2478 = vsel %vm2384, %v1437, 0
    %2480 = vmatprep.subr.bf16.mxu0 0
    %2481 = vmatpush1.bf16.msra.mxu0 %v2478
    %2482 = vmatprep.subr.bf16.mxu0 0
    %2483 = vmatpush1.bf16.msra.mxu0 0
    %2484 = vmatprep.subr.bf16.mxu0 0
    %2485 = vmatpush1.bf16.msra.mxu0 0
    %2486 = vmatprep.subr.bf16.mxu0 0
    %2487 = vmatpush1.bf16.msra.mxu0 0
    %2488 = vmatprep.subr.bf16.mxu0 0
    %2489 = vmatpush1.bf16.msra.mxu0 0
    %2490 = vmatprep.subr.bf16.mxu0 0
    %2491 = vmatpush1.bf16.msra.mxu0 0
    %2492 = vmatprep.subr.bf16.mxu0 0
    %2493 = vmatpush1.bf16.msra.mxu0 0
    %2494 = vmatprep.subr.bf16.mxu0 0
    %2495 = vmatpush1.bf16.msra.mxu0 0
    %2496 = vmatprep.subr.bf16.mxu0 0
    %2497 = vmatpush1.bf16.msra.mxu0 0
    %2498 = vmatprep.subr.bf16.mxu0 0
    %2499 = vmatpush1.bf16.msra.mxu0 0
    %2500 = vmatprep.subr.bf16.mxu0 0
    %2501 = vmatpush1.bf16.msra.mxu0 0
    %2502 = vmatprep.subr.bf16.mxu0 0
    %2503 = vmatpush1.bf16.msra.mxu0 0
    %2504 = vmatprep.subr.bf16.mxu0 0
    %2505 = vmatpush1.bf16.msra.mxu0 0
    %2506 = vmatprep.subr.bf16.mxu0 0
    %2507 = vmatpush1.bf16.msra.mxu0 0
    %2508 = vmatprep.subr.bf16.mxu0 0
    %2509 = vmatpush1.bf16.msra.mxu0 0
    %2510 = vmatprep.subr.bf16.mxu0 0
    %2511 = vmatpush1.bf16.msra.mxu0 0
    %2512 = vmatprep.mubr.bf16.mxu0 0
    %2513 = vmatmul.mubr.bf16.gmra.mrb[0].mxu0 %v2475
    %v2514 = vpop.f32.mrb[0].mxu0
    %v2515 = vadd.f32 0.0, %v2514
    %v2516 = vpop.f32.mrb[0].mxu0
    %v2517 = vpop.f32.mrb[0].mxu0
    %v2518 = vpop.f32.mrb[0].mxu0
    %2519 = vdwg.mxu0
    %v2521 = vsel %vm2188, %v2368, 0
    %v2524 = vsel %vm2384, %v1438, 0
    %2526 = vmatprep.subr.bf16.mxu0 0
    %2527 = vmatpush1.bf16.msra.mxu0 %v2524
    %2528 = vmatprep.subr.bf16.mxu0 0
    %2529 = vmatpush1.bf16.msra.mxu0 0
    %2530 = vmatprep.subr.bf16.mxu0 0
    %2531 = vmatpush1.bf16.msra.mxu0 0
    %2532 = vmatprep.subr.bf16.mxu0 0
    %2533 = vmatpush1.bf16.msra.mxu0 0
    %2534 = vmatprep.subr.bf16.mxu0 0
    %2535 = vmatpush1.bf16.msra.mxu0 0
    %2536 = vmatprep.subr.bf16.mxu0 0
    %2537 = vmatpush1.bf16.msra.mxu0 0
    %2538 = vmatprep.subr.bf16.mxu0 0
    %2539 = vmatpush1.bf16.msra.mxu0 0
    %2540 = vmatprep.subr.bf16.mxu0 0
    %2541 = vmatpush1.bf16.msra.mxu0 0
    %2542 = vmatprep.subr.bf16.mxu0 0
    %2543 = vmatpush1.bf16.msra.mxu0 0
    %2544 = vmatprep.subr.bf16.mxu0 0
    %2545 = vmatpush1.bf16.msra.mxu0 0
    %2546 = vmatprep.subr.bf16.mxu0 0
    %2547 = vmatpush1.bf16.msra.mxu0 0
    %2548 = vmatprep.subr.bf16.mxu0 0
    %2549 = vmatpush1.bf16.msra.mxu0 0
    %2550 = vmatprep.subr.bf16.mxu0 0
    %2551 = vmatpush1.bf16.msra.mxu0 0
    %2552 = vmatprep.subr.bf16.mxu0 0
    %2553 = vmatpush1.bf16.msra.mxu0 0
    %2554 = vmatprep.subr.bf16.mxu0 0
    %2555 = vmatpush1.bf16.msra.mxu0 0
    %2556 = vmatprep.subr.bf16.mxu0 0
    %2557 = vmatpush1.bf16.msra.mxu0 0
    %2558 = vmatprep.mubr.bf16.mxu0 0
    %2559 = vmatmul.mubr.bf16.gmra.mrb[0].mxu0 %v2521
    %v2560 = vpop.f32.mrb[0].mxu0
    %v2561 = vadd.f32 0.0, %v2560
    %v2562 = vpop.f32.mrb[0].mxu0
    %v2563 = vpop.f32.mrb[0].mxu0
    %v2564 = vpop.f32.mrb[0].mxu0
    %2565 = vdwg.mxu0
    %v2567 = vsel %vm2188, %v2369, 0
    %v2570 = vsel %vm2384, %v1439, 0
    %2572 = vmatprep.subr.bf16.mxu0 0
    %2573 = vmatpush1.bf16.msra.mxu0 %v2570
    %2574 = vmatprep.subr.bf16.mxu0 0
    %2575 = vmatpush1.bf16.msra.mxu0 0
    %2576 = vmatprep.subr.bf16.mxu0 0
    %2577 = vmatpush1.bf16.msra.mxu0 0
    %2578 = vmatprep.subr.bf16.mxu0 0
    %2579 = vmatpush1.bf16.msra.mxu0 0
    %2580 = vmatprep.subr.bf16.mxu0 0
    %2581 = vmatpush1.bf16.msra.mxu0 0
    %2582 = vmatprep.subr.bf16.mxu0 0
    %2583 = vmatpush1.bf16.msra.mxu0 0
    %2584 = vmatprep.subr.bf16.mxu0 0
    %2585 = vmatpush1.bf16.msra.mxu0 0
    %2586 = vmatprep.subr.bf16.mxu0 0
    %2587 = vmatpush1.bf16.msra.mxu0 0
    %2588 = vmatprep.subr.bf16.mxu0 0
    %2589 = vmatpush1.bf16.msra.mxu0 0
    %2590 = vmatprep.subr.bf16.mxu0 0
    %2591 = vmatpush1.bf16.msra.mxu0 0
    %2592 = vmatprep.subr.bf16.mxu0 0
    %2593 = vmatpush1.bf16.msra.mxu0 0
    %2594 = vmatprep.subr.bf16.mxu0 0
    %2595 = vmatpush1.bf16.msra.mxu0 0
    %2596 = vmatprep.subr.bf16.mxu0 0
    %2597 = vmatpush1.bf16.msra.mxu0 0
    %2598 = vmatprep.subr.bf16.mxu0 0
    %2599 = vmatpush1.bf16.msra.mxu0 0
    %2600 = vmatprep.subr.bf16.mxu0 0
    %2601 = vmatpush1.bf16.msra.mxu0 0
    %2602 = vmatprep.subr.bf16.mxu0 0
    %2603 = vmatpush1.bf16.msra.mxu0 0
    %2604 = vmatprep.mubr.bf16.mxu0 0
    %2605 = vmatmul.mubr.bf16.gmra.mrb[0].mxu0 %v2567
    %v2606 = vpop.f32.mrb[0].mxu0
    %v2607 = vadd.f32 0.0, %v2606
    %v2608 = vpop.f32.mrb[0].mxu0
    %v2609 = vpop.f32.mrb[0].mxu0
    %v2610 = vpop.f32.mrb[0].mxu0
    %2611 = vdwg.mxu0
    %v2613 = vsel %vm2188, %v2370, 0
    %v2616 = vsel %vm2384, %v1440, 0
    %2618 = vmatprep.subr.bf16.mxu0 0
    %2619 = vmatpush1.bf16.msra.mxu0 %v2616
    %2620 = vmatprep.subr.bf16.mxu0 0
    %2621 = vmatpush1.bf16.msra.mxu0 0
    %2622 = vmatprep.subr.bf16.mxu0 0
    %2623 = vmatpush1.bf16.msra.mxu0 0
    %2624 = vmatprep.subr.bf16.mxu0 0
    %2625 = vmatpush1.bf16.msra.mxu0 0
    %2626 = vmatprep.subr.bf16.mxu0 0
    %2627 = vmatpush1.bf16.msra.mxu0 0
    %2628 = vmatprep.subr.bf16.mxu0 0
    %2629 = vmatpush1.bf16.msra.mxu0 0
    %2630 = vmatprep.subr.bf16.mxu0 0
    %2631 = vmatpush1.bf16.msra.mxu0 0
    %2632 = vmatprep.subr.bf16.mxu0 0
    %2633 = vmatpush1.bf16.msra.mxu0 0
    %2634 = vmatprep.subr.bf16.mxu0 0
    %2635 = vmatpush1.bf16.msra.mxu0 0
    %2636 = vmatprep.subr.bf16.mxu0 0
    %2637 = vmatpush1.bf16.msra.mxu0 0
    %2638 = vmatprep.subr.bf16.mxu0 0
    %2639 = vmatpush1.bf16.msra.mxu0 0
    %2640 = vmatprep.subr.bf16.mxu0 0
    %2641 = vmatpush1.bf16.msra.mxu0 0
    %2642 = vmatprep.subr.bf16.mxu0 0
    %2643 = vmatpush1.bf16.msra.mxu0 0
    %2644 = vmatprep.subr.bf16.mxu0 0
    %2645 = vmatpush1.bf16.msra.mxu0 0
    %2646 = vmatprep.subr.bf16.mxu0 0
    %2647 = vmatpush1.bf16.msra.mxu0 0
    %2648 = vmatprep.subr.bf16.mxu0 0
    %2649 = vmatpush1.bf16.msra.mxu0 0
    %2650 = vmatprep.mubr.bf16.mxu0 0
    %2651 = vmatmul.mubr.bf16.gmra.mrb[0].mxu0 %v2613
    %v2652 = vpop.f32.mrb[0].mxu0
    %v2653 = vadd.f32 0.0, %v2652
    %v2654 = vpop.f32.mrb[0].mxu0
    %v2655 = vpop.f32.mrb[0].mxu0
    %v2656 = vpop.f32.mrb[0].mxu0
    %2657 = vdwg.mxu0
    %v2659 = vsel %vm2188, %v2371, 0
    %v2662 = vsel %vm2384, %v1441, 0
    %2664 = vmatprep.subr.bf16.mxu0 0
    %2665 = vmatpush1.bf16.msra.mxu0 %v2662
    %2666 = vmatprep.subr.bf16.mxu0 0
    %2667 = vmatpush1.bf16.msra.mxu0 0
    %2668 = vmatprep.subr.bf16.mxu0 0
    %2669 = vmatpush1.bf16.msra.mxu0 0
    %2670 = vmatprep.subr.bf16.mxu0 0
    %2671 = vmatpush1.bf16.msra.mxu0 0
    %2672 = vmatprep.subr.bf16.mxu0 0
    %2673 = vmatpush1.bf16.msra.mxu0 0
    %2674 = vmatprep.subr.bf16.mxu0 0
    %2675 = vmatpush1.bf16.msra.mxu0 0
    %2676 = vmatprep.subr.bf16.mxu0 0
    %2677 = vmatpush1.bf16.msra.mxu0 0
    %2678 = vmatprep.subr.bf16.mxu0 0
    %2679 = vmatpush1.bf16.msra.mxu0 0
    %2680 = vmatprep.subr.bf16.mxu0 0
    %2681 = vmatpush1.bf16.msra.mxu0 0
    %2682 = vmatprep.subr.bf16.mxu0 0
    %2683 = vmatpush1.bf16.msra.mxu0 0
    %2684 = vmatprep.subr.bf16.mxu0 0
    %2685 = vmatpush1.bf16.msra.mxu0 0
    %2686 = vmatprep.subr.bf16.mxu0 0
    %2687 = vmatpush1.bf16.msra.mxu0 0
    %2688 = vmatprep.subr.bf16.mxu0 0
    %2689 = vmatpush1.bf16.msra.mxu0 0
    %2690 = vmatprep.subr.bf16.mxu0 0
    %2691 = vmatpush1.bf16.msra.mxu0 0
    %2692 = vmatprep.subr.bf16.mxu0 0
    %2693 = vmatpush1.bf16.msra.mxu0 0
    %2694 = vmatprep.subr.bf16.mxu0 0
    %2695 = vmatpush1.bf16.msra.mxu0 0
    %2696 = vmatprep.mubr.bf16.mxu0 0
    %2697 = vmatmul.mubr.bf16.gmra.mrb[0].mxu0 %v2659
    %v2698 = vpop.f32.mrb[0].mxu0
    %v2699 = vadd.f32 0.0, %v2698
    %v2700 = vpop.f32.mrb[0].mxu0
    %v2701 = vpop.f32.mrb[0].mxu0
    %v2702 = vpop.f32.mrb[0].mxu0
    %2703 = vdwg.mxu0
    %v2705 = vsel %vm2188, %v2372, 0
    %v2708 = vsel %vm2384, %v1442, 0
    %2710 = vmatprep.subr.bf16.mxu0 0
    %2711 = vmatpush1.bf16.msra.mxu0 %v2708
    %2712 = vmatprep.subr.bf16.mxu0 0
    %2713 = vmatpush1.bf16.msra.mxu0 0
    %2714 = vmatprep.subr.bf16.mxu0 0
    %2715 = vmatpush1.bf16.msra.mxu0 0
    %2716 = vmatprep.subr.bf16.mxu0 0
    %2717 = vmatpush1.bf16.msra.mxu0 0
    %2718 = vmatprep.subr.bf16.mxu0 0
    %2719 = vmatpush1.bf16.msra.mxu0 0
    %2720 = vmatprep.subr.bf16.mxu0 0
    %2721 = vmatpush1.bf16.msra.mxu0 0
    %2722 = vmatprep.subr.bf16.mxu0 0
    %2723 = vmatpush1.bf16.msra.mxu0 0
    %2724 = vmatprep.subr.bf16.mxu0 0
    %2725 = vmatpush1.bf16.msra.mxu0 0
    %2726 = vmatprep.subr.bf16.mxu0 0
    %2727 = vmatpush1.bf16.msra.mxu0 0
    %2728 = vmatprep.subr.bf16.mxu0 0
    %2729 = vmatpush1.bf16.msra.mxu0 0
    %2730 = vmatprep.subr.bf16.mxu0 0
    %2731 = vmatpush1.bf16.msra.mxu0 0
    %2732 = vmatprep.subr.bf16.mxu0 0
    %2733 = vmatpush1.bf16.msra.mxu0 0
    %2734 = vmatprep.subr.bf16.mxu0 0
    %2735 = vmatpush1.bf16.msra.mxu0 0
    %2736 = vmatprep.subr.bf16.mxu0 0
    %2737 = vmatpush1.bf16.msra.mxu0 0
    %2738 = vmatprep.subr.bf16.mxu0 0
    %2739 = vmatpush1.bf16.msra.mxu0 0
    %2740 = vmatprep.subr.bf16.mxu0 0
    %2741 = vmatpush1.bf16.msra.mxu0 0
    %2742 = vmatprep.mubr.bf16.mxu0 0
    %2743 = vmatmul.mubr.bf16.gmra.mrb[0].mxu0 %v2705
    %v2744 = vpop.f32.mrb[0].mxu0
    %v2745 = vadd.f32 0.0, %v2744
    %v2746 = vpop.f32.mrb[0].mxu0
    %v2747 = vpop.f32.mrb[0].mxu0
    %v2748 = vpop.f32.mrb[0].mxu0
    %2749 = vdwg.mxu0
    %v2751 = vsel %vm2188, %v2373, 0
    %v2754 = vsel %vm2384, %v1443, 0
    %2756 = vmatprep.subr.bf16.mxu0 0
    %2757 = vmatpush1.bf16.msra.mxu0 %v2754
    %2758 = vmatprep.subr.bf16.mxu0 0
    %2759 = vmatpush1.bf16.msra.mxu0 0
    %2760 = vmatprep.subr.bf16.mxu0 0
    %2761 = vmatpush1.bf16.msra.mxu0 0
    %2762 = vmatprep.subr.bf16.mxu0 0
    %2763 = vmatpush1.bf16.msra.mxu0 0
    %2764 = vmatprep.subr.bf16.mxu0 0
    %2765 = vmatpush1.bf16.msra.mxu0 0
    %2766 = vmatprep.subr.bf16.mxu0 0
    %2767 = vmatpush1.bf16.msra.mxu0 0
    %2768 = vmatprep.subr.bf16.mxu0 0
    %2769 = vmatpush1.bf16.msra.mxu0 0
    %2770 = vmatprep.subr.bf16.mxu0 0
    %2771 = vmatpush1.bf16.msra.mxu0 0
    %2772 = vmatprep.subr.bf16.mxu0 0
    %2773 = vmatpush1.bf16.msra.mxu0 0
    %2774 = vmatprep.subr.bf16.mxu0 0
    %2775 = vmatpush1.bf16.msra.mxu0 0
    %2776 = vmatprep.subr.bf16.mxu0 0
    %2777 = vmatpush1.bf16.msra.mxu0 0
    %2778 = vmatprep.subr.bf16.mxu0 0
    %2779 = vmatpush1.bf16.msra.mxu0 0
    %2780 = vmatprep.subr.bf16.mxu0 0
    %2781 = vmatpush1.bf16.msra.mxu0 0
    %2782 = vmatprep.subr.bf16.mxu0 0
    %2783 = vmatpush1.bf16.msra.mxu0 0
    %2784 = vmatprep.subr.bf16.mxu0 0
    %2785 = vmatpush1.bf16.msra.mxu0 0
    %2786 = vmatprep.subr.bf16.mxu0 0
    %2787 = vmatpush1.bf16.msra.mxu0 0
    %2788 = vmatprep.mubr.bf16.mxu0 0
    %2789 = vmatmul.mubr.bf16.gmra.mrb[0].mxu0 %v2751
    %v2790 = vpop.f32.mrb[0].mxu0
    %v2791 = vadd.f32 0.0, %v2790
    %v2792 = vpop.f32.mrb[0].mxu0
    %v2793 = vpop.f32.mrb[0].mxu0
    %v2794 = vpop.f32.mrb[0].mxu0
    %2795 = vdwg.mxu0
    %v2797 = vsel %vm2188, %v2374, 0
    %v2800 = vsel %vm2384, %v1444, 0
    %2802 = vmatprep.subr.bf16.mxu0 0
    %2803 = vmatpush1.bf16.msra.mxu0 %v2800
    %2804 = vmatprep.subr.bf16.mxu0 0
    %2805 = vmatpush1.bf16.msra.mxu0 0
    %2806 = vmatprep.subr.bf16.mxu0 0
    %2807 = vmatpush1.bf16.msra.mxu0 0
    %2808 = vmatprep.subr.bf16.mxu0 0
    %2809 = vmatpush1.bf16.msra.mxu0 0
    %2810 = vmatprep.subr.bf16.mxu0 0
    %2811 = vmatpush1.bf16.msra.mxu0 0
    %2812 = vmatprep.subr.bf16.mxu0 0
    %2813 = vmatpush1.bf16.msra.mxu0 0
    %2814 = vmatprep.subr.bf16.mxu0 0
    %2815 = vmatpush1.bf16.msra.mxu0 0
    %2816 = vmatprep.subr.bf16.mxu0 0
    %2817 = vmatpush1.bf16.msra.mxu0 0
    %2818 = vmatprep.subr.bf16.mxu0 0
    %2819 = vmatpush1.bf16.msra.mxu0 0
    %2820 = vmatprep.subr.bf16.mxu0 0
    %2821 = vmatpush1.bf16.msra.mxu0 0
    %2822 = vmatprep.subr.bf16.mxu0 0
    %2823 = vmatpush1.bf16.msra.mxu0 0
    %2824 = vmatprep.subr.bf16.mxu0 0
    %2825 = vmatpush1.bf16.msra.mxu0 0
    %2826 = vmatprep.subr.bf16.mxu0 0
    %2827 = vmatpush1.bf16.msra.mxu0 0
    %2828 = vmatprep.subr.bf16.mxu0 0
    %2829 = vmatpush1.bf16.msra.mxu0 0
    %2830 = vmatprep.subr.bf16.mxu0 0
    %2831 = vmatpush1.bf16.msra.mxu0 0
    %2832 = vmatprep.subr.bf16.mxu0 0
    %2833 = vmatpush1.bf16.msra.mxu0 0
    %2834 = vmatprep.mubr.bf16.mxu0 0
    %2835 = vmatmul.mubr.bf16.gmra.mrb[0].mxu0 %v2797
    %v2836 = vpop.f32.mrb[0].mxu0
    %v2837 = vadd.f32 0.0, %v2836
    %v2838 = vpop.f32.mrb[0].mxu0
    %v2839 = vpop.f32.mrb[0].mxu0
    %v2840 = vpop.f32.mrb[0].mxu0
    %2841 = vdwg.mxu0
    %v2843 = vsel %vm2188, %v2375, 0
    %v2846 = vsel %vm2384, %v1445, 0
    %2848 = vmatprep.subr.bf16.mxu0 0
    %2849 = vmatpush1.bf16.msra.mxu0 %v2846
    %2850 = vmatprep.subr.bf16.mxu0 0
    %2851 = vmatpush1.bf16.msra.mxu0 0
    %2852 = vmatprep.subr.bf16.mxu0 0
    %2853 = vmatpush1.bf16.msra.mxu0 0
    %2854 = vmatprep.subr.bf16.mxu0 0
    %2855 = vmatpush1.bf16.msra.mxu0 0
    %2856 = vmatprep.subr.bf16.mxu0 0
    %2857 = vmatpush1.bf16.msra.mxu0 0
    %2858 = vmatprep.subr.bf16.mxu0 0
    %2859 = vmatpush1.bf16.msra.mxu0 0
    %2860 = vmatprep.subr.bf16.mxu0 0
    %2861 = vmatpush1.bf16.msra.mxu0 0
    %2862 = vmatprep.subr.bf16.mxu0 0
    %2863 = vmatpush1.bf16.msra.mxu0 0
    %2864 = vmatprep.subr.bf16.mxu0 0
    %2865 = vmatpush1.bf16.msra.mxu0 0
    %2866 = vmatprep.subr.bf16.mxu0 0
    %2867 = vmatpush1.bf16.msra.mxu0 0
    %2868 = vmatprep.subr.bf16.mxu0 0
    %2869 = vmatpush1.bf16.msra.mxu0 0
    %2870 = vmatprep.subr.bf16.mxu0 0
    %2871 = vmatpush1.bf16.msra.mxu0 0
    %2872 = vmatprep.subr.bf16.mxu0 0
    %2873 = vmatpush1.bf16.msra.mxu0 0
    %2874 = vmatprep.subr.bf16.mxu0 0
    %2875 = vmatpush1.bf16.msra.mxu0 0
    %2876 = vmatprep.subr.bf16.mxu0 0
    %2877 = vmatpush1.bf16.msra.mxu0 0
    %2878 = vmatprep.subr.bf16.mxu0 0
    %2879 = vmatpush1.bf16.msra.mxu0 0
    %2880 = vmatprep.mubr.bf16.mxu0 0
    %2881 = vmatmul.mubr.bf16.gmra.mrb[0].mxu0 %v2843
    %v2882 = vpop.f32.mrb[0].mxu0
    %v2883 = vadd.f32 0.0, %v2882
    %v2884 = vpop.f32.mrb[0].mxu0
    %v2885 = vpop.f32.mrb[0].mxu0
    %v2886 = vpop.f32.mrb[0].mxu0
    %2887 = vdwg.mxu0
    %v2889 = vsel %vm2188, %v2376, 0
    %v2892 = vsel %vm2384, %v1446, 0
    %2894 = vmatprep.subr.bf16.mxu0 0
    %2895 = vmatpush1.bf16.msra.mxu0 %v2892
    %2896 = vmatprep.subr.bf16.mxu0 0
    %2897 = vmatpush1.bf16.msra.mxu0 0
    %2898 = vmatprep.subr.bf16.mxu0 0
    %2899 = vmatpush1.bf16.msra.mxu0 0
    %2900 = vmatprep.subr.bf16.mxu0 0
    %2901 = vmatpush1.bf16.msra.mxu0 0
    %2902 = vmatprep.subr.bf16.mxu0 0
    %2903 = vmatpush1.bf16.msra.mxu0 0
    %2904 = vmatprep.subr.bf16.mxu0 0
    %2905 = vmatpush1.bf16.msra.mxu0 0
    %2906 = vmatprep.subr.bf16.mxu0 0
    %2907 = vmatpush1.bf16.msra.mxu0 0
    %2908 = vmatprep.subr.bf16.mxu0 0
    %2909 = vmatpush1.bf16.msra.mxu0 0
    %2910 = vmatprep.subr.bf16.mxu0 0
    %2911 = vmatpush1.bf16.msra.mxu0 0
    %2912 = vmatprep.subr.bf16.mxu0 0
    %2913 = vmatpush1.bf16.msra.mxu0 0
    %2914 = vmatprep.subr.bf16.mxu0 0
    %2915 = vmatpush1.bf16.msra.mxu0 0
    %2916 = vmatprep.subr.bf16.mxu0 0
    %2917 = vmatpush1.bf16.msra.mxu0 0
    %2918 = vmatprep.subr.bf16.mxu0 0
    %2919 = vmatpush1.bf16.msra.mxu0 0
    %2920 = vmatprep.subr.bf16.mxu0 0
    %2921 = vmatpush1.bf16.msra.mxu0 0
    %2922 = vmatprep.subr.bf16.mxu0 0
    %2923 = vmatpush1.bf16.msra.mxu0 0
    %2924 = vmatprep.subr.bf16.mxu0 0
    %2925 = vmatpush1.bf16.msra.mxu0 0
    %2926 = vmatprep.mubr.bf16.mxu0 0
    %2927 = vmatmul.mubr.bf16.gmra.mrb[0].mxu0 %v2889
    %v2928 = vpop.f32.mrb[0].mxu0
    %v2929 = vadd.f32 0.0, %v2928
    %v2930 = vpop.f32.mrb[0].mxu0
    %v2931 = vpop.f32.mrb[0].mxu0
    %v2932 = vpop.f32.mrb[0].mxu0
    %2933 = vdwg.mxu0
    %v2935 = vsel %vm2188, %v2377, 0
    %v2938 = vsel %vm2384, %v1447, 0
    %2940 = vmatprep.subr.bf16.mxu0 0
    %2941 = vmatpush1.bf16.msra.mxu0 %v2938
    %2942 = vmatprep.subr.bf16.mxu0 0
    %2943 = vmatpush1.bf16.msra.mxu0 0
    %2944 = vmatprep.subr.bf16.mxu0 0
    %2945 = vmatpush1.bf16.msra.mxu0 0
    %2946 = vmatprep.subr.bf16.mxu0 0
    %2947 = vmatpush1.bf16.msra.mxu0 0
    %2948 = vmatprep.subr.bf16.mxu0 0
    %2949 = vmatpush1.bf16.msra.mxu0 0
    %2950 = vmatprep.subr.bf16.mxu0 0
    %2951 = vmatpush1.bf16.msra.mxu0 0
    %2952 = vmatprep.subr.bf16.mxu0 0
    %2953 = vmatpush1.bf16.msra.mxu0 0
    %2954 = vmatprep.subr.bf16.mxu0 0
    %2955 = vmatpush1.bf16.msra.mxu0 0
    %2956 = vmatprep.subr.bf16.mxu0 0
    %2957 = vmatpush1.bf16.msra.mxu0 0
    %2958 = vmatprep.subr.bf16.mxu0 0
    %2959 = vmatpush1.bf16.msra.mxu0 0
    %2960 = vmatprep.subr.bf16.mxu0 0
    %2961 = vmatpush1.bf16.msra.mxu0 0
    %2962 = vmatprep.subr.bf16.mxu0 0
    %2963 = vmatpush1.bf16.msra.mxu0 0
    %2964 = vmatprep.subr.bf16.mxu0 0
    %2965 = vmatpush1.bf16.msra.mxu0 0
    %2966 = vmatprep.subr.bf16.mxu0 0
    %2967 = vmatpush1.bf16.msra.mxu0 0
    %2968 = vmatprep.subr.bf16.mxu0 0
    %2969 = vmatpush1.bf16.msra.mxu0 0
    %2970 = vmatprep.subr.bf16.mxu0 0
    %2971 = vmatpush1.bf16.msra.mxu0 0
    %2972 = vmatprep.mubr.bf16.mxu0 0
    %2973 = vmatmul.mubr.bf16.gmra.mrb[0].mxu0 %v2935
    %v2974 = vpop.f32.mrb[0].mxu0
    %v2975 = vadd.f32 0.0, %v2974
    %v2976 = vpop.f32.mrb[0].mxu0
    %v2977 = vpop.f32.mrb[0].mxu0
    %v2978 = vpop.f32.mrb[0].mxu0
    %2979 = vdwg.mxu0
    %v2981 = vsel %vm2188, %v2378, 0
    %v2984 = vsel %vm2384, %v1448, 0
    %2986 = vmatprep.subr.bf16.mxu0 0
    %2987 = vmatpush1.bf16.msra.mxu0 %v2984
    %2988 = vmatprep.subr.bf16.mxu0 0
    %2989 = vmatpush1.bf16.msra.mxu0 0
    %2990 = vmatprep.subr.bf16.mxu0 0
    %2991 = vmatpush1.bf16.msra.mxu0 0
    %2992 = vmatprep.subr.bf16.mxu0 0
    %2993 = vmatpush1.bf16.msra.mxu0 0
    %2994 = vmatprep.subr.bf16.mxu0 0
    %2995 = vmatpush1.bf16.msra.mxu0 0
    %2996 = vmatprep.subr.bf16.mxu0 0
    %2997 = vmatpush1.bf16.msra.mxu0 0
    %2998 = vmatprep.subr.bf16.mxu0 0
    %2999 = vmatpush1.bf16.msra.mxu0 0
    %3000 = vmatprep.subr.bf16.mxu0 0
    %3001 = vmatpush1.bf16.msra.mxu0 0
    %3002 = vmatprep.subr.bf16.mxu0 0
    %3003 = vmatpush1.bf16.msra.mxu0 0
    %3004 = vmatprep.subr.bf16.mxu0 0
    %3005 = vmatpush1.bf16.msra.mxu0 0
    %3006 = vmatprep.subr.bf16.mxu0 0
    %3007 = vmatpush1.bf16.msra.mxu0 0
    %3008 = vmatprep.subr.bf16.mxu0 0
    %3009 = vmatpush1.bf16.msra.mxu0 0
    %3010 = vmatprep.subr.bf16.mxu0 0
    %3011 = vmatpush1.bf16.msra.mxu0 0
    %3012 = vmatprep.subr.bf16.mxu0 0
    %3013 = vmatpush1.bf16.msra.mxu0 0
    %3014 = vmatprep.subr.bf16.mxu0 0
    %3015 = vmatpush1.bf16.msra.mxu0 0
    %3016 = vmatprep.subr.bf16.mxu0 0
    %3017 = vmatpush1.bf16.msra.mxu0 0
    %3018 = vmatprep.mubr.bf16.mxu0 0
    %3019 = vmatmul.mubr.bf16.gmra.mrb[0].mxu0 %v2981
    %v3020 = vpop.f32.mrb[0].mxu0
    %v3021 = vadd.f32 0.0, %v3020
    %v3022 = vpop.f32.mrb[0].mxu0
    %v3023 = vpop.f32.mrb[0].mxu0
    %v3024 = vpop.f32.mrb[0].mxu0
    %3025 = vdwg.mxu0
    %v3027 = vsel %vm2188, %v2379, 0
    %v3030 = vsel %vm2384, %v1449, 0
    %3032 = vmatprep.subr.bf16.mxu0 0
    %3033 = vmatpush1.bf16.msra.mxu0 %v3030
    %3034 = vmatprep.subr.bf16.mxu0 0
    %3035 = vmatpush1.bf16.msra.mxu0 0
    %3036 = vmatprep.subr.bf16.mxu0 0
    %3037 = vmatpush1.bf16.msra.mxu0 0
    %3038 = vmatprep.subr.bf16.mxu0 0
    %3039 = vmatpush1.bf16.msra.mxu0 0
    %3040 = vmatprep.subr.bf16.mxu0 0
    %3041 = vmatpush1.bf16.msra.mxu0 0
    %3042 = vmatprep.subr.bf16.mxu0 0
    %3043 = vmatpush1.bf16.msra.mxu0 0
    %3044 = vmatprep.subr.bf16.mxu0 0
    %3045 = vmatpush1.bf16.msra.mxu0 0
    %3046 = vmatprep.subr.bf16.mxu0 0
    %3047 = vmatpush1.bf16.msra.mxu0 0
    %3048 = vmatprep.subr.bf16.mxu0 0
    %3049 = vmatpush1.bf16.msra.mxu0 0
    %3050 = vmatprep.subr.bf16.mxu0 0
    %3051 = vmatpush1.bf16.msra.mxu0 0
    %3052 = vmatprep.subr.bf16.mxu0 0
    %3053 = vmatpush1.bf16.msra.mxu0 0
    %3054 = vmatprep.subr.bf16.mxu0 0
    %3055 = vmatpush1.bf16.msra.mxu0 0
    %3056 = vmatprep.subr.bf16.mxu0 0
    %3057 = vmatpush1.bf16.msra.mxu0 0
    %3058 = vmatprep.subr.bf16.mxu0 0
    %3059 = vmatpush1.bf16.msra.mxu0 0
    %3060 = vmatprep.subr.bf16.mxu0 0
    %3061 = vmatpush1.bf16.msra.mxu0 0
    %3062 = vmatprep.subr.bf16.mxu0 0
    %3063 = vmatpush1.bf16.msra.mxu0 0
    %3064 = vmatprep.mubr.bf16.mxu0 0
    %3065 = vmatmul.mubr.bf16.gmra.mrb[0].mxu0 %v3027
    %v3066 = vpop.f32.mrb[0].mxu0
    %v3067 = vadd.f32 0.0, %v3066
    %v3068 = vpop.f32.mrb[0].mxu0
    %v3069 = vpop.f32.mrb[0].mxu0
    %v3070 = vpop.f32.mrb[0].mxu0
    %3071 = vdwg.mxu0
    %v3073 = vsel %vm2188, %v2380, 0
    %v3076 = vsel %vm2384, %v1450, 0
    %3078 = vmatprep.subr.bf16.mxu0 0
    %3079 = vmatpush1.bf16.msra.mxu0 %v3076
    %3080 = vmatprep.subr.bf16.mxu0 0
    %3081 = vmatpush1.bf16.msra.mxu0 0
    %3082 = vmatprep.subr.bf16.mxu0 0
    %3083 = vmatpush1.bf16.msra.mxu0 0
    %3084 = vmatprep.subr.bf16.mxu0 0
    %3085 = vmatpush1.bf16.msra.mxu0 0
    %3086 = vmatprep.subr.bf16.mxu0 0
    %3087 = vmatpush1.bf16.msra.mxu0 0
    %3088 = vmatprep.subr.bf16.mxu0 0
    %3089 = vmatpush1.bf16.msra.mxu0 0
    %3090 = vmatprep.subr.bf16.mxu0 0
    %3091 = vmatpush1.bf16.msra.mxu0 0
    %3092 = vmatprep.subr.bf16.mxu0 0
    %3093 = vmatpush1.bf16.msra.mxu0 0
    %3094 = vmatprep.subr.bf16.mxu0 0
    %3095 = vmatpush1.bf16.msra.mxu0 0
    %3096 = vmatprep.subr.bf16.mxu0 0
    %3097 = vmatpush1.bf16.msra.mxu0 0
    %3098 = vmatprep.subr.bf16.mxu0 0
    %3099 = vmatpush1.bf16.msra.mxu0 0
    %3100 = vmatprep.subr.bf16.mxu0 0
    %3101 = vmatpush1.bf16.msra.mxu0 0
    %3102 = vmatprep.subr.bf16.mxu0 0
    %3103 = vmatpush1.bf16.msra.mxu0 0
    %3104 = vmatprep.subr.bf16.mxu0 0
    %3105 = vmatpush1.bf16.msra.mxu0 0
    %3106 = vmatprep.subr.bf16.mxu0 0
    %3107 = vmatpush1.bf16.msra.mxu0 0
    %3108 = vmatprep.subr.bf16.mxu0 0
    %3109 = vmatpush1.bf16.msra.mxu0 0
    %3110 = vmatprep.mubr.bf16.mxu0 0
    %3111 = vmatmul.mubr.bf16.gmra.mrb[0].mxu0 %v3073
    %v3112 = vpop.f32.mrb[0].mxu0
    %v3113 = vadd.f32 0.0, %v3112
    %v3114 = vpop.f32.mrb[0].mxu0
    %v3115 = vpop.f32.mrb[0].mxu0
    %v3116 = vpop.f32.mrb[0].mxu0
    %3117 = vdwg.mxu0
    %v3118 = vcombine.low %v2423, %v2607
    %v3119 = vcombine.high %v2423, %v2607
    %v3121 = vunpack.c.l.s4 1983009808
    %v3122 = vunpack.c.0.s8 %v3121
    %v3123 = vlaneseq
    %v3124 = vshrl.u32 %v3123, 7
    %v3125 = vsub.s32 %v3122, %v3124
    %v3126 = vrot.slane %v3118, %v3125
    %v3128 = vunpack.c.l.s4 1983009808
    %v3129 = vunpack.c.0.s8 %v3128
    %v3130 = vlaneseq
    %v3131 = vshrl.u32 %v3130, 7
    %v3132 = vsub.s32 %v3129, %v3131
    %v3133 = vrot.slane %v3119, %v3132
    %v3134 = vcombine.low %v2515, %v2699
    %v3135 = vcombine.high %v2515, %v2699
    %v3137 = vunpack.c.l.s4 1983009808
    %v3138 = vunpack.c.0.s8 %v3137
    %v3139 = vlaneseq
    %v3140 = vshrl.u32 %v3139, 7
    %v3141 = vsub.s32 %v3138, %v3140
    %v3142 = vrot.slane %v3134, %v3141
    %v3144 = vunpack.c.l.s4 1983009808
    %v3145 = vunpack.c.0.s8 %v3144
    %v3146 = vlaneseq
    %v3147 = vshrl.u32 %v3146, 7
    %v3148 = vsub.s32 %v3145, %v3147
    %v3149 = vrot.slane %v3135, %v3148
    %v3150 = vcombine.low %v2791, %v2975
    %v3151 = vcombine.high %v2791, %v2975
    %v3153 = vunpack.c.l.s4 1983009808
    %v3154 = vunpack.c.0.s8 %v3153
    %v3155 = vlaneseq
    %v3156 = vshrl.u32 %v3155, 7
    %v3157 = vsub.s32 %v3154, %v3156
    %v3158 = vrot.slane %v3150, %v3157
    %v3160 = vunpack.c.l.s4 1983009808
    %v3161 = vunpack.c.0.s8 %v3160
    %v3162 = vlaneseq
    %v3163 = vshrl.u32 %v3162, 7
    %v3164 = vsub.s32 %v3161, %v3163
    %v3165 = vrot.slane %v3151, %v3164
    %v3166 = vcombine.low %v2883, %v3067
    %v3167 = vcombine.high %v2883, %v3067
    %v3169 = vunpack.c.l.s4 1983009808
    %v3170 = vunpack.c.0.s8 %v3169
    %v3171 = vlaneseq
    %v3172 = vshrl.u32 %v3171, 7
    %v3173 = vsub.s32 %v3170, %v3172
    %v3174 = vrot.slane %v3166, %v3173
    %v3176 = vunpack.c.l.s4 1983009808
    %v3177 = vunpack.c.0.s8 %v3176
    %v3178 = vlaneseq
    %v3179 = vshrl.u32 %v3178, 7
    %v3180 = vsub.s32 %v3177, %v3179
    %v3181 = vrot.slane %v3167, %v3180
    %v3182 = vcombine.low %v3126, %v3142
    %v3183 = vcombine.high %v3126, %v3142
    %v3185 = vunpack.c.l.s4 1934713408
    %v3186 = vunpack.c.0.s8 %v3185
    %v3187 = vlaneseq
    %v3188 = vshrl.u32 %v3187, 7
    %v3189 = vsub.s32 %v3186, %v3188
    %v3190 = vrot.slane %v3182, %v3189
    %v3192 = vunpack.c.l.s4 1934713408
    %v3193 = vunpack.c.0.s8 %v3192
    %v3194 = vlaneseq
    %v3195 = vshrl.u32 %v3194, 7
    %v3196 = vsub.s32 %v3193, %v3195
    %v3197 = vrot.slane %v3183, %v3196
    %v3198 = vcombine.low %v3133, %v3149
    %v3199 = vcombine.high %v3133, %v3149
    %v3201 = vunpack.c.l.s4 1934713408
    %v3202 = vunpack.c.0.s8 %v3201
    %v3203 = vlaneseq
    %v3204 = vshrl.u32 %v3203, 7
    %v3205 = vsub.s32 %v3202, %v3204
    %v3206 = vrot.slane %v3198, %v3205
    %v3208 = vunpack.c.l.s4 1934713408
    %v3209 = vunpack.c.0.s8 %v3208
    %v3210 = vlaneseq
    %v3211 = vshrl.u32 %v3210, 7
    %v3212 = vsub.s32 %v3209, %v3211
    %v3213 = vrot.slane %v3199, %v3212
    %v3214 = vcombine.low %v3158, %v3174
    %v3215 = vcombine.high %v3158, %v3174
    %v3217 = vunpack.c.l.s4 1934713408
    %v3218 = vunpack.c.0.s8 %v3217
    %v3219 = vlaneseq
    %v3220 = vshrl.u32 %v3219, 7
    %v3221 = vsub.s32 %v3218, %v3220
    %v3222 = vrot.slane %v3214, %v3221
    %v3224 = vunpack.c.l.s4 1934713408
    %v3225 = vunpack.c.0.s8 %v3224
    %v3226 = vlaneseq
    %v3227 = vshrl.u32 %v3226, 7
    %v3228 = vsub.s32 %v3225, %v3227
    %v3229 = vrot.slane %v3215, %v3228
    %v3230 = vcombine.low %v3165, %v3181
    %v3231 = vcombine.high %v3165, %v3181
    %v3233 = vunpack.c.l.s4 1934713408
    %v3234 = vunpack.c.0.s8 %v3233
    %v3235 = vlaneseq
    %v3236 = vshrl.u32 %v3235, 7
    %v3237 = vsub.s32 %v3234, %v3236
    %v3238 = vrot.slane %v3230, %v3237
    %v3240 = vunpack.c.l.s4 1934713408
    %v3241 = vunpack.c.0.s8 %v3240
    %v3242 = vlaneseq
    %v3243 = vshrl.u32 %v3242, 7
    %v3244 = vsub.s32 %v3241, %v3243
    %v3245 = vrot.slane %v3231, %v3244
    %v3246 = vcombine.low %v3190, %v3222
    %v3247 = vcombine.high %v3190, %v3222
    %v3248 = vcombine.low %v3197, %v3229
    %v3249 = vcombine.high %v3197, %v3229
    %v3250 = vcombine.low %v3206, %v3238
    %v3251 = vcombine.high %v3206, %v3238
    %v3252 = vcombine.low %v3213, %v3245
    %v3253 = vcombine.high %v3213, %v3245
    %v3254 = vcombine.low %v2469, %v2653
    %v3255 = vcombine.high %v2469, %v2653
    %v3257 = vunpack.c.l.s4 1983009808
    %v3258 = vunpack.c.0.s8 %v3257
    %v3259 = vlaneseq
    %v3260 = vshrl.u32 %v3259, 7
    %v3261 = vsub.s32 %v3258, %v3260
    %v3262 = vrot.slane %v3254, %v3261
    %v3264 = vunpack.c.l.s4 1983009808
    %v3265 = vunpack.c.0.s8 %v3264
    %v3266 = vlaneseq
    %v3267 = vshrl.u32 %v3266, 7
    %v3268 = vsub.s32 %v3265, %v3267
    %v3269 = vrot.slane %v3255, %v3268
    %v3270 = vcombine.low %v2561, %v2745
    %v3271 = vcombine.high %v2561, %v2745
    %v3273 = vunpack.c.l.s4 1983009808
    %v3274 = vunpack.c.0.s8 %v3273
    %v3275 = vlaneseq
    %v3276 = vshrl.u32 %v3275, 7
    %v3277 = vsub.s32 %v3274, %v3276
    %v3278 = vrot.slane %v3270, %v3277
    %v3280 = vunpack.c.l.s4 1983009808
    %v3281 = vunpack.c.0.s8 %v3280
    %v3282 = vlaneseq
    %v3283 = vshrl.u32 %v3282, 7
    %v3284 = vsub.s32 %v3281, %v3283
    %v3285 = vrot.slane %v3271, %v3284
    %v3286 = vcombine.low %v2837, %v3021
    %v3287 = vcombine.high %v2837, %v3021
    %v3289 = vunpack.c.l.s4 1983009808
    %v3290 = vunpack.c.0.s8 %v3289
    %v3291 = vlaneseq
    %v3292 = vshrl.u32 %v3291, 7
    %v3293 = vsub.s32 %v3290, %v3292
    %v3294 = vrot.slane %v3286, %v3293
    %v3296 = vunpack.c.l.s4 1983009808
    %v3297 = vunpack.c.0.s8 %v3296
    %v3298 = vlaneseq
    %v3299 = vshrl.u32 %v3298, 7
    %v3300 = vsub.s32 %v3297, %v3299
    %v3301 = vrot.slane %v3287, %v3300
    %v3302 = vcombine.low %v2929, %v3113
    %v3303 = vcombine.high %v2929, %v3113
    %v3305 = vunpack.c.l.s4 1983009808
    %v3306 = vunpack.c.0.s8 %v3305
    %v3307 = vlaneseq
    %v3308 = vshrl.u32 %v3307, 7
    %v3309 = vsub.s32 %v3306, %v3308
    %v3310 = vrot.slane %v3302, %v3309
    %v3312 = vunpack.c.l.s4 1983009808
    %v3313 = vunpack.c.0.s8 %v3312
    %v3314 = vlaneseq
    %v3315 = vshrl.u32 %v3314, 7
    %v3316 = vsub.s32 %v3313, %v3315
    %v3317 = vrot.slane %v3303, %v3316
    %v3318 = vcombine.low %v3262, %v3278
    %v3319 = vcombine.high %v3262, %v3278
    %v3321 = vunpack.c.l.s4 1934713408
    %v3322 = vunpack.c.0.s8 %v3321
    %v3323 = vlaneseq
    %v3324 = vshrl.u32 %v3323, 7
    %v3325 = vsub.s32 %v3322, %v3324
    %v3326 = vrot.slane %v3318, %v3325
    %v3328 = vunpack.c.l.s4 1934713408
    %v3329 = vunpack.c.0.s8 %v3328
    %v3330 = vlaneseq
    %v3331 = vshrl.u32 %v3330, 7
    %v3332 = vsub.s32 %v3329, %v3331
    %v3333 = vrot.slane %v3319, %v3332
    %v3334 = vcombine.low %v3269, %v3285
    %v3335 = vcombine.high %v3269, %v3285
    %v3337 = vunpack.c.l.s4 1934713408
    %v3338 = vunpack.c.0.s8 %v3337
    %v3339 = vlaneseq
    %v3340 = vshrl.u32 %v3339, 7
    %v3341 = vsub.s32 %v3338, %v3340
    %v3342 = vrot.slane %v3334, %v3341
    %v3344 = vunpack.c.l.s4 1934713408
    %v3345 = vunpack.c.0.s8 %v3344
    %v3346 = vlaneseq
    %v3347 = vshrl.u32 %v3346, 7
    %v3348 = vsub.s32 %v3345, %v3347
    %v3349 = vrot.slane %v3335, %v3348
    %v3350 = vcombine.low %v3294, %v3310
    %v3351 = vcombine.high %v3294, %v3310
    %v3353 = vunpack.c.l.s4 1934713408
    %v3354 = vunpack.c.0.s8 %v3353
    %v3355 = vlaneseq
    %v3356 = vshrl.u32 %v3355, 7
    %v3357 = vsub.s32 %v3354, %v3356
    %v3358 = vrot.slane %v3350, %v3357
    %v3360 = vunpack.c.l.s4 1934713408
    %v3361 = vunpack.c.0.s8 %v3360
    %v3362 = vlaneseq
    %v3363 = vshrl.u32 %v3362, 7
    %v3364 = vsub.s32 %v3361, %v3363
    %v3365 = vrot.slane %v3351, %v3364
    %v3366 = vcombine.low %v3301, %v3317
    %v3367 = vcombine.high %v3301, %v3317
    %v3369 = vunpack.c.l.s4 1934713408
    %v3370 = vunpack.c.0.s8 %v3369
    %v3371 = vlaneseq
    %v3372 = vshrl.u32 %v3371, 7
    %v3373 = vsub.s32 %v3370, %v3372
    %v3374 = vrot.slane %v3366, %v3373
    %v3376 = vunpack.c.l.s4 1934713408
    %v3377 = vunpack.c.0.s8 %v3376
    %v3378 = vlaneseq
    %v3379 = vshrl.u32 %v3378, 7
    %v3380 = vsub.s32 %v3377, %v3379
    %v3381 = vrot.slane %v3367, %v3380
    %v3382 = vcombine.low %v3326, %v3358
    %v3383 = vcombine.high %v3326, %v3358
    %v3384 = vcombine.low %v3333, %v3365
    %v3385 = vcombine.high %v3333, %v3365
    %v3386 = vcombine.low %v3342, %v3374
    %v3387 = vcombine.high %v3342, %v3374
    %v3388 = vcombine.low %v3349, %v3381
    %v3389 = vcombine.high %v3349, %v3381
    %v3390 = vcombine.low %v3246, %v3248
    %v3391 = vcombine.high %v3246, %v3248
    %v3393 = vunpack.c.l.s4 1983009808
    %v3394 = vunpack.c.0.s8 %v3393
    %v3395 = vlaneseq
    %v3396 = vshrl.u32 %v3395, 7
    %v3397 = vsub.s32 %v3394, %v3396
    %v3398 = vrot.slane %v3390, %v3397
    %v3400 = vunpack.c.l.s4 1983009808
    %v3401 = vunpack.c.0.s8 %v3400
    %v3402 = vlaneseq
    %v3403 = vshrl.u32 %v3402, 7
    %v3404 = vsub.s32 %v3401, %v3403
    %v3405 = vrot.slane %v3391, %v3404
    %v3406 = vcombine.low %v3247, %v3249
    %v3407 = vcombine.high %v3247, %v3249
    %v3409 = vunpack.c.l.s4 1983009808
    %v3410 = vunpack.c.0.s8 %v3409
    %v3411 = vlaneseq
    %v3412 = vshrl.u32 %v3411, 7
    %v3413 = vsub.s32 %v3410, %v3412
    %v3414 = vrot.slane %v3406, %v3413
    %v3416 = vunpack.c.l.s4 1983009808
    %v3417 = vunpack.c.0.s8 %v3416
    %v3418 = vlaneseq
    %v3419 = vshrl.u32 %v3418, 7
    %v3420 = vsub.s32 %v3417, %v3419
    %v3421 = vrot.slane %v3407, %v3420
    %v3422 = vcombine.low %v3250, %v3252
    %v3423 = vcombine.high %v3250, %v3252
    %v3425 = vunpack.c.l.s4 1983009808
    %v3426 = vunpack.c.0.s8 %v3425
    %v3427 = vlaneseq
    %v3428 = vshrl.u32 %v3427, 7
    %v3429 = vsub.s32 %v3426, %v3428
    %v3430 = vrot.slane %v3422, %v3429
    %v3432 = vunpack.c.l.s4 1983009808
    %v3433 = vunpack.c.0.s8 %v3432
    %v3434 = vlaneseq
    %v3435 = vshrl.u32 %v3434, 7
    %v3436 = vsub.s32 %v3433, %v3435
    %v3437 = vrot.slane %v3423, %v3436
    %v3438 = vcombine.low %v3251, %v3253
    %v3439 = vcombine.high %v3251, %v3253
    %v3441 = vunpack.c.l.s4 1983009808
    %v3442 = vunpack.c.0.s8 %v3441
    %v3443 = vlaneseq
    %v3444 = vshrl.u32 %v3443, 7
    %v3445 = vsub.s32 %v3442, %v3444
    %v3446 = vrot.slane %v3438, %v3445
    %v3448 = vunpack.c.l.s4 1983009808
    %v3449 = vunpack.c.0.s8 %v3448
    %v3450 = vlaneseq
    %v3451 = vshrl.u32 %v3450, 7
    %v3452 = vsub.s32 %v3449, %v3451
    %v3453 = vrot.slane %v3439, %v3452
    %v3454 = vcombine.low %v3398, %v3414
    %v3455 = vcombine.high %v3398, %v3414
    %v3457 = vunpack.c.l.s4 1934713408
    %v3458 = vunpack.c.0.s8 %v3457
    %v3459 = vlaneseq
    %v3460 = vshrl.u32 %v3459, 7
    %v3461 = vsub.s32 %v3458, %v3460
    %v3462 = vrot.slane %v3454, %v3461
    %v3464 = vunpack.c.l.s4 1934713408
    %v3465 = vunpack.c.0.s8 %v3464
    %v3466 = vlaneseq
    %v3467 = vshrl.u32 %v3466, 7
    %v3468 = vsub.s32 %v3465, %v3467
    %v3469 = vrot.slane %v3455, %v3468
    %v3470 = vcombine.low %v3405, %v3421
    %v3471 = vcombine.high %v3405, %v3421
    %v3473 = vunpack.c.l.s4 1934713408
    %v3474 = vunpack.c.0.s8 %v3473
    %v3475 = vlaneseq
    %v3476 = vshrl.u32 %v3475, 7
    %v3477 = vsub.s32 %v3474, %v3476
    %v3478 = vrot.slane %v3470, %v3477
    %v3480 = vunpack.c.l.s4 1934713408
    %v3481 = vunpack.c.0.s8 %v3480
    %v3482 = vlaneseq
    %v3483 = vshrl.u32 %v3482, 7
    %v3484 = vsub.s32 %v3481, %v3483
    %v3485 = vrot.slane %v3471, %v3484
    %v3486 = vcombine.low %v3430, %v3446
    %v3487 = vcombine.high %v3430, %v3446
    %v3489 = vunpack.c.l.s4 1934713408
    %v3490 = vunpack.c.0.s8 %v3489
    %v3491 = vlaneseq
    %v3492 = vshrl.u32 %v3491, 7
    %v3493 = vsub.s32 %v3490, %v3492
    %v3494 = vrot.slane %v3486, %v3493
    %v3496 = vunpack.c.l.s4 1934713408
    %v3497 = vunpack.c.0.s8 %v3496
    %v3498 = vlaneseq
    %v3499 = vshrl.u32 %v3498, 7
    %v3500 = vsub.s32 %v3497, %v3499
    %v3501 = vrot.slane %v3487, %v3500
    %v3502 = vcombine.low %v3437, %v3453
    %v3503 = vcombine.high %v3437, %v3453
    %v3505 = vunpack.c.l.s4 1934713408
    %v3506 = vunpack.c.0.s8 %v3505
    %v3507 = vlaneseq
    %v3508 = vshrl.u32 %v3507, 7
    %v3509 = vsub.s32 %v3506, %v3508
    %v3510 = vrot.slane %v3502, %v3509
    %v3512 = vunpack.c.l.s4 1934713408
    %v3513 = vunpack.c.0.s8 %v3512
    %v3514 = vlaneseq
    %v3515 = vshrl.u32 %v3514, 7
    %v3516 = vsub.s32 %v3513, %v3515
    %v3517 = vrot.slane %v3503, %v3516
    %v3518 = vcombine.low %v3462, %v3494
    %v3519 = vcombine.high %v3462, %v3494
    %v3520 = vcombine.low %v3469, %v3501
    %v3521 = vcombine.high %v3469, %v3501
    %v3522 = vcombine.low %v3478, %v3510
    %v3523 = vcombine.high %v3478, %v3510
    %v3524 = vcombine.low %v3485, %v3517
    %v3525 = vcombine.high %v3485, %v3517
    %v3526 = vcombine.low %v3382, %v3384
    %v3527 = vcombine.high %v3382, %v3384
    %v3529 = vunpack.c.l.s4 1983009808
    %v3530 = vunpack.c.0.s8 %v3529
    %v3531 = vlaneseq
    %v3532 = vshrl.u32 %v3531, 7
    %v3533 = vsub.s32 %v3530, %v3532
    %v3534 = vrot.slane %v3526, %v3533
    %v3536 = vunpack.c.l.s4 1983009808
    %v3537 = vunpack.c.0.s8 %v3536
    %v3538 = vlaneseq
    %v3539 = vshrl.u32 %v3538, 7
    %v3540 = vsub.s32 %v3537, %v3539
    %v3541 = vrot.slane %v3527, %v3540
    %v3542 = vcombine.low %v3383, %v3385
    %v3543 = vcombine.high %v3383, %v3385
    %v3545 = vunpack.c.l.s4 1983009808
    %v3546 = vunpack.c.0.s8 %v3545
    %v3547 = vlaneseq
    %v3548 = vshrl.u32 %v3547, 7
    %v3549 = vsub.s32 %v3546, %v3548
    %v3550 = vrot.slane %v3542, %v3549
    %v3552 = vunpack.c.l.s4 1983009808
    %v3553 = vunpack.c.0.s8 %v3552
    %v3554 = vlaneseq
    %v3555 = vshrl.u32 %v3554, 7
    %v3556 = vsub.s32 %v3553, %v3555
    %v3557 = vrot.slane %v3543, %v3556
    %v3558 = vcombine.low %v3386, %v3388
    %v3559 = vcombine.high %v3386, %v3388
    %v3561 = vunpack.c.l.s4 1983009808
    %v3562 = vunpack.c.0.s8 %v3561
    %v3563 = vlaneseq
    %v3564 = vshrl.u32 %v3563, 7
    %v3565 = vsub.s32 %v3562, %v3564
    %v3566 = vrot.slane %v3558, %v3565
    %v3568 = vunpack.c.l.s4 1983009808
    %v3569 = vunpack.c.0.s8 %v3568
    %v3570 = vlaneseq
    %v3571 = vshrl.u32 %v3570, 7
    %v3572 = vsub.s32 %v3569, %v3571
    %v3573 = vrot.slane %v3559, %v3572
    %v3574 = vcombine.low %v3387, %v3389
    %v3575 = vcombine.high %v3387, %v3389
    %v3577 = vunpack.c.l.s4 1983009808
    %v3578 = vunpack.c.0.s8 %v3577
    %v3579 = vlaneseq
    %v3580 = vshrl.u32 %v3579, 7
    %v3581 = vsub.s32 %v3578, %v3580
    %v3582 = vrot.slane %v3574, %v3581
    %v3584 = vunpack.c.l.s4 1983009808
    %v3585 = vunpack.c.0.s8 %v3584
    %v3586 = vlaneseq
    %v3587 = vshrl.u32 %v3586, 7
    %v3588 = vsub.s32 %v3585, %v3587
    %v3589 = vrot.slane %v3575, %v3588
    %v3590 = vcombine.low %v3534, %v3550
    %v3591 = vcombine.high %v3534, %v3550
    %v3593 = vunpack.c.l.s4 1934713408
    %v3594 = vunpack.c.0.s8 %v3593
    %v3595 = vlaneseq
    %v3596 = vshrl.u32 %v3595, 7
    %v3597 = vsub.s32 %v3594, %v3596
    %v3598 = vrot.slane %v3590, %v3597
    %v3600 = vunpack.c.l.s4 1934713408
    %v3601 = vunpack.c.0.s8 %v3600
    %v3602 = vlaneseq
    %v3603 = vshrl.u32 %v3602, 7
    %v3604 = vsub.s32 %v3601, %v3603
    %v3605 = vrot.slane %v3591, %v3604
    %v3606 = vcombine.low %v3541, %v3557
    %v3607 = vcombine.high %v3541, %v3557
    %v3609 = vunpack.c.l.s4 1934713408
    %v3610 = vunpack.c.0.s8 %v3609
    %v3611 = vlaneseq
    %v3612 = vshrl.u32 %v3611, 7
    %v3613 = vsub.s32 %v3610, %v3612
    %v3614 = vrot.slane %v3606, %v3613
    %v3616 = vunpack.c.l.s4 1934713408
    %v3617 = vunpack.c.0.s8 %v3616
    %v3618 = vlaneseq
    %v3619 = vshrl.u32 %v3618, 7
    %v3620 = vsub.s32 %v3617, %v3619
    %v3621 = vrot.slane %v3607, %v3620
    %v3622 = vcombine.low %v3566, %v3582
    %v3623 = vcombine.high %v3566, %v3582
    %v3625 = vunpack.c.l.s4 1934713408
    %v3626 = vunpack.c.0.s8 %v3625
    %v3627 = vlaneseq
    %v3628 = vshrl.u32 %v3627, 7
    %v3629 = vsub.s32 %v3626, %v3628
    %v3630 = vrot.slane %v3622, %v3629
    %v3632 = vunpack.c.l.s4 1934713408
    %v3633 = vunpack.c.0.s8 %v3632
    %v3634 = vlaneseq
    %v3635 = vshrl.u32 %v3634, 7
    %v3636 = vsub.s32 %v3633, %v3635
    %v3637 = vrot.slane %v3623, %v3636
    %v3638 = vcombine.low %v3573, %v3589
    %v3639 = vcombine.high %v3573, %v3589
    %v3641 = vunpack.c.l.s4 1934713408
    %v3642 = vunpack.c.0.s8 %v3641
    %v3643 = vlaneseq
    %v3644 = vshrl.u32 %v3643, 7
    %v3645 = vsub.s32 %v3642, %v3644
    %v3646 = vrot.slane %v3638, %v3645
    %v3648 = vunpack.c.l.s4 1934713408
    %v3649 = vunpack.c.0.s8 %v3648
    %v3650 = vlaneseq
    %v3651 = vshrl.u32 %v3650, 7
    %v3652 = vsub.s32 %v3649, %v3651
    %v3653 = vrot.slane %v3639, %v3652
    %v3654 = vcombine.low %v3598, %v3630
    %v3655 = vcombine.high %v3598, %v3630
    %v3656 = vcombine.low %v3605, %v3637
    %v3657 = vcombine.high %v3605, %v3637
    %v3658 = vcombine.low %v3614, %v3646
    %v3659 = vcombine.high %v3614, %v3646
    %v3660 = vcombine.low %v3621, %v3653
    %v3661 = vcombine.high %v3621, %v3653
    %3664 = vrot.lane.b32.xlu0 %v3519, 4
    %v3665 = vpop.permute.xlu0 %3664
    %3666 = vrot.lane.b32.xlu0 %v3655, 4
    %v3667 = vpop.permute.xlu0 %3666
    %3672 = vrot.lane.b32.xlu0 %v3520, 8
    %v3673 = vpop.permute.xlu0 %3672
    %3674 = vrot.lane.b32.xlu0 %v3656, 8
    %v3675 = vpop.permute.xlu0 %3674
    %3680 = vrot.lane.b32.xlu0 %v3521, 12
    %v3681 = vpop.permute.xlu0 %3680
    %3682 = vrot.lane.b32.xlu0 %v3657, 12
    %v3683 = vpop.permute.xlu0 %3682
    %3688 = vrot.lane.b32.xlu0 %v3522, 16
    %v3689 = vpop.permute.xlu0 %3688
    %3690 = vrot.lane.b32.xlu0 %v3658, 16
    %v3691 = vpop.permute.xlu0 %3690
    %3696 = vrot.lane.b32.xlu0 %v3523, 20
    %v3697 = vpop.permute.xlu0 %3696
    %3698 = vrot.lane.b32.xlu0 %v3659, 20
    %v3699 = vpop.permute.xlu0 %3698
    %3704 = vrot.lane.b32.xlu0 %v3524, 24
    %v3705 = vpop.permute.xlu0 %3704
    %3706 = vrot.lane.b32.xlu0 %v3660, 24
    %v3707 = vpop.permute.xlu0 %3706
    %3712 = vrot.lane.b32.xlu0 %v3525, 28
    %v3713 = vpop.permute.xlu0 %3712
    %3714 = vrot.lane.b32.xlu0 %v3661, 28
    %v3715 = vpop.permute.xlu0 %3714
    %v3718 = vsel %vm1451, %v3518, %v3665
    %v3719 = vsel %vm1451, %v3654, %v3667
    %v3720 = vsel %vm2188, %v3718, %v3673
    %v3721 = vsel %vm2188, %v3719, %v3675
    %vm3722 = vcmask 97280
    %v3723 = vsel %vm3722, %v3720, %v3681
    %v3724 = vsel %vm3722, %v3721, %v3683
    %vm3725 = vcmask 130048
    %v3726 = vsel %vm3725, %v3723, %v3689
    %v3727 = vsel %vm3725, %v3724, %v3691
    %vm3728 = vcmask 162816
    %v3729 = vsel %vm3728, %v3726, %v3697
    %v3730 = vsel %vm3728, %v3727, %v3699
    %vm3731 = vcmask 195584
    %v3732 = vsel %vm3731, %v3729, %v3705
    %v3733 = vsel %vm3731, %v3730, %v3707
    %vm3734 = vcmask 228352
    %v3735 = vsel %vm3734, %v3732, %v3713
    %v3736 = vsel %vm3734, %v3733, %v3715
    %v3737 = vpack.c.bf16 %v3736, %v3735
    %v3738 = vld [vmem:[#allocation13] sm:$0xf]
    %v3739 = vld [vmem:[#allocation13 + $0x4] sm:$0xf]
    %v3740 = vld [vmem:[#allocation13 + $0x8] sm:$0xf]
    %v3741 = vld [vmem:[#allocation13 + $0xc] sm:$0xf]
    %v3742 = vld [vmem:[#allocation14] sm:$0x1]
    %v3744 = vlaneseq
    %v3745 = vshrl.u32 %v3744, 7
    %v3746 = vsub.s32 0, %v3745
    %v3747 = vrot.slane %v3742, %v3746
    %v3753 = vunpack.c.l.b16 %v3738
    %v3754 = vunpack.c.l.b16 %v3739
    %v3755 = vunpack.c.l.b16 %v3740
    %v3756 = vunpack.c.l.b16 %v3741
    %v3757 = vpack.c.b16 %v3754, %v3753
    %v3758 = vpack.c.b16 %v3756, %v3755
    %v3762 = vsel %vm149, %v3737, 0
    %3764 = vmatprep.subr.bf16.mxu0 0
    %3765 = vmatpush1.bf16.msra.mxu0 %v3757
    %3766 = vmatprep.subr.bf16.mxu0 0
    %3767 = vmatpush1.bf16.msra.mxu0 %v3758
    %3768 = vmatprep.subr.bf16.mxu0 0
    %3769 = vmatpush1.bf16.msra.mxu0 0
    %3770 = vmatprep.subr.bf16.mxu0 0
    %3771 = vmatpush1.bf16.msra.mxu0 0
    %3772 = vmatprep.subr.bf16.mxu0 0
    %3773 = vmatpush1.bf16.msra.mxu0 0
    %3774 = vmatprep.subr.bf16.mxu0 0
    %3775 = vmatpush1.bf16.msra.mxu0 0
    %3776 = vmatprep.subr.bf16.mxu0 0
    %3777 = vmatpush1.bf16.msra.mxu0 0
    %3778 = vmatprep.subr.bf16.mxu0 0
    %3779 = vmatpush1.bf16.msra.mxu0 0
    %3780 = vmatprep.subr.bf16.mxu0 0
    %3781 = vmatpush1.bf16.msra.mxu0 0
    %3782 = vmatprep.subr.bf16.mxu0 0
    %3783 = vmatpush1.bf16.msra.mxu0 0
    %3784 = vmatprep.subr.bf16.mxu0 0
    %3785 = vmatpush1.bf16.msra.mxu0 0
    %3786 = vmatprep.subr.bf16.mxu0 0
    %3787 = vmatpush1.bf16.msra.mxu0 0
    %3788 = vmatprep.subr.bf16.mxu0 0
    %3789 = vmatpush1.bf16.msra.mxu0 0
    %3790 = vmatprep.subr.bf16.mxu0 0
    %3791 = vmatpush1.bf16.msra.mxu0 0
    %3792 = vmatprep.subr.bf16.mxu0 0
    %3793 = vmatpush1.bf16.msra.mxu0 0
    %3794 = vmatprep.subr.bf16.mxu0 0
    %3795 = vmatpush1.bf16.msra.mxu0 0
    %3796 = vmatprep.mubr.bf16.mxu0 0
    %3797 = vmatmul.mubr.bf16.gmra.mrb[0].mxu0 %v3762
    %v3798 = vpop.f32.mrb[0].mxu0
    %v3799 = vadd.f32 %v3747, %v3798
    %v3800 = vpop.f32.mrb[0].mxu0
    %v3801 = vpop.f32.mrb[0].mxu0
    %v3802 = vadd.f32 %v3747, %v3801
    %v3803 = vpop.f32.mrb[0].mxu0
    %3804 = vdwg.mxu0
    %3805 = vst.msk [vmem:[#allocation16] sm:$0xff] %vm149, %v3799
    %3806 = vst.msk [vmem:[#allocation16 + $0x8] sm:$0xff] %vm149, %v3802
    // Predicated region
    $region66: #{tpu_custom_call.1} parent=1 // pred_check
      _
    $region67: #{tpu_custom_call.1} parent=1 // pred_check_branch
      %3808 = sbr.rel (0) target = $region69
    $region68: #{tpu_custom_call.1} parent=1 // pred_region
      %s3810 = ssub.s32 256, 256
      %3811 = vsyncadd [#allocation4], %s3810
      %s3812 = sshll.u32 [#allocation16], 4
      %s3813 = int_to_ptr.vmem [resolvable:$true] %s3812
      %3818 = dma.vmem_to_hbm [thread:$0]  %s3813, 256, %s8, [#allocation4], 128, 128, 8
    $region69: #{tpu_custom_call.1} parent=1 // pred_fallthru
      _
    // Predicated region
    $region70: #{tpu_custom_call.1} parent=1 // pred_check
      _
    $region71: #{tpu_custom_call.1} parent=1 // pred_check_branch
      %3820 = sbr.rel (0) target = $region73
    $region72: #{tpu_custom_call.1} parent=1 // pred_region
      %3821 = dma.done [#allocation4], 256
    $region73: #{tpu_custom_call.1} parent=1 // pred_fallthru
      _
    %3822 = vsyncpa [#allocation3], 1
    %3823 = vsyncpa [#allocation6], 1
    %3824 = vsyncpa [#allocation9], 1
    %3825 = vsyncpa [#allocation12], 1
    %3826 = vsyncpa [#allocation15], 1
    %3827 = vsyncpa [#allocation4], 1

// kernel: tpu_custom_call.1
$region0: #{tpu_custom_call.1}
  #allocation0 [shape = 'u32[]', space=smem, size = 0x4, offset = 0x4, fixed_abs, tag = 'smem constant byte address 0x4 - core index']
  #allocation1 [shape = 'u32[144,128]{1,0:T(1,128)}', space=vmem, size = 0x12000, scoped, tag = 'internal scratch']
  %s0 = inlined_call_operand.hbm [shape: f32[16,32], index: 0, kind: input, shape index: {}]
  %s1 = inlined_call_operand.hbm [shape: f32[16,32], index: 1, kind: input, shape index: {}]
  %s2 = inlined_call_operand.hbm [shape: f32[32,32], index: 2, kind: input, shape index: {}]
  %s3 = inlined_call_operand.hbm [shape: f32[1,32], index: 3, kind: input, shape index: {}]
  %s4 = inlined_call_operand.hbm [shape: f32[32,64], index: 4, kind: input, shape index: {}]
  %s5 = inlined_call_operand.hbm [shape: f32[1,64], index: 5, kind: input, shape index: {}]
  %s6 = inlined_call_operand.hbm [shape: bf16[32,32], index: 6, kind: input, shape index: {}]
  %s7 = inlined_call_operand.hbm [shape: f32[1,32], index: 7, kind: input, shape index: {}]
  %s8 = inlined_call_operand.hbm [shape: f32[16,32], index: 8, kind: output, shape index: {}]
  %s9 = sld [smem:[#allocation0]]
  $region74: #{tpu_custom_call.1} parent=0
    _
  %s11 = ssub.s32 1, %s9
  %s12 = scalar_select 0, %s11, %s9
  $region1: #{tpu_custom_call.1} parent=0
    #allocation2 [shape = 'u8[8192]{0}', space=vmem, size = 0x2000, scoped, tag = 'input window, operand 0, single buffered']
    #allocation3 [shape = 's32[1]{0}', space=sflag, size = 0x4, scoped, tag = 'scoped memory for tpu_custom_call.1']
    #allocation4 [shape = 's32[1]{0}', space=sflag, size = 0x4, scoped, tag = 'scoped memory for tpu_custom_call.1']
    #allocation5 [shape = 'u8[8192]{0}', space=vmem, size = 0x2000, scoped, tag = 'input window, operand 1, single buffered']
    #allocation6 [shape = 's32[1]{0}', space=sflag, size = 0x4, scoped, tag = 'scoped memory for tpu_custom_call.1']
    #allocation7 [shape = 'u8[16384]{0}', space=vmem, size = 0x4000, scoped, tag = 'input window, operand 2, single buffered']
    #allocation8 [shape = 'u8[512]{0}', space=vmem, size = 0x400, scoped, tag = 'input window, operand 3, single buffered']
    #allocation9 [shape = 's32[1]{0}', space=sflag, size = 0x4, scoped, tag = 'scoped memory for tpu_custom_call.1']
    #allocation10 [shape = 'u8[16384]{0}', space=vmem, size = 0x4000, scoped, tag = 'input window, operand 4, single buffered']
    #allocation11 [shape = 'u8[512]{0}', space=vmem, size = 0x400, scoped, tag = 'input window, operand 5, single buffered']
    #allocation12 [shape = 's32[1]{0}', space=sflag, size = 0x4, scoped, tag = 'scoped memory for tpu_custom_call.1']
    #allocation13 [shape = 'u8[8192]{0}', space=vmem, size = 0x2000, scoped, tag = 'input window, operand 6, single buffered']
    #allocation14 [shape = 'u8[512]{0}', space=vmem, size = 0x400, scoped, tag = 'input window, operand 7, single buffered']
    #allocation15 [shape = 's32[1]{0}', space=sflag, size = 0x4, scoped, tag = 'scoped memory for tpu_custom_call.1']
    #allocation16 [shape = 'u8[8192]{0}', space=vmem, size = 0x2000, scoped, tag = 'output window, operand 0, single buffered']
    %13 = vsyncpa [#allocation3], 0
    %14 = vsyncpa [#allocation6], 0
    %15 = vsyncpa [#allocation9], 0
    %16 = vsyncpa [#allocation12], 0
    %17 = vsyncpa [#allocation15], 0
    %18 = vsyncpa [#allocation4], 0
    // Predicated region
    $region2: #{tpu_custom_call.1} parent=1 // pred_check
      _
    $region3: #{tpu_custom_call.1} parent=1 // pred_check_branch
      %20 = sbr.rel (0) target = $region5
    $region4: #{tpu_custom_call.1} parent=1 // pred_region
      %s22 = ssub.s32 256, 256
      %23 = vsyncadd [#allocation3], %s22
      %s24 = sshll.u32 [#allocation2], 4
      %s25 = int_to_ptr.vmem [resolvable:$true] %s24
      %30 = dma.hbm_to_vmem [thread:$0]  %s0, 256, %s25, [#allocation3], 128, 128, 8
    $region5: #{tpu_custom_call.1} parent=1 // pred_fallthru
      _
    // Predicated region
    $region6: #{tpu_custom_call.1} parent=1 // pred_check
      _
    $region7: #{tpu_custom_call.1} parent=1 // pred_check_branch
      %32 = sbr.rel (0) target = $region9
    $region8: #{tpu_custom_call.1} parent=1 // pred_region
      %s34 = ssub.s32 256, 256
      %35 = vsyncadd [#allocation6], %s34
      %s36 = sshll.u32 [#allocation5], 4
      %s37 = int_to_ptr.vmem [resolvable:$true] %s36
      %42 = dma.hbm_to_vmem [thread:$0]  %s1, 256, %s37, [#allocation6], 128, 128, 8
    $region9: #{tpu_custom_call.1} parent=1 // pred_fallthru
      _
    // Predicated region
    $region10: #{tpu_custom_call.1} parent=1 // pred_check
      _
    $region11: #{tpu_custom_call.1} parent=1 // pred_check_branch
      %44 = sbr.rel (0) target = $region13
    $region12: #{tpu_custom_call.1} parent=1 // pred_region
      %s46 = ssub.s32 512, 512
      %47 = vsyncadd [#allocation6], %s46
      %s48 = sshll.u32 [#allocation7], 4
      %s49 = int_to_ptr.vmem [resolvable:$true] %s48
      %54 = dma.hbm_to_vmem [thread:$0]  %s2, 512, %s49, [#allocation6], 128, 128, 8
    $region13: #{tpu_custom_call.1} parent=1 // pred_fallthru
      _
    // Predicated region
    $region14: #{tpu_custom_call.1} parent=1 // pred_check
      _
    $region15: #{tpu_custom_call.1} parent=1 // pred_check_branch
      %56 = sbr.rel (0) target = $region17
    $region16: #{tpu_custom_call.1} parent=1 // pred_region
      %s58 = ssub.s32 16, 16
      %59 = vsyncadd [#allocation9], %s58
      %s61 = sshll.u32 [#allocation8], 4
      %s62 = int_to_ptr.vmem [resolvable:$true] %s61
      %64 = dma.hbm_to_vmem [thread:$0]  %s3, 16, %s62, [#allocation9]
    $region17: #{tpu_custom_call.1} parent=1 // pred_fallthru
      _
    // Predicated region
    $region18: #{tpu_custom_call.1} parent=1 // pred_check
      _
    $region19: #{tpu_custom_call.1} parent=1 // pred_check_branch
      %66 = sbr.rel (0) target = $region21
    $region20: #{tpu_custom_call.1} parent=1 // pred_region
      %s68 = ssub.s32 512, 512
      %69 = vsyncadd [#allocation9], %s68
      %s70 = sshll.u32 [#allocation10], 4
      %s71 = int_to_ptr.vmem [resolvable:$true] %s70
      %76 = dma.hbm_to_vmem [thread:$0]  %s4, 512, %s71, [#allocation9], 128, 128, 8
    $region21: #{tpu_custom_call.1} parent=1 // pred_fallthru
      _
    // Predicated region
    $region22: #{tpu_custom_call.1} parent=1 // pred_check
      _
    $region23: #{tpu_custom_call.1} parent=1 // pred_check_branch
      %78 = sbr.rel (0) target = $region25
    $region24: #{tpu_custom_call.1} parent=1 // pred_region
      %s80 = ssub.s32 16, 16
      %81 = vsyncadd [#allocation12], %s80
      %s83 = sshll.u32 [#allocation11], 4
      %s84 = int_to_ptr.vmem [resolvable:$true] %s83
      %86 = dma.hbm_to_vmem [thread:$0]  %s5, 16, %s84, [#allocation12]
    $region25: #{tpu_custom_call.1} parent=1 // pred_fallthru
      _
    // Predicated region
    $region26: #{tpu_custom_call.1} parent=1 // pred_check
      _
    $region27: #{tpu_custom_call.1} parent=1 // pred_check_branch
      %88 = sbr.rel (0) target = $region29
    $region28: #{tpu_custom_call.1} parent=1 // pred_region
      %s90 = ssub.s32 256, 256
      %91 = vsyncadd [#allocation12], %s90
      %s92 = sshll.u32 [#allocation13], 4
      %s93 = int_to_ptr.vmem [resolvable:$true] %s92
      %98 = dma.hbm_to_vmem [thread:$0]  %s6, 256, %s93, [#allocation12], 64, 64, 4
    $region29: #{tpu_custom_call.1} parent=1 // pred_fallthru
      _
    // Predicated region
    $region30: #{tpu_custom_call.1} parent=1 // pred_check
      _
    $region31: #{tpu_custom_call.1} parent=1 // pred_check_branch
      %100 = sbr.rel (0) target = $region33
    $region32: #{tpu_custom_call.1} parent=1 // pred_region
      %s102 = ssub.s32 16, 16
      %103 = vsyncadd [#allocation15], %s102
      %s105 = sshll.u32 [#allocation14], 4
      %s106 = int_to_ptr.vmem [resolvable:$true] %s105
      %108 = dma.hbm_to_vmem [thread:$0]  %s7, 16, %s106, [#allocation15]
    $region33: #{tpu_custom_call.1} parent=1 // pred_fallthru
      _
    // Predicated region
    $region34: #{tpu_custom_call.1} parent=1 // pred_check
      _
    $region35: #{tpu_custom_call.1} parent=1 // pred_check_branch
      %110 = sbr.rel (0) target = $region37
    $region36: #{tpu_custom_call.1} parent=1 // pred_region
      %111 = dma.done [#allocation3], 256
    $region37: #{tpu_custom_call.1} parent=1 // pred_fallthru
      _
    // Predicated region
    $region38: #{tpu_custom_call.1} parent=1 // pred_check
      _
    $region39: #{tpu_custom_call.1} parent=1 // pred_check_branch
      %113 = sbr.rel (0) target = $region41
    $region40: #{tpu_custom_call.1} parent=1 // pred_region
      %114 = dma.done [#allocation6], 256
    $region41: #{tpu_custom_call.1} parent=1 // pred_fallthru
      _
    // Predicated region
    $region42: #{tpu_custom_call.1} parent=1 // pred_check
      _
    $region43: #{tpu_custom_call.1} parent=1 // pred_check_branch
      %116 = sbr.rel (0) target = $region45
    $region44: #{tpu_custom_call.1} parent=1 // pred_region
      %117 = dma.done [#allocation6], 512
    $region45: #{tpu_custom_call.1} parent=1 // pred_fallthru
      _
    // Predicated region
    $region46: #{tpu_custom_call.1} parent=1 // pred_check
      _
    $region47: #{tpu_custom_call.1} parent=1 // pred_check_branch
      %119 = sbr.rel (0) target = $region49
    $region48: #{tpu_custom_call.1} parent=1 // pred_region
      %120 = dma.done [#allocation9], 16
    $region49: #{tpu_custom_call.1} parent=1 // pred_fallthru
      _
    // Predicated region
    $region50: #{tpu_custom_call.1} parent=1 // pred_check
      _
    $region51: #{tpu_custom_call.1} parent=1 // pred_check_branch
      %122 = sbr.rel (0) target = $region53
    $region52: #{tpu_custom_call.1} parent=1 // pred_region
      %123 = dma.done [#allocation9], 512
    $region53: #{tpu_custom_call.1} parent=1 // pred_fallthru
      _
    // Predicated region
    $region54: #{tpu_custom_call.1} parent=1 // pred_check
      _
    $region55: #{tpu_custom_call.1} parent=1 // pred_check_branch
      %125 = sbr.rel (0) target = $region57
    $region56: #{tpu_custom_call.1} parent=1 // pred_region
      %126 = dma.done [#allocation12], 16
    $region57: #{tpu_custom_call.1} parent=1 // pred_fallthru
      _
    // Predicated region
    $region58: #{tpu_custom_call.1} parent=1 // pred_check
      _
    $region59: #{tpu_custom_call.1} parent=1 // pred_check_branch
      %128 = sbr.rel (0) target = $region61
    $region60: #{tpu_custom_call.1} parent=1 // pred_region
      %129 = dma.done [#allocation12], 256
    $region61: #{tpu_custom_call.1} parent=1 // pred_fallthru
      _
    // Predicated region
    $region62: #{tpu_custom_call.1} parent=1 // pred_check
      _
    $region63: #{tpu_custom_call.1} parent=1 // pred_check_branch
      %131 = sbr.rel (0) target = $region65
    $region64: #{tpu_custom_call.1} parent=1 // pred_region
      %132 = dma.done [#allocation15], 16
    $region65: #{tpu_custom_call.1} parent=1 // pred_fallthru
      _
    %v134 = vld [vmem:[#allocation2] sm:$0xff]
    %v135 = vld [vmem:[#allocation2 + $0x8] sm:$0xff]
    %v136 = vld [vmem:[#allocation5] sm:$0xff]
    %v137 = vld [vmem:[#allocation5 + $0x8] sm:$0xff]
    %v138 = vld [vmem:[#allocation7] sm:$0xff]
    %v139 = vld [vmem:[#allocation7 + $0x8] sm:$0xff]
    %v140 = vld [vmem:[#allocation7 + $0x10] sm:$0xff]
    %v141 = vld [vmem:[#allocation7 + $0x18] sm:$0xff]
    %v142 = vld [vmem:[#allocation8] sm:$0x1]
    %v144 = vlaneseq
    %v145 = vshrl.u32 %v144, 7
    %v146 = vsub.s32 0, %v145
    %v147 = vrot.slane %v142, %v146
    %vm149 = vcmask 261120
    %v151 = vsel %vm149, %v134, 0
    %v154 = vsel %vm149, %v135, 0
    %156 = vmatprep.subr.mxu0 0.0
    %157 = vmatpush1.msra.mxu0 %v138
    %158 = vmatprep.subr.mxu0 0.0
    %159 = vmatpush1.msra.mxu0 %v139
    %160 = vmatprep.subr.mxu0 0.0
    %161 = vmatpush1.msra.mxu0 %v140
    %162 = vmatprep.subr.mxu0 0.0
    %163 = vmatpush1.msra.mxu0 %v141
    %164 = vmatprep.subr.mxu0 0.0
    %165 = vmatpush1.msra.mxu0 0.0
    %166 = vmatprep.subr.mxu0 0.0
    %167 = vmatpush1.msra.mxu0 0.0
    %168 = vmatprep.subr.mxu0 0.0
    %169 = vmatpush1.msra.mxu0 0.0
    %170 = vmatprep.subr.mxu0 0.0
    %171 = vmatpush1.msra.mxu0 0.0
    %172 = vmatprep.subr.mxu0 0.0
    %173 = vmatpush1.msra.mxu0 0.0
    %174 = vmatprep.subr.mxu0 0.0
    %175 = vmatpush1.msra.mxu0 0.0
    %176 = vmatprep.subr.mxu0 0.0
    %177 = vmatpush1.msra.mxu0 0.0
    %178 = vmatprep.subr.mxu0 0.0
    %179 = vmatpush1.msra.mxu0 0.0
    %180 = vmatprep.subr.mxu0 0.0
    %181 = vmatpush1.msra.mxu0 0.0
    %182 = vmatprep.subr.mxu0 0.0
    %183 = vmatpush1.msra.mxu0 0.0
    %184 = vmatprep.subr.mxu0 0.0
    %185 = vmatpush1.msra.mxu0 0.0
    %186 = vmatprep.subr.mxu0 0.0
    %187 = vmatpush1.msra.mxu0 0.0
    %188 = vmatprep.subr.mxu0 0.0
    %189 = vmatpush1.msra.mxu0 0.0
    %190 = vmatprep.subr.mxu0 0.0
    %191 = vmatpush1.msra.mxu0 0.0
    %192 = vmatprep.subr.mxu0 0.0
    %193 = vmatpush1.msra.mxu0 0.0
    %194 = vmatprep.subr.mxu0 0.0
    %195 = vmatpush1.msra.mxu0 0.0
    %196 = vmatprep.subr.mxu0 0.0
    %197 = vmatpush1.msra.mxu0 0.0
    %198 = vmatprep.subr.mxu0 0.0
    %199 = vmatpush1.msra.mxu0 0.0
    %200 = vmatprep.subr.mxu0 0.0
    %201 = vmatpush1.msra.mxu0 0.0
    %202 = vmatprep.subr.mxu0 0.0
    %203 = vmatpush1.msra.mxu0 0.0
    %204 = vmatprep.subr.mxu0 0.0
    %205 = vmatpush1.msra.mxu0 0.0
    %206 = vmatprep.subr.mxu0 0.0
    %207 = vmatpush1.msra.mxu0 0.0
    %208 = vmatprep.subr.mxu0 0.0
    %209 = vmatpush1.msra.mxu0 0.0
    %210 = vmatprep.subr.mxu0 0.0
    %211 = vmatpush1.msra.mxu0 0.0
    %212 = vmatprep.subr.mxu0 0.0
    %213 = vmatpush1.msra.mxu0 0.0
    %214 = vmatprep.subr.mxu0 0.0
    %215 = vmatpush1.msra.mxu0 0.0
    %216 = vmatprep.subr.mxu0 0.0
    %217 = vmatpush1.msra.mxu0 0.0
    %218 = vmatprep.subr.mxu0 0.0
    %219 = vmatpush1.msra.mxu0 0.0
    %220 = vmatprep.mubr.f32.mxu0 0.0
    %221 = vmatmul.mubr.f32.gmra.mrb[0].mxu0 %v151
    %v222 = vpop.f32.mrb[0].mxu0
    %v223 = vadd.f32 %v147, %v222
    %v224 = vpop.f32.mrb[0].mxu0
    %225 = vmatprep.mubr.f32.mxu0 0.0
    %226 = vmatmul.mubr.f32.gmra.mrb[0].mxu0 %v154
    %v227 = vpop.f32.mrb[0].mxu0
    %v228 = vadd.f32 %v147, %v227
    %v229 = vpop.f32.mrb[0].mxu0
    %230 = vdwg.mxu0
    %v231 = vld [vmem:[#allocation10] sm:$0xff]
    %v232 = vld [vmem:[#allocation10 + $0x8] sm:$0xff]
    %v233 = vld [vmem:[#allocation10 + $0x10] sm:$0xff]
    %v234 = vld [vmem:[#allocation10 + $0x18] sm:$0xff]
    %v235 = vld [vmem:[#allocation11] sm:$0x1]
    %v237 = vlaneseq
    %v238 = vshrl.u32 %v237, 7
    %v239 = vsub.s32 0, %v238
    %v240 = vrot.slane %v235, %v239
    %v243 = vsel %vm149, %v136, 0
    %v246 = vsel %vm149, %v137, 0
    %248 = vmatprep.subr.mxu0 0.0
    %249 = vmatpush1.msra.mxu0 %v231
    %250 = vmatprep.subr.mxu0 0.0
    %251 = vmatpush1.msra.mxu0 %v232
    %252 = vmatprep.subr.mxu0 0.0
    %253 = vmatpush1.msra.mxu0 %v233
    %254 = vmatprep.subr.mxu0 0.0
    %255 = vmatpush1.msra.mxu0 %v234
    %256 = vmatprep.subr.mxu0 0.0
    %257 = vmatpush1.msra.mxu0 0.0
    %258 = vmatprep.subr.mxu0 0.0
    %259 = vmatpush1.msra.mxu0 0.0
    %260 = vmatprep.subr.mxu0 0.0
    %261 = vmatpush1.msra.mxu0 0.0
    %262 = vmatprep.subr.mxu0 0.0
    %263 = vmatpush1.msra.mxu0 0.0
    %264 = vmatprep.subr.mxu0 0.0
    %265 = vmatpush1.msra.mxu0 0.0
    %266 = vmatprep.subr.mxu0 0.0
    %267 = vmatpush1.msra.mxu0 0.0
    %268 = vmatprep.subr.mxu0 0.0
    %269 = vmatpush1.msra.mxu0 0.0
    %270 = vmatprep.subr.mxu0 0.0
    %271 = vmatpush1.msra.mxu0 0.0
    %272 = vmatprep.subr.mxu0 0.0
    %273 = vmatpush1.msra.mxu0 0.0
    %274 = vmatprep.subr.mxu0 0.0
    %275 = vmatpush1.msra.mxu0 0.0
    %276 = vmatprep.subr.mxu0 0.0
    %277 = vmatpush1.msra.mxu0 0.0
    %278 = vmatprep.subr.mxu0 0.0
    %279 = vmatpush1.msra.mxu0 0.0
    %280 = vmatprep.subr.mxu0 0.0
    %281 = vmatpush1.msra.mxu0 0.0
    %282 = vmatprep.subr.mxu0 0.0
    %283 = vmatpush1.msra.mxu0 0.0
    %284 = vmatprep.subr.mxu0 0.0
    %285 = vmatpush1.msra.mxu0 0.0
    %286 = vmatprep.subr.mxu0 0.0
    %287 = vmatpush1.msra.mxu0 0.0
    %288 = vmatprep.subr.mxu0 0.0
    %289 = vmatpush1.msra.mxu0 0.0
    %290 = vmatprep.subr.mxu0 0.0
    %291 = vmatpush1.msra.mxu0 0.0
    %292 = vmatprep.subr.mxu0 0.0
    %293 = vmatpush1.msra.mxu0 0.0
    %294 = vmatprep.subr.mxu0 0.0
    %295 = vmatpush1.msra.mxu0 0.0
    %296 = vmatprep.subr.mxu0 0.0
    %297 = vmatpush1.msra.mxu0 0.0
    %298 = vmatprep.subr.mxu0 0.0
    %299 = vmatpush1.msra.mxu0 0.0
    %300 = vmatprep.subr.mxu0 0.0
    %301 = vmatpush1.msra.mxu0 0.0
    %302 = vmatprep.subr.mxu0 0.0
    %303 = vmatpush1.msra.mxu0 0.0
    %304 = vmatprep.subr.mxu0 0.0
    %305 = vmatpush1.msra.mxu0 0.0
    %306 = vmatprep.subr.mxu0 0.0
    %307 = vmatpush1.msra.mxu0 0.0
    %308 = vmatprep.subr.mxu0 0.0
    %309 = vmatpush1.msra.mxu0 0.0
    %310 = vmatprep.subr.mxu0 0.0
    %311 = vmatpush1.msra.mxu0 0.0
    %312 = vmatprep.mubr.f32.mxu0 0.0
    %313 = vmatmul.mubr.f32.gmra.mrb[0].mxu0 %v243
    %v314 = vpop.f32.mrb[0].mxu0
    %v315 = vadd.f32 %v240, %v314
    %v316 = vpop.f32.mrb[0].mxu0
    %317 = vmatprep.mubr.f32.mxu0 0.0
    %318 = vmatmul.mubr.f32.gmra.mrb[0].mxu0 %v246
    %v319 = vpop.f32.mrb[0].mxu0
    %v320 = vadd.f32 %v240, %v319
    %v321 = vpop.f32.mrb[0].mxu0
    %322 = vdwg.mxu0
    %v323 = vpack.c.bf16 %v228, %v223
    %v324 = vpack.c.bf16 %v320, %v315
    %326 = vrot.lane.b32.xlu0 %v323, 124
    %v327 = vpop.permute.xlu0 %326
    %328 = vrot.lane.b32.xlu0 %v323, 120
    %v329 = vpop.permute.xlu0 %328
    %330 = vrot.lane.b32.xlu0 %v323, 116
    %v331 = vpop.permute.xlu0 %330
    %332 = vrot.lane.b32.xlu0 %v323, 112
    %v333 = vpop.permute.xlu0 %332
    %334 = vrot.lane.b32.xlu0 %v323, 108
    %v335 = vpop.permute.xlu0 %334
    %336 = vrot.lane.b32.xlu0 %v323, 104
    %v337 = vpop.permute.xlu0 %336
    %338 = vrot.lane.b32.xlu0 %v323, 100
    %v339 = vpop.permute.xlu0 %338
    %v342 = vpack.i.b16 %v327, %v323
    %v344 = vshrl.u32 %v323, 16
    %v345 = vshrl.u32 %v327, 16
    %v346 = vpack.i.b16 %v345, %v344
    %v350 = vpack.i.b16 %v331, %v329
    %v352 = vshrl.u32 %v329, 16
    %v353 = vshrl.u32 %v331, 16
    %v354 = vpack.i.b16 %v353, %v352
    %v358 = vpack.i.b16 %v335, %v333
    %v360 = vshrl.u32 %v333, 16
    %v361 = vshrl.u32 %v335, 16
    %v362 = vpack.i.b16 %v361, %v360
    %v366 = vpack.i.b16 %v339, %v337
    %v368 = vshrl.u32 %v337, 16
    %v369 = vshrl.u32 %v339, 16
    %v370 = vpack.i.b16 %v369, %v368
    %v372 = vcombine.low %v342, %v358
    %v373 = vcombine.high %v342, %v358
    %v375 = vunpack.c.l.s4 1983009808
    %v376 = vunpack.c.0.s8 %v375
    %v377 = vlaneseq
    %v378 = vshrl.u32 %v377, 7
    %v379 = vsub.s32 %v376, %v378
    %v380 = vrot.slane %v372, %v379
    %v382 = vunpack.c.l.s4 1983009808
    %v383 = vunpack.c.0.s8 %v382
    %v384 = vlaneseq
    %v385 = vshrl.u32 %v384, 7
    %v386 = vsub.s32 %v383, %v385
    %v387 = vrot.slane %v373, %v386
    %v388 = vcombine.low %v350, %v366
    %v389 = vcombine.high %v350, %v366
    %v391 = vunpack.c.l.s4 1983009808
    %v392 = vunpack.c.0.s8 %v391
    %v393 = vlaneseq
    %v394 = vshrl.u32 %v393, 7
    %v395 = vsub.s32 %v392, %v394
    %v396 = vrot.slane %v388, %v395
    %v398 = vunpack.c.l.s4 1983009808
    %v399 = vunpack.c.0.s8 %v398
    %v400 = vlaneseq
    %v401 = vshrl.u32 %v400, 7
    %v402 = vsub.s32 %v399, %v401
    %v403 = vrot.slane %v389, %v402
    %v404 = vcombine.low %v380, %v396
    %v405 = vcombine.high %v380, %v396
    %v407 = vunpack.c.l.s4 1934713408
    %v408 = vunpack.c.0.s8 %v407
    %v409 = vlaneseq
    %v410 = vshrl.u32 %v409, 7
    %v411 = vsub.s32 %v408, %v410
    %v412 = vrot.slane %v404, %v411
    %v414 = vunpack.c.l.s4 1934713408
    %v415 = vunpack.c.0.s8 %v414
    %v416 = vlaneseq
    %v417 = vshrl.u32 %v416, 7
    %v418 = vsub.s32 %v415, %v417
    %v419 = vrot.slane %v405, %v418
    %v420 = vcombine.low %v387, %v403
    %v421 = vcombine.high %v387, %v403
    %v423 = vunpack.c.l.s4 1934713408
    %v424 = vunpack.c.0.s8 %v423
    %v425 = vlaneseq
    %v426 = vshrl.u32 %v425, 7
    %v427 = vsub.s32 %v424, %v426
    %v428 = vrot.slane %v420, %v427
    %v430 = vunpack.c.l.s4 1934713408
    %v431 = vunpack.c.0.s8 %v430
    %v432 = vlaneseq
    %v433 = vshrl.u32 %v432, 7
    %v434 = vsub.s32 %v431, %v433
    %v435 = vrot.slane %v421, %v434
    %v436 = vcombine.high %v412, 0
    %v437 = vcombine.high %v419, 0
    %v438 = vcombine.high %v428, 0
    %v439 = vcombine.high %v435, 0
    %v440 = vcombine.low %v346, %v362
    %v441 = vcombine.high %v346, %v362
    %v443 = vunpack.c.l.s4 1983009808
    %v444 = vunpack.c.0.s8 %v443
    %v445 = vlaneseq
    %v446 = vshrl.u32 %v445, 7
    %v447 = vsub.s32 %v444, %v446
    %v448 = vrot.slane %v440, %v447
    %v450 = vunpack.c.l.s4 1983009808
    %v451 = vunpack.c.0.s8 %v450
    %v452 = vlaneseq
    %v453 = vshrl.u32 %v452, 7
    %v454 = vsub.s32 %v451, %v453
    %v455 = vrot.slane %v441, %v454
    %v456 = vcombine.low %v354, %v370
    %v457 = vcombine.high %v354, %v370
    %v459 = vunpack.c.l.s4 1983009808
    %v460 = vunpack.c.0.s8 %v459
    %v461 = vlaneseq
    %v462 = vshrl.u32 %v461, 7
    %v463 = vsub.s32 %v460, %v462
    %v464 = vrot.slane %v456, %v463
    %v466 = vunpack.c.l.s4 1983009808
    %v467 = vunpack.c.0.s8 %v466
    %v468 = vlaneseq
    %v469 = vshrl.u32 %v468, 7
    %v470 = vsub.s32 %v467, %v469
    %v471 = vrot.slane %v457, %v470
    %v472 = vcombine.low %v448, %v464
    %v473 = vcombine.high %v448, %v464
    %v475 = vunpack.c.l.s4 1934713408
    %v476 = vunpack.c.0.s8 %v475
    %v477 = vlaneseq
    %v478 = vshrl.u32 %v477, 7
    %v479 = vsub.s32 %v476, %v478
    %v480 = vrot.slane %v472, %v479
    %v482 = vunpack.c.l.s4 1934713408
    %v483 = vunpack.c.0.s8 %v482
    %v484 = vlaneseq
    %v485 = vshrl.u32 %v484, 7
    %v486 = vsub.s32 %v483, %v485
    %v487 = vrot.slane %v473, %v486
    %v488 = vcombine.low %v455, %v471
    %v489 = vcombine.high %v455, %v471
    %v491 = vunpack.c.l.s4 1934713408
    %v492 = vunpack.c.0.s8 %v491
    %v493 = vlaneseq
    %v494 = vshrl.u32 %v493, 7
    %v495 = vsub.s32 %v492, %v494
    %v496 = vrot.slane %v488, %v495
    %v498 = vunpack.c.l.s4 1934713408
    %v499 = vunpack.c.0.s8 %v498
    %v500 = vlaneseq
    %v501 = vshrl.u32 %v500, 7
    %v502 = vsub.s32 %v499, %v501
    %v503 = vrot.slane %v489, %v502
    %v504 = vcombine.high %v480, 0
    %v505 = vcombine.high %v487, 0
    %v506 = vcombine.high %v496, 0
    %v507 = vcombine.high %v503, 0
    %v508 = vcombine.low %v412, %v419
    %v510 = vunpack.c.l.s4 1983009808
    %v511 = vunpack.c.0.s8 %v510
    %v512 = vlaneseq
    %v513 = vshrl.u32 %v512, 7
    %v514 = vsub.s32 %v511, %v513
    %v515 = vrot.slane %v508, %v514
    %v516 = vcombine.low %v436, %v437
    %v518 = vunpack.c.l.s4 1983009808
    %v519 = vunpack.c.0.s8 %v518
    %v520 = vlaneseq
    %v521 = vshrl.u32 %v520, 7
    %v522 = vsub.s32 %v519, %v521
    %v523 = vrot.slane %v516, %v522
    %v524 = vcombine.low %v428, %v435
    %v526 = vunpack.c.l.s4 1983009808
    %v527 = vunpack.c.0.s8 %v526
    %v528 = vlaneseq
    %v529 = vshrl.u32 %v528, 7
    %v530 = vsub.s32 %v527, %v529
    %v531 = vrot.slane %v524, %v530
    %v532 = vcombine.low %v438, %v439
    %v534 = vunpack.c.l.s4 1983009808
    %v535 = vunpack.c.0.s8 %v534
    %v536 = vlaneseq
    %v537 = vshrl.u32 %v536, 7
    %v538 = vsub.s32 %v535, %v537
    %v539 = vrot.slane %v532, %v538
    %v540 = vcombine.low %v515, %v523
    %v541 = vcombine.high %v515, %v523
    %v543 = vunpack.c.l.s4 1934713408
    %v544 = vunpack.c.0.s8 %v543
    %v545 = vlaneseq
    %v546 = vshrl.u32 %v545, 7
    %v547 = vsub.s32 %v544, %v546
    %v548 = vrot.slane %v540, %v547
    %v550 = vunpack.c.l.s4 1934713408
    %v551 = vunpack.c.0.s8 %v550
    %v552 = vlaneseq
    %v553 = vshrl.u32 %v552, 7
    %v554 = vsub.s32 %v551, %v553
    %v555 = vrot.slane %v541, %v554
    %v556 = vcombine.low %v531, %v539
    %v557 = vcombine.high %v531, %v539
    %v559 = vunpack.c.l.s4 1934713408
    %v560 = vunpack.c.0.s8 %v559
    %v561 = vlaneseq
    %v562 = vshrl.u32 %v561, 7
    %v563 = vsub.s32 %v560, %v562
    %v564 = vrot.slane %v556, %v563
    %v566 = vunpack.c.l.s4 1934713408
    %v567 = vunpack.c.0.s8 %v566
    %v568 = vlaneseq
    %v569 = vshrl.u32 %v568, 7
    %v570 = vsub.s32 %v567, %v569
    %v571 = vrot.slane %v557, %v570
    %v572 = vcombine.low %v548, %v564
    %v573 = vcombine.high %v548, %v564
    %v574 = vcombine.low %v555, %v571
    %v575 = vcombine.high %v555, %v571
    %v576 = vcombine.low %v480, %v487
    %v578 = vunpack.c.l.s4 1983009808
    %v579 = vunpack.c.0.s8 %v578
    %v580 = vlaneseq
    %v581 = vshrl.u32 %v580, 7
    %v582 = vsub.s32 %v579, %v581
    %v583 = vrot.slane %v576, %v582
    %v584 = vcombine.low %v504, %v505
    %v586 = vunpack.c.l.s4 1983009808
    %v587 = vunpack.c.0.s8 %v586
    %v588 = vlaneseq
    %v589 = vshrl.u32 %v588, 7
    %v590 = vsub.s32 %v587, %v589
    %v591 = vrot.slane %v584, %v590
    %v592 = vcombine.low %v496, %v503
    %v594 = vunpack.c.l.s4 1983009808
    %v595 = vunpack.c.0.s8 %v594
    %v596 = vlaneseq
    %v597 = vshrl.u32 %v596, 7
    %v598 = vsub.s32 %v595, %v597
    %v599 = vrot.slane %v592, %v598
    %v600 = vcombine.low %v506, %v507
    %v602 = vunpack.c.l.s4 1983009808
    %v603 = vunpack.c.0.s8 %v602
    %v604 = vlaneseq
    %v605 = vshrl.u32 %v604, 7
    %v606 = vsub.s32 %v603, %v605
    %v607 = vrot.slane %v600, %v606
    %v608 = vcombine.low %v583, %v591
    %v609 = vcombine.high %v583, %v591
    %v611 = vunpack.c.l.s4 1934713408
    %v612 = vunpack.c.0.s8 %v611
    %v613 = vlaneseq
    %v614 = vshrl.u32 %v613, 7
    %v615 = vsub.s32 %v612, %v614
    %v616 = vrot.slane %v608, %v615
    %v618 = vunpack.c.l.s4 1934713408
    %v619 = vunpack.c.0.s8 %v618
    %v620 = vlaneseq
    %v621 = vshrl.u32 %v620, 7
    %v622 = vsub.s32 %v619, %v621
    %v623 = vrot.slane %v609, %v622
    %v624 = vcombine.low %v599, %v607
    %v625 = vcombine.high %v599, %v607
    %v627 = vunpack.c.l.s4 1934713408
    %v628 = vunpack.c.0.s8 %v627
    %v629 = vlaneseq
    %v630 = vshrl.u32 %v629, 7
    %v631 = vsub.s32 %v628, %v630
    %v632 = vrot.slane %v624, %v631
    %v634 = vunpack.c.l.s4 1934713408
    %v635 = vunpack.c.0.s8 %v634
    %v636 = vlaneseq
    %v637 = vshrl.u32 %v636, 7
    %v638 = vsub.s32 %v635, %v637
    %v639 = vrot.slane %v625, %v638
    %v640 = vcombine.low %v616, %v632
    %v641 = vcombine.high %v616, %v632
    %v642 = vcombine.low %v623, %v639
    %v643 = vcombine.high %v623, %v639
    %v646 = vpack.i.b16 %v640, %v572
    %v647 = vshrl.u32 %v572, 16
    %v648 = vshrl.u32 %v640, 16
    %v649 = vpack.i.b16 %v648, %v647
    %v652 = vpack.i.b16 %v641, %v573
    %v653 = vshrl.u32 %v573, 16
    %v654 = vshrl.u32 %v641, 16
    %v655 = vpack.i.b16 %v654, %v653
    %v658 = vpack.i.b16 %v642, %v574
    %v659 = vshrl.u32 %v574, 16
    %v660 = vshrl.u32 %v642, 16
    %v661 = vpack.i.b16 %v660, %v659
    %v664 = vpack.i.b16 %v643, %v575
    %v665 = vshrl.u32 %v575, 16
    %v666 = vshrl.u32 %v643, 16
    %v667 = vpack.i.b16 %v666, %v665
    %v668 = vunpack.c.l.b16 %v646
    %v669 = vunpack.c.h.b16 %v646
    %v670 = vunpack.c.l.b16 %v649
    %v671 = vunpack.c.h.b16 %v649
    %v672 = vunpack.c.l.b16 %v652
    %v673 = vunpack.c.h.b16 %v652
    %v674 = vunpack.c.l.b16 %v655
    %v675 = vunpack.c.h.b16 %v655
    %v676 = vunpack.c.l.b16 %v658
    %v677 = vunpack.c.h.b16 %v658
    %v678 = vunpack.c.l.b16 %v661
    %v679 = vunpack.c.h.b16 %v661
    %v680 = vunpack.c.l.b16 %v664
    %v681 = vunpack.c.h.b16 %v664
    %v682 = vunpack.c.l.b16 %v667
    %v683 = vunpack.c.h.b16 %v667
    %v684 = vpack.c.b16 %v668, %v668
    %v685 = vpack.c.b16 %v669, %v669
    %v686 = vpack.c.b16 %v670, %v670
    %v687 = vpack.c.b16 %v671, %v671
    %v688 = vpack.c.b16 %v672, %v672
    %v689 = vpack.c.b16 %v673, %v673
    %v690 = vpack.c.b16 %v674, %v674
    %v691 = vpack.c.b16 %v675, %v675
    %v692 = vpack.c.b16 %v676, %v676
    %v693 = vpack.c.b16 %v677, %v677
    %v694 = vpack.c.b16 %v678, %v678
    %v695 = vpack.c.b16 %v679, %v679
    %v696 = vpack.c.b16 %v680, %v680
    %v697 = vpack.c.b16 %v681, %v681
    %v698 = vpack.c.b16 %v682, %v682
    %v699 = vpack.c.b16 %v683, %v683
    %701 = vrot.lane.b32.xlu0 %v324, 124
    %v702 = vpop.permute.xlu0 %701
    %703 = vrot.lane.b32.xlu0 %v324, 120
    %v704 = vpop.permute.xlu0 %703
    %705 = vrot.lane.b32.xlu0 %v324, 116
    %v706 = vpop.permute.xlu0 %705
    %707 = vrot.lane.b32.xlu0 %v324, 112
    %v708 = vpop.permute.xlu0 %707
    %709 = vrot.lane.b32.xlu0 %v324, 108
    %v710 = vpop.permute.xlu0 %709
    %711 = vrot.lane.b32.xlu0 %v324, 104
    %v712 = vpop.permute.xlu0 %711
    %713 = vrot.lane.b32.xlu0 %v324, 100
    %v714 = vpop.permute.xlu0 %713
    %v717 = vpack.i.b16 %v702, %v324
    %v719 = vshrl.u32 %v324, 16
    %v720 = vshrl.u32 %v702, 16
    %v721 = vpack.i.b16 %v720, %v719
    %v725 = vpack.i.b16 %v706, %v704
    %v727 = vshrl.u32 %v704, 16
    %v728 = vshrl.u32 %v706, 16
    %v729 = vpack.i.b16 %v728, %v727
    %v733 = vpack.i.b16 %v710, %v708
    %v735 = vshrl.u32 %v708, 16
    %v736 = vshrl.u32 %v710, 16
    %v737 = vpack.i.b16 %v736, %v735
    %v741 = vpack.i.b16 %v714, %v712
    %v743 = vshrl.u32 %v712, 16
    %v744 = vshrl.u32 %v714, 16
    %v745 = vpack.i.b16 %v744, %v743
    %v747 = vcombine.low %v717, %v733
    %v748 = vcombine.high %v717, %v733
    %v750 = vunpack.c.l.s4 1983009808
    %v751 = vunpack.c.0.s8 %v750
    %v752 = vlaneseq
    %v753 = vshrl.u32 %v752, 7
    %v754 = vsub.s32 %v751, %v753
    %v755 = vrot.slane %v747, %v754
    %v757 = vunpack.c.l.s4 1983009808
    %v758 = vunpack.c.0.s8 %v757
    %v759 = vlaneseq
    %v760 = vshrl.u32 %v759, 7
    %v761 = vsub.s32 %v758, %v760
    %v762 = vrot.slane %v748, %v761
    %v763 = vcombine.low %v725, %v741
    %v764 = vcombine.high %v725, %v741
    %v766 = vunpack.c.l.s4 1983009808
    %v767 = vunpack.c.0.s8 %v766
    %v768 = vlaneseq
    %v769 = vshrl.u32 %v768, 7
    %v770 = vsub.s32 %v767, %v769
    %v771 = vrot.slane %v763, %v770
    %v773 = vunpack.c.l.s4 1983009808
    %v774 = vunpack.c.0.s8 %v773
    %v775 = vlaneseq
    %v776 = vshrl.u32 %v775, 7
    %v777 = vsub.s32 %v774, %v776
    %v778 = vrot.slane %v764, %v777
    %v779 = vcombine.low %v755, %v771
    %v780 = vcombine.high %v755, %v771
    %v782 = vunpack.c.l.s4 1934713408
    %v783 = vunpack.c.0.s8 %v782
    %v784 = vlaneseq
    %v785 = vshrl.u32 %v784, 7
    %v786 = vsub.s32 %v783, %v785
    %v787 = vrot.slane %v779, %v786
    %v789 = vunpack.c.l.s4 1934713408
    %v790 = vunpack.c.0.s8 %v789
    %v791 = vlaneseq
    %v792 = vshrl.u32 %v791, 7
    %v793 = vsub.s32 %v790, %v792
    %v794 = vrot.slane %v780, %v793
    %v795 = vcombine.low %v762, %v778
    %v796 = vcombine.high %v762, %v778
    %v798 = vunpack.c.l.s4 1934713408
    %v799 = vunpack.c.0.s8 %v798
    %v800 = vlaneseq
    %v801 = vshrl.u32 %v800, 7
    %v802 = vsub.s32 %v799, %v801
    %v803 = vrot.slane %v795, %v802
    %v805 = vunpack.c.l.s4 1934713408
    %v806 = vunpack.c.0.s8 %v805
    %v807 = vlaneseq
    %v808 = vshrl.u32 %v807, 7
    %v809 = vsub.s32 %v806, %v808
    %v810 = vrot.slane %v796, %v809
    %v811 = vcombine.high %v787, 0
    %v812 = vcombine.high %v794, 0
    %v813 = vcombine.high %v803, 0
    %v814 = vcombine.high %v810, 0
    %v815 = vcombine.low %v721, %v737
    %v816 = vcombine.high %v721, %v737
    %v818 = vunpack.c.l.s4 1983009808
    %v819 = vunpack.c.0.s8 %v818
    %v820 = vlaneseq
    %v821 = vshrl.u32 %v820, 7
    %v822 = vsub.s32 %v819, %v821
    %v823 = vrot.slane %v815, %v822
    %v825 = vunpack.c.l.s4 1983009808
    %v826 = vunpack.c.0.s8 %v825
    %v827 = vlaneseq
    %v828 = vshrl.u32 %v827, 7
    %v829 = vsub.s32 %v826, %v828
    %v830 = vrot.slane %v816, %v829
    %v831 = vcombine.low %v729, %v745
    %v832 = vcombine.high %v729, %v745
    %v834 = vunpack.c.l.s4 1983009808
    %v835 = vunpack.c.0.s8 %v834
    %v836 = vlaneseq
    %v837 = vshrl.u32 %v836, 7
    %v838 = vsub.s32 %v835, %v837
    %v839 = vrot.slane %v831, %v838
    %v841 = vunpack.c.l.s4 1983009808
    %v842 = vunpack.c.0.s8 %v841
    %v843 = vlaneseq
    %v844 = vshrl.u32 %v843, 7
    %v845 = vsub.s32 %v842, %v844
    %v846 = vrot.slane %v832, %v845
    %v847 = vcombine.low %v823, %v839
    %v848 = vcombine.high %v823, %v839
    %v850 = vunpack.c.l.s4 1934713408
    %v851 = vunpack.c.0.s8 %v850
    %v852 = vlaneseq
    %v853 = vshrl.u32 %v852, 7
    %v854 = vsub.s32 %v851, %v853
    %v855 = vrot.slane %v847, %v854
    %v857 = vunpack.c.l.s4 1934713408
    %v858 = vunpack.c.0.s8 %v857
    %v859 = vlaneseq
    %v860 = vshrl.u32 %v859, 7
    %v861 = vsub.s32 %v858, %v860
    %v862 = vrot.slane %v848, %v861
    %v863 = vcombine.low %v830, %v846
    %v864 = vcombine.high %v830, %v846
    %v866 = vunpack.c.l.s4 1934713408
    %v867 = vunpack.c.0.s8 %v866
    %v868 = vlaneseq
    %v869 = vshrl.u32 %v868, 7
    %v870 = vsub.s32 %v867, %v869
    %v871 = vrot.slane %v863, %v870
    %v873 = vunpack.c.l.s4 1934713408
    %v874 = vunpack.c.0.s8 %v873
    %v875 = vlaneseq
    %v876 = vshrl.u32 %v875, 7
    %v877 = vsub.s32 %v874, %v876
    %v878 = vrot.slane %v864, %v877
    %v879 = vcombine.high %v855, 0
    %v880 = vcombine.high %v862, 0
    %v881 = vcombine.high %v871, 0
    %v882 = vcombine.high %v878, 0
    %v883 = vcombine.low %v787, %v794
    %v885 = vunpack.c.l.s4 1983009808
    %v886 = vunpack.c.0.s8 %v885
    %v887 = vlaneseq
    %v888 = vshrl.u32 %v887, 7
    %v889 = vsub.s32 %v886, %v888
    %v890 = vrot.slane %v883, %v889
    %v891 = vcombine.low %v811, %v812
    %v893 = vunpack.c.l.s4 1983009808
    %v894 = vunpack.c.0.s8 %v893
    %v895 = vlaneseq
    %v896 = vshrl.u32 %v895, 7
    %v897 = vsub.s32 %v894, %v896
    %v898 = vrot.slane %v891, %v897
    %v899 = vcombine.low %v803, %v810
    %v901 = vunpack.c.l.s4 1983009808
    %v902 = vunpack.c.0.s8 %v901
    %v903 = vlaneseq
    %v904 = vshrl.u32 %v903, 7
    %v905 = vsub.s32 %v902, %v904
    %v906 = vrot.slane %v899, %v905
    %v907 = vcombine.low %v813, %v814
    %v909 = vunpack.c.l.s4 1983009808
    %v910 = vunpack.c.0.s8 %v909
    %v911 = vlaneseq
    %v912 = vshrl.u32 %v911, 7
    %v913 = vsub.s32 %v910, %v912
    %v914 = vrot.slane %v907, %v913
    %v915 = vcombine.low %v890, %v898
    %v916 = vcombine.high %v890, %v898
    %v918 = vunpack.c.l.s4 1934713408
    %v919 = vunpack.c.0.s8 %v918
    %v920 = vlaneseq
    %v921 = vshrl.u32 %v920, 7
    %v922 = vsub.s32 %v919, %v921
    %v923 = vrot.slane %v915, %v922
    %v925 = vunpack.c.l.s4 1934713408
    %v926 = vunpack.c.0.s8 %v925
    %v927 = vlaneseq
    %v928 = vshrl.u32 %v927, 7
    %v929 = vsub.s32 %v926, %v928
    %v930 = vrot.slane %v916, %v929
    %v931 = vcombine.low %v906, %v914
    %v932 = vcombine.high %v906, %v914
    %v934 = vunpack.c.l.s4 1934713408
    %v935 = vunpack.c.0.s8 %v934
    %v936 = vlaneseq
    %v937 = vshrl.u32 %v936, 7
    %v938 = vsub.s32 %v935, %v937
    %v939 = vrot.slane %v931, %v938
    %v941 = vunpack.c.l.s4 1934713408
    %v942 = vunpack.c.0.s8 %v941
    %v943 = vlaneseq
    %v944 = vshrl.u32 %v943, 7
    %v945 = vsub.s32 %v942, %v944
    %v946 = vrot.slane %v932, %v945
    %v947 = vcombine.low %v923, %v939
    %v948 = vcombine.high %v923, %v939
    %v949 = vcombine.low %v930, %v946
    %v950 = vcombine.high %v930, %v946
    %v951 = vcombine.low %v855, %v862
    %v953 = vunpack.c.l.s4 1983009808
    %v954 = vunpack.c.0.s8 %v953
    %v955 = vlaneseq
    %v956 = vshrl.u32 %v955, 7
    %v957 = vsub.s32 %v954, %v956
    %v958 = vrot.slane %v951, %v957
    %v959 = vcombine.low %v879, %v880
    %v961 = vunpack.c.l.s4 1983009808
    %v962 = vunpack.c.0.s8 %v961
    %v963 = vlaneseq
    %v964 = vshrl.u32 %v963, 7
    %v965 = vsub.s32 %v962, %v964
    %v966 = vrot.slane %v959, %v965
    %v967 = vcombine.low %v871, %v878
    %v969 = vunpack.c.l.s4 1983009808
    %v970 = vunpack.c.0.s8 %v969
    %v971 = vlaneseq
    %v972 = vshrl.u32 %v971, 7
    %v973 = vsub.s32 %v970, %v972
    %v974 = vrot.slane %v967, %v973
    %v975 = vcombine.low %v881, %v882
    %v977 = vunpack.c.l.s4 1983009808
    %v978 = vunpack.c.0.s8 %v977
    %v979 = vlaneseq
    %v980 = vshrl.u32 %v979, 7
    %v981 = vsub.s32 %v978, %v980
    %v982 = vrot.slane %v975, %v981
    %v983 = vcombine.low %v958, %v966
    %v984 = vcombine.high %v958, %v966
    %v986 = vunpack.c.l.s4 1934713408
    %v987 = vunpack.c.0.s8 %v986
    %v988 = vlaneseq
    %v989 = vshrl.u32 %v988, 7
    %v990 = vsub.s32 %v987, %v989
    %v991 = vrot.slane %v983, %v990
    %v993 = vunpack.c.l.s4 1934713408
    %v994 = vunpack.c.0.s8 %v993
    %v995 = vlaneseq
    %v996 = vshrl.u32 %v995, 7
    %v997 = vsub.s32 %v994, %v996
    %v998 = vrot.slane %v984, %v997
    %v999 = vcombine.low %v974, %v982
    %v1000 = vcombine.high %v974, %v982
    %v1002 = vunpack.c.l.s4 1934713408
    %v1003 = vunpack.c.0.s8 %v1002
    %v1004 = vlaneseq
    %v1005 = vshrl.u32 %v1004, 7
    %v1006 = vsub.s32 %v1003, %v1005
    %v1007 = vrot.slane %v999, %v1006
    %v1009 = vunpack.c.l.s4 1934713408
    %v1010 = vunpack.c.0.s8 %v1009
    %v1011 = vlaneseq
    %v1012 = vshrl.u32 %v1011, 7
    %v1013 = vsub.s32 %v1010, %v1012
    %v1014 = vrot.slane %v1000, %v1013
    %v1015 = vcombine.low %v991, %v1007
    %v1016 = vcombine.high %v991, %v1007
    %v1017 = vcombine.low %v998, %v1014
    %v1018 = vcombine.high %v998, %v1014
    %v1021 = vpack.i.b16 %v1015, %v947
    %v1022 = vshrl.u32 %v947, 16
    %v1023 = vshrl.u32 %v1015, 16
    %v1024 = vpack.i.b16 %v1023, %v1022
    %v1027 = vpack.i.b16 %v1016, %v948
    %v1028 = vshrl.u32 %v948, 16
    %v1029 = vshrl.u32 %v1016, 16
    %v1030 = vpack.i.b16 %v1029, %v1028
    %v1033 = vpack.i.b16 %v1017, %v949
    %v1034 = vshrl.u32 %v949, 16
    %v1035 = vshrl.u32 %v1017, 16
    %v1036 = vpack.i.b16 %v1035, %v1034
    %v1039 = vpack.i.b16 %v1018, %v950
    %v1040 = vshrl.u32 %v950, 16
    %v1041 = vshrl.u32 %v1018, 16
    %v1042 = vpack.i.b16 %v1041, %v1040
    %v1043 = vunpack.c.l.b16 %v1021
    %v1044 = vunpack.c.h.b16 %v1021
    %v1045 = vunpack.c.l.b16 %v1024
    %v1046 = vunpack.c.h.b16 %v1024
    %v1047 = vunpack.c.l.b16 %v1027
    %v1048 = vunpack.c.h.b16 %v1027
    %v1049 = vunpack.c.l.b16 %v1030
    %v1050 = vunpack.c.h.b16 %v1030
    %v1051 = vunpack.c.l.b16 %v1033
    %v1052 = vunpack.c.h.b16 %v1033
    %v1053 = vunpack.c.l.b16 %v1036
    %v1054 = vunpack.c.h.b16 %v1036
    %v1055 = vunpack.c.l.b16 %v1039
    %v1056 = vunpack.c.h.b16 %v1039
    %v1057 = vunpack.c.l.b16 %v1042
    %v1058 = vunpack.c.h.b16 %v1042
    %v1059 = vpack.c.b16 %v1043, %v1043
    %v1060 = vpack.c.b16 %v1044, %v1044
    %v1061 = vpack.c.b16 %v1045, %v1045
    %v1062 = vpack.c.b16 %v1046, %v1046
    %v1063 = vpack.c.b16 %v1047, %v1047
    %v1064 = vpack.c.b16 %v1048, %v1048
    %v1065 = vpack.c.b16 %v1049, %v1049
    %v1066 = vpack.c.b16 %v1050, %v1050
    %v1067 = vpack.c.b16 %v1051, %v1051
    %v1068 = vpack.c.b16 %v1052, %v1052
    %v1069 = vpack.c.b16 %v1053, %v1053
    %v1070 = vpack.c.b16 %v1054, %v1054
    %v1071 = vpack.c.b16 %v1055, %v1055
    %v1072 = vpack.c.b16 %v1056, %v1056
    %v1073 = vpack.c.b16 %v1057, %v1057
    %v1074 = vpack.c.b16 %v1058, %v1058
    %1075 = vrot.lane.b32.xlu0 %v324, 96
    %v1076 = vpop.permute.xlu0 %1075
    %1077 = vrot.lane.b32.xlu0 %v702, 96
    %v1078 = vpop.permute.xlu0 %1077
    %1079 = vrot.lane.b32.xlu0 %v704, 96
    %v1080 = vpop.permute.xlu0 %1079
    %1081 = vrot.lane.b32.xlu0 %v706, 96
    %v1082 = vpop.permute.xlu0 %1081
    %1083 = vrot.lane.b32.xlu0 %v708, 96
    %v1084 = vpop.permute.xlu0 %1083
    %1085 = vrot.lane.b32.xlu0 %v710, 96
    %v1086 = vpop.permute.xlu0 %1085
    %1087 = vrot.lane.b32.xlu0 %v712, 96
    %v1088 = vpop.permute.xlu0 %1087
    %1089 = vrot.lane.b32.xlu0 %v714, 96
    %v1090 = vpop.permute.xlu0 %1089
    %v1093 = vpack.i.b16 %v1078, %v1076
    %v1095 = vshrl.u32 %v1076, 16
    %v1096 = vshrl.u32 %v1078, 16
    %v1097 = vpack.i.b16 %v1096, %v1095
    %v1101 = vpack.i.b16 %v1082, %v1080
    %v1103 = vshrl.u32 %v1080, 16
    %v1104 = vshrl.u32 %v1082, 16
    %v1105 = vpack.i.b16 %v1104, %v1103
    %v1109 = vpack.i.b16 %v1086, %v1084
    %v1111 = vshrl.u32 %v1084, 16
    %v1112 = vshrl.u32 %v1086, 16
    %v1113 = vpack.i.b16 %v1112, %v1111
    %v1117 = vpack.i.b16 %v1090, %v1088
    %v1119 = vshrl.u32 %v1088, 16
    %v1120 = vshrl.u32 %v1090, 16
    %v1121 = vpack.i.b16 %v1120, %v1119
    %v1123 = vcombine.low %v1093, %v1109
    %v1124 = vcombine.high %v1093, %v1109
    %v1126 = vunpack.c.l.s4 1983009808
    %v1127 = vunpack.c.0.s8 %v1126
    %v1128 = vlaneseq
    %v1129 = vshrl.u32 %v1128, 7
    %v1130 = vsub.s32 %v1127, %v1129
    %v1131 = vrot.slane %v1123, %v1130
    %v1133 = vunpack.c.l.s4 1983009808
    %v1134 = vunpack.c.0.s8 %v1133
    %v1135 = vlaneseq
    %v1136 = vshrl.u32 %v1135, 7
    %v1137 = vsub.s32 %v1134, %v1136
    %v1138 = vrot.slane %v1124, %v1137
    %v1139 = vcombine.low %v1101, %v1117
    %v1140 = vcombine.high %v1101, %v1117
    %v1142 = vunpack.c.l.s4 1983009808
    %v1143 = vunpack.c.0.s8 %v1142
    %v1144 = vlaneseq
    %v1145 = vshrl.u32 %v1144, 7
    %v1146 = vsub.s32 %v1143, %v1145
    %v1147 = vrot.slane %v1139, %v1146
    %v1149 = vunpack.c.l.s4 1983009808
    %v1150 = vunpack.c.0.s8 %v1149
    %v1151 = vlaneseq
    %v1152 = vshrl.u32 %v1151, 7
    %v1153 = vsub.s32 %v1150, %v1152
    %v1154 = vrot.slane %v1140, %v1153
    %v1155 = vcombine.low %v1131, %v1147
    %v1156 = vcombine.high %v1131, %v1147
    %v1158 = vunpack.c.l.s4 1934713408
    %v1159 = vunpack.c.0.s8 %v1158
    %v1160 = vlaneseq
    %v1161 = vshrl.u32 %v1160, 7
    %v1162 = vsub.s32 %v1159, %v1161
    %v1163 = vrot.slane %v1155, %v1162
    %v1165 = vunpack.c.l.s4 1934713408
    %v1166 = vunpack.c.0.s8 %v1165
    %v1167 = vlaneseq
    %v1168 = vshrl.u32 %v1167, 7
    %v1169 = vsub.s32 %v1166, %v1168
    %v1170 = vrot.slane %v1156, %v1169
    %v1171 = vcombine.low %v1138, %v1154
    %v1172 = vcombine.high %v1138, %v1154
    %v1174 = vunpack.c.l.s4 1934713408
    %v1175 = vunpack.c.0.s8 %v1174
    %v1176 = vlaneseq
    %v1177 = vshrl.u32 %v1176, 7
    %v1178 = vsub.s32 %v1175, %v1177
    %v1179 = vrot.slane %v1171, %v1178
    %v1181 = vunpack.c.l.s4 1934713408
    %v1182 = vunpack.c.0.s8 %v1181
    %v1183 = vlaneseq
    %v1184 = vshrl.u32 %v1183, 7
    %v1185 = vsub.s32 %v1182, %v1184
    %v1186 = vrot.slane %v1172, %v1185
    %v1187 = vcombine.high %v1163, 0
    %v1188 = vcombine.high %v1170, 0
    %v1189 = vcombine.high %v1179, 0
    %v1190 = vcombine.high %v1186, 0
    %v1191 = vcombine.low %v1097, %v1113
    %v1192 = vcombine.high %v1097, %v1113
    %v1194 = vunpack.c.l.s4 1983009808
    %v1195 = vunpack.c.0.s8 %v1194
    %v1196 = vlaneseq
    %v1197 = vshrl.u32 %v1196, 7
    %v1198 = vsub.s32 %v1195, %v1197
    %v1199 = vrot.slane %v1191, %v1198
    %v1201 = vunpack.c.l.s4 1983009808
    %v1202 = vunpack.c.0.s8 %v1201
    %v1203 = vlaneseq
    %v1204 = vshrl.u32 %v1203, 7
    %v1205 = vsub.s32 %v1202, %v1204
    %v1206 = vrot.slane %v1192, %v1205
    %v1207 = vcombine.low %v1105, %v1121
    %v1208 = vcombine.high %v1105, %v1121
    %v1210 = vunpack.c.l.s4 1983009808
    %v1211 = vunpack.c.0.s8 %v1210
    %v1212 = vlaneseq
    %v1213 = vshrl.u32 %v1212, 7
    %v1214 = vsub.s32 %v1211, %v1213
    %v1215 = vrot.slane %v1207, %v1214
    %v1217 = vunpack.c.l.s4 1983009808
    %v1218 = vunpack.c.0.s8 %v1217
    %v1219 = vlaneseq
    %v1220 = vshrl.u32 %v1219, 7
    %v1221 = vsub.s32 %v1218, %v1220
    %v1222 = vrot.slane %v1208, %v1221
    %v1223 = vcombine.low %v1199, %v1215
    %v1224 = vcombine.high %v1199, %v1215
    %v1226 = vunpack.c.l.s4 1934713408
    %v1227 = vunpack.c.0.s8 %v1226
    %v1228 = vlaneseq
    %v1229 = vshrl.u32 %v1228, 7
    %v1230 = vsub.s32 %v1227, %v1229
    %v1231 = vrot.slane %v1223, %v1230
    %v1233 = vunpack.c.l.s4 1934713408
    %v1234 = vunpack.c.0.s8 %v1233
    %v1235 = vlaneseq
    %v1236 = vshrl.u32 %v1235, 7
    %v1237 = vsub.s32 %v1234, %v1236
    %v1238 = vrot.slane %v1224, %v1237
    %v1239 = vcombine.low %v1206, %v1222
    %v1240 = vcombine.high %v1206, %v1222
    %v1242 = vunpack.c.l.s4 1934713408
    %v1243 = vunpack.c.0.s8 %v1242
    %v1244 = vlaneseq
    %v1245 = vshrl.u32 %v1244, 7
    %v1246 = vsub.s32 %v1243, %v1245
    %v1247 = vrot.slane %v1239, %v1246
    %v1249 = vunpack.c.l.s4 1934713408
    %v1250 = vunpack.c.0.s8 %v1249
    %v1251 = vlaneseq
    %v1252 = vshrl.u32 %v1251, 7
    %v1253 = vsub.s32 %v1250, %v1252
    %v1254 = vrot.slane %v1240, %v1253
    %v1255 = vcombine.high %v1231, 0
    %v1256 = vcombine.high %v1238, 0
    %v1257 = vcombine.high %v1247, 0
    %v1258 = vcombine.high %v1254, 0
    %v1259 = vcombine.low %v1163, %v1170
    %v1261 = vunpack.c.l.s4 1983009808
    %v1262 = vunpack.c.0.s8 %v1261
    %v1263 = vlaneseq
    %v1264 = vshrl.u32 %v1263, 7
    %v1265 = vsub.s32 %v1262, %v1264
    %v1266 = vrot.slane %v1259, %v1265
    %v1267 = vcombine.low %v1187, %v1188
    %v1269 = vunpack.c.l.s4 1983009808
    %v1270 = vunpack.c.0.s8 %v1269
    %v1271 = vlaneseq
    %v1272 = vshrl.u32 %v1271, 7
    %v1273 = vsub.s32 %v1270, %v1272
    %v1274 = vrot.slane %v1267, %v1273
    %v1275 = vcombine.low %v1179, %v1186
    %v1277 = vunpack.c.l.s4 1983009808
    %v1278 = vunpack.c.0.s8 %v1277
    %v1279 = vlaneseq
    %v1280 = vshrl.u32 %v1279, 7
    %v1281 = vsub.s32 %v1278, %v1280
    %v1282 = vrot.slane %v1275, %v1281
    %v1283 = vcombine.low %v1189, %v1190
    %v1285 = vunpack.c.l.s4 1983009808
    %v1286 = vunpack.c.0.s8 %v1285
    %v1287 = vlaneseq
    %v1288 = vshrl.u32 %v1287, 7
    %v1289 = vsub.s32 %v1286, %v1288
    %v1290 = vrot.slane %v1283, %v1289
    %v1291 = vcombine.low %v1266, %v1274
    %v1292 = vcombine.high %v1266, %v1274
    %v1294 = vunpack.c.l.s4 1934713408
    %v1295 = vunpack.c.0.s8 %v1294
    %v1296 = vlaneseq
    %v1297 = vshrl.u32 %v1296, 7
    %v1298 = vsub.s32 %v1295, %v1297
    %v1299 = vrot.slane %v1291, %v1298
    %v1301 = vunpack.c.l.s4 1934713408
    %v1302 = vunpack.c.0.s8 %v1301
    %v1303 = vlaneseq
    %v1304 = vshrl.u32 %v1303, 7
    %v1305 = vsub.s32 %v1302, %v1304
    %v1306 = vrot.slane %v1292, %v1305
    %v1307 = vcombine.low %v1282, %v1290
    %v1308 = vcombine.high %v1282, %v1290
    %v1310 = vunpack.c.l.s4 1934713408
    %v1311 = vunpack.c.0.s8 %v1310
    %v1312 = vlaneseq
    %v1313 = vshrl.u32 %v1312, 7
    %v1314 = vsub.s32 %v1311, %v1313
    %v1315 = vrot.slane %v1307, %v1314
    %v1317 = vunpack.c.l.s4 1934713408
    %v1318 = vunpack.c.0.s8 %v1317
    %v1319 = vlaneseq
    %v1320 = vshrl.u32 %v1319, 7
    %v1321 = vsub.s32 %v1318, %v1320
    %v1322 = vrot.slane %v1308, %v1321
    %v1323 = vcombine.low %v1299, %v1315
    %v1324 = vcombine.high %v1299, %v1315
    %v1325 = vcombine.low %v1306, %v1322
    %v1326 = vcombine.high %v1306, %v1322
    %v1327 = vcombine.low %v1231, %v1238
    %v1329 = vunpack.c.l.s4 1983009808
    %v1330 = vunpack.c.0.s8 %v1329
    %v1331 = vlaneseq
    %v1332 = vshrl.u32 %v1331, 7
    %v1333 = vsub.s32 %v1330, %v1332
    %v1334 = vrot.slane %v1327, %v1333
    %v1335 = vcombine.low %v1255, %v1256
    %v1337 = vunpack.c.l.s4 1983009808
    %v1338 = vunpack.c.0.s8 %v1337
    %v1339 = vlaneseq
    %v1340 = vshrl.u32 %v1339, 7
    %v1341 = vsub.s32 %v1338, %v1340
    %v1342 = vrot.slane %v1335, %v1341
    %v1343 = vcombine.low %v1247, %v1254
    %v1345 = vunpack.c.l.s4 1983009808
    %v1346 = vunpack.c.0.s8 %v1345
    %v1347 = vlaneseq
    %v1348 = vshrl.u32 %v1347, 7
    %v1349 = vsub.s32 %v1346, %v1348
    %v1350 = vrot.slane %v1343, %v1349
    %v1351 = vcombine.low %v1257, %v1258
    %v1353 = vunpack.c.l.s4 1983009808
    %v1354 = vunpack.c.0.s8 %v1353
    %v1355 = vlaneseq
    %v1356 = vshrl.u32 %v1355, 7
    %v1357 = vsub.s32 %v1354, %v1356
    %v1358 = vrot.slane %v1351, %v1357
    %v1359 = vcombine.low %v1334, %v1342
    %v1360 = vcombine.high %v1334, %v1342
    %v1362 = vunpack.c.l.s4 1934713408
    %v1363 = vunpack.c.0.s8 %v1362
    %v1364 = vlaneseq
    %v1365 = vshrl.u32 %v1364, 7
    %v1366 = vsub.s32 %v1363, %v1365
    %v1367 = vrot.slane %v1359, %v1366
    %v1369 = vunpack.c.l.s4 1934713408
    %v1370 = vunpack.c.0.s8 %v1369
    %v1371 = vlaneseq
    %v1372 = vshrl.u32 %v1371, 7
    %v1373 = vsub.s32 %v1370, %v1372
    %v1374 = vrot.slane %v1360, %v1373
    %v1375 = vcombine.low %v1350, %v1358
    %v1376 = vcombine.high %v1350, %v1358
    %v1378 = vunpack.c.l.s4 1934713408
    %v1379 = vunpack.c.0.s8 %v1378
    %v1380 = vlaneseq
    %v1381 = vshrl.u32 %v1380, 7
    %v1382 = vsub.s32 %v1379, %v1381
    %v1383 = vrot.slane %v1375, %v1382
    %v1385 = vunpack.c.l.s4 1934713408
    %v1386 = vunpack.c.0.s8 %v1385
    %v1387 = vlaneseq
    %v1388 = vshrl.u32 %v1387, 7
    %v1389 = vsub.s32 %v1386, %v1388
    %v1390 = vrot.slane %v1376, %v1389
    %v1391 = vcombine.low %v1367, %v1383
    %v1392 = vcombine.high %v1367, %v1383
    %v1393 = vcombine.low %v1374, %v1390
    %v1394 = vcombine.high %v1374, %v1390
    %v1397 = vpack.i.b16 %v1391, %v1323
    %v1398 = vshrl.u32 %v1323, 16
    %v1399 = vshrl.u32 %v1391, 16
    %v1400 = vpack.i.b16 %v1399, %v1398
    %v1403 = vpack.i.b16 %v1392, %v1324
    %v1404 = vshrl.u32 %v1324, 16
    %v1405 = vshrl.u32 %v1392, 16
    %v1406 = vpack.i.b16 %v1405, %v1404
    %v1409 = vpack.i.b16 %v1393, %v1325
    %v1410 = vshrl.u32 %v1325, 16
    %v1411 = vshrl.u32 %v1393, 16
    %v1412 = vpack.i.b16 %v1411, %v1410
    %v1415 = vpack.i.b16 %v1394, %v1326
    %v1416 = vshrl.u32 %v1326, 16
    %v1417 = vshrl.u32 %v1394, 16
    %v1418 = vpack.i.b16 %v1417, %v1416
    %v1419 = vunpack.c.l.b16 %v1397
    %v1420 = vunpack.c.h.b16 %v1397
    %v1421 = vunpack.c.l.b16 %v1400
    %v1422 = vunpack.c.h.b16 %v1400
    %v1423 = vunpack.c.l.b16 %v1403
    %v1424 = vunpack.c.h.b16 %v1403
    %v1425 = vunpack.c.l.b16 %v1406
    %v1426 = vunpack.c.h.b16 %v1406
    %v1427 = vunpack.c.l.b16 %v1409
    %v1428 = vunpack.c.h.b16 %v1409
    %v1429 = vunpack.c.l.b16 %v1412
    %v1430 = vunpack.c.h.b16 %v1412
    %v1431 = vunpack.c.l.b16 %v1415
    %v1432 = vunpack.c.h.b16 %v1415
    %v1433 = vunpack.c.l.b16 %v1418
    %v1434 = vunpack.c.h.b16 %v1418
    %v1435 = vpack.c.b16 %v1419, %v1419
    %v1436 = vpack.c.b16 %v1420, %v1420
    %v1437 = vpack.c.b16 %v1421, %v1421
    %v1438 = vpack.c.b16 %v1422, %v1422
    %v1439 = vpack.c.b16 %v1423, %v1423
    %v1440 = vpack.c.b16 %v1424, %v1424
    %v1441 = vpack.c.b16 %v1425, %v1425
    %v1442 = vpack.c.b16 %v1426, %v1426
    %v1443 = vpack.c.b16 %v1427, %v1427
    %v1444 = vpack.c.b16 %v1428, %v1428
    %v1445 = vpack.c.b16 %v1429, %v1429
    %v1446 = vpack.c.b16 %v1430, %v1430
    %v1447 = vpack.c.b16 %v1431, %v1431
    %v1448 = vpack.c.b16 %v1432, %v1432
    %v1449 = vpack.c.b16 %v1433, %v1433
    %v1450 = vpack.c.b16 %v1434, %v1434
    %vm1451 = vcmask 31744
    %v1453 = vsel %vm1451, %v684, 0
    %v1456 = vsel %vm1451, %v1059, 0
    %1458 = vmatprep.subr.bf16.mxu0 0
    %1459 = vmatpush1.bf16.xpose.msra.mxu0 %v1456
    %1460 = vmatprep.subr.bf16.mxu0 0
    %1461 = vmatpush1.bf16.xpose.msra.mxu0 0
    %1462 = vmatprep.subr.bf16.mxu0 0
    %1463 = vmatpush1.bf16.xpose.msra.mxu0 0
    %1464 = vmatprep.subr.bf16.mxu0 0
    %1465 = vmatpush1.bf16.xpose.msra.mxu0 0
    %1466 = vmatprep.subr.bf16.mxu0 0
    %1467 = vmatpush1.bf16.xpose.msra.mxu0 0
    %1468 = vmatprep.subr.bf16.mxu0 0
    %1469 = vmatpush1.bf16.xpose.msra.mxu0 0
    %1470 = vmatprep.subr.bf16.mxu0 0
    %1471 = vmatpush1.bf16.xpose.msra.mxu0 0
    %1472 = vmatprep.subr.bf16.mxu0 0
    %1473 = vmatpush1.bf16.xpose.msra.mxu0 0
    %1474 = vmatprep.subr.bf16.mxu0 0
    %1475 = vmatpush1.bf16.xpose.msra.mxu0 0
    %1476 = vmatprep.subr.bf16.mxu0 0
    %1477 = vmatpush1.bf16.xpose.msra.mxu0 0
    %1478 = vmatprep.subr.bf16.mxu0 0
    %1479 = vmatpush1.bf16.xpose.msra.mxu0 0
    %1480 = vmatprep.subr.bf16.mxu0 0
    %1481 = vmatpush1.bf16.xpose.msra.mxu0 0
    %1482 = vmatprep.subr.bf16.mxu0 0
    %1483 = vmatpush1.bf16.xpose.msra.mxu0 0
    %1484 = vmatprep.subr.bf16.mxu0 0
    %1485 = vmatpush1.bf16.xpose.msra.mxu0 0
    %1486 = vmatprep.subr.bf16.mxu0 0
    %1487 = vmatpush1.bf16.xpose.msra.mxu0 0
    %1488 = vmatprep.subr.bf16.mxu0 0
    %1489 = vmatpush1.bf16.xpose.msra.mxu0 0
    %1490 = vmatprep.mubr.bf16.mxu0 0
    %1491 = vmatmul.mubr.bf16.gmra.mrb[0].mxu0 %v1453
    %v1492 = vpop.f32.mrb[0].mxu0
    %v1493 = vadd.f32 0.0, %v1492
    %v1494 = vpop.f32.mrb[0].mxu0
    %v1495 = vpop.f32.mrb[0].mxu0
    %v1496 = vpop.f32.mrb[0].mxu0
    %1497 = vdwg.mxu0
    %v1499 = vsel %vm1451, %v685, 0
    %v1502 = vsel %vm1451, %v1060, 0
    %1504 = vmatprep.subr.bf16.mxu0 0
    %1505 = vmatpush1.bf16.xpose.msra.mxu0 %v1502
    %1506 = vmatprep.subr.bf16.mxu0 0
    %1507 = vmatpush1.bf16.xpose.msra.mxu0 0
    %1508 = vmatprep.subr.bf16.mxu0 0
    %1509 = vmatpush1.bf16.xpose.msra.mxu0 0
    %1510 = vmatprep.subr.bf16.mxu0 0
    %1511 = vmatpush1.bf16.xpose.msra.mxu0 0
    %1512 = vmatprep.subr.bf16.mxu0 0
    %1513 = vmatpush1.bf16.xpose.msra.mxu0 0
    %1514 = vmatprep.subr.bf16.mxu0 0
    %1515 = vmatpush1.bf16.xpose.msra.mxu0 0
    %1516 = vmatprep.subr.bf16.mxu0 0
    %1517 = vmatpush1.bf16.xpose.msra.mxu0 0
    %1518 = vmatprep.subr.bf16.mxu0 0
    %1519 = vmatpush1.bf16.xpose.msra.mxu0 0
    %1520 = vmatprep.subr.bf16.mxu0 0
    %1521 = vmatpush1.bf16.xpose.msra.mxu0 0
    %1522 = vmatprep.subr.bf16.mxu0 0
    %1523 = vmatpush1.bf16.xpose.msra.mxu0 0
    %1524 = vmatprep.subr.bf16.mxu0 0
    %1525 = vmatpush1.bf16.xpose.msra.mxu0 0
    %1526 = vmatprep.subr.bf16.mxu0 0
    %1527 = vmatpush1.bf16.xpose.msra.mxu0 0
    %1528 = vmatprep.subr.bf16.mxu0 0
    %1529 = vmatpush1.bf16.xpose.msra.mxu0 0
    %1530 = vmatprep.subr.bf16.mxu0 0
    %1531 = vmatpush1.bf16.xpose.msra.mxu0 0
    %1532 = vmatprep.subr.bf16.mxu0 0
    %1533 = vmatpush1.bf16.xpose.msra.mxu0 0
    %1534 = vmatprep.subr.bf16.mxu0 0
    %1535 = vmatpush1.bf16.xpose.msra.mxu0 0
    %1536 = vmatprep.mubr.bf16.mxu0 0
    %1537 = vmatmul.mubr.bf16.gmra.mrb[0].mxu0 %v1499
    %v1538 = vpop.f32.mrb[0].mxu0
    %v1539 = vadd.f32 0.0, %v1538
    %v1540 = vpop.f32.mrb[0].mxu0
    %v1541 = vpop.f32.mrb[0].mxu0
    %v1542 = vpop.f32.mrb[0].mxu0
    %1543 = vdwg.mxu0
    %v1545 = vsel %vm1451, %v686, 0
    %v1548 = vsel %vm1451, %v1061, 0
    %1550 = vmatprep.subr.bf16.mxu0 0
    %1551 = vmatpush1.bf16.xpose.msra.mxu0 %v1548
    %1552 = vmatprep.subr.bf16.mxu0 0
    %1553 = vmatpush1.bf16.xpose.msra.mxu0 0
    %1554 = vmatprep.subr.bf16.mxu0 0
    %1555 = vmatpush1.bf16.xpose.msra.mxu0 0
    %1556 = vmatprep.subr.bf16.mxu0 0
    %1557 = vmatpush1.bf16.xpose.msra.mxu0 0
    %1558 = vmatprep.subr.bf16.mxu0 0
    %1559 = vmatpush1.bf16.xpose.msra.mxu0 0
    %1560 = vmatprep.subr.bf16.mxu0 0
    %1561 = vmatpush1.bf16.xpose.msra.mxu0 0
    %1562 = vmatprep.subr.bf16.mxu0 0
    %1563 = vmatpush1.bf16.xpose.msra.mxu0 0
    %1564 = vmatprep.subr.bf16.mxu0 0
    %1565 = vmatpush1.bf16.xpose.msra.mxu0 0
    %1566 = vmatprep.subr.bf16.mxu0 0
    %1567 = vmatpush1.bf16.xpose.msra.mxu0 0
    %1568 = vmatprep.subr.bf16.mxu0 0
    %1569 = vmatpush1.bf16.xpose.msra.mxu0 0
    %1570 = vmatprep.subr.bf16.mxu0 0
    %1571 = vmatpush1.bf16.xpose.msra.mxu0 0
    %1572 = vmatprep.subr.bf16.mxu0 0
    %1573 = vmatpush1.bf16.xpose.msra.mxu0 0
    %1574 = vmatprep.subr.bf16.mxu0 0
    %1575 = vmatpush1.bf16.xpose.msra.mxu0 0
    %1576 = vmatprep.subr.bf16.mxu0 0
    %1577 = vmatpush1.bf16.xpose.msra.mxu0 0
    %1578 = vmatprep.subr.bf16.mxu0 0
    %1579 = vmatpush1.bf16.xpose.msra.mxu0 0
    %1580 = vmatprep.subr.bf16.mxu0 0
    %1581 = vmatpush1.bf16.xpose.msra.mxu0 0
    %1582 = vmatprep.mubr.bf16.mxu0 0
    %1583 = vmatmul.mubr.bf16.gmra.mrb[0].mxu0 %v1545
    %v1584 = vpop.f32.mrb[0].mxu0
    %v1585 = vadd.f32 0.0, %v1584
    %v1586 = vpop.f32.mrb[0].mxu0
    %v1587 = vpop.f32.mrb[0].mxu0
    %v1588 = vpop.f32.mrb[0].mxu0
    %1589 = vdwg.mxu0
    %v1591 = vsel %vm1451, %v687, 0
    %v1594 = vsel %vm1451, %v1062, 0
    %1596 = vmatprep.subr.bf16.mxu0 0
    %1597 = vmatpush1.bf16.xpose.msra.mxu0 %v1594
    %1598 = vmatprep.subr.bf16.mxu0 0
    %1599 = vmatpush1.bf16.xpose.msra.mxu0 0
    %1600 = vmatprep.subr.bf16.mxu0 0
    %1601 = vmatpush1.bf16.xpose.msra.mxu0 0
    %1602 = vmatprep.subr.bf16.mxu0 0
    %1603 = vmatpush1.bf16.xpose.msra.mxu0 0
    %1604 = vmatprep.subr.bf16.mxu0 0
    %1605 = vmatpush1.bf16.xpose.msra.mxu0 0
    %1606 = vmatprep.subr.bf16.mxu0 0
    %1607 = vmatpush1.bf16.xpose.msra.mxu0 0
    %1608 = vmatprep.subr.bf16.mxu0 0
    %1609 = vmatpush1.bf16.xpose.msra.mxu0 0
    %1610 = vmatprep.subr.bf16.mxu0 0
    %1611 = vmatpush1.bf16.xpose.msra.mxu0 0
    %1612 = vmatprep.subr.bf16.mxu0 0
    %1613 = vmatpush1.bf16.xpose.msra.mxu0 0
    %1614 = vmatprep.subr.bf16.mxu0 0
    %1615 = vmatpush1.bf16.xpose.msra.mxu0 0
    %1616 = vmatprep.subr.bf16.mxu0 0
    %1617 = vmatpush1.bf16.xpose.msra.mxu0 0
    %1618 = vmatprep.subr.bf16.mxu0 0
    %1619 = vmatpush1.bf16.xpose.msra.mxu0 0
    %1620 = vmatprep.subr.bf16.mxu0 0
    %1621 = vmatpush1.bf16.xpose.msra.mxu0 0
    %1622 = vmatprep.subr.bf16.mxu0 0
    %1623 = vmatpush1.bf16.xpose.msra.mxu0 0
    %1624 = vmatprep.subr.bf16.mxu0 0
    %1625 = vmatpush1.bf16.xpose.msra.mxu0 0
    %1626 = vmatprep.subr.bf16.mxu0 0
    %1627 = vmatpush1.bf16.xpose.msra.mxu0 0
    %1628 = vmatprep.mubr.bf16.mxu0 0
    %1629 = vmatmul.mubr.bf16.gmra.mrb[0].mxu0 %v1591
    %v1630 = vpop.f32.mrb[0].mxu0
    %v1631 = vadd.f32 0.0, %v1630
    %v1632 = vpop.f32.mrb[0].mxu0
    %v1633 = vpop.f32.mrb[0].mxu0
    %v1634 = vpop.f32.mrb[0].mxu0
    %1635 = vdwg.mxu0
    %v1637 = vsel %vm1451, %v688, 0
    %v1640 = vsel %vm1451, %v1063, 0
    %1642 = vmatprep.subr.bf16.mxu0 0
    %1643 = vmatpush1.bf16.xpose.msra.mxu0 %v1640
    %1644 = vmatprep.subr.bf16.mxu0 0
    %1645 = vmatpush1.bf16.xpose.msra.mxu0 0
    %1646 = vmatprep.subr.bf16.mxu0 0
    %1647 = vmatpush1.bf16.xpose.msra.mxu0 0
    %1648 = vmatprep.subr.bf16.mxu0 0
    %1649 = vmatpush1.bf16.xpose.msra.mxu0 0
    %1650 = vmatprep.subr.bf16.mxu0 0
    %1651 = vmatpush1.bf16.xpose.msra.mxu0 0
    %1652 = vmatprep.subr.bf16.mxu0 0
    %1653 = vmatpush1.bf16.xpose.msra.mxu0 0
    %1654 = vmatprep.subr.bf16.mxu0 0
    %1655 = vmatpush1.bf16.xpose.msra.mxu0 0
    %1656 = vmatprep.subr.bf16.mxu0 0
    %1657 = vmatpush1.bf16.xpose.msra.mxu0 0
    %1658 = vmatprep.subr.bf16.mxu0 0
    %1659 = vmatpush1.bf16.xpose.msra.mxu0 0
    %1660 = vmatprep.subr.bf16.mxu0 0
    %1661 = vmatpush1.bf16.xpose.msra.mxu0 0
    %1662 = vmatprep.subr.bf16.mxu0 0
    %1663 = vmatpush1.bf16.xpose.msra.mxu0 0
    %1664 = vmatprep.subr.bf16.mxu0 0
    %1665 = vmatpush1.bf16.xpose.msra.mxu0 0
    %1666 = vmatprep.subr.bf16.mxu0 0
    %1667 = vmatpush1.bf16.xpose.msra.mxu0 0
    %1668 = vmatprep.subr.bf16.mxu0 0
    %1669 = vmatpush1.bf16.xpose.msra.mxu0 0
    %1670 = vmatprep.subr.bf16.mxu0 0
    %1671 = vmatpush1.bf16.xpose.msra.mxu0 0
    %1672 = vmatprep.subr.bf16.mxu0 0
    %1673 = vmatpush1.bf16.xpose.msra.mxu0 0
    %1674 = vmatprep.mubr.bf16.mxu0 0
    %1675 = vmatmul.mubr.bf16.gmra.mrb[0].mxu0 %v1637
    %v1676 = vpop.f32.mrb[0].mxu0
    %v1677 = vadd.f32 0.0, %v1676
    %v1678 = vpop.f32.mrb[0].mxu0
    %v1679 = vpop.f32.mrb[0].mxu0
    %v1680 = vpop.f32.mrb[0].mxu0
    %1681 = vdwg.mxu0
    %v1683 = vsel %vm1451, %v689, 0
    %v1686 = vsel %vm1451, %v1064, 0
    %1688 = vmatprep.subr.bf16.mxu0 0
    %1689 = vmatpush1.bf16.xpose.msra.mxu0 %v1686
    %1690 = vmatprep.subr.bf16.mxu0 0
    %1691 = vmatpush1.bf16.xpose.msra.mxu0 0
    %1692 = vmatprep.subr.bf16.mxu0 0
    %1693 = vmatpush1.bf16.xpose.msra.mxu0 0
    %1694 = vmatprep.subr.bf16.mxu0 0
    %1695 = vmatpush1.bf16.xpose.msra.mxu0 0
    %1696 = vmatprep.subr.bf16.mxu0 0
    %1697 = vmatpush1.bf16.xpose.msra.mxu0 0
    %1698 = vmatprep.subr.bf16.mxu0 0
    %1699 = vmatpush1.bf16.xpose.msra.mxu0 0
    %1700 = vmatprep.subr.bf16.mxu0 0
    %1701 = vmatpush1.bf16.xpose.msra.mxu0 0
    %1702 = vmatprep.subr.bf16.mxu0 0
    %1703 = vmatpush1.bf16.xpose.msra.mxu0 0
    %1704 = vmatprep.subr.bf16.mxu0 0
    %1705 = vmatpush1.bf16.xpose.msra.mxu0 0
    %1706 = vmatprep.subr.bf16.mxu0 0
    %1707 = vmatpush1.bf16.xpose.msra.mxu0 0
    %1708 = vmatprep.subr.bf16.mxu0 0
    %1709 = vmatpush1.bf16.xpose.msra.mxu0 0
    %1710 = vmatprep.subr.bf16.mxu0 0
    %1711 = vmatpush1.bf16.xpose.msra.mxu0 0
    %1712 = vmatprep.subr.bf16.mxu0 0
    %1713 = vmatpush1.bf16.xpose.msra.mxu0 0
    %1714 = vmatprep.subr.bf16.mxu0 0
    %1715 = vmatpush1.bf16.xpose.msra.mxu0 0
    %1716 = vmatprep.subr.bf16.mxu0 0
    %1717 = vmatpush1.bf16.xpose.msra.mxu0 0
    %1718 = vmatprep.subr.bf16.mxu0 0
    %1719 = vmatpush1.bf16.xpose.msra.mxu0 0
    %1720 = vmatprep.mubr.bf16.mxu0 0
    %1721 = vmatmul.mubr.bf16.gmra.mrb[0].mxu0 %v1683
    %v1722 = vpop.f32.mrb[0].mxu0
    %v1723 = vadd.f32 0.0, %v1722
    %v1724 = vpop.f32.mrb[0].mxu0
    %v1725 = vpop.f32.mrb[0].mxu0
    %v1726 = vpop.f32.mrb[0].mxu0
    %1727 = vdwg.mxu0
    %v1729 = vsel %vm1451, %v690, 0
    %v1732 = vsel %vm1451, %v1065, 0
    %1734 = vmatprep.subr.bf16.mxu0 0
    %1735 = vmatpush1.bf16.xpose.msra.mxu0 %v1732
    %1736 = vmatprep.subr.bf16.mxu0 0
    %1737 = vmatpush1.bf16.xpose.msra.mxu0 0
    %1738 = vmatprep.subr.bf16.mxu0 0
    %1739 = vmatpush1.bf16.xpose.msra.mxu0 0
    %1740 = vmatprep.subr.bf16.mxu0 0
    %1741 = vmatpush1.bf16.xpose.msra.mxu0 0
    %1742 = vmatprep.subr.bf16.mxu0 0
    %1743 = vmatpush1.bf16.xpose.msra.mxu0 0
    %1744 = vmatprep.subr.bf16.mxu0 0
    %1745 = vmatpush1.bf16.xpose.msra.mxu0 0
    %1746 = vmatprep.subr.bf16.mxu0 0
    %1747 = vmatpush1.bf16.xpose.msra.mxu0 0
    %1748 = vmatprep.subr.bf16.mxu0 0
    %1749 = vmatpush1.bf16.xpose.msra.mxu0 0
    %1750 = vmatprep.subr.bf16.mxu0 0
    %1751 = vmatpush1.bf16.xpose.msra.mxu0 0
    %1752 = vmatprep.subr.bf16.mxu0 0
    %1753 = vmatpush1.bf16.xpose.msra.mxu0 0
    %1754 = vmatprep.subr.bf16.mxu0 0
    %1755 = vmatpush1.bf16.xpose.msra.mxu0 0
    %1756 = vmatprep.subr.bf16.mxu0 0
    %1757 = vmatpush1.bf16.xpose.msra.mxu0 0
    %1758 = vmatprep.subr.bf16.mxu0 0
    %1759 = vmatpush1.bf16.xpose.msra.mxu0 0
    %1760 = vmatprep.subr.bf16.mxu0 0
    %1761 = vmatpush1.bf16.xpose.msra.mxu0 0
    %1762 = vmatprep.subr.bf16.mxu0 0
    %1763 = vmatpush1.bf16.xpose.msra.mxu0 0
    %1764 = vmatprep.subr.bf16.mxu0 0
    %1765 = vmatpush1.bf16.xpose.msra.mxu0 0
    %1766 = vmatprep.mubr.bf16.mxu0 0
    %1767 = vmatmul.mubr.bf16.gmra.mrb[0].mxu0 %v1729
    %v1768 = vpop.f32.mrb[0].mxu0
    %v1769 = vadd.f32 0.0, %v1768
    %v1770 = vpop.f32.mrb[0].mxu0
    %v1771 = vpop.f32.mrb[0].mxu0
    %v1772 = vpop.f32.mrb[0].mxu0
    %1773 = vdwg.mxu0
    %v1775 = vsel %vm1451, %v691, 0
    %v1778 = vsel %vm1451, %v1066, 0
    %1780 = vmatprep.subr.bf16.mxu0 0
    %1781 = vmatpush1.bf16.xpose.msra.mxu0 %v1778
    %1782 = vmatprep.subr.bf16.mxu0 0
    %1783 = vmatpush1.bf16.xpose.msra.mxu0 0
    %1784 = vmatprep.subr.bf16.mxu0 0
    %1785 = vmatpush1.bf16.xpose.msra.mxu0 0
    %1786 = vmatprep.subr.bf16.mxu0 0
    %1787 = vmatpush1.bf16.xpose.msra.mxu0 0
    %1788 = vmatprep.subr.bf16.mxu0 0
    %1789 = vmatpush1.bf16.xpose.msra.mxu0 0
    %1790 = vmatprep.subr.bf16.mxu0 0
    %1791 = vmatpush1.bf16.xpose.msra.mxu0 0
    %1792 = vmatprep.subr.bf16.mxu0 0
    %1793 = vmatpush1.bf16.xpose.msra.mxu0 0
    %1794 = vmatprep.subr.bf16.mxu0 0
    %1795 = vmatpush1.bf16.xpose.msra.mxu0 0
    %1796 = vmatprep.subr.bf16.mxu0 0
    %1797 = vmatpush1.bf16.xpose.msra.mxu0 0
    %1798 = vmatprep.subr.bf16.mxu0 0
    %1799 = vmatpush1.bf16.xpose.msra.mxu0 0
    %1800 = vmatprep.subr.bf16.mxu0 0
    %1801 = vmatpush1.bf16.xpose.msra.mxu0 0
    %1802 = vmatprep.subr.bf16.mxu0 0
    %1803 = vmatpush1.bf16.xpose.msra.mxu0 0
    %1804 = vmatprep.subr.bf16.mxu0 0
    %1805 = vmatpush1.bf16.xpose.msra.mxu0 0
    %1806 = vmatprep.subr.bf16.mxu0 0
    %1807 = vmatpush1.bf16.xpose.msra.mxu0 0
    %1808 = vmatprep.subr.bf16.mxu0 0
    %1809 = vmatpush1.bf16.xpose.msra.mxu0 0
    %1810 = vmatprep.subr.bf16.mxu0 0
    %1811 = vmatpush1.bf16.xpose.msra.mxu0 0
    %1812 = vmatprep.mubr.bf16.mxu0 0
    %1813 = vmatmul.mubr.bf16.gmra.mrb[0].mxu0 %v1775
    %v1814 = vpop.f32.mrb[0].mxu0
    %v1815 = vadd.f32 0.0, %v1814
    %v1816 = vpop.f32.mrb[0].mxu0
    %v1817 = vpop.f32.mrb[0].mxu0
    %v1818 = vpop.f32.mrb[0].mxu0
    %1819 = vdwg.mxu0
    %v1821 = vsel %vm1451, %v692, 0
    %v1824 = vsel %vm1451, %v1067, 0
    %1826 = vmatprep.subr.bf16.mxu0 0
    %1827 = vmatpush1.bf16.xpose.msra.mxu0 %v1824
    %1828 = vmatprep.subr.bf16.mxu0 0
    %1829 = vmatpush1.bf16.xpose.msra.mxu0 0
    %1830 = vmatprep.subr.bf16.mxu0 0
    %1831 = vmatpush1.bf16.xpose.msra.mxu0 0
    %1832 = vmatprep.subr.bf16.mxu0 0
    %1833 = vmatpush1.bf16.xpose.msra.mxu0 0
    %1834 = vmatprep.subr.bf16.mxu0 0
    %1835 = vmatpush1.bf16.xpose.msra.mxu0 0
    %1836 = vmatprep.subr.bf16.mxu0 0
    %1837 = vmatpush1.bf16.xpose.msra.mxu0 0
    %1838 = vmatprep.subr.bf16.mxu0 0
    %1839 = vmatpush1.bf16.xpose.msra.mxu0 0
    %1840 = vmatprep.subr.bf16.mxu0 0
    %1841 = vmatpush1.bf16.xpose.msra.mxu0 0
    %1842 = vmatprep.subr.bf16.mxu0 0
    %1843 = vmatpush1.bf16.xpose.msra.mxu0 0
    %1844 = vmatprep.subr.bf16.mxu0 0
    %1845 = vmatpush1.bf16.xpose.msra.mxu0 0
    %1846 = vmatprep.subr.bf16.mxu0 0
    %1847 = vmatpush1.bf16.xpose.msra.mxu0 0
    %1848 = vmatprep.subr.bf16.mxu0 0
    %1849 = vmatpush1.bf16.xpose.msra.mxu0 0
    %1850 = vmatprep.subr.bf16.mxu0 0
    %1851 = vmatpush1.bf16.xpose.msra.mxu0 0
    %1852 = vmatprep.subr.bf16.mxu0 0
    %1853 = vmatpush1.bf16.xpose.msra.mxu0 0
    %1854 = vmatprep.subr.bf16.mxu0 0
    %1855 = vmatpush1.bf16.xpose.msra.mxu0 0
    %1856 = vmatprep.subr.bf16.mxu0 0
    %1857 = vmatpush1.bf16.xpose.msra.mxu0 0
    %1858 = vmatprep.mubr.bf16.mxu0 0
    %1859 = vmatmul.mubr.bf16.gmra.mrb[0].mxu0 %v1821
    %v1860 = vpop.f32.mrb[0].mxu0
    %v1861 = vadd.f32 0.0, %v1860
    %v1862 = vpop.f32.mrb[0].mxu0
    %v1863 = vpop.f32.mrb[0].mxu0
    %v1864 = vpop.f32.mrb[0].mxu0
    %1865 = vdwg.mxu0
    %v1867 = vsel %vm1451, %v693, 0
    %v1870 = vsel %vm1451, %v1068, 0
    %1872 = vmatprep.subr.bf16.mxu0 0
    %1873 = vmatpush1.bf16.xpose.msra.mxu0 %v1870
    %1874 = vmatprep.subr.bf16.mxu0 0
    %1875 = vmatpush1.bf16.xpose.msra.mxu0 0
    %1876 = vmatprep.subr.bf16.mxu0 0
    %1877 = vmatpush1.bf16.xpose.msra.mxu0 0
    %1878 = vmatprep.subr.bf16.mxu0 0
    %1879 = vmatpush1.bf16.xpose.msra.mxu0 0
    %1880 = vmatprep.subr.bf16.mxu0 0
    %1881 = vmatpush1.bf16.xpose.msra.mxu0 0
    %1882 = vmatprep.subr.bf16.mxu0 0
    %1883 = vmatpush1.bf16.xpose.msra.mxu0 0
    %1884 = vmatprep.subr.bf16.mxu0 0
    %1885 = vmatpush1.bf16.xpose.msra.mxu0 0
    %1886 = vmatprep.subr.bf16.mxu0 0
    %1887 = vmatpush1.bf16.xpose.msra.mxu0 0
    %1888 = vmatprep.subr.bf16.mxu0 0
    %1889 = vmatpush1.bf16.xpose.msra.mxu0 0
    %1890 = vmatprep.subr.bf16.mxu0 0
    %1891 = vmatpush1.bf16.xpose.msra.mxu0 0
    %1892 = vmatprep.subr.bf16.mxu0 0
    %1893 = vmatpush1.bf16.xpose.msra.mxu0 0
    %1894 = vmatprep.subr.bf16.mxu0 0
    %1895 = vmatpush1.bf16.xpose.msra.mxu0 0
    %1896 = vmatprep.subr.bf16.mxu0 0
    %1897 = vmatpush1.bf16.xpose.msra.mxu0 0
    %1898 = vmatprep.subr.bf16.mxu0 0
    %1899 = vmatpush1.bf16.xpose.msra.mxu0 0
    %1900 = vmatprep.subr.bf16.mxu0 0
    %1901 = vmatpush1.bf16.xpose.msra.mxu0 0
    %1902 = vmatprep.subr.bf16.mxu0 0
    %1903 = vmatpush1.bf16.xpose.msra.mxu0 0
    %1904 = vmatprep.mubr.bf16.mxu0 0
    %1905 = vmatmul.mubr.bf16.gmra.mrb[0].mxu0 %v1867
    %v1906 = vpop.f32.mrb[0].mxu0
    %v1907 = vadd.f32 0.0, %v1906
    %v1908 = vpop.f32.mrb[0].mxu0
    %v1909 = vpop.f32.mrb[0].mxu0
    %v1910 = vpop.f32.mrb[0].mxu0
    %1911 = vdwg.mxu0
    %v1913 = vsel %vm1451, %v694, 0
    %v1916 = vsel %vm1451, %v1069, 0
    %1918 = vmatprep.subr.bf16.mxu0 0
    %1919 = vmatpush1.bf16.xpose.msra.mxu0 %v1916
    %1920 = vmatprep.subr.bf16.mxu0 0
    %1921 = vmatpush1.bf16.xpose.msra.mxu0 0
    %1922 = vmatprep.subr.bf16.mxu0 0
    %1923 = vmatpush1.bf16.xpose.msra.mxu0 0
    %1924 = vmatprep.subr.bf16.mxu0 0
    %1925 = vmatpush1.bf16.xpose.msra.mxu0 0
    %1926 = vmatprep.subr.bf16.mxu0 0
    %1927 = vmatpush1.bf16.xpose.msra.mxu0 0
    %1928 = vmatprep.subr.bf16.mxu0 0
    %1929 = vmatpush1.bf16.xpose.msra.mxu0 0
    %1930 = vmatprep.subr.bf16.mxu0 0
    %1931 = vmatpush1.bf16.xpose.msra.mxu0 0
    %1932 = vmatprep.subr.bf16.mxu0 0
    %1933 = vmatpush1.bf16.xpose.msra.mxu0 0
    %1934 = vmatprep.subr.bf16.mxu0 0
    %1935 = vmatpush1.bf16.xpose.msra.mxu0 0
    %1936 = vmatprep.subr.bf16.mxu0 0
    %1937 = vmatpush1.bf16.xpose.msra.mxu0 0
    %1938 = vmatprep.subr.bf16.mxu0 0
    %1939 = vmatpush1.bf16.xpose.msra.mxu0 0
    %1940 = vmatprep.subr.bf16.mxu0 0
    %1941 = vmatpush1.bf16.xpose.msra.mxu0 0
    %1942 = vmatprep.subr.bf16.mxu0 0
    %1943 = vmatpush1.bf16.xpose.msra.mxu0 0
    %1944 = vmatprep.subr.bf16.mxu0 0
    %1945 = vmatpush1.bf16.xpose.msra.mxu0 0
    %1946 = vmatprep.subr.bf16.mxu0 0
    %1947 = vmatpush1.bf16.xpose.msra.mxu0 0
    %1948 = vmatprep.subr.bf16.mxu0 0
    %1949 = vmatpush1.bf16.xpose.msra.mxu0 0
    %1950 = vmatprep.mubr.bf16.mxu0 0
    %1951 = vmatmul.mubr.bf16.gmra.mrb[0].mxu0 %v1913
    %v1952 = vpop.f32.mrb[0].mxu0
    %v1953 = vadd.f32 0.0, %v1952
    %v1954 = vpop.f32.mrb[0].mxu0
    %v1955 = vpop.f32.mrb[0].mxu0
    %v1956 = vpop.f32.mrb[0].mxu0
    %1957 = vdwg.mxu0
    %v1959 = vsel %vm1451, %v695, 0
    %v1962 = vsel %vm1451, %v1070, 0
    %1964 = vmatprep.subr.bf16.mxu0 0
    %1965 = vmatpush1.bf16.xpose.msra.mxu0 %v1962
    %1966 = vmatprep.subr.bf16.mxu0 0
    %1967 = vmatpush1.bf16.xpose.msra.mxu0 0
    %1968 = vmatprep.subr.bf16.mxu0 0
    %1969 = vmatpush1.bf16.xpose.msra.mxu0 0
    %1970 = vmatprep.subr.bf16.mxu0 0
    %1971 = vmatpush1.bf16.xpose.msra.mxu0 0
    %1972 = vmatprep.subr.bf16.mxu0 0
    %1973 = vmatpush1.bf16.xpose.msra.mxu0 0
    %1974 = vmatprep.subr.bf16.mxu0 0
    %1975 = vmatpush1.bf16.xpose.msra.mxu0 0
    %1976 = vmatprep.subr.bf16.mxu0 0
    %1977 = vmatpush1.bf16.xpose.msra.mxu0 0
    %1978 = vmatprep.subr.bf16.mxu0 0
    %1979 = vmatpush1.bf16.xpose.msra.mxu0 0
    %1980 = vmatprep.subr.bf16.mxu0 0
    %1981 = vmatpush1.bf16.xpose.msra.mxu0 0
    %1982 = vmatprep.subr.bf16.mxu0 0
    %1983 = vmatpush1.bf16.xpose.msra.mxu0 0
    %1984 = vmatprep.subr.bf16.mxu0 0
    %1985 = vmatpush1.bf16.xpose.msra.mxu0 0
    %1986 = vmatprep.subr.bf16.mxu0 0
    %1987 = vmatpush1.bf16.xpose.msra.mxu0 0
    %1988 = vmatprep.subr.bf16.mxu0 0
    %1989 = vmatpush1.bf16.xpose.msra.mxu0 0
    %1990 = vmatprep.subr.bf16.mxu0 0
    %1991 = vmatpush1.bf16.xpose.msra.mxu0 0
    %1992 = vmatprep.subr.bf16.mxu0 0
    %1993 = vmatpush1.bf16.xpose.msra.mxu0 0
    %1994 = vmatprep.subr.bf16.mxu0 0
    %1995 = vmatpush1.bf16.xpose.msra.mxu0 0
    %1996 = vmatprep.mubr.bf16.mxu0 0
    %1997 = vmatmul.mubr.bf16.gmra.mrb[0].mxu0 %v1959
    %v1998 = vpop.f32.mrb[0].mxu0
    %v1999 = vadd.f32 0.0, %v1998
    %v2000 = vpop.f32.mrb[0].mxu0
    %v2001 = vpop.f32.mrb[0].mxu0
    %v2002 = vpop.f32.mrb[0].mxu0
    %2003 = vdwg.mxu0
    %v2005 = vsel %vm1451, %v696, 0
    %v2008 = vsel %vm1451, %v1071, 0
    %2010 = vmatprep.subr.bf16.mxu0 0
    %2011 = vmatpush1.bf16.xpose.msra.mxu0 %v2008
    %2012 = vmatprep.subr.bf16.mxu0 0
    %2013 = vmatpush1.bf16.xpose.msra.mxu0 0
    %2014 = vmatprep.subr.bf16.mxu0 0
    %2015 = vmatpush1.bf16.xpose.msra.mxu0 0
    %2016 = vmatprep.subr.bf16.mxu0 0
    %2017 = vmatpush1.bf16.xpose.msra.mxu0 0
    %2018 = vmatprep.subr.bf16.mxu0 0
    %2019 = vmatpush1.bf16.xpose.msra.mxu0 0
    %2020 = vmatprep.subr.bf16.mxu0 0
    %2021 = vmatpush1.bf16.xpose.msra.mxu0 0
    %2022 = vmatprep.subr.bf16.mxu0 0
    %2023 = vmatpush1.bf16.xpose.msra.mxu0 0
    %2024 = vmatprep.subr.bf16.mxu0 0
    %2025 = vmatpush1.bf16.xpose.msra.mxu0 0
    %2026 = vmatprep.subr.bf16.mxu0 0
    %2027 = vmatpush1.bf16.xpose.msra.mxu0 0
    %2028 = vmatprep.subr.bf16.mxu0 0
    %2029 = vmatpush1.bf16.xpose.msra.mxu0 0
    %2030 = vmatprep.subr.bf16.mxu0 0
    %2031 = vmatpush1.bf16.xpose.msra.mxu0 0
    %2032 = vmatprep.subr.bf16.mxu0 0
    %2033 = vmatpush1.bf16.xpose.msra.mxu0 0
    %2034 = vmatprep.subr.bf16.mxu0 0
    %2035 = vmatpush1.bf16.xpose.msra.mxu0 0
    %2036 = vmatprep.subr.bf16.mxu0 0
    %2037 = vmatpush1.bf16.xpose.msra.mxu0 0
    %2038 = vmatprep.subr.bf16.mxu0 0
    %2039 = vmatpush1.bf16.xpose.msra.mxu0 0
    %2040 = vmatprep.subr.bf16.mxu0 0
    %2041 = vmatpush1.bf16.xpose.msra.mxu0 0
    %2042 = vmatprep.mubr.bf16.mxu0 0
    %2043 = vmatmul.mubr.bf16.gmra.mrb[0].mxu0 %v2005
    %v2044 = vpop.f32.mrb[0].mxu0
    %v2045 = vadd.f32 0.0, %v2044
    %v2046 = vpop.f32.mrb[0].mxu0
    %v2047 = vpop.f32.mrb[0].mxu0
    %v2048 = vpop.f32.mrb[0].mxu0
    %2049 = vdwg.mxu0
    %v2051 = vsel %vm1451, %v697, 0
    %v2054 = vsel %vm1451, %v1072, 0
    %2056 = vmatprep.subr.bf16.mxu0 0
    %2057 = vmatpush1.bf16.xpose.msra.mxu0 %v2054
    %2058 = vmatprep.subr.bf16.mxu0 0
    %2059 = vmatpush1.bf16.xpose.msra.mxu0 0
    %2060 = vmatprep.subr.bf16.mxu0 0
    %2061 = vmatpush1.bf16.xpose.msra.mxu0 0
    %2062 = vmatprep.subr.bf16.mxu0 0
    %2063 = vmatpush1.bf16.xpose.msra.mxu0 0
    %2064 = vmatprep.subr.bf16.mxu0 0
    %2065 = vmatpush1.bf16.xpose.msra.mxu0 0
    %2066 = vmatprep.subr.bf16.mxu0 0
    %2067 = vmatpush1.bf16.xpose.msra.mxu0 0
    %2068 = vmatprep.subr.bf16.mxu0 0
    %2069 = vmatpush1.bf16.xpose.msra.mxu0 0
    %2070 = vmatprep.subr.bf16.mxu0 0
    %2071 = vmatpush1.bf16.xpose.msra.mxu0 0
    %2072 = vmatprep.subr.bf16.mxu0 0
    %2073 = vmatpush1.bf16.xpose.msra.mxu0 0
    %2074 = vmatprep.subr.bf16.mxu0 0
    %2075 = vmatpush1.bf16.xpose.msra.mxu0 0
    %2076 = vmatprep.subr.bf16.mxu0 0
    %2077 = vmatpush1.bf16.xpose.msra.mxu0 0
    %2078 = vmatprep.subr.bf16.mxu0 0
    %2079 = vmatpush1.bf16.xpose.msra.mxu0 0
    %2080 = vmatprep.subr.bf16.mxu0 0
    %2081 = vmatpush1.bf16.xpose.msra.mxu0 0
    %2082 = vmatprep.subr.bf16.mxu0 0
    %2083 = vmatpush1.bf16.xpose.msra.mxu0 0
    %2084 = vmatprep.subr.bf16.mxu0 0
    %2085 = vmatpush1.bf16.xpose.msra.mxu0 0
    %2086 = vmatprep.subr.bf16.mxu0 0
    %2087 = vmatpush1.bf16.xpose.msra.mxu0 0
    %2088 = vmatprep.mubr.bf16.mxu0 0
    %2089 = vmatmul.mubr.bf16.gmra.mrb[0].mxu0 %v2051
    %v2090 = vpop.f32.mrb[0].mxu0
    %v2091 = vadd.f32 0.0, %v2090
    %v2092 = vpop.f32.mrb[0].mxu0
    %v2093 = vpop.f32.mrb[0].mxu0
    %v2094 = vpop.f32.mrb[0].mxu0
    %2095 = vdwg.mxu0
    %v2097 = vsel %vm1451, %v698, 0
    %v2100 = vsel %vm1451, %v1073, 0
    %2102 = vmatprep.subr.bf16.mxu0 0
    %2103 = vmatpush1.bf16.xpose.msra.mxu0 %v2100
    %2104 = vmatprep.subr.bf16.mxu0 0
    %2105 = vmatpush1.bf16.xpose.msra.mxu0 0
    %2106 = vmatprep.subr.bf16.mxu0 0
    %2107 = vmatpush1.bf16.xpose.msra.mxu0 0
    %2108 = vmatprep.subr.bf16.mxu0 0
    %2109 = vmatpush1.bf16.xpose.msra.mxu0 0
    %2110 = vmatprep.subr.bf16.mxu0 0
    %2111 = vmatpush1.bf16.xpose.msra.mxu0 0
    %2112 = vmatprep.subr.bf16.mxu0 0
    %2113 = vmatpush1.bf16.xpose.msra.mxu0 0
    %2114 = vmatprep.subr.bf16.mxu0 0
    %2115 = vmatpush1.bf16.xpose.msra.mxu0 0
    %2116 = vmatprep.subr.bf16.mxu0 0
    %2117 = vmatpush1.bf16.xpose.msra.mxu0 0
    %2118 = vmatprep.subr.bf16.mxu0 0
    %2119 = vmatpush1.bf16.xpose.msra.mxu0 0
    %2120 = vmatprep.subr.bf16.mxu0 0
    %2121 = vmatpush1.bf16.xpose.msra.mxu0 0
    %2122 = vmatprep.subr.bf16.mxu0 0
    %2123 = vmatpush1.bf16.xpose.msra.mxu0 0
    %2124 = vmatprep.subr.bf16.mxu0 0
    %2125 = vmatpush1.bf16.xpose.msra.mxu0 0
    %2126 = vmatprep.subr.bf16.mxu0 0
    %2127 = vmatpush1.bf16.xpose.msra.mxu0 0
    %2128 = vmatprep.subr.bf16.mxu0 0
    %2129 = vmatpush1.bf16.xpose.msra.mxu0 0
    %2130 = vmatprep.subr.bf16.mxu0 0
    %2131 = vmatpush1.bf16.xpose.msra.mxu0 0
    %2132 = vmatprep.subr.bf16.mxu0 0
    %2133 = vmatpush1.bf16.xpose.msra.mxu0 0
    %2134 = vmatprep.mubr.bf16.mxu0 0
    %2135 = vmatmul.mubr.bf16.gmra.mrb[0].mxu0 %v2097
    %v2136 = vpop.f32.mrb[0].mxu0
    %v2137 = vadd.f32 0.0, %v2136
    %v2138 = vpop.f32.mrb[0].mxu0
    %v2139 = vpop.f32.mrb[0].mxu0
    %v2140 = vpop.f32.mrb[0].mxu0
    %2141 = vdwg.mxu0
    %v2143 = vsel %vm1451, %v699, 0
    %v2146 = vsel %vm1451, %v1074, 0
    %2148 = vmatprep.subr.bf16.mxu0 0
    %2149 = vmatpush1.bf16.xpose.msra.mxu0 %v2146
    %2150 = vmatprep.subr.bf16.mxu0 0
    %2151 = vmatpush1.bf16.xpose.msra.mxu0 0
    %2152 = vmatprep.subr.bf16.mxu0 0
    %2153 = vmatpush1.bf16.xpose.msra.mxu0 0
    %2154 = vmatprep.subr.bf16.mxu0 0
    %2155 = vmatpush1.bf16.xpose.msra.mxu0 0
    %2156 = vmatprep.subr.bf16.mxu0 0
    %2157 = vmatpush1.bf16.xpose.msra.mxu0 0
    %2158 = vmatprep.subr.bf16.mxu0 0
    %2159 = vmatpush1.bf16.xpose.msra.mxu0 0
    %2160 = vmatprep.subr.bf16.mxu0 0
    %2161 = vmatpush1.bf16.xpose.msra.mxu0 0
    %2162 = vmatprep.subr.bf16.mxu0 0
    %2163 = vmatpush1.bf16.xpose.msra.mxu0 0
    %2164 = vmatprep.subr.bf16.mxu0 0
    %2165 = vmatpush1.bf16.xpose.msra.mxu0 0
    %2166 = vmatprep.subr.bf16.mxu0 0
    %2167 = vmatpush1.bf16.xpose.msra.mxu0 0
    %2168 = vmatprep.subr.bf16.mxu0 0
    %2169 = vmatpush1.bf16.xpose.msra.mxu0 0
    %2170 = vmatprep.subr.bf16.mxu0 0
    %2171 = vmatpush1.bf16.xpose.msra.mxu0 0
    %2172 = vmatprep.subr.bf16.mxu0 0
    %2173 = vmatpush1.bf16.xpose.msra.mxu0 0
    %2174 = vmatprep.subr.bf16.mxu0 0
    %2175 = vmatpush1.bf16.xpose.msra.mxu0 0
    %2176 = vmatprep.subr.bf16.mxu0 0
    %2177 = vmatpush1.bf16.xpose.msra.mxu0 0
    %2178 = vmatprep.subr.bf16.mxu0 0
    %2179 = vmatpush1.bf16.xpose.msra.mxu0 0
    %2180 = vmatprep.mubr.bf16.mxu0 0
    %2181 = vmatmul.mubr.bf16.gmra.mrb[0].mxu0 %v2143
    %v2182 = vpop.f32.mrb[0].mxu0
    %v2183 = vadd.f32 0.0, %v2182
    %v2184 = vpop.f32.mrb[0].mxu0
    %v2185 = vpop.f32.mrb[0].mxu0
    %v2186 = vpop.f32.mrb[0].mxu0
    %2187 = vdwg.mxu0
    %vm2188 = vcmask 64512
    %v2189 = vsel %vm2188, %v1493, -inf
    %2190 = vmax.xlane.f32.xlu0 %v2189
    %v2191 = vpop.xlane.xlu0 %2190
    %v2192 = vsel %vm2188, %v1539, -inf
    %2193 = vmax.xlane.f32.xlu0 %v2192
    %v2194 = vpop.xlane.xlu0 %2193
    %v2195 = vsel %vm2188, %v1585, -inf
    %2196 = vmax.xlane.f32.xlu0 %v2195
    %v2197 = vpop.xlane.xlu0 %2196
    %v2198 = vsel %vm2188, %v1631, -inf
    %2199 = vmax.xlane.f32.xlu0 %v2198
    %v2200 = vpop.xlane.xlu0 %2199
    %v2201 = vsel %vm2188, %v1677, -inf
    %2202 = vmax.xlane.f32.xlu0 %v2201
    %v2203 = vpop.xlane.xlu0 %2202
    %v2204 = vsel %vm2188, %v1723, -inf
    %2205 = vmax.xlane.f32.xlu0 %v2204
    %v2206 = vpop.xlane.xlu0 %2205
    %v2207 = vsel %vm2188, %v1769, -inf
    %2208 = vmax.xlane.f32.xlu0 %v2207
    %v2209 = vpop.xlane.xlu0 %2208
    %v2210 = vsel %vm2188, %v1815, -inf
    %2211 = vmax.xlane.f32.xlu0 %v2210
    %v2212 = vpop.xlane.xlu0 %2211
    %v2213 = vsel %vm2188, %v1861, -inf
    %2214 = vmax.xlane.f32.xlu0 %v2213
    %v2215 = vpop.xlane.xlu0 %2214
    %v2216 = vsel %vm2188, %v1907, -inf
    %2217 = vmax.xlane.f32.xlu0 %v2216
    %v2218 = vpop.xlane.xlu0 %2217
    %v2219 = vsel %vm2188, %v1953, -inf
    %2220 = vmax.xlane.f32.xlu0 %v2219
    %v2221 = vpop.xlane.xlu0 %2220
    %v2222 = vsel %vm2188, %v1999, -inf
    %2223 = vmax.xlane.f32.xlu0 %v2222
    %v2224 = vpop.xlane.xlu0 %2223
    %v2225 = vsel %vm2188, %v2045, -inf
    %2226 = vmax.xlane.f32.xlu0 %v2225
    %v2227 = vpop.xlane.xlu0 %2226
    %v2228 = vsel %vm2188, %v2091, -inf
    %2229 = vmax.xlane.f32.xlu0 %v2228
    %v2230 = vpop.xlane.xlu0 %2229
    %v2231 = vsel %vm2188, %v2137, -inf
    %2232 = vmax.xlane.f32.xlu0 %v2231
    %v2233 = vpop.xlane.xlu0 %2232
    %v2234 = vsel %vm2188, %v2183, -inf
    %2235 = vmax.xlane.f32.xlu0 %v2234
    %v2236 = vpop.xlane.xlu0 %2235
    %v2237 = vsub.f32 %v1493, %v2191
    %v2238 = vsub.f32 %v1539, %v2194
    %v2239 = vsub.f32 %v1585, %v2197
    %v2240 = vsub.f32 %v1631, %v2200
    %v2241 = vsub.f32 %v1677, %v2203
    %v2242 = vsub.f32 %v1723, %v2206
    %v2243 = vsub.f32 %v1769, %v2209
    %v2244 = vsub.f32 %v1815, %v2212
    %v2245 = vsub.f32 %v1861, %v2215
    %v2246 = vsub.f32 %v1907, %v2218
    %v2247 = vsub.f32 %v1953, %v2221
    %v2248 = vsub.f32 %v1999, %v2224
    %v2249 = vsub.f32 %v2045, %v2227
    %v2250 = vsub.f32 %v2091, %v2230
    %v2251 = vsub.f32 %v2137, %v2233
    %v2252 = vsub.f32 %v2183, %v2236
    %v2253 = vmul.f32 %v2237, 1.442695
    %v2254 = vpow.pop %v2253
    %v2255 = vmul.f32 %v2238, 1.442695
    %v2256 = vpow.pop %v2255
    %v2257 = vmul.f32 %v2239, 1.442695
    %v2258 = vpow.pop %v2257
    %v2259 = vmul.f32 %v2240, 1.442695
    %v2260 = vpow.pop %v2259
    %v2261 = vmul.f32 %v2241, 1.442695
    %v2262 = vpow.pop %v2261
    %v2263 = vmul.f32 %v2242, 1.442695
    %v2264 = vpow.pop %v2263
    %v2265 = vmul.f32 %v2243, 1.442695
    %v2266 = vpow.pop %v2265
    %v2267 = vmul.f32 %v2244, 1.442695
    %v2268 = vpow.pop %v2267
    %v2269 = vmul.f32 %v2245, 1.442695
    %v2270 = vpow.pop %v2269
    %v2271 = vmul.f32 %v2246, 1.442695
    %v2272 = vpow.pop %v2271
    %v2273 = vmul.f32 %v2247, 1.442695
    %v2274 = vpow.pop %v2273
    %v2275 = vmul.f32 %v2248, 1.442695
    %v2276 = vpow.pop %v2275
    %v2277 = vmul.f32 %v2249, 1.442695
    %v2278 = vpow.pop %v2277
    %v2279 = vmul.f32 %v2250, 1.442695
    %v2280 = vpow.pop %v2279
    %v2281 = vmul.f32 %v2251, 1.442695
    %v2282 = vpow.pop %v2281
    %v2283 = vmul.f32 %v2252, 1.442695
    %v2284 = vpow.pop %v2283
    %v2285 = vsel %vm2188, %v2254, 0.0
    %2286 = vadd.xlane.f32.xlu0 %v2285
    %v2287 = vpop.xlane.xlu0 %2286
    %v2288 = vsel %vm2188, %v2256, 0.0
    %2289 = vadd.xlane.f32.xlu0 %v2288
    %v2290 = vpop.xlane.xlu0 %2289
    %v2291 = vsel %vm2188, %v2258, 0.0
    %2292 = vadd.xlane.f32.xlu0 %v2291
    %v2293 = vpop.xlane.xlu0 %2292
    %v2294 = vsel %vm2188, %v2260, 0.0
    %2295 = vadd.xlane.f32.xlu0 %v2294
    %v2296 = vpop.xlane.xlu0 %2295
    %v2297 = vsel %vm2188, %v2262, 0.0
    %2298 = vadd.xlane.f32.xlu0 %v2297
    %v2299 = vpop.xlane.xlu0 %2298
    %v2300 = vsel %vm2188, %v2264, 0.0
    %2301 = vadd.xlane.f32.xlu0 %v2300
    %v2302 = vpop.xlane.xlu0 %2301
    %v2303 = vsel %vm2188, %v2266, 0.0
    %2304 = vadd.xlane.f32.xlu0 %v2303
    %v2305 = vpop.xlane.xlu0 %2304
    %v2306 = vsel %vm2188, %v2268, 0.0
    %2307 = vadd.xlane.f32.xlu0 %v2306
    %v2308 = vpop.xlane.xlu0 %2307
    %v2309 = vsel %vm2188, %v2270, 0.0
    %2310 = vadd.xlane.f32.xlu0 %v2309
    %v2311 = vpop.xlane.xlu0 %2310
    %v2312 = vsel %vm2188, %v2272, 0.0
    %2313 = vadd.xlane.f32.xlu0 %v2312
    %v2314 = vpop.xlane.xlu0 %2313
    %v2315 = vsel %vm2188, %v2274, 0.0
    %2316 = vadd.xlane.f32.xlu0 %v2315
    %v2317 = vpop.xlane.xlu0 %2316
    %v2318 = vsel %vm2188, %v2276, 0.0
    %2319 = vadd.xlane.f32.xlu0 %v2318
    %v2320 = vpop.xlane.xlu0 %2319
    %v2321 = vsel %vm2188, %v2278, 0.0
    %2322 = vadd.xlane.f32.xlu0 %v2321
    %v2323 = vpop.xlane.xlu0 %2322
    %v2324 = vsel %vm2188, %v2280, 0.0
    %2325 = vadd.xlane.f32.xlu0 %v2324
    %v2326 = vpop.xlane.xlu0 %2325
    %v2327 = vsel %vm2188, %v2282, 0.0
    %2328 = vadd.xlane.f32.xlu0 %v2327
    %v2329 = vpop.xlane.xlu0 %2328
    %v2330 = vsel %vm2188, %v2284, 0.0
    %2331 = vadd.xlane.f32.xlu0 %v2330
    %v2332 = vpop.xlane.xlu0 %2331
    %v2333 = vrcp.pop %v2287
    %v2334 = vrcp.pop %v2290
    %v2335 = vrcp.pop %v2293
    %v2336 = vrcp.pop %v2296
    %v2337 = vrcp.pop %v2299
    %v2338 = vrcp.pop %v2302
    %v2339 = vrcp.pop %v2305
    %v2340 = vrcp.pop %v2308
    %v2341 = vrcp.pop %v2311
    %v2342 = vrcp.pop %v2314
    %v2343 = vrcp.pop %v2317
    %v2344 = vrcp.pop %v2320
    %v2345 = vrcp.pop %v2323
    %v2346 = vrcp.pop %v2326
    %v2347 = vrcp.pop %v2329
    %v2348 = vrcp.pop %v2332
    %v2349 = vmul.f32 %v2254, %v2333
    %v2350 = vmul.f32 %v2256, %v2334
    %v2351 = vmul.f32 %v2258, %v2335
    %v2352 = vmul.f32 %v2260, %v2336
    %v2353 = vmul.f32 %v2262, %v2337
    %v2354 = vmul.f32 %v2264, %v2338
    %v2355 = vmul.f32 %v2266, %v2339
    %v2356 = vmul.f32 %v2268, %v2340
    %v2357 = vmul.f32 %v2270, %v2341
    %v2358 = vmul.f32 %v2272, %v2342
    %v2359 = vmul.f32 %v2274, %v2343
    %v2360 = vmul.f32 %v2276, %v2344
    %v2361 = vmul.f32 %v2278, %v2345
    %v2362 = vmul.f32 %v2280, %v2346
    %v2363 = vmul.f32 %v2282, %v2347
    %v2364 = vmul.f32 %v2284, %v2348
    %v2365 = vpack.c.bf16 %v2349, %v2349
    %v2366 = vpack.c.bf16 %v2350, %v2350
    %v2367 = vpack.c.bf16 %v2351, %v2351
    %v2368 = vpack.c.bf16 %v2352, %v2352
    %v2369 = vpack.c.bf16 %v2353, %v2353
    %v2370 = vpack.c.bf16 %v2354, %v2354
    %v2371 = vpack.c.bf16 %v2355, %v2355
    %v2372 = vpack.c.bf16 %v2356, %v2356
    %v2373 = vpack.c.bf16 %v2357, %v2357
    %v2374 = vpack.c.bf16 %v2358, %v2358
    %v2375 = vpack.c.bf16 %v2359, %v2359
    %v2376 = vpack.c.bf16 %v2360, %v2360
    %v2377 = vpack.c.bf16 %v2361, %v2361
    %v2378 = vpack.c.bf16 %v2362, %v2362
    %v2379 = vpack.c.bf16 %v2363, %v2363
    %v2380 = vpack.c.bf16 %v2364, %v2364
    %v2382 = vsel %vm2188, %v2365, 0
    %vm2384 = vcmask 1043456
    %v2386 = vsel %vm2384, %v1435, 0
    %2388 = vmatprep.subr.bf16.mxu0 0
    %2389 = vmatpush1.bf16.msra.mxu0 %v2386
    %2390 = vmatprep.subr.bf16.mxu0 0
    %2391 = vmatpush1.bf16.msra.mxu0 0
    %2392 = vmatprep.subr.bf16.mxu0 0
    %2393 = vmatpush1.bf16.msra.mxu0 0
    %2394 = vmatprep.subr.bf16.mxu0 0
    %2395 = vmatpush1.bf16.msra.mxu0 0
    %2396 = vmatprep.subr.bf16.mxu0 0
    %2397 = vmatpush1.bf16.msra.mxu0 0
    %2398 = vmatprep.subr.bf16.mxu0 0
    %2399 = vmatpush1.bf16.msra.mxu0 0
    %2400 = vmatprep.subr.bf16.mxu0 0
    %2401 = vmatpush1.bf16.msra.mxu0 0
    %2402 = vmatprep.subr.bf16.mxu0 0
    %2403 = vmatpush1.bf16.msra.mxu0 0
    %2404 = vmatprep.subr.bf16.mxu0 0
    %2405 = vmatpush1.bf16.msra.mxu0 0
    %2406 = vmatprep.subr.bf16.mxu0 0
    %2407 = vmatpush1.bf16.msra.mxu0 0
    %2408 = vmatprep.subr.bf16.mxu0 0
    %2409 = vmatpush1.bf16.msra.mxu0 0
    %2410 = vmatprep.subr.bf16.mxu0 0
    %2411 = vmatpush1.bf16.msra.mxu0 0
    %2412 = vmatprep.subr.bf16.mxu0 0
    %2413 = vmatpush1.bf16.msra.mxu0 0
    %2414 = vmatprep.subr.bf16.mxu0 0
    %2415 = vmatpush1.bf16.msra.mxu0 0
    %2416 = vmatprep.subr.bf16.mxu0 0
    %2417 = vmatpush1.bf16.msra.mxu0 0
    %2418 = vmatprep.subr.bf16.mxu0 0
    %2419 = vmatpush1.bf16.msra.mxu0 0
    %2420 = vmatprep.mubr.bf16.mxu0 0
    %2421 = vmatmul.mubr.bf16.gmra.mrb[0].mxu0 %v2382
    %v2422 = vpop.f32.mrb[0].mxu0
    %v2423 = vadd.f32 0.0, %v2422
    %v2424 = vpop.f32.mrb[0].mxu0
    %v2425 = vpop.f32.mrb[0].mxu0
    %v2426 = vpop.f32.mrb[0].mxu0
    %2427 = vdwg.mxu0
    %v2429 = vsel %vm2188, %v2366, 0
    %v2432 = vsel %vm2384, %v1436, 0
    %2434 = vmatprep.subr.bf16.mxu0 0
    %2435 = vmatpush1.bf16.msra.mxu0 %v2432
    %2436 = vmatprep.subr.bf16.mxu0 0
    %2437 = vmatpush1.bf16.msra.mxu0 0
    %2438 = vmatprep.subr.bf16.mxu0 0
    %2439 = vmatpush1.bf16.msra.mxu0 0
    %2440 = vmatprep.subr.bf16.mxu0 0
    %2441 = vmatpush1.bf16.msra.mxu0 0
    %2442 = vmatprep.subr.bf16.mxu0 0
    %2443 = vmatpush1.bf16.msra.mxu0 0
    %2444 = vmatprep.subr.bf16.mxu0 0
    %2445 = vmatpush1.bf16.msra.mxu0 0
    %2446 = vmatprep.subr.bf16.mxu0 0
    %2447 = vmatpush1.bf16.msra.mxu0 0
    %2448 = vmatprep.subr.bf16.mxu0 0
    %2449 = vmatpush1.bf16.msra.mxu0 0
    %2450 = vmatprep.subr.bf16.mxu0 0
    %2451 = vmatpush1.bf16.msra.mxu0 0
    %2452 = vmatprep.subr.bf16.mxu0 0
    %2453 = vmatpush1.bf16.msra.mxu0 0
    %2454 = vmatprep.subr.bf16.mxu0 0
    %2455 = vmatpush1.bf16.msra.mxu0 0
    %2456 = vmatprep.subr.bf16.mxu0 0
    %2457 = vmatpush1.bf16.msra.mxu0 0
    %2458 = vmatprep.subr.bf16.mxu0 0
    %2459 = vmatpush1.bf16.msra.mxu0 0
    %2460 = vmatprep.subr.bf16.mxu0 0
    %2461 = vmatpush1.bf16.msra.mxu0 0
    %2462 = vmatprep.subr.bf16.mxu0 0
    %2463 = vmatpush1.bf16.msra.mxu0 0
    %2464 = vmatprep.subr.bf16.mxu0 0
    %2465 = vmatpush1.bf16.msra.mxu0 0
    %2466 = vmatprep.mubr.bf16.mxu0 0
    %2467 = vmatmul.mubr.bf16.gmra.mrb[0].mxu0 %v2429
    %v2468 = vpop.f32.mrb[0].mxu0
    %v2469 = vadd.f32 0.0, %v2468
    %v2470 = vpop.f32.mrb[0].mxu0
    %v2471 = vpop.f32.mrb[0].mxu0
    %v2472 = vpop.f32.mrb[0].mxu0
    %2473 = vdwg.mxu0
    %v2475 = vsel %vm2188, %v2367, 0
    %v2478 = vsel %vm2384, %v1437, 0
    %2480 = vmatprep.subr.bf16.mxu0 0
    %2481 = vmatpush1.bf16.msra.mxu0 %v2478
    %2482 = vmatprep.subr.bf16.mxu0 0
    %2483 = vmatpush1.bf16.msra.mxu0 0
    %2484 = vmatprep.subr.bf16.mxu0 0
    %2485 = vmatpush1.bf16.msra.mxu0 0
    %2486 = vmatprep.subr.bf16.mxu0 0
    %2487 = vmatpush1.bf16.msra.mxu0 0
    %2488 = vmatprep.subr.bf16.mxu0 0
    %2489 = vmatpush1.bf16.msra.mxu0 0
    %2490 = vmatprep.subr.bf16.mxu0 0
    %2491 = vmatpush1.bf16.msra.mxu0 0
    %2492 = vmatprep.subr.bf16.mxu0 0
    %2493 = vmatpush1.bf16.msra.mxu0 0
    %2494 = vmatprep.subr.bf16.mxu0 0
    %2495 = vmatpush1.bf16.msra.mxu0 0
    %2496 = vmatprep.subr.bf16.mxu0 0
    %2497 = vmatpush1.bf16.msra.mxu0 0
    %2498 = vmatprep.subr.bf16.mxu0 0
    %2499 = vmatpush1.bf16.msra.mxu0 0
    %2500 = vmatprep.subr.bf16.mxu0 0
    %2501 = vmatpush1.bf16.msra.mxu0 0
    %2502 = vmatprep.subr.bf16.mxu0 0
    %2503 = vmatpush1.bf16.msra.mxu0 0
    %2504 = vmatprep.subr.bf16.mxu0 0
    %2505 = vmatpush1.bf16.msra.mxu0 0
    %2506 = vmatprep.subr.bf16.mxu0 0
    %2507 = vmatpush1.bf16.msra.mxu0 0
    %2508 = vmatprep.subr.bf16.mxu0 0
    %2509 = vmatpush1.bf16.msra.mxu0 0
    %2510 = vmatprep.subr.bf16.mxu0 0
    %2511 = vmatpush1.bf16.msra.mxu0 0
    %2512 = vmatprep.mubr.bf16.mxu0 0
    %2513 = vmatmul.mubr.bf16.gmra.mrb[0].mxu0 %v2475
    %v2514 = vpop.f32.mrb[0].mxu0
    %v2515 = vadd.f32 0.0, %v2514
    %v2516 = vpop.f32.mrb[0].mxu0
    %v2517 = vpop.f32.mrb[0].mxu0
    %v2518 = vpop.f32.mrb[0].mxu0
    %2519 = vdwg.mxu0
    %v2521 = vsel %vm2188, %v2368, 0
    %v2524 = vsel %vm2384, %v1438, 0
    %2526 = vmatprep.subr.bf16.mxu0 0
    %2527 = vmatpush1.bf16.msra.mxu0 %v2524
    %2528 = vmatprep.subr.bf16.mxu0 0
    %2529 = vmatpush1.bf16.msra.mxu0 0
    %2530 = vmatprep.subr.bf16.mxu0 0
    %2531 = vmatpush1.bf16.msra.mxu0 0
    %2532 = vmatprep.subr.bf16.mxu0 0
    %2533 = vmatpush1.bf16.msra.mxu0 0
    %2534 = vmatprep.subr.bf16.mxu0 0
    %2535 = vmatpush1.bf16.msra.mxu0 0
    %2536 = vmatprep.subr.bf16.mxu0 0
    %2537 = vmatpush1.bf16.msra.mxu0 0
    %2538 = vmatprep.subr.bf16.mxu0 0
    %2539 = vmatpush1.bf16.msra.mxu0 0
    %2540 = vmatprep.subr.bf16.mxu0 0
    %2541 = vmatpush1.bf16.msra.mxu0 0
    %2542 = vmatprep.subr.bf16.mxu0 0
    %2543 = vmatpush1.bf16.msra.mxu0 0
    %2544 = vmatprep.subr.bf16.mxu0 0
    %2545 = vmatpush1.bf16.msra.mxu0 0
    %2546 = vmatprep.subr.bf16.mxu0 0
    %2547 = vmatpush1.bf16.msra.mxu0 0
    %2548 = vmatprep.subr.bf16.mxu0 0
    %2549 = vmatpush1.bf16.msra.mxu0 0
    %2550 = vmatprep.subr.bf16.mxu0 0
    %2551 = vmatpush1.bf16.msra.mxu0 0
    %2552 = vmatprep.subr.bf16.mxu0 0
    %2553 = vmatpush1.bf16.msra.mxu0 0
    %2554 = vmatprep.subr.bf16.mxu0 0
    %2555 = vmatpush1.bf16.msra.mxu0 0
    %2556 = vmatprep.subr.bf16.mxu0 0
    %2557 = vmatpush1.bf16.msra.mxu0 0
    %2558 = vmatprep.mubr.bf16.mxu0 0
    %2559 = vmatmul.mubr.bf16.gmra.mrb[0].mxu0 %v2521
    %v2560 = vpop.f32.mrb[0].mxu0
    %v2561 = vadd.f32 0.0, %v2560
    %v2562 = vpop.f32.mrb[0].mxu0
    %v2563 = vpop.f32.mrb[0].mxu0
    %v2564 = vpop.f32.mrb[0].mxu0
    %2565 = vdwg.mxu0
    %v2567 = vsel %vm2188, %v2369, 0
    %v2570 = vsel %vm2384, %v1439, 0
    %2572 = vmatprep.subr.bf16.mxu0 0
    %2573 = vmatpush1.bf16.msra.mxu0 %v2570
    %2574 = vmatprep.subr.bf16.mxu0 0
    %2575 = vmatpush1.bf16.msra.mxu0 0
    %2576 = vmatprep.subr.bf16.mxu0 0
    %2577 = vmatpush1.bf16.msra.mxu0 0
    %2578 = vmatprep.subr.bf16.mxu0 0
    %2579 = vmatpush1.bf16.msra.mxu0 0
    %2580 = vmatprep.subr.bf16.mxu0 0
    %2581 = vmatpush1.bf16.msra.mxu0 0
    %2582 = vmatprep.subr.bf16.mxu0 0
    %2583 = vmatpush1.bf16.msra.mxu0 0
    %2584 = vmatprep.subr.bf16.mxu0 0
    %2585 = vmatpush1.bf16.msra.mxu0 0
    %2586 = vmatprep.subr.bf16.mxu0 0
    %2587 = vmatpush1.bf16.msra.mxu0 0
    %2588 = vmatprep.subr.bf16.mxu0 0
    %2589 = vmatpush1.bf16.msra.mxu0 0
    %2590 = vmatprep.subr.bf16.mxu0 0
    %2591 = vmatpush1.bf16.msra.mxu0 0
    %2592 = vmatprep.subr.bf16.mxu0 0
    %2593 = vmatpush1.bf16.msra.mxu0 0
    %2594 = vmatprep.subr.bf16.mxu0 0
    %2595 = vmatpush1.bf16.msra.mxu0 0
    %2596 = vmatprep.subr.bf16.mxu0 0
    %2597 = vmatpush1.bf16.msra.mxu0 0
    %2598 = vmatprep.subr.bf16.mxu0 0
    %2599 = vmatpush1.bf16.msra.mxu0 0
    %2600 = vmatprep.subr.bf16.mxu0 0
    %2601 = vmatpush1.bf16.msra.mxu0 0
    %2602 = vmatprep.subr.bf16.mxu0 0
    %2603 = vmatpush1.bf16.msra.mxu0 0
    %2604 = vmatprep.mubr.bf16.mxu0 0
    %2605 = vmatmul.mubr.bf16.gmra.mrb[0].mxu0 %v2567
    %v2606 = vpop.f32.mrb[0].mxu0
    %v2607 = vadd.f32 0.0, %v2606
    %v2608 = vpop.f32.mrb[0].mxu0
    %v2609 = vpop.f32.mrb[0].mxu0
    %v2610 = vpop.f32.mrb[0].mxu0
    %2611 = vdwg.mxu0
    %v2613 = vsel %vm2188, %v2370, 0
    %v2616 = vsel %vm2384, %v1440, 0
    %2618 = vmatprep.subr.bf16.mxu0 0
    %2619 = vmatpush1.bf16.msra.mxu0 %v2616
    %2620 = vmatprep.subr.bf16.mxu0 0
    %2621 = vmatpush1.bf16.msra.mxu0 0
    %2622 = vmatprep.subr.bf16.mxu0 0
    %2623 = vmatpush1.bf16.msra.mxu0 0
    %2624 = vmatprep.subr.bf16.mxu0 0
    %2625 = vmatpush1.bf16.msra.mxu0 0
    %2626 = vmatprep.subr.bf16.mxu0 0
    %2627 = vmatpush1.bf16.msra.mxu0 0
    %2628 = vmatprep.subr.bf16.mxu0 0
    %2629 = vmatpush1.bf16.msra.mxu0 0
    %2630 = vmatprep.subr.bf16.mxu0 0
    %2631 = vmatpush1.bf16.msra.mxu0 0
    %2632 = vmatprep.subr.bf16.mxu0 0
    %2633 = vmatpush1.bf16.msra.mxu0 0
    %2634 = vmatprep.subr.bf16.mxu0 0
    %2635 = vmatpush1.bf16.msra.mxu0 0
    %2636 = vmatprep.subr.bf16.mxu0 0
    %2637 = vmatpush1.bf16.msra.mxu0 0
    %2638 = vmatprep.subr.bf16.mxu0 0
    %2639 = vmatpush1.bf16.msra.mxu0 0
    %2640 = vmatprep.subr.bf16.mxu0 0
    %2641 = vmatpush1.bf16.msra.mxu0 0
    %2642 = vmatprep.subr.bf16.mxu0 0
    %2643 = vmatpush1.bf16.msra.mxu0 0
    %2644 = vmatprep.subr.bf16.mxu0 0
    %2645 = vmatpush1.bf16.msra.mxu0 0
    %2646 = vmatprep.subr.bf16.mxu0 0
    %2647 = vmatpush1.bf16.msra.mxu0 0
    %2648 = vmatprep.subr.bf16.mxu0 0
    %2649 = vmatpush1.bf16.msra.mxu0 0
    %2650 = vmatprep.mubr.bf16.mxu0 0
    %2651 = vmatmul.mubr.bf16.gmra.mrb[0].mxu0 %v2613
    %v2652 = vpop.f32.mrb[0].mxu0
    %v2653 = vadd.f32 0.0, %v2652
    %v2654 = vpop.f32.mrb[0].mxu0
    %v2655 = vpop.f32.mrb[0].mxu0
    %v2656 = vpop.f32.mrb[0].mxu0
    %2657 = vdwg.mxu0
    %v2659 = vsel %vm2188, %v2371, 0
    %v2662 = vsel %vm2384, %v1441, 0
    %2664 = vmatprep.subr.bf16.mxu0 0
    %2665 = vmatpush1.bf16.msra.mxu0 %v2662
    %2666 = vmatprep.subr.bf16.mxu0 0
    %2667 = vmatpush1.bf16.msra.mxu0 0
    %2668 = vmatprep.subr.bf16.mxu0 0
    %2669 = vmatpush1.bf16.msra.mxu0 0
    %2670 = vmatprep.subr.bf16.mxu0 0
    %2671 = vmatpush1.bf16.msra.mxu0 0
    %2672 = vmatprep.subr.bf16.mxu0 0
    %2673 = vmatpush1.bf16.msra.mxu0 0
    %2674 = vmatprep.subr.bf16.mxu0 0
    %2675 = vmatpush1.bf16.msra.mxu0 0
    %2676 = vmatprep.subr.bf16.mxu0 0
    %2677 = vmatpush1.bf16.msra.mxu0 0
    %2678 = vmatprep.subr.bf16.mxu0 0
    %2679 = vmatpush1.bf16.msra.mxu0 0
    %2680 = vmatprep.subr.bf16.mxu0 0
    %2681 = vmatpush1.bf16.msra.mxu0 0
    %2682 = vmatprep.subr.bf16.mxu0 0
    %2683 = vmatpush1.bf16.msra.mxu0 0
    %2684 = vmatprep.subr.bf16.mxu0 0
    %2685 = vmatpush1.bf16.msra.mxu0 0
    %2686 = vmatprep.subr.bf16.mxu0 0
    %2687 = vmatpush1.bf16.msra.mxu0 0
    %2688 = vmatprep.subr.bf16.mxu0 0
    %2689 = vmatpush1.bf16.msra.mxu0 0
    %2690 = vmatprep.subr.bf16.mxu0 0
    %2691 = vmatpush1.bf16.msra.mxu0 0
    %2692 = vmatprep.subr.bf16.mxu0 0
    %2693 = vmatpush1.bf16.msra.mxu0 0
    %2694 = vmatprep.subr.bf16.mxu0 0
    %2695 = vmatpush1.bf16.msra.mxu0 0
    %2696 = vmatprep.mubr.bf16.mxu0 0
    %2697 = vmatmul.mubr.bf16.gmra.mrb[0].mxu0 %v2659
    %v2698 = vpop.f32.mrb[0].mxu0
    %v2699 = vadd.f32 0.0, %v2698
    %v2700 = vpop.f32.mrb[0].mxu0
    %v2701 = vpop.f32.mrb[0].mxu0
    %v2702 = vpop.f32.mrb[0].mxu0
    %2703 = vdwg.mxu0
    %v2705 = vsel %vm2188, %v2372, 0
    %v2708 = vsel %vm2384, %v1442, 0
    %2710 = vmatprep.subr.bf16.mxu0 0
    %2711 = vmatpush1.bf16.msra.mxu0 %v2708
    %2712 = vmatprep.subr.bf16.mxu0 0
    %2713 = vmatpush1.bf16.msra.mxu0 0
    %2714 = vmatprep.subr.bf16.mxu0 0
    %2715 = vmatpush1.bf16.msra.mxu0 0
    %2716 = vmatprep.subr.bf16.mxu0 0
    %2717 = vmatpush1.bf16.msra.mxu0 0
    %2718 = vmatprep.subr.bf16.mxu0 0
    %2719 = vmatpush1.bf16.msra.mxu0 0
    %2720 = vmatprep.subr.bf16.mxu0 0
    %2721 = vmatpush1.bf16.msra.mxu0 0
    %2722 = vmatprep.subr.bf16.mxu0 0
    %2723 = vmatpush1.bf16.msra.mxu0 0
    %2724 = vmatprep.subr.bf16.mxu0 0
    %2725 = vmatpush1.bf16.msra.mxu0 0
    %2726 = vmatprep.subr.bf16.mxu0 0
    %2727 = vmatpush1.bf16.msra.mxu0 0
    %2728 = vmatprep.subr.bf16.mxu0 0
    %2729 = vmatpush1.bf16.msra.mxu0 0
    %2730 = vmatprep.subr.bf16.mxu0 0
    %2731 = vmatpush1.bf16.msra.mxu0 0
    %2732 = vmatprep.subr.bf16.mxu0 0
    %2733 = vmatpush1.bf16.msra.mxu0 0
    %2734 = vmatprep.subr.bf16.mxu0 0
    %2735 = vmatpush1.bf16.msra.mxu0 0
    %2736 = vmatprep.subr.bf16.mxu0 0
    %2737 = vmatpush1.bf16.msra.mxu0 0
    %2738 = vmatprep.subr.bf16.mxu0 0
    %2739 = vmatpush1.bf16.msra.mxu0 0
    %2740 = vmatprep.subr.bf16.mxu0 0
    %2741 = vmatpush1.bf16.msra.mxu0 0
    %2742 = vmatprep.mubr.bf16.mxu0 0
    %2743 = vmatmul.mubr.bf16.gmra.mrb[0].mxu0 %v2705
    %v2744 = vpop.f32.mrb[0].mxu0
    %v2745 = vadd.f32 0.0, %v2744
    %v2746 = vpop.f32.mrb[0].mxu0
    %v2747 = vpop.f32.mrb[0].mxu0
    %v2748 = vpop.f32.mrb[0].mxu0
    %2749 = vdwg.mxu0
    %v2751 = vsel %vm2188, %v2373, 0
    %v2754 = vsel %vm2384, %v1443, 0
    %2756 = vmatprep.subr.bf16.mxu0 0
    %2757 = vmatpush1.bf16.msra.mxu0 %v2754
    %2758 = vmatprep.subr.bf16.mxu0 0
    %2759 = vmatpush1.bf16.msra.mxu0 0
    %2760 = vmatprep.subr.bf16.mxu0 0
    %2761 = vmatpush1.bf16.msra.mxu0 0
    %2762 = vmatprep.subr.bf16.mxu0 0
    %2763 = vmatpush1.bf16.msra.mxu0 0
    %2764 = vmatprep.subr.bf16.mxu0 0
    %2765 = vmatpush1.bf16.msra.mxu0 0
    %2766 = vmatprep.subr.bf16.mxu0 0
    %2767 = vmatpush1.bf16.msra.mxu0 0
    %2768 = vmatprep.subr.bf16.mxu0 0
    %2769 = vmatpush1.bf16.msra.mxu0 0
    %2770 = vmatprep.subr.bf16.mxu0 0
    %2771 = vmatpush1.bf16.msra.mxu0 0
    %2772 = vmatprep.subr.bf16.mxu0 0
    %2773 = vmatpush1.bf16.msra.mxu0 0
    %2774 = vmatprep.subr.bf16.mxu0 0
    %2775 = vmatpush1.bf16.msra.mxu0 0
    %2776 = vmatprep.subr.bf16.mxu0 0
    %2777 = vmatpush1.bf16.msra.mxu0 0
    %2778 = vmatprep.subr.bf16.mxu0 0
    %2779 = vmatpush1.bf16.msra.mxu0 0
    %2780 = vmatprep.subr.bf16.mxu0 0
    %2781 = vmatpush1.bf16.msra.mxu0 0
    %2782 = vmatprep.subr.bf16.mxu0 0
    %2783 = vmatpush1.bf16.msra.mxu0 0
    %2784 = vmatprep.subr.bf16.mxu0 0
    %2785 = vmatpush1.bf16.msra.mxu0 0
    %2786 = vmatprep.subr.bf16.mxu0 0
    %2787 = vmatpush1.bf16.msra.mxu0 0
    %2788 = vmatprep.mubr.bf16.mxu0 0
    %2789 = vmatmul.mubr.bf16.gmra.mrb[0].mxu0 %v2751
    %v2790 = vpop.f32.mrb[0].mxu0
    %v2791 = vadd.f32 0.0, %v2790
    %v2792 = vpop.f32.mrb[0].mxu0
    %v2793 = vpop.f32.mrb[0].mxu0
    %v2794 = vpop.f32.mrb[0].mxu0
    %2795 = vdwg.mxu0
    %v2797 = vsel %vm2188, %v2374, 0
    %v2800 = vsel %vm2384, %v1444, 0
    %2802 = vmatprep.subr.bf16.mxu0 0
    %2803 = vmatpush1.bf16.msra.mxu0 %v2800
    %2804 = vmatprep.subr.bf16.mxu0 0
    %2805 = vmatpush1.bf16.msra.mxu0 0
    %2806 = vmatprep.subr.bf16.mxu0 0
    %2807 = vmatpush1.bf16.msra.mxu0 0
    %2808 = vmatprep.subr.bf16.mxu0 0
    %2809 = vmatpush1.bf16.msra.mxu0 0
    %2810 = vmatprep.subr.bf16.mxu0 0
    %2811 = vmatpush1.bf16.msra.mxu0 0
    %2812 = vmatprep.subr.bf16.mxu0 0
    %2813 = vmatpush1.bf16.msra.mxu0 0
    %2814 = vmatprep.subr.bf16.mxu0 0
    %2815 = vmatpush1.bf16.msra.mxu0 0
    %2816 = vmatprep.subr.bf16.mxu0 0
    %2817 = vmatpush1.bf16.msra.mxu0 0
    %2818 = vmatprep.subr.bf16.mxu0 0
    %2819 = vmatpush1.bf16.msra.mxu0 0
    %2820 = vmatprep.subr.bf16.mxu0 0
    %2821 = vmatpush1.bf16.msra.mxu0 0
    %2822 = vmatprep.subr.bf16.mxu0 0
    %2823 = vmatpush1.bf16.msra.mxu0 0
    %2824 = vmatprep.subr.bf16.mxu0 0
    %2825 = vmatpush1.bf16.msra.mxu0 0
    %2826 = vmatprep.subr.bf16.mxu0 0
    %2827 = vmatpush1.bf16.msra.mxu0 0
    %2828 = vmatprep.subr.bf16.mxu0 0
    %2829 = vmatpush1.bf16.msra.mxu0 0
    %2830 = vmatprep.subr.bf16.mxu0 0
    %2831 = vmatpush1.bf16.msra.mxu0 0
    %2832 = vmatprep.subr.bf16.mxu0 0
    %2833 = vmatpush1.bf16.msra.mxu0 0
    %2834 = vmatprep.mubr.bf16.mxu0 0
    %2835 = vmatmul.mubr.bf16.gmra.mrb[0].mxu0 %v2797
    %v2836 = vpop.f32.mrb[0].mxu0
    %v2837 = vadd.f32 0.0, %v2836
    %v2838 = vpop.f32.mrb[0].mxu0
    %v2839 = vpop.f32.mrb[0].mxu0
    %v2840 = vpop.f32.mrb[0].mxu0
    %2841 = vdwg.mxu0
    %v2843 = vsel %vm2188, %v2375, 0
    %v2846 = vsel %vm2384, %v1445, 0
    %2848 = vmatprep.subr.bf16.mxu0 0
    %2849 = vmatpush1.bf16.msra.mxu0 %v2846
    %2850 = vmatprep.subr.bf16.mxu0 0
    %2851 = vmatpush1.bf16.msra.mxu0 0
    %2852 = vmatprep.subr.bf16.mxu0 0
    %2853 = vmatpush1.bf16.msra.mxu0 0
    %2854 = vmatprep.subr.bf16.mxu0 0
    %2855 = vmatpush1.bf16.msra.mxu0 0
    %2856 = vmatprep.subr.bf16.mxu0 0
    %2857 = vmatpush1.bf16.msra.mxu0 0
    %2858 = vmatprep.subr.bf16.mxu0 0
    %2859 = vmatpush1.bf16.msra.mxu0 0
    %2860 = vmatprep.subr.bf16.mxu0 0
    %2861 = vmatpush1.bf16.msra.mxu0 0
    %2862 = vmatprep.subr.bf16.mxu0 0
    %2863 = vmatpush1.bf16.msra.mxu0 0
    %2864 = vmatprep.subr.bf16.mxu0 0
    %2865 = vmatpush1.bf16.msra.mxu0 0
    %2866 = vmatprep.subr.bf16.mxu0 0
    %2867 = vmatpush1.bf16.msra.mxu0 0
    %2868 = vmatprep.subr.bf16.mxu0 0
    %2869 = vmatpush1.bf16.msra.mxu0 0
    %2870 = vmatprep.subr.bf16.mxu0 0
    %2871 = vmatpush1.bf16.msra.mxu0 0
    %2872 = vmatprep.subr.bf16.mxu0 0
    %2873 = vmatpush1.bf16.msra.mxu0 0
    %2874 = vmatprep.subr.bf16.mxu0 0
    %2875 = vmatpush1.bf16.msra.mxu0 0
    %2876 = vmatprep.subr.bf16.mxu0 0
    %2877 = vmatpush1.bf16.msra.mxu0 0
    %2878 = vmatprep.subr.bf16.mxu0 0
    %2879 = vmatpush1.bf16.msra.mxu0 0
    %2880 = vmatprep.mubr.bf16.mxu0 0
    %2881 = vmatmul.mubr.bf16.gmra.mrb[0].mxu0 %v2843
    %v2882 = vpop.f32.mrb[0].mxu0
    %v2883 = vadd.f32 0.0, %v2882
    %v2884 = vpop.f32.mrb[0].mxu0
    %v2885 = vpop.f32.mrb[0].mxu0
    %v2886 = vpop.f32.mrb[0].mxu0
    %2887 = vdwg.mxu0
    %v2889 = vsel %vm2188, %v2376, 0
    %v2892 = vsel %vm2384, %v1446, 0
    %2894 = vmatprep.subr.bf16.mxu0 0
    %2895 = vmatpush1.bf16.msra.mxu0 %v2892
    %2896 = vmatprep.subr.bf16.mxu0 0
    %2897 = vmatpush1.bf16.msra.mxu0 0
    %2898 = vmatprep.subr.bf16.mxu0 0
    %2899 = vmatpush1.bf16.msra.mxu0 0
    %2900 = vmatprep.subr.bf16.mxu0 0
    %2901 = vmatpush1.bf16.msra.mxu0 0
    %2902 = vmatprep.subr.bf16.mxu0 0
    %2903 = vmatpush1.bf16.msra.mxu0 0
    %2904 = vmatprep.subr.bf16.mxu0 0
    %2905 = vmatpush1.bf16.msra.mxu0 0
    %2906 = vmatprep.subr.bf16.mxu0 0
    %2907 = vmatpush1.bf16.msra.mxu0 0
    %2908 = vmatprep.subr.bf16.mxu0 0
    %2909 = vmatpush1.bf16.msra.mxu0 0
    %2910 = vmatprep.subr.bf16.mxu0 0
    %2911 = vmatpush1.bf16.msra.mxu0 0
    %2912 = vmatprep.subr.bf16.mxu0 0
    %2913 = vmatpush1.bf16.msra.mxu0 0
    %2914 = vmatprep.subr.bf16.mxu0 0
    %2915 = vmatpush1.bf16.msra.mxu0 0
    %2916 = vmatprep.subr.bf16.mxu0 0
    %2917 = vmatpush1.bf16.msra.mxu0 0
    %2918 = vmatprep.subr.bf16.mxu0 0
    %2919 = vmatpush1.bf16.msra.mxu0 0
    %2920 = vmatprep.subr.bf16.mxu0 0
    %2921 = vmatpush1.bf16.msra.mxu0 0
    %2922 = vmatprep.subr.bf16.mxu0 0
    %2923 = vmatpush1.bf16.msra.mxu0 0
    %2924 = vmatprep.subr.bf16.mxu0 0
    %2925 = vmatpush1.bf16.msra.mxu0 0
    %2926 = vmatprep.mubr.bf16.mxu0 0
    %2927 = vmatmul.mubr.bf16.gmra.mrb[0].mxu0 %v2889
    %v2928 = vpop.f32.mrb[0].mxu0
    %v2929 = vadd.f32 0.0, %v2928
    %v2930 = vpop.f32.mrb[0].mxu0
    %v2931 = vpop.f32.mrb[0].mxu0
    %v2932 = vpop.f32.mrb[0].mxu0
    %2933 = vdwg.mxu0
    %v2935 = vsel %vm2188, %v2377, 0
    %v2938 = vsel %vm2384, %v1447, 0
    %2940 = vmatprep.subr.bf16.mxu0 0
    %2941 = vmatpush1.bf16.msra.mxu0 %v2938
    %2942 = vmatprep.subr.bf16.mxu0 0
    %2943 = vmatpush1.bf16.msra.mxu0 0
    %2944 = vmatprep.subr.bf16.mxu0 0
    %2945 = vmatpush1.bf16.msra.mxu0 0
    %2946 = vmatprep.subr.bf16.mxu0 0
    %2947 = vmatpush1.bf16.msra.mxu0 0
    %2948 = vmatprep.subr.bf16.mxu0 0
    %2949 = vmatpush1.bf16.msra.mxu0 0
    %2950 = vmatprep.subr.bf16.mxu0 0
    %2951 = vmatpush1.bf16.msra.mxu0 0
    %2952 = vmatprep.subr.bf16.mxu0 0
    %2953 = vmatpush1.bf16.msra.mxu0 0
    %2954 = vmatprep.subr.bf16.mxu0 0
    %2955 = vmatpush1.bf16.msra.mxu0 0
    %2956 = vmatprep.subr.bf16.mxu0 0
    %2957 = vmatpush1.bf16.msra.mxu0 0
    %2958 = vmatprep.subr.bf16.mxu0 0
    %2959 = vmatpush1.bf16.msra.mxu0 0
    %2960 = vmatprep.subr.bf16.mxu0 0
    %2961 = vmatpush1.bf16.msra.mxu0 0
    %2962 = vmatprep.subr.bf16.mxu0 0
    %2963 = vmatpush1.bf16.msra.mxu0 0
    %2964 = vmatprep.subr.bf16.mxu0 0
    %2965 = vmatpush1.bf16.msra.mxu0 0
    %2966 = vmatprep.subr.bf16.mxu0 0
    %2967 = vmatpush1.bf16.msra.mxu0 0
    %2968 = vmatprep.subr.bf16.mxu0 0
    %2969 = vmatpush1.bf16.msra.mxu0 0
    %2970 = vmatprep.subr.bf16.mxu0 0
    %2971 = vmatpush1.bf16.msra.mxu0 0
    %2972 = vmatprep.mubr.bf16.mxu0 0
    %2973 = vmatmul.mubr.bf16.gmra.mrb[0].mxu0 %v2935
    %v2974 = vpop.f32.mrb[0].mxu0
    %v2975 = vadd.f32 0.0, %v2974
    %v2976 = vpop.f32.mrb[0].mxu0
    %v2977 = vpop.f32.mrb[0].mxu0
    %v2978 = vpop.f32.mrb[0].mxu0
    %2979 = vdwg.mxu0
    %v2981 = vsel %vm2188, %v2378, 0
    %v2984 = vsel %vm2384, %v1448, 0
    %2986 = vmatprep.subr.bf16.mxu0 0
    %2987 = vmatpush1.bf16.msra.mxu0 %v2984
    %2988 = vmatprep.subr.bf16.mxu0 0
    %2989 = vmatpush1.bf16.msra.mxu0 0
    %2990 = vmatprep.subr.bf16.mxu0 0
    %2991 = vmatpush1.bf16.msra.mxu0 0
    %2992 = vmatprep.subr.bf16.mxu0 0
    %2993 = vmatpush1.bf16.msra.mxu0 0
    %2994 = vmatprep.subr.bf16.mxu0 0
    %2995 = vmatpush1.bf16.msra.mxu0 0
    %2996 = vmatprep.subr.bf16.mxu0 0
    %2997 = vmatpush1.bf16.msra.mxu0 0
    %2998 = vmatprep.subr.bf16.mxu0 0
    %2999 = vmatpush1.bf16.msra.mxu0 0
    %3000 = vmatprep.subr.bf16.mxu0 0
    %3001 = vmatpush1.bf16.msra.mxu0 0
    %3002 = vmatprep.subr.bf16.mxu0 0
    %3003 = vmatpush1.bf16.msra.mxu0 0
    %3004 = vmatprep.subr.bf16.mxu0 0
    %3005 = vmatpush1.bf16.msra.mxu0 0
    %3006 = vmatprep.subr.bf16.mxu0 0
    %3007 = vmatpush1.bf16.msra.mxu0 0
    %3008 = vmatprep.subr.bf16.mxu0 0
    %3009 = vmatpush1.bf16.msra.mxu0 0
    %3010 = vmatprep.subr.bf16.mxu0 0
    %3011 = vmatpush1.bf16.msra.mxu0 0
    %3012 = vmatprep.subr.bf16.mxu0 0
    %3013 = vmatpush1.bf16.msra.mxu0 0
    %3014 = vmatprep.subr.bf16.mxu0 0
    %3015 = vmatpush1.bf16.msra.mxu0 0
    %3016 = vmatprep.subr.bf16.mxu0 0
    %3017 = vmatpush1.bf16.msra.mxu0 0
    %3018 = vmatprep.mubr.bf16.mxu0 0
    %3019 = vmatmul.mubr.bf16.gmra.mrb[0].mxu0 %v2981
    %v3020 = vpop.f32.mrb[0].mxu0
    %v3021 = vadd.f32 0.0, %v3020
    %v3022 = vpop.f32.mrb[0].mxu0
    %v3023 = vpop.f32.mrb[0].mxu0
    %v3024 = vpop.f32.mrb[0].mxu0
    %3025 = vdwg.mxu0
    %v3027 = vsel %vm2188, %v2379, 0
    %v3030 = vsel %vm2384, %v1449, 0
    %3032 = vmatprep.subr.bf16.mxu0 0
    %3033 = vmatpush1.bf16.msra.mxu0 %v3030
    %3034 = vmatprep.subr.bf16.mxu0 0
    %3035 = vmatpush1.bf16.msra.mxu0 0
    %3036 = vmatprep.subr.bf16.mxu0 0
    %3037 = vmatpush1.bf16.msra.mxu0 0
    %3038 = vmatprep.subr.bf16.mxu0 0
    %3039 = vmatpush1.bf16.msra.mxu0 0
    %3040 = vmatprep.subr.bf16.mxu0 0
    %3041 = vmatpush1.bf16.msra.mxu0 0
    %3042 = vmatprep.subr.bf16.mxu0 0
    %3043 = vmatpush1.bf16.msra.mxu0 0
    %3044 = vmatprep.subr.bf16.mxu0 0
    %3045 = vmatpush1.bf16.msra.mxu0 0
    %3046 = vmatprep.subr.bf16.mxu0 0
    %3047 = vmatpush1.bf16.msra.mxu0 0
    %3048 = vmatprep.subr.bf16.mxu0 0
    %3049 = vmatpush1.bf16.msra.mxu0 0
    %3050 = vmatprep.subr.bf16.mxu0 0
    %3051 = vmatpush1.bf16.msra.mxu0 0
    %3052 = vmatprep.subr.bf16.mxu0 0
    %3053 = vmatpush1.bf16.msra.mxu0 0
    %3054 = vmatprep.subr.bf16.mxu0 0
    %3055 = vmatpush1.bf16.msra.mxu0 0
    %3056 = vmatprep.subr.bf16.mxu0 0
    %3057 = vmatpush1.bf16.msra.mxu0 0
    %3058 = vmatprep.subr.bf16.mxu0 0
    %3059 = vmatpush1.bf16.msra.mxu0 0
    %3060 = vmatprep.subr.bf16.mxu0 0
    %3061 = vmatpush1.bf16.msra.mxu0 0
    %3062 = vmatprep.subr.bf16.mxu0 0
    %3063 = vmatpush1.bf16.msra.mxu0 0
    %3064 = vmatprep.mubr.bf16.mxu0 0
    %3065 = vmatmul.mubr.bf16.gmra.mrb[0].mxu0 %v3027
    %v3066 = vpop.f32.mrb[0].mxu0
    %v3067 = vadd.f32 0.0, %v3066
    %v3068 = vpop.f32.mrb[0].mxu0
    %v3069 = vpop.f32.mrb[0].mxu0
    %v3070 = vpop.f32.mrb[0].mxu0
    %3071 = vdwg.mxu0
    %v3073 = vsel %vm2188, %v2380, 0
    %v3076 = vsel %vm2384, %v1450, 0
    %3078 = vmatprep.subr.bf16.mxu0 0
    %3079 = vmatpush1.bf16.msra.mxu0 %v3076
    %3080 = vmatprep.subr.bf16.mxu0 0
    %3081 = vmatpush1.bf16.msra.mxu0 0
    %3082 = vmatprep.subr.bf16.mxu0 0
    %3083 = vmatpush1.bf16.msra.mxu0 0
    %3084 = vmatprep.subr.bf16.mxu0 0
    %3085 = vmatpush1.bf16.msra.mxu0 0
    %3086 = vmatprep.subr.bf16.mxu0 0
    %3087 = vmatpush1.bf16.msra.mxu0 0
    %3088 = vmatprep.subr.bf16.mxu0 0
    %3089 = vmatpush1.bf16.msra.mxu0 0
    %3090 = vmatprep.subr.bf16.mxu0 0
    %3091 = vmatpush1.bf16.msra.mxu0 0
    %3092 = vmatprep.subr.bf16.mxu0 0
    %3093 = vmatpush1.bf16.msra.mxu0 0
    %3094 = vmatprep.subr.bf16.mxu0 0
    %3095 = vmatpush1.bf16.msra.mxu0 0
    %3096 = vmatprep.subr.bf16.mxu0 0
    %3097 = vmatpush1.bf16.msra.mxu0 0
    %3098 = vmatprep.subr.bf16.mxu0 0
    %3099 = vmatpush1.bf16.msra.mxu0 0
    %3100 = vmatprep.subr.bf16.mxu0 0
    %3101 = vmatpush1.bf16.msra.mxu0 0
    %3102 = vmatprep.subr.bf16.mxu0 0
    %3103 = vmatpush1.bf16.msra.mxu0 0
    %3104 = vmatprep.subr.bf16.mxu0 0
    %3105 = vmatpush1.bf16.msra.mxu0 0
    %3106 = vmatprep.subr.bf16.mxu0 0
    %3107 = vmatpush1.bf16.msra.mxu0 0
    %3108 = vmatprep.subr.bf16.mxu0 0
    %3109 = vmatpush1.bf16.msra.mxu0 0
    %3110 = vmatprep.mubr.bf16.mxu0 0
    %3111 = vmatmul.mubr.bf16.gmra.mrb[0].mxu0 %v3073
    %v3112 = vpop.f32.mrb[0].mxu0
    %v3113 = vadd.f32 0.0, %v3112
    %v3114 = vpop.f32.mrb[0].mxu0
    %v3115 = vpop.f32.mrb[0].mxu0
    %v3116 = vpop.f32.mrb[0].mxu0
    %3117 = vdwg.mxu0
    %v3118 = vcombine.low %v2423, %v2607
    %v3119 = vcombine.high %v2423, %v2607
    %v3121 = vunpack.c.l.s4 1983009808
    %v3122 = vunpack.c.0.s8 %v3121
    %v3123 = vlaneseq
    %v3124 = vshrl.u32 %v3123, 7
    %v3125 = vsub.s32 %v3122, %v3124
    %v3126 = vrot.slane %v3118, %v3125
    %v3128 = vunpack.c.l.s4 1983009808
    %v3129 = vunpack.c.0.s8 %v3128
    %v3130 = vlaneseq
    %v3131 = vshrl.u32 %v3130, 7
    %v3132 = vsub.s32 %v3129, %v3131
    %v3133 = vrot.slane %v3119, %v3132
    %v3134 = vcombine.low %v2515, %v2699
    %v3135 = vcombine.high %v2515, %v2699
    %v3137 = vunpack.c.l.s4 1983009808
    %v3138 = vunpack.c.0.s8 %v3137
    %v3139 = vlaneseq
    %v3140 = vshrl.u32 %v3139, 7
    %v3141 = vsub.s32 %v3138, %v3140
    %v3142 = vrot.slane %v3134, %v3141
    %v3144 = vunpack.c.l.s4 1983009808
    %v3145 = vunpack.c.0.s8 %v3144
    %v3146 = vlaneseq
    %v3147 = vshrl.u32 %v3146, 7
    %v3148 = vsub.s32 %v3145, %v3147
    %v3149 = vrot.slane %v3135, %v3148
    %v3150 = vcombine.low %v2791, %v2975
    %v3151 = vcombine.high %v2791, %v2975
    %v3153 = vunpack.c.l.s4 1983009808
    %v3154 = vunpack.c.0.s8 %v3153
    %v3155 = vlaneseq
    %v3156 = vshrl.u32 %v3155, 7
    %v3157 = vsub.s32 %v3154, %v3156
    %v3158 = vrot.slane %v3150, %v3157
    %v3160 = vunpack.c.l.s4 1983009808
    %v3161 = vunpack.c.0.s8 %v3160
    %v3162 = vlaneseq
    %v3163 = vshrl.u32 %v3162, 7
    %v3164 = vsub.s32 %v3161, %v3163
    %v3165 = vrot.slane %v3151, %v3164
    %v3166 = vcombine.low %v2883, %v3067
    %v3167 = vcombine.high %v2883, %v3067
    %v3169 = vunpack.c.l.s4 1983009808
    %v3170 = vunpack.c.0.s8 %v3169
    %v3171 = vlaneseq
    %v3172 = vshrl.u32 %v3171, 7
    %v3173 = vsub.s32 %v3170, %v3172
    %v3174 = vrot.slane %v3166, %v3173
    %v3176 = vunpack.c.l.s4 1983009808
    %v3177 = vunpack.c.0.s8 %v3176
    %v3178 = vlaneseq
    %v3179 = vshrl.u32 %v3178, 7
    %v3180 = vsub.s32 %v3177, %v3179
    %v3181 = vrot.slane %v3167, %v3180
    %v3182 = vcombine.low %v3126, %v3142
    %v3183 = vcombine.high %v3126, %v3142
    %v3185 = vunpack.c.l.s4 1934713408
    %v3186 = vunpack.c.0.s8 %v3185
    %v3187 = vlaneseq
    %v3188 = vshrl.u32 %v3187, 7
    %v3189 = vsub.s32 %v3186, %v3188
    %v3190 = vrot.slane %v3182, %v3189
    %v3192 = vunpack.c.l.s4 1934713408
    %v3193 = vunpack.c.0.s8 %v3192
    %v3194 = vlaneseq
    %v3195 = vshrl.u32 %v3194, 7
    %v3196 = vsub.s32 %v3193, %v3195
    %v3197 = vrot.slane %v3183, %v3196
    %v3198 = vcombine.low %v3133, %v3149
    %v3199 = vcombine.high %v3133, %v3149
    %v3201 = vunpack.c.l.s4 1934713408
    %v3202 = vunpack.c.0.s8 %v3201
    %v3203 = vlaneseq
    %v3204 = vshrl.u32 %v3203, 7
    %v3205 = vsub.s32 %v3202, %v3204
    %v3206 = vrot.slane %v3198, %v3205
    %v3208 = vunpack.c.l.s4 1934713408
    %v3209 = vunpack.c.0.s8 %v3208
    %v3210 = vlaneseq
    %v3211 = vshrl.u32 %v3210, 7
    %v3212 = vsub.s32 %v3209, %v3211
    %v3213 = vrot.slane %v3199, %v3212
    %v3214 = vcombine.low %v3158, %v3174
    %v3215 = vcombine.high %v3158, %v3174
    %v3217 = vunpack.c.l.s4 1934713408
    %v3218 = vunpack.c.0.s8 %v3217
    %v3219 = vlaneseq
    %v3220 = vshrl.u32 %v3219, 7
    %v3221 = vsub.s32 %v3218, %v3220
    %v3222 = vrot.slane %v3214, %v3221
    %v3224 = vunpack.c.l.s4 1934713408
    %v3225 = vunpack.c.0.s8 %v3224
    %v3226 = vlaneseq
    %v3227 = vshrl.u32 %v3226, 7
    %v3228 = vsub.s32 %v3225, %v3227
    %v3229 = vrot.slane %v3215, %v3228
    %v3230 = vcombine.low %v3165, %v3181
    %v3231 = vcombine.high %v3165, %v3181
    %v3233 = vunpack.c.l.s4 1934713408
    %v3234 = vunpack.c.0.s8 %v3233
    %v3235 = vlaneseq
    %v3236 = vshrl.u32 %v3235, 7
    %v3237 = vsub.s32 %v3234, %v3236
    %v3238 = vrot.slane %v3230, %v3237
    %v3240 = vunpack.c.l.s4 1934713408
    %v3241 = vunpack.c.0.s8 %v3240
    %v3242 = vlaneseq
    %v3243 = vshrl.u32 %v3242, 7
    %v3244 = vsub.s32 %v3241, %v3243
    %v3245 = vrot.slane %v3231, %v3244
    %v3246 = vcombine.low %v3190, %v3222
    %v3247 = vcombine.high %v3190, %v3222
    %v3248 = vcombine.low %v3197, %v3229
    %v3249 = vcombine.high %v3197, %v3229
    %v3250 = vcombine.low %v3206, %v3238
    %v3251 = vcombine.high %v3206, %v3238
    %v3252 = vcombine.low %v3213, %v3245
    %v3253 = vcombine.high %v3213, %v3245
    %v3254 = vcombine.low %v2469, %v2653
    %v3255 = vcombine.high %v2469, %v2653
    %v3257 = vunpack.c.l.s4 1983009808
    %v3258 = vunpack.c.0.s8 %v3257
    %v3259 = vlaneseq
    %v3260 = vshrl.u32 %v3259, 7
    %v3261 = vsub.s32 %v3258, %v3260
    %v3262 = vrot.slane %v3254, %v3261
    %v3264 = vunpack.c.l.s4 1983009808
    %v3265 = vunpack.c.0.s8 %v3264
    %v3266 = vlaneseq
    %v3267 = vshrl.u32 %v3266, 7
    %v3268 = vsub.s32 %v3265, %v3267
    %v3269 = vrot.slane %v3255, %v3268
    %v3270 = vcombine.low %v2561, %v2745
    %v3271 = vcombine.high %v2561, %v2745
    %v3273 = vunpack.c.l.s4 1983009808
    %v3274 = vunpack.c.0.s8 %v3273
    %v3275 = vlaneseq
    %v3276 = vshrl.u32 %v3275, 7
    %v3277 = vsub.s32 %v3274, %v3276
    %v3278 = vrot.slane %v3270, %v3277
    %v3280 = vunpack.c.l.s4 1983009808
    %v3281 = vunpack.c.0.s8 %v3280
    %v3282 = vlaneseq
    %v3283 = vshrl.u32 %v3282, 7
    %v3284 = vsub.s32 %v3281, %v3283
    %v3285 = vrot.slane %v3271, %v3284
    %v3286 = vcombine.low %v2837, %v3021
    %v3287 = vcombine.high %v2837, %v3021
    %v3289 = vunpack.c.l.s4 1983009808
    %v3290 = vunpack.c.0.s8 %v3289
    %v3291 = vlaneseq
    %v3292 = vshrl.u32 %v3291, 7
    %v3293 = vsub.s32 %v3290, %v3292
    %v3294 = vrot.slane %v3286, %v3293
    %v3296 = vunpack.c.l.s4 1983009808
    %v3297 = vunpack.c.0.s8 %v3296
    %v3298 = vlaneseq
    %v3299 = vshrl.u32 %v3298, 7
    %v3300 = vsub.s32 %v3297, %v3299
    %v3301 = vrot.slane %v3287, %v3300
    %v3302 = vcombine.low %v2929, %v3113
    %v3303 = vcombine.high %v2929, %v3113
    %v3305 = vunpack.c.l.s4 1983009808
    %v3306 = vunpack.c.0.s8 %v3305
    %v3307 = vlaneseq
    %v3308 = vshrl.u32 %v3307, 7
    %v3309 = vsub.s32 %v3306, %v3308
    %v3310 = vrot.slane %v3302, %v3309
    %v3312 = vunpack.c.l.s4 1983009808
    %v3313 = vunpack.c.0.s8 %v3312
    %v3314 = vlaneseq
    %v3315 = vshrl.u32 %v3314, 7
    %v3316 = vsub.s32 %v3313, %v3315
    %v3317 = vrot.slane %v3303, %v3316
    %v3318 = vcombine.low %v3262, %v3278
    %v3319 = vcombine.high %v3262, %v3278
    %v3321 = vunpack.c.l.s4 1934713408
    %v3322 = vunpack.c.0.s8 %v3321
    %v3323 = vlaneseq
    %v3324 = vshrl.u32 %v3323, 7
    %v3325 = vsub.s32 %v3322, %v3324
    %v3326 = vrot.slane %v3318, %v3325
    %v3328 = vunpack.c.l.s4 1934713408
    %v3329 = vunpack.c.0.s8 %v3328
    %v3330 = vlaneseq
    %v3331 = vshrl.u32 %v3330, 7
    %v3332 = vsub.s32 %v3329, %v3331
    %v3333 = vrot.slane %v3319, %v3332
    %v3334 = vcombine.low %v3269, %v3285
    %v3335 = vcombine.high %v3269, %v3285
    %v3337 = vunpack.c.l.s4 1934713408
    %v3338 = vunpack.c.0.s8 %v3337
    %v3339 = vlaneseq
    %v3340 = vshrl.u32 %v3339, 7
    %v3341 = vsub.s32 %v3338, %v3340
    %v3342 = vrot.slane %v3334, %v3341
    %v3344 = vunpack.c.l.s4 1934713408
    %v3345 = vunpack.c.0.s8 %v3344
    %v3346 = vlaneseq
    %v3347 = vshrl.u32 %v3346, 7
    %v3348 = vsub.s32 %v3345, %v3347
    %v3349 = vrot.slane %v3335, %v3348
    %v3350 = vcombine.low %v3294, %v3310
    %v3351 = vcombine.high %v3294, %v3310
    %v3353 = vunpack.c.l.s4 1934713408
    %v3354 = vunpack.c.0.s8 %v3353
    %v3355 = vlaneseq
    %v3356 = vshrl.u32 %v3355, 7
    %v3357 = vsub.s32 %v3354, %v3356
    %v3358 = vrot.slane %v3350, %v3357
    %v3360 = vunpack.c.l.s4 1934713408
    %v3361 = vunpack.c.0.s8 %v3360
    %v3362 = vlaneseq
    %v3363 = vshrl.u32 %v3362, 7
    %v3364 = vsub.s32 %v3361, %v3363
    %v3365 = vrot.slane %v3351, %v3364
    %v3366 = vcombine.low %v3301, %v3317
    %v3367 = vcombine.high %v3301, %v3317
    %v3369 = vunpack.c.l.s4 1934713408
    %v3370 = vunpack.c.0.s8 %v3369
    %v3371 = vlaneseq
    %v3372 = vshrl.u32 %v3371, 7
    %v3373 = vsub.s32 %v3370, %v3372
    %v3374 = vrot.slane %v3366, %v3373
    %v3376 = vunpack.c.l.s4 1934713408
    %v3377 = vunpack.c.0.s8 %v3376
    %v3378 = vlaneseq
    %v3379 = vshrl.u32 %v3378, 7
    %v3380 = vsub.s32 %v3377, %v3379
    %v3381 = vrot.slane %v3367, %v3380
    %v3382 = vcombine.low %v3326, %v3358
    %v3383 = vcombine.high %v3326, %v3358
    %v3384 = vcombine.low %v3333, %v3365
    %v3385 = vcombine.high %v3333, %v3365
    %v3386 = vcombine.low %v3342, %v3374
    %v3387 = vcombine.high %v3342, %v3374
    %v3388 = vcombine.low %v3349, %v3381
    %v3389 = vcombine.high %v3349, %v3381
    %v3390 = vcombine.low %v3246, %v3248
    %v3391 = vcombine.high %v3246, %v3248
    %v3393 = vunpack.c.l.s4 1983009808
    %v3394 = vunpack.c.0.s8 %v3393
    %v3395 = vlaneseq
    %v3396 = vshrl.u32 %v3395, 7
    %v3397 = vsub.s32 %v3394, %v3396
    %v3398 = vrot.slane %v3390, %v3397
    %v3400 = vunpack.c.l.s4 1983009808
    %v3401 = vunpack.c.0.s8 %v3400
    %v3402 = vlaneseq
    %v3403 = vshrl.u32 %v3402, 7
    %v3404 = vsub.s32 %v3401, %v3403
    %v3405 = vrot.slane %v3391, %v3404
    %v3406 = vcombine.low %v3247, %v3249
    %v3407 = vcombine.high %v3247, %v3249
    %v3409 = vunpack.c.l.s4 1983009808
    %v3410 = vunpack.c.0.s8 %v3409
    %v3411 = vlaneseq
    %v3412 = vshrl.u32 %v3411, 7
    %v3413 = vsub.s32 %v3410, %v3412
    %v3414 = vrot.slane %v3406, %v3413
    %v3416 = vunpack.c.l.s4 1983009808
    %v3417 = vunpack.c.0.s8 %v3416
    %v3418 = vlaneseq
    %v3419 = vshrl.u32 %v3418, 7
    %v3420 = vsub.s32 %v3417, %v3419
    %v3421 = vrot.slane %v3407, %v3420
    %v3422 = vcombine.low %v3250, %v3252
    %v3423 = vcombine.high %v3250, %v3252
    %v3425 = vunpack.c.l.s4 1983009808
    %v3426 = vunpack.c.0.s8 %v3425
    %v3427 = vlaneseq
    %v3428 = vshrl.u32 %v3427, 7
    %v3429 = vsub.s32 %v3426, %v3428
    %v3430 = vrot.slane %v3422, %v3429
    %v3432 = vunpack.c.l.s4 1983009808
    %v3433 = vunpack.c.0.s8 %v3432
    %v3434 = vlaneseq
    %v3435 = vshrl.u32 %v3434, 7
    %v3436 = vsub.s32 %v3433, %v3435
    %v3437 = vrot.slane %v3423, %v3436
    %v3438 = vcombine.low %v3251, %v3253
    %v3439 = vcombine.high %v3251, %v3253
    %v3441 = vunpack.c.l.s4 1983009808
    %v3442 = vunpack.c.0.s8 %v3441
    %v3443 = vlaneseq
    %v3444 = vshrl.u32 %v3443, 7
    %v3445 = vsub.s32 %v3442, %v3444
    %v3446 = vrot.slane %v3438, %v3445
    %v3448 = vunpack.c.l.s4 1983009808
    %v3449 = vunpack.c.0.s8 %v3448
    %v3450 = vlaneseq
    %v3451 = vshrl.u32 %v3450, 7
    %v3452 = vsub.s32 %v3449, %v3451
    %v3453 = vrot.slane %v3439, %v3452
    %v3454 = vcombine.low %v3398, %v3414
    %v3455 = vcombine.high %v3398, %v3414
    %v3457 = vunpack.c.l.s4 1934713408
    %v3458 = vunpack.c.0.s8 %v3457
    %v3459 = vlaneseq
    %v3460 = vshrl.u32 %v3459, 7
    %v3461 = vsub.s32 %v3458, %v3460
    %v3462 = vrot.slane %v3454, %v3461
    %v3464 = vunpack.c.l.s4 1934713408
    %v3465 = vunpack.c.0.s8 %v3464
    %v3466 = vlaneseq
    %v3467 = vshrl.u32 %v3466, 7
    %v3468 = vsub.s32 %v3465, %v3467
    %v3469 = vrot.slane %v3455, %v3468
    %v3470 = vcombine.low %v3405, %v3421
    %v3471 = vcombine.high %v3405, %v3421
    %v3473 = vunpack.c.l.s4 1934713408
    %v3474 = vunpack.c.0.s8 %v3473
    %v3475 = vlaneseq
    %v3476 = vshrl.u32 %v3475, 7
    %v3477 = vsub.s32 %v3474, %v3476
    %v3478 = vrot.slane %v3470, %v3477
    %v3480 = vunpack.c.l.s4 1934713408
    %v3481 = vunpack.c.0.s8 %v3480
    %v3482 = vlaneseq
    %v3483 = vshrl.u32 %v3482, 7
    %v3484 = vsub.s32 %v3481, %v3483
    %v3485 = vrot.slane %v3471, %v3484
    %v3486 = vcombine.low %v3430, %v3446
    %v3487 = vcombine.high %v3430, %v3446
    %v3489 = vunpack.c.l.s4 1934713408
    %v3490 = vunpack.c.0.s8 %v3489
    %v3491 = vlaneseq
    %v3492 = vshrl.u32 %v3491, 7
    %v3493 = vsub.s32 %v3490, %v3492
    %v3494 = vrot.slane %v3486, %v3493
    %v3496 = vunpack.c.l.s4 1934713408
    %v3497 = vunpack.c.0.s8 %v3496
    %v3498 = vlaneseq
    %v3499 = vshrl.u32 %v3498, 7
    %v3500 = vsub.s32 %v3497, %v3499
    %v3501 = vrot.slane %v3487, %v3500
    %v3502 = vcombine.low %v3437, %v3453
    %v3503 = vcombine.high %v3437, %v3453
    %v3505 = vunpack.c.l.s4 1934713408
    %v3506 = vunpack.c.0.s8 %v3505
    %v3507 = vlaneseq
    %v3508 = vshrl.u32 %v3507, 7
    %v3509 = vsub.s32 %v3506, %v3508
    %v3510 = vrot.slane %v3502, %v3509
    %v3512 = vunpack.c.l.s4 1934713408
    %v3513 = vunpack.c.0.s8 %v3512
    %v3514 = vlaneseq
    %v3515 = vshrl.u32 %v3514, 7
    %v3516 = vsub.s32 %v3513, %v3515
    %v3517 = vrot.slane %v3503, %v3516
    %v3518 = vcombine.low %v3462, %v3494
    %v3519 = vcombine.high %v3462, %v3494
    %v3520 = vcombine.low %v3469, %v3501
    %v3521 = vcombine.high %v3469, %v3501
    %v3522 = vcombine.low %v3478, %v3510
    %v3523 = vcombine.high %v3478, %v3510
    %v3524 = vcombine.low %v3485, %v3517
    %v3525 = vcombine.high %v3485, %v3517
    %v3526 = vcombine.low %v3382, %v3384
    %v3527 = vcombine.high %v3382, %v3384
    %v3529 = vunpack.c.l.s4 1983009808
    %v3530 = vunpack.c.0.s8 %v3529
    %v3531 = vlaneseq
    %v3532 = vshrl.u32 %v3531, 7
    %v3533 = vsub.s32 %v3530, %v3532
    %v3534 = vrot.slane %v3526, %v3533
    %v3536 = vunpack.c.l.s4 1983009808
    %v3537 = vunpack.c.0.s8 %v3536
    %v3538 = vlaneseq
    %v3539 = vshrl.u32 %v3538, 7
    %v3540 = vsub.s32 %v3537, %v3539
    %v3541 = vrot.slane %v3527, %v3540
    %v3542 = vcombine.low %v3383, %v3385
    %v3543 = vcombine.high %v3383, %v3385
    %v3545 = vunpack.c.l.s4 1983009808
    %v3546 = vunpack.c.0.s8 %v3545
    %v3547 = vlaneseq
    %v3548 = vshrl.u32 %v3547, 7
    %v3549 = vsub.s32 %v3546, %v3548
    %v3550 = vrot.slane %v3542, %v3549
    %v3552 = vunpack.c.l.s4 1983009808
    %v3553 = vunpack.c.0.s8 %v3552
    %v3554 = vlaneseq
    %v3555 = vshrl.u32 %v3554, 7
    %v3556 = vsub.s32 %v3553, %v3555
    %v3557 = vrot.slane %v3543, %v3556
    %v3558 = vcombine.low %v3386, %v3388
    %v3559 = vcombine.high %v3386, %v3388
    %v3561 = vunpack.c.l.s4 1983009808
    %v3562 = vunpack.c.0.s8 %v3561
    %v3563 = vlaneseq
    %v3564 = vshrl.u32 %v3563, 7
    %v3565 = vsub.s32 %v3562, %v3564
    %v3566 = vrot.slane %v3558, %v3565
    %v3568 = vunpack.c.l.s4 1983009808
    %v3569 = vunpack.c.0.s8 %v3568
    %v3570 = vlaneseq
    %v3571 = vshrl.u32 %v3570, 7
    %v3572 = vsub.s32 %v3569, %v3571
    %v3573 = vrot.slane %v3559, %v3572
    %v3574 = vcombine.low %v3387, %v3389
    %v3575 = vcombine.high %v3387, %v3389
    %v3577 = vunpack.c.l.s4 1983009808
    %v3578 = vunpack.c.0.s8 %v3577
    %v3579 = vlaneseq
    %v3580 = vshrl.u32 %v3579, 7
    %v3581 = vsub.s32 %v3578, %v3580
    %v3582 = vrot.slane %v3574, %v3581
    %v3584 = vunpack.c.l.s4 1983009808
    %v3585 = vunpack.c.0.s8 %v3584
    %v3586 = vlaneseq
    %v3587 = vshrl.u32 %v3586, 7
    %v3588 = vsub.s32 %v3585, %v3587
    %v3589 = vrot.slane %v3575, %v3588
    %v3590 = vcombine.low %v3534, %v3550
    %v3591 = vcombine.high %v3534, %v3550
    %v3593 = vunpack.c.l.s4 1934713408
    %v3594 = vunpack.c.0.s8 %v3593
    %v3595 = vlaneseq
    %v3596 = vshrl.u32 %v3595, 7
    %v3597 = vsub.s32 %v3594, %v3596
    %v3598 = vrot.slane %v3590, %v3597
    %v3600 = vunpack.c.l.s4 1934713408
    %v3601 = vunpack.c.0.s8 %v3600
    %v3602 = vlaneseq
    %v3603 = vshrl.u32 %v3602, 7
    %v3604 = vsub.s32 %v3601, %v3603
    %v3605 = vrot.slane %v3591, %v3604
    %v3606 = vcombine.low %v3541, %v3557
    %v3607 = vcombine.high %v3541, %v3557
    %v3609 = vunpack.c.l.s4 1934713408
    %v3610 = vunpack.c.0.s8 %v3609
    %v3611 = vlaneseq
    %v3612 = vshrl.u32 %v3611, 7
    %v3613 = vsub.s32 %v3610, %v3612
    %v3614 = vrot.slane %v3606, %v3613
    %v3616 = vunpack.c.l.s4 1934713408
    %v3617 = vunpack.c.0.s8 %v3616
    %v3618 = vlaneseq
    %v3619 = vshrl.u32 %v3618, 7
    %v3620 = vsub.s32 %v3617, %v3619
    %v3621 = vrot.slane %v3607, %v3620
    %v3622 = vcombine.low %v3566, %v3582
    %v3623 = vcombine.high %v3566, %v3582
    %v3625 = vunpack.c.l.s4 1934713408
    %v3626 = vunpack.c.0.s8 %v3625
    %v3627 = vlaneseq
    %v3628 = vshrl.u32 %v3627, 7
    %v3629 = vsub.s32 %v3626, %v3628
    %v3630 = vrot.slane %v3622, %v3629
    %v3632 = vunpack.c.l.s4 1934713408
    %v3633 = vunpack.c.0.s8 %v3632
    %v3634 = vlaneseq
    %v3635 = vshrl.u32 %v3634, 7
    %v3636 = vsub.s32 %v3633, %v3635
    %v3637 = vrot.slane %v3623, %v3636
    %v3638 = vcombine.low %v3573, %v3589
    %v3639 = vcombine.high %v3573, %v3589
    %v3641 = vunpack.c.l.s4 1934713408
    %v3642 = vunpack.c.0.s8 %v3641
    %v3643 = vlaneseq
    %v3644 = vshrl.u32 %v3643, 7
    %v3645 = vsub.s32 %v3642, %v3644
    %v3646 = vrot.slane %v3638, %v3645
    %v3648 = vunpack.c.l.s4 1934713408
    %v3649 = vunpack.c.0.s8 %v3648
    %v3650 = vlaneseq
    %v3651 = vshrl.u32 %v3650, 7
    %v3652 = vsub.s32 %v3649, %v3651
    %v3653 = vrot.slane %v3639, %v3652
    %v3654 = vcombine.low %v3598, %v3630
    %v3655 = vcombine.high %v3598, %v3630
    %v3656 = vcombine.low %v3605, %v3637
    %v3657 = vcombine.high %v3605, %v3637
    %v3658 = vcombine.low %v3614, %v3646
    %v3659 = vcombine.high %v3614, %v3646
    %v3660 = vcombine.low %v3621, %v3653
    %v3661 = vcombine.high %v3621, %v3653
    %3664 = vrot.lane.b32.xlu0 %v3519, 4
    %v3665 = vpop.permute.xlu0 %3664
    %3666 = vrot.lane.b32.xlu0 %v3655, 4
    %v3667 = vpop.permute.xlu0 %3666
    %3672 = vrot.lane.b32.xlu0 %v3520, 8
    %v3673 = vpop.permute.xlu0 %3672
    %3674 = vrot.lane.b32.xlu0 %v3656, 8
    %v3675 = vpop.permute.xlu0 %3674
    %3680 = vrot.lane.b32.xlu0 %v3521, 12
    %v3681 = vpop.permute.xlu0 %3680
    %3682 = vrot.lane.b32.xlu0 %v3657, 12
    %v3683 = vpop.permute.xlu0 %3682
    %3688 = vrot.lane.b32.xlu0 %v3522, 16
    %v3689 = vpop.permute.xlu0 %3688
    %3690 = vrot.lane.b32.xlu0 %v3658, 16
    %v3691 = vpop.permute.xlu0 %3690
    %3696 = vrot.lane.b32.xlu0 %v3523, 20
    %v3697 = vpop.permute.xlu0 %3696
    %3698 = vrot.lane.b32.xlu0 %v3659, 20
    %v3699 = vpop.permute.xlu0 %3698
    %3704 = vrot.lane.b32.xlu0 %v3524, 24
    %v3705 = vpop.permute.xlu0 %3704
    %3706 = vrot.lane.b32.xlu0 %v3660, 24
    %v3707 = vpop.permute.xlu0 %3706
    %3712 = vrot.lane.b32.xlu0 %v3525, 28
    %v3713 = vpop.permute.xlu0 %3712
    %3714 = vrot.lane.b32.xlu0 %v3661, 28
    %v3715 = vpop.permute.xlu0 %3714
    %v3718 = vsel %vm1451, %v3518, %v3665
    %v3719 = vsel %vm1451, %v3654, %v3667
    %v3720 = vsel %vm2188, %v3718, %v3673
    %v3721 = vsel %vm2188, %v3719, %v3675
    %vm3722 = vcmask 97280
    %v3723 = vsel %vm3722, %v3720, %v3681
    %v3724 = vsel %vm3722, %v3721, %v3683
    %vm3725 = vcmask 130048
    %v3726 = vsel %vm3725, %v3723, %v3689
    %v3727 = vsel %vm3725, %v3724, %v3691
    %vm3728 = vcmask 162816
    %v3729 = vsel %vm3728, %v3726, %v3697
    %v3730 = vsel %vm3728, %v3727, %v3699
    %vm3731 = vcmask 195584
    %v3732 = vsel %vm3731, %v3729, %v3705
    %v3733 = vsel %vm3731, %v3730, %v3707
    %vm3734 = vcmask 228352
    %v3735 = vsel %vm3734, %v3732, %v3713
    %v3736 = vsel %vm3734, %v3733, %v3715
    %v3737 = vpack.c.bf16 %v3736, %v3735
    %v3738 = vld [vmem:[#allocation13] sm:$0xf]
    %v3739 = vld [vmem:[#allocation13 + $0x4] sm:$0xf]
    %v3740 = vld [vmem:[#allocation13 + $0x8] sm:$0xf]
    %v3741 = vld [vmem:[#allocation13 + $0xc] sm:$0xf]
    %v3742 = vld [vmem:[#allocation14] sm:$0x1]
    %v3744 = vlaneseq
    %v3745 = vshrl.u32 %v3744, 7
    %v3746 = vsub.s32 0, %v3745
    %v3747 = vrot.slane %v3742, %v3746
    %v3753 = vunpack.c.l.b16 %v3738
    %v3754 = vunpack.c.l.b16 %v3739
    %v3755 = vunpack.c.l.b16 %v3740
    %v3756 = vunpack.c.l.b16 %v3741
    %v3757 = vpack.c.b16 %v3754, %v3753
    %v3758 = vpack.c.b16 %v3756, %v3755
    %v3762 = vsel %vm149, %v3737, 0
    %3764 = vmatprep.subr.bf16.mxu0 0
    %3765 = vmatpush1.bf16.msra.mxu0 %v3757
    %3766 = vmatprep.subr.bf16.mxu0 0
    %3767 = vmatpush1.bf16.msra.mxu0 %v3758
    %3768 = vmatprep.subr.bf16.mxu0 0
    %3769 = vmatpush1.bf16.msra.mxu0 0
    %3770 = vmatprep.subr.bf16.mxu0 0
    %3771 = vmatpush1.bf16.msra.mxu0 0
    %3772 = vmatprep.subr.bf16.mxu0 0
    %3773 = vmatpush1.bf16.msra.mxu0 0
    %3774 = vmatprep.subr.bf16.mxu0 0
    %3775 = vmatpush1.bf16.msra.mxu0 0
    %3776 = vmatprep.subr.bf16.mxu0 0
    %3777 = vmatpush1.bf16.msra.mxu0 0
    %3778 = vmatprep.subr.bf16.mxu0 0
    %3779 = vmatpush1.bf16.msra.mxu0 0
    %3780 = vmatprep.subr.bf16.mxu0 0
    %3781 = vmatpush1.bf16.msra.mxu0 0
    %3782 = vmatprep.subr.bf16.mxu0 0
    %3783 = vmatpush1.bf16.msra.mxu0 0
    %3784 = vmatprep.subr.bf16.mxu0 0
    %3785 = vmatpush1.bf16.msra.mxu0 0
    %3786 = vmatprep.subr.bf16.mxu0 0
    %3787 = vmatpush1.bf16.msra.mxu0 0
    %3788 = vmatprep.subr.bf16.mxu0 0
    %3789 = vmatpush1.bf16.msra.mxu0 0
    %3790 = vmatprep.subr.bf16.mxu0 0
    %3791 = vmatpush1.bf16.msra.mxu0 0
    %3792 = vmatprep.subr.bf16.mxu0 0
    %3793 = vmatpush1.bf16.msra.mxu0 0
    %3794 = vmatprep.subr.bf16.mxu0 0
    %3795 = vmatpush1.bf16.msra.mxu0 0
    %3796 = vmatprep.mubr.bf16.mxu0 0
    %3797 = vmatmul.mubr.bf16.gmra.mrb[0].mxu0 %v3762
    %v3798 = vpop.f32.mrb[0].mxu0
    %v3799 = vadd.f32 %v3747, %v3798
    %v3800 = vpop.f32.mrb[0].mxu0
    %v3801 = vpop.f32.mrb[0].mxu0
    %v3802 = vadd.f32 %v3747, %v3801
    %v3803 = vpop.f32.mrb[0].mxu0
    %3804 = vdwg.mxu0
    %3805 = vst.msk [vmem:[#allocation16] sm:$0xff] %vm149, %v3799
    %3806 = vst.msk [vmem:[#allocation16 + $0x8] sm:$0xff] %vm149, %v3802
    // Predicated region
    $region66: #{tpu_custom_call.1} parent=1 // pred_check
      _
    $region67: #{tpu_custom_call.1} parent=1 // pred_check_branch
      %3808 = sbr.rel (0) target = $region69
    $region68: #{tpu_custom_call.1} parent=1 // pred_region
      %s3810 = ssub.s32 256, 256
      %3811 = vsyncadd [#allocation4], %s3810
      %s3812 = sshll.u32 [#allocation16], 4
      %s3813 = int_to_ptr.vmem [resolvable:$true] %s3812
      %3818 = dma.vmem_to_hbm [thread:$0]  %s3813, 256, %s8, [#allocation4], 128, 128, 8
    $region69: #{tpu_custom_call.1} parent=1 // pred_fallthru
      _
    // Predicated region
    $region70: #{tpu_custom_call.1} parent=1 // pred_check
      _
    $region71: #{tpu_custom_call.1} parent=1 // pred_check_branch
      %3820 = sbr.rel (0) target = $region73
    $region72: #{tpu_custom_call.1} parent=1 // pred_region
      %3821 = dma.done [#allocation4], 256
    $region73: #{tpu_custom_call.1} parent=1 // pred_fallthru
      _
    %3822 = vsyncpa [#allocation3], 1
    %3823 = vsyncpa [#allocation6], 1
    %3824 = vsyncpa [#allocation9], 1
    %3825 = vsyncpa [#allocation12], 1
    %3826 = vsyncpa [#allocation15], 1
    %3827 = vsyncpa [#allocation4], 1

</llo_original>
